<compile_context>
chip_gen: v7x
topology: tpu7x:2x2x1
jax: 0.10.0
libtpu: 0.0.40
codegen_flags: <defaults>
</compile_context>

<pallas_src>
import functools

import jax
import jax.numpy as jnp
from jax.experimental import pallas as pl
from jax.experimental.pallas import tpu as pltpu

_INV_SQRT2 = 0.7071067811865476
_VMEM_LIMIT = 32 * 1024 * 1024  # safe on v5e/v6e (128 MiB) and v7x (64 MiB)


def _round_up(v, m):
    return ((v + m - 1) // m) * m


def _pick_tile_m(m, cap=512):
    """Largest multiple of 8 that divides m and is <= cap (fallback: m)."""
    cap = min(cap, m)
    start = cap - cap % 8
    for t in range(start, 0, -8):
        if m % t == 0:
            return t
    return m


def _erf_f32(x):
    # f32 rational approximation of erf (same form/coefficients XLA uses for
    # f32 erf) -> exact (non-tanh) GELU to f32 precision. The p/q divide is
    # routed through pl.reciprocal so it lands on the EUP slot.
    x = jnp.clip(x, -4.0, 4.0)
    x2 = x * x
    alpha = (-2.72614225801306e-10, 2.77068142495902e-08, -2.10102402082508e-06,
             -5.69250639462346e-05, -7.34990630326855e-04, -2.95459980854025e-03,
             -1.60960333262415e-02)
    beta = (-1.45660718464996e-05, -2.13374055278905e-04, -1.68282697438203e-03,
            -7.37332916720468e-03, -1.42647390514189e-02)
    p = jnp.full_like(x2, alpha[0])
    for c in alpha[1:]:
        p = p * x2 + c
    q = jnp.full_like(x2, beta[0])
    for c in beta[1:]:
        q = q * x2 + c
    return x * p * pl.reciprocal(q, approx=False)


def _gelu_exact(x):
    return 0.5 * x * (1.0 + _erf_f32(x * _INV_SQRT2))


# ---------------- Pallas kernels ----------------

def _resize_dw_kernel(*args, ksize, depth):
    """Fused resize (1x1x1 conv) + depthwise 3D conv for one (n, d) slice.

    args = [x slice refs for dz=0..K-1 (depth-clamped)] +
           [w_resize, b_resize, w_dw, b_dw] + [skip_ref, dw_ref] + [ypad scratch]
    """
    K = ksize
    p = (K - 1) // 2
    x_refs = args[:K]
    wr_ref, br_ref, wdw_ref, bdw_ref = args[K:K + 4]
    skip_ref, dw_ref = args[K + 4], args[K + 5]
    ypad_ref = args[K + 6]

    _, _, H, W, Cin = x_refs[0].shape
    C = skip_ref.shape[-1]
    d = pl.program_id(1)

    # Zero-initialised padded scratch provides the 'same' zero padding along
    # H/W, and along D for out-of-range taps (whose store is skipped below).
    ypad_ref[...] = jnp.zeros_like(ypad_ref)

    wr = wr_ref[...]
    br = br_ref[...]

    # Resize (1x1x1 conv) of the K depth slices needed by this output slice.
    for dz in range(K):
        x = x_refs[dz][...].reshape(H * W, Cin).astype(jnp.float32)
        y = jnp.dot(x, wr, preferred_element_type=jnp.float32) + br

        if dz == p:
            # residual/skip branch = resize output of the centre slice
            skip_ref[...] = y.reshape(1, 1, H, W, C)

        valid = jnp.logical_and(d + (dz - p) >= 0, d + (dz - p) <= depth - 1)

        @pl.when(valid)
        def _(y=y, dz=dz):
            ypad_ref[dz, p:p + H, p:p + W, :] = y.reshape(H, W, C)

    # Depthwise conv (cross-correlation, matching torch.nn.Conv3d).
    wdw = wdw_ref[...]
    acc = jnp.zeros((H, W, C), jnp.float32)
    t = 0
    for dz in range(K):
        for dy in range(K):
            for dx in range(K):
                tap = ypad_ref[dz, dy:dy + H, dx:dx + W, :]
                acc = acc + tap * wdw[t:t + 1, :].reshape(1, 1, C)
                t += 1
    acc = acc + bdw_ref[...].reshape(1, 1, C)
    dw_ref[...] = acc.reshape(1, 1, H, W, C).astype(dw_ref.dtype)


def _bn_stats_kernel(z_ref, stats_ref):
    """Pass A of BatchNorm: per-channel sum and sum-of-squares over all rows."""
    i = pl.program_id(0)

    @pl.when(i == 0)
    def _():
        stats_ref[...] = jnp.zeros_like(stats_ref)

    z = z_ref[...].astype(jnp.float32)
    stats_ref[0:1, :] += jnp.sum(z, axis=0, keepdims=True)
    stats_ref[1:2, :] += jnp.sum(z * z, axis=0, keepdims=True)


def _bn_mlp_kernel(skip_ref, z_ref, scale_ref, shift_ref,
                   w1_ref, b1_ref, w2_ref, b2_ref, o_ref):
    """Pass B: normalise (precomputed scale/shift) -> conv1 -> GELU -> conv2
    -> residual. Dropout(p=0) is the identity. Hidden dim is zero-padded to a
    multiple of 128 (lane-dense, numerically exact)."""
    z = z_ref[...].astype(jnp.float32)
    zn = z * scale_ref[...] + shift_ref[...]

    h = jnp.dot(zn, w1_ref[...], preferred_element_type=jnp.float32) + b1_ref[...]
    h = _gelu_exact(h)
    out = jnp.dot(h, w2_ref[...], preferred_element_type=jnp.float32) + b2_ref[...]

    o_ref[...] = (out + skip_ref[...].astype(jnp.float32)).astype(o_ref.dtype)


# ---------------- wrapper ----------------

def conv_next_block(x_ncdhw, params, *, kernel_size, eps=1e-5, max_tile_m=512):
    """Forward pass of ConvNextBLock. x_ncdhw: (N, C_in, D, H, W) float32."""
    N, Cin, D, H, W = x_ncdhw.shape
    Cout = params["w_resize"].shape[1]
    hid = params["w1"].shape[1]
    K = kernel_size
    p = (K - 1) // 2
    M = N * D * H * W

    cparams_par2 = pltpu.CompilerParams(
        dimension_semantics=("parallel", "parallel"),
        vmem_limit_bytes=_VMEM_LIMIT)

    # entry glue: NCDHW -> channels-last NDHWC (single transpose of the input)
    x5d = jnp.transpose(x_ncdhw, (0, 2, 3, 4, 1))

    # ---- stage 1: fused resize + depthwise 3D conv, grid over (N, D) -------
    # K depth-clamped views of x feed the depth halo; boundary contributions
    # are zeroed in-kernel with pl.when (so no jnp.pad and no separate resize
    # pass through HBM).
    x_specs = [
        pl.BlockSpec(
            (1, 1, H, W, Cin),
            (lambda n, d, dz=dz: (n, jnp.clip(d + dz - p, 0, D - 1), 0, 0, 0)))
        for dz in range(K)
    ]
    param_specs = [
        pl.BlockSpec(params["w_resize"].shape, lambda n, d: (0, 0)),
        pl.BlockSpec(params["b_resize"].shape, lambda n, d: (0, 0)),
        pl.BlockSpec(params["w_dw"].shape, lambda n, d: (0, 0)),
        pl.BlockSpec(params["b_dw"].shape, lambda n, d: (0, 0)),
    ]
    out_spec5 = pl.BlockSpec((1, 1, H, W, Cout), lambda n, d: (n, d, 0, 0, 0))

    skip5d, dw5d = pl.pallas_call(
        functools.partial(_resize_dw_kernel, ksize=K, depth=D),
        out_shape=(jax.ShapeDtypeStruct((N, D, H, W, Cout), jnp.float32),
                   jax.ShapeDtypeStruct((N, D, H, W, Cout), jnp.float32)),
        grid=(N, D),
        in_specs=x_specs + param_specs,
        out_specs=(out_spec5, out_spec5),
        scratch_shapes=[pltpu.VMEM((K, H + 2 * p, W + 2 * p, Cout), jnp.float32)],
        compiler_params=cparams_par2,
    )(*([x5d] * K), params["w_resize"], params["b_resize"],
      params["w_dw"], params["b_dw"])

    skip2d = skip5d.reshape(M, Cout)   # free reshapes (row-major contiguous)
    dw2d = dw5d.reshape(M, Cout)

    # ---- stage 2: BatchNorm batch statistics (grid reduction over M) -------
    tile_m = _pick_tile_m(M, max_tile_m)
    grid_m = M // tile_m

    stats = pl.pallas_call(
        _bn_stats_kernel,
        out_shape=jax.ShapeDtypeStruct((2, Cout), jnp.float32),
        grid=(grid_m,),
        in_specs=[pl.BlockSpec((tile_m, Cout), lambda i: (i, 0))],
        out_specs=pl.BlockSpec((2, Cout), lambda i: (0, 0)),
        compiler_params=pltpu.CompilerParams(
            dimension_semantics=("arbitrary",),       # reduction axis
            vmem_limit_bytes=_VMEM_LIMIT),
    )(dw2d)

    # tiny (1, C) glue: fold mean/var/gamma/beta into per-channel scale/shift
    mean = stats[0:1, :] / M
    var = jnp.maximum(stats[1:2, :] / M - mean * mean, 0.0)   # biased variance
    scale = params["gamma"] * jax.lax.rsqrt(var + eps)
    shift = params["beta"] - mean * scale

    # ---- stage 3: normalise + conv1 + GELU + conv2 + residual, tiled over M
    hid_p = _round_up(hid, 128)            # lane-dense hidden dim (exact: pads
    w1p = jnp.pad(params["w1"], ((0, 0), (0, hid_p - hid)))   # are zeros and
    b1p = jnp.pad(params["b1"], ((0, 0), (0, hid_p - hid)))   # GELU(0)=0 hits
    w2p = jnp.pad(params["w2"], ((0, hid_p - hid), (0, 0)))   # zero w2 rows)

    out2d = pl.pallas_call(
        _bn_mlp_kernel,
        out_shape=jax.ShapeDtypeStruct((M, Cout), jnp.float32),
        grid=(grid_m,),
        in_specs=[
            pl.BlockSpec((tile_m, Cout), lambda i: (i, 0)),   # skip
            pl.BlockSpec((tile_m, Cout), lambda i: (i, 0)),   # depthwise out
            pl.BlockSpec((1, Cout), lambda i: (0, 0)),        # scale
            pl.BlockSpec((1, Cout), lambda i: (0, 0)),        # shift
            pl.BlockSpec((Cout, hid_p), lambda i: (0, 0)),    # w1 (padded)
            pl.BlockSpec((1, hid_p), lambda i: (0, 0)),       # b1 (padded)
            pl.BlockSpec((hid_p, Cout), lambda i: (0, 0)),    # w2 (padded)
            pl.BlockSpec((1, Cout), lambda i: (0, 0)),        # b2
        ],
        out_specs=pl.BlockSpec((tile_m, Cout), lambda i: (i, 0)),
        compiler_params=pltpu.CompilerParams(
            dimension_semantics=("parallel",),
            vmem_limit_bytes=_VMEM_LIMIT),
    )(skip2d, dw2d, scale, shift, w1p, b1p, w2p, params["b2"])

    # exit glue: (M, C) -> NDHWC -> NCDHW
    return jnp.transpose(out2d.reshape(N, D, H, W, Cout), (0, 4, 1, 2, 3))


# ---------------- parameters & reference ----------------

def init_params(key, in_channels, out_channels, kernel_size, up_factor=3):
    """Deterministic synthetic parameters.

    PyTorch layout correspondence:
      w_resize = resize.weight[:, :, 0, 0, 0].T              (C_in, C_out)
      w_dw     = depth_conv.weight[:, 0] flattened to (k^3, C), (dz,dy,dx)-major
      w1       = conv1.weight[:, :, 0, 0, 0].T               (C, up*C)
      w2       = conv2.weight[:, :, 0, 0, 0].T               (up*C, C)
      gamma/beta = BatchNorm3d affine defaults (ones / zeros)
    """
    C, hid = out_channels, up_factor * out_channels
    ks = jax.random.split(key, 8)

    def nrm(k, shape, scale):
        return scale * jax.random.normal(k, shape, jnp.float32)

    return dict(
        w_resize=nrm(ks[0], (in_channels, C), 0.3),
        b_resize=nrm(ks[1], (1, C), 0.1),
        w_dw=nrm(ks[2], (kernel_size ** 3, C), 0.2),
        b_dw=nrm(ks[3], (1, C), 0.1),
        gamma=jnp.ones((1, C), jnp.float32),
        beta=jnp.zeros((1, C), jnp.float32),
        w1=nrm(ks[4], (C, hid), 0.2),
        b1=nrm(ks[5], (1, hid), 0.1),
        w2=nrm(ks[6], (hid, C), 0.2),
        b2=nrm(ks[7], (1, C), 0.1),
    )


def _reference(x, params, *, ksize, eps):
    """Pure-JAX reference of the same forward pass (no Pallas)."""
    N, Cin, D, H, W = x.shape
    C = params["w_resize"].shape[1]
    p = (ksize - 1) // 2
    hi = jax.lax.Precision.HIGHEST

    xl = jnp.transpose(x, (0, 2, 3, 4, 1))
    y = (jnp.einsum('ndhwc,co->ndhwo', xl, params["w_resize"], precision=hi)
         + params["b_resize"].reshape(1, 1, 1, 1, C))
    ypad = jnp.pad(y, ((0, 0), (p, p), (p, p), (p, p), (0, 0)))
    dw = jnp.zeros_like(y)
    t = 0
    for dz in range(ksize):
        for dy in range(ksize):
            for dx in range(ksize):
                dw = dw + (ypad[:, dz:dz + D, dy:dy + H, dx:dx + W, :]
                           * params["w_dw"][t].reshape(1, 1, 1, 1, C))
                t += 1
    dw = dw + params["b_dw"].reshape(1, 1, 1, 1, C)

    z = dw.reshape(-1, C)
    mean = jnp.mean(z, axis=0, keepdims=True)
    var = jnp.mean(jnp.square(z - mean), axis=0, keepdims=True)
    zn = (z - mean) * jax.lax.rsqrt(var + eps) * params["gamma"] + params["beta"]
    h = jnp.dot(zn, params["w1"], precision=hi) + params["b1"]
    h = 0.5 * h * (1.0 + jax.lax.erf(h * _INV_SQRT2))
    out = jnp.dot(h, params["w2"], precision=hi) + params["b2"] + y.reshape(-1, C)
    return jnp.transpose(out.reshape(N, D, H, W, C), (0, 4, 1, 2, 3))


if __name__ == "__main__":
    N, C_IN, C_OUT, D, H, W, KSIZE = 2, 4, 8, 8, 8, 8, 3

    key = jax.random.PRNGKey(0)
    kx, kp = jax.random.split(key)
    x = jax.random.normal(kx, (N, C_IN, D, H, W), jnp.float32)
    params = init_params(kp, C_IN, C_OUT, KSIZE, up_factor=3)

    fwd = jax.jit(functools.partial(conv_next_block, kernel_size=KSIZE))
    out = fwd(x, params)
    jax.block_until_ready(out)

    assert out.shape == (N, C_OUT, D, H, W), out.shape
    assert bool(jnp.all(jnp.isfinite(out)))

    ref = _reference(x, params, ksize=KSIZE, eps=1e-5)
    err = float(jnp.max(jnp.abs(out - ref)))
    assert err < 2e-2, f"max abs err vs reference: {err}"

    print("KERNEL_OK")
</pallas_src>

<mosaic_0001>
module attributes {stable_mosaic.version = 11 : i64} {
  func.func @_bn_stats_kernel(%arg0: i32, %arg1: memref<512x8xf32, #tpu.memory_space<vmem>>, %arg2: memref<2x8xf32, #tpu.memory_space<vmem>>) attributes {dimension_semantics = [#tpu.dimension_semantics<arbitrary>], iteration_bounds = array<i64: 2>, scalar_prefetch = 0 : i64, scratch_operands = 0 : i64, tpu.core_type = #tpu.core_type<tc>, window_params = [{transform_indices = @transform_0, window_bounds = array<i64: 512, 8>}, {pipeline_mode = #tpu.pipeline_mode<synchronous>, transform_indices = @transform_1, window_bounds = array<i64: 2, 8>}]} {
    %c0_i32 = arith.constant 0 : i32
    %0 = arith.cmpi eq, %arg0, %c0_i32 : i32
    %1 = arith.extui %0 : i1 to i32
    %c0_i32_0 = arith.constant 0 : i32
    %2 = arith.cmpi ne, %1, %c0_i32_0 : i32
    scf.if %2 {
      %cst_10 = arith.constant 0.000000e+00 : f32
      %15 = vector.broadcast %cst_10 : f32 to vector<2x8xf32>
      %c0_11 = arith.constant 0 : index
      %c0_12 = arith.constant 0 : index
      %16 = vector.load %arg2[%c0_11, %c0_12] : memref<2x8xf32, #tpu.memory_space<vmem>>, vector<2x8xf32>
      tpu.vector_store %arg2[%c0_11, %c0_12], %15 {strides = array<i32>} : memref<2x8xf32, #tpu.memory_space<vmem>>, vector<2x8xf32>,
    } else {
    }
    %c0 = arith.constant 0 : index
    %c0_1 = arith.constant 0 : index
    %3 = vector.load %arg1[%c0, %c0_1] : memref<512x8xf32, #tpu.memory_space<vmem>>, vector<512x8xf32>
    %c0_2 = arith.constant 0 : index
    %c0_3 = arith.constant 0 : index
    %4 = vector.load %arg2[%c0_2, %c0_3] : memref<2x8xf32, #tpu.memory_space<vmem>>, vector<1x8xf32>
    %cst = arith.constant dense<0.000000e+00> : vector<8xf32>
    %5 = vector.multi_reduction <add>, %3, %cst [0] : vector<512x8xf32> to vector<8xf32>
    %6 = vector.shape_cast %5 : vector<8xf32> to vector<1x8xf32>
    %7 = arith.addf %4, %6 : vector<1x8xf32>
    %c0_4 = arith.constant 0 : index
    %c0_5 = arith.constant 0 : index
    %8 = vector.load %arg2[%c0_4, %c0_5] : memref<2x8xf32, #tpu.memory_space<vmem>>, vector<1x8xf32>
    tpu.vector_store %arg2[%c0_4, %c0_5], %7 {strides = array<i32>} : memref<2x8xf32, #tpu.memory_space<vmem>>, vector<1x8xf32>,
    %c1 = arith.constant 1 : index
    %c0_6 = arith.constant 0 : index
    %9 = vector.load %arg2[%c1, %c0_6] : memref<2x8xf32, #tpu.memory_space<vmem>>, vector<1x8xf32>
    %10 = arith.mulf %3, %3 : vector<512x8xf32>
    %cst_7 = arith.constant dense<0.000000e+00> : vector<8xf32>
    %11 = vector.multi_reduction <add>, %10, %cst_7 [0] : vector<512x8xf32> to vector<8xf32>
    %12 = vector.shape_cast %11 : vector<8xf32> to vector<1x8xf32>
    %13 = arith.addf %9, %12 : vector<1x8xf32>
    %c1_8 = arith.constant 1 : index
    %c0_9 = arith.constant 0 : index
    %14 = vector.load %arg2[%c1_8, %c0_9] : memref<2x8xf32, #tpu.memory_space<vmem>>, vector<1x8xf32>
    tpu.vector_store %arg2[%c1_8, %c0_9], %13 {strides = array<i32>} : memref<2x8xf32, #tpu.memory_space<vmem>>, vector<1x8xf32>,
    return
  }
  func.func @transform_0(%arg0: i32) -> (i32, i32) {
    %c0_i32 = arith.constant 0 : i32
    %c0_i32_0 = arith.constant 0 : i32
    return %arg0, %c0_i32 : i32, i32
  }
  func.func @transform_1(%arg0: i32) -> (i32, i32) {
    %c0_i32 = arith.constant 0 : i32
    %c0_i32_0 = arith.constant 0 : i32
    %c0_i32_1 = arith.constant 0 : i32
    return %c0_i32, %c0_i32_0 : i32, i32
  }
}

module attributes {stable_mosaic.version = 11 : i64} {
  func.func @_resize_dw_kernel(%arg0: i32, %arg1: i32, %arg2: memref<1x1x8x8x4xf32, #tpu.memory_space<vmem>>, %arg3: memref<1x1x8x8x4xf32, #tpu.memory_space<vmem>>, %arg4: memref<1x1x8x8x4xf32, #tpu.memory_space<vmem>>, %arg5: memref<4x8xf32, #tpu.memory_space<vmem>>, %arg6: memref<1x8xf32, #tpu.memory_space<vmem>>, %arg7: memref<27x8xf32, #tpu.memory_space<vmem>>, %arg8: memref<1x8xf32, #tpu.memory_space<vmem>>, %arg9: memref<1x1x8x8x8xf32, #tpu.memory_space<vmem>>, %arg10: memref<1x1x8x8x8xf32, #tpu.memory_space<vmem>>, %arg11: memref<3x10x10x8xf32, #tpu.memory_space<vmem>>) attributes {dimension_semantics = [#tpu.dimension_semantics<parallel>, #tpu.dimension_semantics<parallel>], iteration_bounds = array<i64: 2, 8>, scalar_prefetch = 0 : i64, scratch_operands = 1 : i64, tpu.core_type = #tpu.core_type<tc>, window_params = [{transform_indices = @transform_0, window_bounds = array<i64: 1, 1, 8, 8, 4>}, {transform_indices = @transform_1, window_bounds = array<i64: 1, 1, 8, 8, 4>}, {transform_indices = @transform_2, window_bounds = array<i64: 1, 1, 8, 8, 4>}, {pipeline_mode = #tpu.pipeline_mode<synchronous>, transform_indices = @transform_3, window_bounds = array<i64: 4, 8>}, {pipeline_mode = #tpu.pipeline_mode<synchronous>, transform_indices = @transform_4, window_bounds = array<i64: 1, 8>}, {pipeline_mode = #tpu.pipeline_mode<synchronous>, transform_indices = @transform_5, window_bounds = array<i64: 27, 8>}, {pipeline_mode = #tpu.pipeline_mode<synchronous>, transform_indices = @transform_6, window_bounds = array<i64: 1, 8>}, {transform_indices = @transform_7, window_bounds = array<i64: 1, 1, 8, 8, 8>}, {transform_indices = @transform_8, window_bounds = array<i64: 1, 1, 8, 8, 8>}]} {
    %cst = arith.constant 0.000000e+00 : f32
    %0 = vector.broadcast %cst : f32 to vector<3x10x10x8xf32>
    %c0 = arith.constant 0 : index
    %c0_0 = arith.constant 0 : index
    %c0_1 = arith.constant 0 : index
    %c0_2 = arith.constant 0 : index
    %1 = vector.load %arg11[%c0, %c0_0, %c0_1, %c0_2] : memref<3x10x10x8xf32, #tpu.memory_space<vmem>>, vector<3x10x10x8xf32>
    tpu.vector_store %arg11[%c0, %c0_0, %c0_1, %c0_2], %0 {strides = array<i32>} : memref<3x10x10x8xf32, #tpu.memory_space<vmem>>, vector<3x10x10x8xf32>,
    %c0_3 = arith.constant 0 : index
    %c0_4 = arith.constant 0 : index
    %2 = vector.load %arg5[%c0_3, %c0_4] : memref<4x8xf32, #tpu.memory_space<vmem>>, vector<4x8xf32>
    %c0_5 = arith.constant 0 : index
    %c0_6 = arith.constant 0 : index
    %3 = vector.load %arg6[%c0_5, %c0_6] : memref<1x8xf32, #tpu.memory_space<vmem>>, vector<1x8xf32>
    %c0_7 = arith.constant 0 : index
    %c0_8 = arith.constant 0 : index
    %c0_9 = arith.constant 0 : index
    %c0_10 = arith.constant 0 : index
    %c0_11 = arith.constant 0 : index
    %4 = vector.load %arg2[%c0_7, %c0_8, %c0_9, %c0_10, %c0_11] : memref<1x1x8x8x4xf32, #tpu.memory_space<vmem>>, vector<1x1x8x8x4xf32>
    %5 = vector.shape_cast %4 : vector<1x1x8x8x4xf32> to vector<64x4xf32>
    %cst_12 = arith.constant dense<0.000000e+00> : vector<64x8xf32>
    %6 = tpu.matmul %5, %2, %cst_12 {dimension_numbers = #tpu.dot_dimension_numbers<[1], [0], [0], [1], [0, 0, 1, 1], [], []>} : vector<64x4xf32>, vector<4x8xf32>, vector<64x8xf32> -> vector<64x8xf32>
    %7 = vector.broadcast %3 : vector<1x8xf32> to vector<64x8xf32>
    %8 = arith.addf %6, %7 : vector<64x8xf32>
    %c-1_i32 = arith.constant -1 : i32
    %9 = arith.addi %arg1, %c-1_i32 : i32
    %c0_i32 = arith.constant 0 : i32
    %10 = arith.cmpi sge, %9, %c0_i32 : i32
    %c-1_i32_13 = arith.constant -1 : i32
    %11 = arith.addi %arg1, %c-1_i32_13 : i32
    %c7_i32 = arith.constant 7 : i32
    %12 = arith.cmpi sle, %11, %c7_i32 : i32
    %13 = arith.andi %10, %12 : i1
    %14 = arith.extui %13 : i1 to i32
    %c0_i32_14 = arith.constant 0 : i32
    %15 = arith.cmpi ne, %14, %c0_i32_14 : i32
    scf.if %15 {
      %239 = vector.shape_cast %8 : vector<64x8xf32> to vector<8x8x8xf32>
      %c0_157 = arith.constant 0 : index
      %c1_158 = arith.constant 1 : index
      %c1_159 = arith.constant 1 : index
      %c0_160 = arith.constant 0 : index
      %240 = vector.load %arg11[%c0_157, %c1_158, %c1_159, %c0_160] : memref<3x10x10x8xf32, #tpu.memory_space<vmem>>, vector<1x8x8x8xf32>
      %241 = vector.shape_cast %240 : vector<1x8x8x8xf32> to vector<8x8x8xf32>
      %242 = vector.shape_cast %239 : vector<8x8x8xf32> to vector<1x8x8x8xf32>
      tpu.vector_store %arg11[%c0_157, %c1_158, %c1_159, %c0_160], %242 {strides = array<i32>} : memref<3x10x10x8xf32, #tpu.memory_space<vmem>>, vector<1x8x8x8xf32>,
    } else {
    }
    %c0_15 = arith.constant 0 : index
    %c0_16 = arith.constant 0 : index
    %c0_17 = arith.constant 0 : index
    %c0_18 = arith.constant 0 : index
    %c0_19 = arith.constant 0 : index
    %16 = vector.load %arg3[%c0_15, %c0_16, %c0_17, %c0_18, %c0_19] : memref<1x1x8x8x4xf32, #tpu.memory_space<vmem>>, vector<1x1x8x8x4xf32>
    %17 = vector.shape_cast %16 : vector<1x1x8x8x4xf32> to vector<64x4xf32>
    %cst_20 = arith.constant dense<0.000000e+00> : vector<64x8xf32>
    %18 = tpu.matmul %17, %2, %cst_20 {dimension_numbers = #tpu.dot_dimension_numbers<[1], [0], [0], [1], [0, 0, 1, 1], [], []>} : vector<64x4xf32>, vector<4x8xf32>, vector<64x8xf32> -> vector<64x8xf32>
    %19 = vector.broadcast %3 : vector<1x8xf32> to vector<64x8xf32>
    %20 = arith.addf %18, %19 : vector<64x8xf32>
    %21 = vector.shape_cast %20 : vector<64x8xf32> to vector<1x1x8x8x8xf32>
    %c0_21 = arith.constant 0 : index
    %c0_22 = arith.constant 0 : index
    %c0_23 = arith.constant 0 : index
    %c0_24 = arith.constant 0 : index
    %c0_25 = arith.constant 0 : index
    %22 = vector.load %arg9[%c0_21, %c0_22, %c0_23, %c0_24, %c0_25] : memref<1x1x8x8x8xf32, #tpu.memory_space<vmem>>, vector<1x1x8x8x8xf32>
    tpu.vector_store %arg9[%c0_21, %c0_22, %c0_23, %c0_24, %c0_25], %21 {strides = array<i32>} : memref<1x1x8x8x8xf32, #tpu.memory_space<vmem>>, vector<1x1x8x8x8xf32>,
    %c0_i32_26 = arith.constant 0 : i32
    %23 = arith.addi %arg1, %c0_i32_26 : i32
    %c0_i32_27 = arith.constant 0 : i32
    %24 = arith.cmpi sge, %23, %c0_i32_27 : i32
    %c0_i32_28 = arith.constant 0 : i32
    %25 = arith.addi %arg1, %c0_i32_28 : i32
    %c7_i32_29 = arith.constant 7 : i32
    %26 = arith.cmpi sle, %25, %c7_i32_29 : i32
    %27 = arith.andi %24, %26 : i1
    %28 = arith.extui %27 : i1 to i32
    %c0_i32_30 = arith.constant 0 : i32
    %29 = arith.cmpi ne, %28, %c0_i32_30 : i32
    scf.if %29 {
      %239 = vector.shape_cast %20 : vector<64x8xf32> to vector<8x8x8xf32>
      %c1_157 = arith.constant 1 : index
      %c1_158 = arith.constant 1 : index
      %c1_159 = arith.constant 1 : index
      %c0_160 = arith.constant 0 : index
      %240 = vector.load %arg11[%c1_157, %c1_158, %c1_159, %c0_160] : memref<3x10x10x8xf32, #tpu.memory_space<vmem>>, vector<1x8x8x8xf32>
      %241 = vector.shape_cast %240 : vector<1x8x8x8xf32> to vector<8x8x8xf32>
      %242 = vector.shape_cast %239 : vector<8x8x8xf32> to vector<1x8x8x8xf32>
      tpu.vector_store %arg11[%c1_157, %c1_158, %c1_159, %c0_160], %242 {strides = array<i32>} : memref<3x10x10x8xf32, #tpu.memory_space<vmem>>, vector<1x8x8x8xf32>,
    } else {
    }
    %c0_31 = arith.constant 0 : index
    %c0_32 = arith.constant 0 : index
    %c0_33 = arith.constant 0 : index
    %c0_34 = arith.constant 0 : index
    %c0_35 = arith.constant 0 : index
    %30 = vector.load %arg4[%c0_31, %c0_32, %c0_33, %c0_34, %c0_35] : memref<1x1x8x8x4xf32, #tpu.memory_space<vmem>>, vector<1x1x8x8x4xf32>
    %31 = vector.shape_cast %30 : vector<1x1x8x8x4xf32> to vector<64x4xf32>
    %cst_36 = arith.constant dense<0.000000e+00> : vector<64x8xf32>
    %32 = tpu.matmul %31, %2, %cst_36 {dimension_numbers = #tpu.dot_dimension_numbers<[1], [0], [0], [1], [0, 0, 1, 1], [], []>} : vector<64x4xf32>, vector<4x8xf32>, vector<64x8xf32> -> vector<64x8xf32>
    %33 = vector.broadcast %3 : vector<1x8xf32> to vector<64x8xf32>
    %34 = arith.addf %32, %33 : vector<64x8xf32>
    %c1_i32 = arith.constant 1 : i32
    %35 = arith.addi %arg1, %c1_i32 : i32
    %c0_i32_37 = arith.constant 0 : i32
    %36 = arith.cmpi sge, %35, %c0_i32_37 : i32
    %c1_i32_38 = arith.constant 1 : i32
    %37 = arith.addi %arg1, %c1_i32_38 : i32
    %c7_i32_39 = arith.constant 7 : i32
    %38 = arith.cmpi sle, %37, %c7_i32_39 : i32
    %39 = arith.andi %36, %38 : i1
    %40 = arith.extui %39 : i1 to i32
    %c0_i32_40 = arith.constant 0 : i32
    %41 = arith.cmpi ne, %40, %c0_i32_40 : i32
    scf.if %41 {
      %239 = vector.shape_cast %34 : vector<64x8xf32> to vector<8x8x8xf32>
      %c2_157 = arith.constant 2 : index
      %c1_158 = arith.constant 1 : index
      %c1_159 = arith.constant 1 : index
      %c0_160 = arith.constant 0 : index
      %240 = vector.load %arg11[%c2_157, %c1_158, %c1_159, %c0_160] : memref<3x10x10x8xf32, #tpu.memory_space<vmem>>, vector<1x8x8x8xf32>
      %241 = vector.shape_cast %240 : vector<1x8x8x8xf32> to vector<8x8x8xf32>
      %242 = vector.shape_cast %239 : vector<8x8x8xf32> to vector<1x8x8x8xf32>
      tpu.vector_store %arg11[%c2_157, %c1_158, %c1_159, %c0_160], %242 {strides = array<i32>} : memref<3x10x10x8xf32, #tpu.memory_space<vmem>>, vector<1x8x8x8xf32>,
    } else {
    }
    %c0_41 = arith.constant 0 : index
    %c0_42 = arith.constant 0 : index
    %42 = vector.load %arg7[%c0_41, %c0_42] : memref<27x8xf32, #tpu.memory_space<vmem>>, vector<27x8xf32>
    %cst_43 = arith.constant 0.000000e+00 : f32
    %43 = vector.broadcast %cst_43 : f32 to vector<8x8x8xf32>
    %c0_44 = arith.constant 0 : index
    %c0_45 = arith.constant 0 : index
    %c0_46 = arith.constant 0 : index
    %c0_47 = arith.constant 0 : index
    %44 = vector.load %arg11[%c0_44, %c0_45, %c0_46, %c0_47] : memref<3x10x10x8xf32, #tpu.memory_space<vmem>>, vector<1x8x8x8xf32>
    %45 = vector.shape_cast %44 : vector<1x8x8x8xf32> to vector<8x8x8xf32>
    %46 = vector.extract_strided_slice %42 {offsets = [0, 0], sizes = [1, 8], strides = [1, 1]} : vector<27x8xf32> to vector<1x8xf32>
    %47 = vector.shape_cast %46 : vector<1x8xf32> to vector<1x1x8xf32>
    %48 = vector.broadcast %47 : vector<1x1x8xf32> to vector<8x8x8xf32>
    %49 = arith.mulf %45, %48 : vector<8x8x8xf32>
    %50 = arith.addf %43, %49 : vector<8x8x8xf32>
    %c0_48 = arith.constant 0 : index
    %c0_49 = arith.constant 0 : index
    %c1 = arith.constant 1 : index
    %c0_50 = arith.constant 0 : index
    %51 = vector.load %arg11[%c0_48, %c0_49, %c1, %c0_50] : memref<3x10x10x8xf32, #tpu.memory_space<vmem>>, vector<1x8x8x8xf32>
    %52 = vector.shape_cast %51 : vector<1x8x8x8xf32> to vector<8x8x8xf32>
    %53 = vector.extract_strided_slice %42 {offsets = [1, 0], sizes = [1, 8], strides = [1, 1]} : vector<27x8xf32> to vector<1x8xf32>
    %54 = vector.shape_cast %53 : vector<1x8xf32> to vector<1x1x8xf32>
    %55 = vector.broadcast %54 : vector<1x1x8xf32> to vector<8x8x8xf32>
    %56 = arith.mulf %52, %55 : vector<8x8x8xf32>
    %57 = arith.addf %50, %56 : vector<8x8x8xf32>
    %c0_51 = arith.constant 0 : index
    %c0_52 = arith.constant 0 : index
    %c2 = arith.constant 2 : index
    %c0_53 = arith.constant 0 : index
    %58 = vector.load %arg11[%c0_51, %c0_52, %c2, %c0_53] : memref<3x10x10x8xf32, #tpu.memory_space<vmem>>, vector<1x8x8x8xf32>
    %59 = vector.shape_cast %58 : vector<1x8x8x8xf32> to vector<8x8x8xf32>
    %60 = vector.extract_strided_slice %42 {offsets = [2, 0], sizes = [1, 8], strides = [1, 1]} : vector<27x8xf32> to vector<1x8xf32>
    %61 = vector.shape_cast %60 : vector<1x8xf32> to vector<1x1x8xf32>
    %62 = vector.broadcast %61 : vector<1x1x8xf32> to vector<8x8x8xf32>
    %63 = arith.mulf %59, %62 : vector<8x8x8xf32>
    %64 = arith.addf %57, %63 : vector<8x8x8xf32>
    %c0_54 = arith.constant 0 : index
    %c1_55 = arith.constant 1 : index
    %c0_56 = arith.constant 0 : index
    %c0_57 = arith.constant 0 : index
    %65 = vector.load %arg11[%c0_54, %c1_55, %c0_56, %c0_57] : memref<3x10x10x8xf32, #tpu.memory_space<vmem>>, vector<1x8x8x8xf32>
    %66 = vector.shape_cast %65 : vector<1x8x8x8xf32> to vector<8x8x8xf32>
    %67 = vector.extract_strided_slice %42 {offsets = [3, 0], sizes = [1, 8], strides = [1, 1]} : vector<27x8xf32> to vector<1x8xf32>
    %68 = vector.shape_cast %67 : vector<1x8xf32> to vector<1x1x8xf32>
    %69 = vector.broadcast %68 : vector<1x1x8xf32> to vector<8x8x8xf32>
    %70 = arith.mulf %66, %69 : vector<8x8x8xf32>
    %71 = arith.addf %64, %70 : vector<8x8x8xf32>
    %c0_58 = arith.constant 0 : index
    %c1_59 = arith.constant 1 : index
    %c1_60 = arith.constant 1 : index
    %c0_61 = arith.constant 0 : index
    %72 = vector.load %arg11[%c0_58, %c1_59, %c1_60, %c0_61] : memref<3x10x10x8xf32, #tpu.memory_space<vmem>>, vector<1x8x8x8xf32>
    %73 = vector.shape_cast %72 : vector<1x8x8x8xf32> to vector<8x8x8xf32>
    %74 = vector.extract_strided_slice %42 {offsets = [4, 0], sizes = [1, 8], strides = [1, 1]} : vector<27x8xf32> to vector<1x8xf32>
    %75 = vector.shape_cast %74 : vector<1x8xf32> to vector<1x1x8xf32>
    %76 = vector.broadcast %75 : vector<1x1x8xf32> to vector<8x8x8xf32>
    %77 = arith.mulf %73, %76 : vector<8x8x8xf32>
    %78 = arith.addf %71, %77 : vector<8x8x8xf32>
    %c0_62 = arith.constant 0 : index
    %c1_63 = arith.constant 1 : index
    %c2_64 = arith.constant 2 : index
    %c0_65 = arith.constant 0 : index
    %79 = vector.load %arg11[%c0_62, %c1_63, %c2_64, %c0_65] : memref<3x10x10x8xf32, #tpu.memory_space<vmem>>, vector<1x8x8x8xf32>
    %80 = vector.shape_cast %79 : vector<1x8x8x8xf32> to vector<8x8x8xf32>
    %81 = vector.extract_strided_slice %42 {offsets = [5, 0], sizes = [1, 8], strides = [1, 1]} : vector<27x8xf32> to vector<1x8xf32>
    %82 = vector.shape_cast %81 : vector<1x8xf32> to vector<1x1x8xf32>
    %83 = vector.broadcast %82 : vector<1x1x8xf32> to vector<8x8x8xf32>
    %84 = arith.mulf %80, %83 : vector<8x8x8xf32>
    %85 = arith.addf %78, %84 : vector<8x8x8xf32>
    %c0_66 = arith.constant 0 : index
    %c2_67 = arith.constant 2 : index
    %c0_68 = arith.constant 0 : index
    %c0_69 = arith.constant 0 : index
    %86 = vector.load %arg11[%c0_66, %c2_67, %c0_68, %c0_69] : memref<3x10x10x8xf32, #tpu.memory_space<vmem>>, vector<1x8x8x8xf32>
    %87 = vector.shape_cast %86 : vector<1x8x8x8xf32> to vector<8x8x8xf32>
    %88 = vector.extract_strided_slice %42 {offsets = [6, 0], sizes = [1, 8], strides = [1, 1]} : vector<27x8xf32> to vector<1x8xf32>
    %89 = vector.shape_cast %88 : vector<1x8xf32> to vector<1x1x8xf32>
    %90 = vector.broadcast %89 : vector<1x1x8xf32> to vector<8x8x8xf32>
    %91 = arith.mulf %87, %90 : vector<8x8x8xf32>
    %92 = arith.addf %85, %91 : vector<8x8x8xf32>
    %c0_70 = arith.constant 0 : index
    %c2_71 = arith.constant 2 : index
    %c1_72 = arith.constant 1 : index
    %c0_73 = arith.constant 0 : index
    %93 = vector.load %arg11[%c0_70, %c2_71, %c1_72, %c0_73] : memref<3x10x10x8xf32, #tpu.memory_space<vmem>>, vector<1x8x8x8xf32>
    %94 = vector.shape_cast %93 : vector<1x8x8x8xf32> to vector<8x8x8xf32>
    %95 = vector.extract_strided_slice %42 {offsets = [7, 0], sizes = [1, 8], strides = [1, 1]} : vector<27x8xf32> to vector<1x8xf32>
    %96 = vector.shape_cast %95 : vector<1x8xf32> to vector<1x1x8xf32>
    %97 = vector.broadcast %96 : vector<1x1x8xf32> to vector<8x8x8xf32>
    %98 = arith.mulf %94, %97 : vector<8x8x8xf32>
    %99 = arith.addf %92, %98 : vector<8x8x8xf32>
    %c0_74 = arith.constant 0 : index
    %c2_75 = arith.constant 2 : index
    %c2_76 = arith.constant 2 : index
    %c0_77 = arith.constant 0 : index
    %100 = vector.load %arg11[%c0_74, %c2_75, %c2_76, %c0_77] : memref<3x10x10x8xf32, #tpu.memory_space<vmem>>, vector<1x8x8x8xf32>
    %101 = vector.shape_cast %100 : vector<1x8x8x8xf32> to vector<8x8x8xf32>
    %102 = vector.extract_strided_slice %42 {offsets = [8, 0], sizes = [1, 8], strides = [1, 1]} : vector<27x8xf32> to vector<1x8xf32>
    %103 = vector.shape_cast %102 : vector<1x8xf32> to vector<1x1x8xf32>
    %104 = vector.broadcast %103 : vector<1x1x8xf32> to vector<8x8x8xf32>
    %105 = arith.mulf %101, %104 : vector<8x8x8xf32>
    %106 = arith.addf %99, %105 : vector<8x8x8xf32>
    %c1_78 = arith.constant 1 : index
    %c0_79 = arith.constant 0 : index
    %c0_80 = arith.constant 0 : index
    %c0_81 = arith.constant 0 : index
    %107 = vector.load %arg11[%c1_78, %c0_79, %c0_80, %c0_81] : memref<3x10x10x8xf32, #tpu.memory_space<vmem>>, vector<1x8x8x8xf32>
    %108 = vector.shape_cast %107 : vector<1x8x8x8xf32> to vector<8x8x8xf32>
    %109 = vector.extract_strided_slice %42 {offsets = [9, 0], sizes = [1, 8], strides = [1, 1]} : vector<27x8xf32> to vector<1x8xf32>
    %110 = vector.shape_cast %109 : vector<1x8xf32> to vector<1x1x8xf32>
    %111 = vector.broadcast %110 : vector<1x1x8xf32> to vector<8x8x8xf32>
    %112 = arith.mulf %108, %111 : vector<8x8x8xf32>
    %113 = arith.addf %106, %112 : vector<8x8x8xf32>
    %c1_82 = arith.constant 1 : index
    %c0_83 = arith.constant 0 : index
    %c1_84 = arith.constant 1 : index
    %c0_85 = arith.constant 0 : index
    %114 = vector.load %arg11[%c1_82, %c0_83, %c1_84, %c0_85] : memref<3x10x10x8xf32, #tpu.memory_space<vmem>>, vector<1x8x8x8xf32>
    %115 = vector.shape_cast %114 : vector<1x8x8x8xf32> to vector<8x8x8xf32>
    %116 = vector.extract_strided_slice %42 {offsets = [10, 0], sizes = [1, 8], strides = [1, 1]} : vector<27x8xf32> to vector<1x8xf32>
    %117 = vector.shape_cast %116 : vector<1x8xf32> to vector<1x1x8xf32>
    %118 = vector.broadcast %117 : vector<1x1x8xf32> to vector<8x8x8xf32>
    %119 = arith.mulf %115, %118 : vector<8x8x8xf32>
    %120 = arith.addf %113, %119 : vector<8x8x8xf32>
    %c1_86 = arith.constant 1 : index
    %c0_87 = arith.constant 0 : index
    %c2_88 = arith.constant 2 : index
    %c0_89 = arith.constant 0 : index
    %121 = vector.load %arg11[%c1_86, %c0_87, %c2_88, %c0_89] : memref<3x10x10x8xf32, #tpu.memory_space<vmem>>, vector<1x8x8x8xf32>
    %122 = vector.shape_cast %121 : vector<1x8x8x8xf32> to vector<8x8x8xf32>
    %123 = vector.extract_strided_slice %42 {offsets = [11, 0], sizes = [1, 8], strides = [1, 1]} : vector<27x8xf32> to vector<1x8xf32>
    %124 = vector.shape_cast %123 : vector<1x8xf32> to vector<1x1x8xf32>
    %125 = vector.broadcast %124 : vector<1x1x8xf32> to vector<8x8x8xf32>
    %126 = arith.mulf %122, %125 : vector<8x8x8xf32>
    %127 = arith.addf %120, %126 : vector<8x8x8xf32>
    %c1_90 = arith.constant 1 : index
    %c1_91 = arith.constant 1 : index
    %c0_92 = arith.constant 0 : index
    %c0_93 = arith.constant 0 : index
    %128 = vector.load %arg11[%c1_90, %c1_91, %c0_92, %c0_93] : memref<3x10x10x8xf32, #tpu.memory_space<vmem>>, vector<1x8x8x8xf32>
    %129 = vector.shape_cast %128 : vector<1x8x8x8xf32> to vector<8x8x8xf32>
    %130 = vector.extract_strided_slice %42 {offsets = [12, 0], sizes = [1, 8], strides = [1, 1]} : vector<27x8xf32> to vector<1x8xf32>
    %131 = vector.shape_cast %130 : vector<1x8xf32> to vector<1x1x8xf32>
    %132 = vector.broadcast %131 : vector<1x1x8xf32> to vector<8x8x8xf32>
    %133 = arith.mulf %129, %132 : vector<8x8x8xf32>
    %134 = arith.addf %127, %133 : vector<8x8x8xf32>
    %c1_94 = arith.constant 1 : index
    %c1_95 = arith.constant 1 : index
    %c1_96 = arith.constant 1 : index
    %c0_97 = arith.constant 0 : index
    %135 = vector.load %arg11[%c1_94, %c1_95, %c1_96, %c0_97] : memref<3x10x10x8xf32, #tpu.memory_space<vmem>>, vector<1x8x8x8xf32>
    %136 = vector.shape_cast %135 : vector<1x8x8x8xf32> to vector<8x8x8xf32>
    %137 = vector.extract_strided_slice %42 {offsets = [13, 0], sizes = [1, 8], strides = [1, 1]} : vector<27x8xf32> to vector<1x8xf32>
    %138 = vector.shape_cast %137 : vector<1x8xf32> to vector<1x1x8xf32>
    %139 = vector.broadcast %138 : vector<1x1x8xf32> to vector<8x8x8xf32>
    %140 = arith.mulf %136, %139 : vector<8x8x8xf32>
    %141 = arith.addf %134, %140 : vector<8x8x8xf32>
    %c1_98 = arith.constant 1 : index
    %c1_99 = arith.constant 1 : index
    %c2_100 = arith.constant 2 : index
    %c0_101 = arith.constant 0 : index
    %142 = vector.load %arg11[%c1_98, %c1_99, %c2_100, %c0_101] : memref<3x10x10x8xf32, #tpu.memory_space<vmem>>, vector<1x8x8x8xf32>
    %143 = vector.shape_cast %142 : vector<1x8x8x8xf32> to vector<8x8x8xf32>
    %144 = vector.extract_strided_slice %42 {offsets = [14, 0], sizes = [1, 8], strides = [1, 1]} : vector<27x8xf32> to vector<1x8xf32>
    %145 = vector.shape_cast %144 : vector<1x8xf32> to vector<1x1x8xf32>
    %146 = vector.broadcast %145 : vector<1x1x8xf32> to vector<8x8x8xf32>
    %147 = arith.mulf %143, %146 : vector<8x8x8xf32>
    %148 = arith.addf %141, %147 : vector<8x8x8xf32>
    %c1_102 = arith.constant 1 : index
    %c2_103 = arith.constant 2 : index
    %c0_104 = arith.constant 0 : index
    %c0_105 = arith.constant 0 : index
    %149 = vector.load %arg11[%c1_102, %c2_103, %c0_104, %c0_105] : memref<3x10x10x8xf32, #tpu.memory_space<vmem>>, vector<1x8x8x8xf32>
    %150 = vector.shape_cast %149 : vector<1x8x8x8xf32> to vector<8x8x8xf32>
    %151 = vector.extract_strided_slice %42 {offsets = [15, 0], sizes = [1, 8], strides = [1, 1]} : vector<27x8xf32> to vector<1x8xf32>
    %152 = vector.shape_cast %151 : vector<1x8xf32> to vector<1x1x8xf32>
    %153 = vector.broadcast %152 : vector<1x1x8xf32> to vector<8x8x8xf32>
    %154 = arith.mulf %150, %153 : vector<8x8x8xf32>
    %155 = arith.addf %148, %154 : vector<8x8x8xf32>
    %c1_106 = arith.constant 1 : index
    %c2_107 = arith.constant 2 : index
    %c1_108 = arith.constant 1 : index
    %c0_109 = arith.constant 0 : index
    %156 = vector.load %arg11[%c1_106, %c2_107, %c1_108, %c0_109] : memref<3x10x10x8xf32, #tpu.memory_space<vmem>>, vector<1x8x8x8xf32>
    %157 = vector.shape_cast %156 : vector<1x8x8x8xf32> to vector<8x8x8xf32>
    %158 = vector.extract_strided_slice %42 {offsets = [16, 0], sizes = [1, 8], strides = [1, 1]} : vector<27x8xf32> to vector<1x8xf32>
    %159 = vector.shape_cast %158 : vector<1x8xf32> to vector<1x1x8xf32>
    %160 = vector.broadcast %159 : vector<1x1x8xf32> to vector<8x8x8xf32>
    %161 = arith.mulf %157, %160 : vector<8x8x8xf32>
    %162 = arith.addf %155, %161 : vector<8x8x8xf32>
    %c1_110 = arith.constant 1 : index
    %c2_111 = arith.constant 2 : index
    %c2_112 = arith.constant 2 : index
    %c0_113 = arith.constant 0 : index
    %163 = vector.load %arg11[%c1_110, %c2_111, %c2_112, %c0_113] : memref<3x10x10x8xf32, #tpu.memory_space<vmem>>, vector<1x8x8x8xf32>
    %164 = vector.shape_cast %163 : vector<1x8x8x8xf32> to vector<8x8x8xf32>
    %165 = vector.extract_strided_slice %42 {offsets = [17, 0], sizes = [1, 8], strides = [1, 1]} : vector<27x8xf32> to vector<1x8xf32>
    %166 = vector.shape_cast %165 : vector<1x8xf32> to vector<1x1x8xf32>
    %167 = vector.broadcast %166 : vector<1x1x8xf32> to vector<8x8x8xf32>
    %168 = arith.mulf %164, %167 : vector<8x8x8xf32>
    %169 = arith.addf %162, %168 : vector<8x8x8xf32>
    %c2_114 = arith.constant 2 : index
    %c0_115 = arith.constant 0 : index
    %c0_116 = arith.constant 0 : index
    %c0_117 = arith.constant 0 : index
    %170 = vector.load %arg11[%c2_114, %c0_115, %c0_116, %c0_117] : memref<3x10x10x8xf32, #tpu.memory_space<vmem>>, vector<1x8x8x8xf32>
    %171 = vector.shape_cast %170 : vector<1x8x8x8xf32> to vector<8x8x8xf32>
    %172 = vector.extract_strided_slice %42 {offsets = [18, 0], sizes = [1, 8], strides = [1, 1]} : vector<27x8xf32> to vector<1x8xf32>
    %173 = vector.shape_cast %172 : vector<1x8xf32> to vector<1x1x8xf32>
    %174 = vector.broadcast %173 : vector<1x1x8xf32> to vector<8x8x8xf32>
    %175 = arith.mulf %171, %174 : vector<8x8x8xf32>
    %176 = arith.addf %169, %175 : vector<8x8x8xf32>
    %c2_118 = arith.constant 2 : index
    %c0_119 = arith.constant 0 : index
    %c1_120 = arith.constant 1 : index
    %c0_121 = arith.constant 0 : index
    %177 = vector.load %arg11[%c2_118, %c0_119, %c1_120, %c0_121] : memref<3x10x10x8xf32, #tpu.memory_space<vmem>>, vector<1x8x8x8xf32>
    %178 = vector.shape_cast %177 : vector<1x8x8x8xf32> to vector<8x8x8xf32>
    %179 = vector.extract_strided_slice %42 {offsets = [19, 0], sizes = [1, 8], strides = [1, 1]} : vector<27x8xf32> to vector<1x8xf32>
    %180 = vector.shape_cast %179 : vector<1x8xf32> to vector<1x1x8xf32>
    %181 = vector.broadcast %180 : vector<1x1x8xf32> to vector<8x8x8xf32>
    %182 = arith.mulf %178, %181 : vector<8x8x8xf32>
    %183 = arith.addf %176, %182 : vector<8x8x8xf32>
    %c2_122 = arith.constant 2 : index
    %c0_123 = arith.constant 0 : index
    %c2_124 = arith.constant 2 : index
    %c0_125 = arith.constant 0 : index
    %184 = vector.load %arg11[%c2_122, %c0_123, %c2_124, %c0_125] : memref<3x10x10x8xf32, #tpu.memory_space<vmem>>, vector<1x8x8x8xf32>
    %185 = vector.shape_cast %184 : vector<1x8x8x8xf32> to vector<8x8x8xf32>
    %186 = vector.extract_strided_slice %42 {offsets = [20, 0], sizes = [1, 8], strides = [1, 1]} : vector<27x8xf32> to vector<1x8xf32>
    %187 = vector.shape_cast %186 : vector<1x8xf32> to vector<1x1x8xf32>
    %188 = vector.broadcast %187 : vector<1x1x8xf32> to vector<8x8x8xf32>
    %189 = arith.mulf %185, %188 : vector<8x8x8xf32>
    %190 = arith.addf %183, %189 : vector<8x8x8xf32>
    %c2_126 = arith.constant 2 : index
    %c1_127 = arith.constant 1 : index
    %c0_128 = arith.constant 0 : index
    %c0_129 = arith.constant 0 : index
    %191 = vector.load %arg11[%c2_126, %c1_127, %c0_128, %c0_129] : memref<3x10x10x8xf32, #tpu.memory_space<vmem>>, vector<1x8x8x8xf32>
    %192 = vector.shape_cast %191 : vector<1x8x8x8xf32> to vector<8x8x8xf32>
    %193 = vector.extract_strided_slice %42 {offsets = [21, 0], sizes = [1, 8], strides = [1, 1]} : vector<27x8xf32> to vector<1x8xf32>
    %194 = vector.shape_cast %193 : vector<1x8xf32> to vector<1x1x8xf32>
    %195 = vector.broadcast %194 : vector<1x1x8xf32> to vector<8x8x8xf32>
    %196 = arith.mulf %192, %195 : vector<8x8x8xf32>
    %197 = arith.addf %190, %196 : vector<8x8x8xf32>
    %c2_130 = arith.constant 2 : index
    %c1_131 = arith.constant 1 : index
    %c1_132 = arith.constant 1 : index
    %c0_133 = arith.constant 0 : index
    %198 = vector.load %arg11[%c2_130, %c1_131, %c1_132, %c0_133] : memref<3x10x10x8xf32, #tpu.memory_space<vmem>>, vector<1x8x8x8xf32>
    %199 = vector.shape_cast %198 : vector<1x8x8x8xf32> to vector<8x8x8xf32>
    %200 = vector.extract_strided_slice %42 {offsets = [22, 0], sizes = [1, 8], strides = [1, 1]} : vector<27x8xf32> to vector<1x8xf32>
    %201 = vector.shape_cast %200 : vector<1x8xf32> to vector<1x1x8xf32>
    %202 = vector.broadcast %201 : vector<1x1x8xf32> to vector<8x8x8xf32>
    %203 = arith.mulf %199, %202 : vector<8x8x8xf32>
    %204 = arith.addf %197, %203 : vector<8x8x8xf32>
    %c2_134 = arith.constant 2 : index
    %c1_135 = arith.constant 1 : index
    %c2_136 = arith.constant 2 : index
    %c0_137 = arith.constant 0 : index
    %205 = vector.load %arg11[%c2_134, %c1_135, %c2_136, %c0_137] : memref<3x10x10x8xf32, #tpu.memory_space<vmem>>, vector<1x8x8x8xf32>
    %206 = vector.shape_cast %205 : vector<1x8x8x8xf32> to vector<8x8x8xf32>
    %207 = vector.extract_strided_slice %42 {offsets = [23, 0], sizes = [1, 8], strides = [1, 1]} : vector<27x8xf32> to vector<1x8xf32>
    %208 = vector.shape_cast %207 : vector<1x8xf32> to vector<1x1x8xf32>
    %209 = vector.broadcast %208 : vector<1x1x8xf32> to vector<8x8x8xf32>
    %210 = arith.mulf %206, %209 : vector<8x8x8xf32>
    %211 = arith.addf %204, %210 : vector<8x8x8xf32>
    %c2_138 = arith.constant 2 : index
    %c2_139 = arith.constant 2 : index
    %c0_140 = arith.constant 0 : index
    %c0_141 = arith.constant 0 : index
    %212 = vector.load %arg11[%c2_138, %c2_139, %c0_140, %c0_141] : memref<3x10x10x8xf32, #tpu.memory_space<vmem>>, vector<1x8x8x8xf32>
    %213 = vector.shape_cast %212 : vector<1x8x8x8xf32> to vector<8x8x8xf32>
    %214 = vector.extract_strided_slice %42 {offsets = [24, 0], sizes = [1, 8], strides = [1, 1]} : vector<27x8xf32> to vector<1x8xf32>
    %215 = vector.shape_cast %214 : vector<1x8xf32> to vector<1x1x8xf32>
    %216 = vector.broadcast %215 : vector<1x1x8xf32> to vector<8x8x8xf32>
    %217 = arith.mulf %213, %216 : vector<8x8x8xf32>
    %218 = arith.addf %211, %217 : vector<8x8x8xf32>
    %c2_142 = arith.constant 2 : index
    %c2_143 = arith.constant 2 : index
    %c1_144 = arith.constant 1 : index
    %c0_145 = arith.constant 0 : index
    %219 = vector.load %arg11[%c2_142, %c2_143, %c1_144, %c0_145] : memref<3x10x10x8xf32, #tpu.memory_space<vmem>>, vector<1x8x8x8xf32>
    %220 = vector.shape_cast %219 : vector<1x8x8x8xf32> to vector<8x8x8xf32>
    %221 = vector.extract_strided_slice %42 {offsets = [25, 0], sizes = [1, 8], strides = [1, 1]} : vector<27x8xf32> to vector<1x8xf32>
    %222 = vector.shape_cast %221 : vector<1x8xf32> to vector<1x1x8xf32>
    %223 = vector.broadcast %222 : vector<1x1x8xf32> to vector<8x8x8xf32>
    %224 = arith.mulf %220, %223 : vector<8x8x8xf32>
    %225 = arith.addf %218, %224 : vector<8x8x8xf32>
    %c2_146 = arith.constant 2 : index
    %c2_147 = arith.constant 2 : index
    %c2_148 = arith.constant 2 : index
    %c0_149 = arith.constant 0 : index
    %226 = vector.load %arg11[%c2_146, %c2_147, %c2_148, %c0_149] : memref<3x10x10x8xf32, #tpu.memory_space<vmem>>, vector<1x8x8x8xf32>
    %227 = vector.shape_cast %226 : vector<1x8x8x8xf32> to vector<8x8x8xf32>
    %228 = vector.extract_strided_slice %42 {offsets = [26, 0], sizes = [1, 8], strides = [1, 1]} : vector<27x8xf32> to vector<1x8xf32>
    %229 = vector.shape_cast %228 : vector<1x8xf32> to vector<1x1x8xf32>
    %230 = vector.broadcast %229 : vector<1x1x8xf32> to vector<8x8x8xf32>
    %231 = arith.mulf %227, %230 : vector<8x8x8xf32>
    %232 = arith.addf %225, %231 : vector<8x8x8xf32>
    %c0_150 = arith.constant 0 : index
    %c0_151 = arith.constant 0 : index
    %233 = vector.load %arg8[%c0_150, %c0_151] : memref<1x8xf32, #tpu.memory_space<vmem>>, vector<1x8xf32>
    %234 = vector.shape_cast %233 : vector<1x8xf32> to vector<1x1x8xf32>
    %235 = vector.broadcast %234 : vector<1x1x8xf32> to vector<8x8x8xf32>
    %236 = arith.addf %232, %235 : vector<8x8x8xf32>
    %237 = vector.shape_cast %236 : vector<8x8x8xf32> to vector<1x1x8x8x8xf32>
    %c0_152 = arith.constant 0 : index
    %c0_153 = arith.constant 0 : index
    %c0_154 = arith.constant 0 : index
    %c0_155 = arith.constant 0 : index
    %c0_156 = arith.constant 0 : index
    %238 = vector.load %arg10[%c0_152, %c0_153, %c0_154, %c0_155, %c0_156] : memref<1x1x8x8x8xf32, #tpu.memory_space<vmem>>, vector<1x1x8x8x8xf32>
    tpu.vector_store %arg10[%c0_152, %c0_153, %c0_154, %c0_155, %c0_156], %237 {strides = array<i32>} : memref<1x1x8x8x8xf32, #tpu.memory_space<vmem>>, vector<1x1x8x8x8xf32>,
    return
  }
  func.func @transform_0(%arg0: i32, %arg1: i32) -> (i32, i32, i32, i32, i32) {
    %c0_i32 = arith.constant 0 : i32
    %0 = arith.addi %arg1, %c0_i32 : i32
    %c1_i32 = arith.constant 1 : i32
    %1 = arith.subi %0, %c1_i32 : i32
    %c0_i32_0 = arith.constant 0 : i32
    %c7_i32 = arith.constant 7 : i32
    %2 = arith.maxsi %c0_i32_0, %1 : i32
    %3 = arith.minsi %c7_i32, %2 : i32
    %c0_i32_1 = arith.constant 0 : i32
    %c0_i32_2 = arith.constant 0 : i32
    %c0_i32_3 = arith.constant 0 : i32
    %c0_i32_4 = arith.constant 0 : i32
    return %arg0, %3, %c0_i32_1, %c0_i32_2, %c0_i32_3 : i32, i32, i32, i32, i32
  }
  func.func @transform_1(%arg0: i32, %arg1: i32) -> (i32, i32, i32, i32, i32) {
    %c1_i32 = arith.constant 1 : i32
    %0 = arith.addi %arg1, %c1_i32 : i32
    %c1_i32_0 = arith.constant 1 : i32
    %1 = arith.subi %0, %c1_i32_0 : i32
    %c0_i32 = arith.constant 0 : i32
    %c7_i32 = arith.constant 7 : i32
    %2 = arith.maxsi %c0_i32, %1 : i32
    %3 = arith.minsi %c7_i32, %2 : i32
    %c0_i32_1 = arith.constant 0 : i32
    %c0_i32_2 = arith.constant 0 : i32
    %c0_i32_3 = arith.constant 0 : i32
    %c0_i32_4 = arith.constant 0 : i32
    return %arg0, %3, %c0_i32_1, %c0_i32_2, %c0_i32_3 : i32, i32, i32, i32, i32
  }
  func.func @transform_2(%arg0: i32, %arg1: i32) -> (i32, i32, i32, i32, i32) {
    %c2_i32 = arith.constant 2 : i32
    %0 = arith.addi %arg1, %c2_i32 : i32
    %c1_i32 = arith.constant 1 : i32
    %1 = arith.subi %0, %c1_i32 : i32
    %c0_i32 = arith.constant 0 : i32
    %c7_i32 = arith.constant 7 : i32
    %2 = arith.maxsi %c0_i32, %1 : i32
    %3 = arith.minsi %c7_i32, %2 : i32
    %c0_i32_0 = arith.constant 0 : i32
    %c0_i32_1 = arith.constant 0 : i32
    %c0_i32_2 = arith.constant 0 : i32
    %c0_i32_3 = arith.constant 0 : i32
    return %arg0, %3, %c0_i32_0, %c0_i32_1, %c0_i32_2 : i32, i32, i32, i32, i32
  }
  func.func @transform_3(%arg0: i32, %arg1: i32) -> (i32, i32) {
    %c0_i32 = arith.constant 0 : i32
    %c0_i32_0 = arith.constant 0 : i32
    %c0_i32_1 = arith.constant 0 : i32
    return %c0_i32, %c0_i32_0 : i32, i32
  }
  func.func @transform_4(%arg0: i32, %arg1: i32) -> (i32, i32) {
    %c0_i32 = arith.constant 0 : i32
    %c0_i32_0 = arith.constant 0 : i32
    %c0_i32_1 = arith.constant 0 : i32
    return %c0_i32, %c0_i32_0 : i32, i32
  }
  func.func @transform_5(%arg0: i32, %arg1: i32) -> (i32, i32) {
    %c0_i32 = arith.constant 0 : i32
    %c0_i32_0 = arith.constant 0 : i32
    %c0_i32_1 = arith.constant 0 : i32
    return %c0_i32, %c0_i32_0 : i32, i32
  }
  func.func @transform_6(%arg0: i32, %arg1: i32) -> (i32, i32) {
    %c0_i32 = arith.constant 0 : i32
    %c0_i32_0 = arith.constant 0 : i32
    %c0_i32_1 = arith.constant 0 : i32
    return %c0_i32, %c0_i32_0 : i32, i32
  }
  func.func @transform_7(%arg0: i32, %arg1: i32) -> (i32, i32, i32, i32, i32) {
    %c0_i32 = arith.constant 0 : i32
    %c0_i32_0 = arith.constant 0 : i32
    %c0_i32_1 = arith.constant 0 : i32
    %c0_i32_2 = arith.constant 0 : i32
    return %arg0, %arg1, %c0_i32, %c0_i32_0, %c0_i32_1 : i32, i32, i32, i32, i32
  }
  func.func @transform_8(%arg0: i32, %arg1: i32) -> (i32, i32, i32, i32, i32) {
    %c0_i32 = arith.constant 0 : i32
    %c0_i32_0 = arith.constant 0 : i32
    %c0_i32_1 = arith.constant 0 : i32
    %c0_i32_2 = arith.constant 0 : i32
    return %arg0, %arg1, %c0_i32, %c0_i32_0, %c0_i32_1 : i32, i32, i32, i32, i32
  }
}

module attributes {stable_mosaic.version = 11 : i64} {
  func.func @_bn_mlp_kernel(%arg0: i32, %arg1: memref<512x8xf32, #tpu.memory_space<vmem>>, %arg2: memref<512x8xf32, #tpu.memory_space<vmem>>, %arg3: memref<1x8xf32, #tpu.memory_space<vmem>>, %arg4: memref<1x8xf32, #tpu.memory_space<vmem>>, %arg5: memref<8x128xf32, #tpu.memory_space<vmem>>, %arg6: memref<1x128xf32, #tpu.memory_space<vmem>>, %arg7: memref<128x8xf32, #tpu.memory_space<vmem>>, %arg8: memref<1x8xf32, #tpu.memory_space<vmem>>, %arg9: memref<512x8xf32, #tpu.memory_space<vmem>>) attributes {dimension_semantics = [#tpu.dimension_semantics<parallel>], iteration_bounds = array<i64: 2>, scalar_prefetch = 0 : i64, scratch_operands = 0 : i64, tpu.core_type = #tpu.core_type<tc>, window_params = [{transform_indices = @transform_0, window_bounds = array<i64: 512, 8>}, {transform_indices = @transform_1, window_bounds = array<i64: 512, 8>}, {pipeline_mode = #tpu.pipeline_mode<synchronous>, transform_indices = @transform_2, window_bounds = array<i64: 1, 8>}, {pipeline_mode = #tpu.pipeline_mode<synchronous>, transform_indices = @transform_3, window_bounds = array<i64: 1, 8>}, {pipeline_mode = #tpu.pipeline_mode<synchronous>, transform_indices = @transform_4, window_bounds = array<i64: 8, 128>}, {pipeline_mode = #tpu.pipeline_mode<synchronous>, transform_indices = @transform_5, window_bounds = array<i64: 1, 128>}, {pipeline_mode = #tpu.pipeline_mode<synchronous>, transform_indices = @transform_6, window_bounds = array<i64: 128, 8>}, {pipeline_mode = #tpu.pipeline_mode<synchronous>, transform_indices = @transform_7, window_bounds = array<i64: 1, 8>}, {transform_indices = @transform_8, window_bounds = array<i64: 512, 8>}]} {
    %c0 = arith.constant 0 : index
    %c0_0 = arith.constant 0 : index
    %0 = vector.load %arg2[%c0, %c0_0] : memref<512x8xf32, #tpu.memory_space<vmem>>, vector<512x8xf32>
    %c0_1 = arith.constant 0 : index
    %c0_2 = arith.constant 0 : index
    %1 = vector.load %arg3[%c0_1, %c0_2] : memref<1x8xf32, #tpu.memory_space<vmem>>, vector<1x8xf32>
    %2 = vector.broadcast %1 : vector<1x8xf32> to vector<512x8xf32>
    %3 = arith.mulf %0, %2 : vector<512x8xf32>
    %c0_3 = arith.constant 0 : index
    %c0_4 = arith.constant 0 : index
    %4 = vector.load %arg4[%c0_3, %c0_4] : memref<1x8xf32, #tpu.memory_space<vmem>>, vector<1x8xf32>
    %5 = vector.broadcast %4 : vector<1x8xf32> to vector<512x8xf32>
    %6 = arith.addf %3, %5 : vector<512x8xf32>
    %c0_5 = arith.constant 0 : index
    %c0_6 = arith.constant 0 : index
    %7 = vector.load %arg5[%c0_5, %c0_6] : memref<8x128xf32, #tpu.memory_space<vmem>>, vector<8x128xf32>
    %cst = arith.constant dense<0.000000e+00> : vector<512x128xf32>
    %8 = tpu.matmul %6, %7, %cst {dimension_numbers = #tpu.dot_dimension_numbers<[1], [0], [0], [1], [0, 0, 1, 1], [], []>} : vector<512x8xf32>, vector<8x128xf32>, vector<512x128xf32> -> vector<512x128xf32>
    %c0_7 = arith.constant 0 : index
    %c0_8 = arith.constant 0 : index
    %9 = vector.load %arg6[%c0_7, %c0_8] : memref<1x128xf32, #tpu.memory_space<vmem>>, vector<1x128xf32>
    %10 = vector.broadcast %9 : vector<1x128xf32> to vector<512x128xf32>
    %11 = arith.addf %8, %10 : vector<512x128xf32>
    %cst_9 = arith.constant 5.000000e-01 : f32
    %12 = vector.broadcast %cst_9 : f32 to vector<512x128xf32>
    %13 = arith.mulf %12, %11 : vector<512x128xf32>
    %cst_10 = arith.constant 0.707106769 : f32
    %14 = vector.broadcast %cst_10 : f32 to vector<512x128xf32>
    %15 = arith.mulf %11, %14 : vector<512x128xf32>
    %cst_11 = arith.constant -4.000000e+00 : f32
    %cst_12 = arith.constant 4.000000e+00 : f32
    %16 = vector.broadcast %cst_11 : f32 to vector<512x128xf32>
    %17 = arith.maximumf %16, %15 : vector<512x128xf32>
    %18 = vector.broadcast %cst_12 : f32 to vector<512x128xf32>
    %19 = arith.minimumf %18, %17 : vector<512x128xf32>
    %20 = arith.mulf %19, %19 : vector<512x128xf32>
    %cst_13 = arith.constant -2.72614237E-10 : f32
    %21 = vector.broadcast %cst_13 : f32 to vector<512x128xf32>
    %22 = arith.mulf %21, %20 : vector<512x128xf32>
    %cst_14 = arith.constant 2.77068146E-8 : f32
    %23 = vector.broadcast %cst_14 : f32 to vector<512x128xf32>
    %24 = arith.addf %22, %23 : vector<512x128xf32>
    %25 = arith.mulf %24, %20 : vector<512x128xf32>
    %cst_15 = arith.constant -2.10102394E-6 : f32
    %26 = vector.broadcast %cst_15 : f32 to vector<512x128xf32>
    %27 = arith.addf %25, %26 : vector<512x128xf32>
    %28 = arith.mulf %27, %20 : vector<512x128xf32>
    %cst_16 = arith.constant -5.69250624E-5 : f32
    %29 = vector.broadcast %cst_16 : f32 to vector<512x128xf32>
    %30 = arith.addf %28, %29 : vector<512x128xf32>
    %31 = arith.mulf %30, %20 : vector<512x128xf32>
    %cst_17 = arith.constant -7.34990637E-4 : f32
    %32 = vector.broadcast %cst_17 : f32 to vector<512x128xf32>
    %33 = arith.addf %31, %32 : vector<512x128xf32>
    %34 = arith.mulf %33, %20 : vector<512x128xf32>
    %cst_18 = arith.constant -2.954600e-03 : f32
    %35 = vector.broadcast %cst_18 : f32 to vector<512x128xf32>
    %36 = arith.addf %34, %35 : vector<512x128xf32>
    %37 = arith.mulf %36, %20 : vector<512x128xf32>
    %cst_19 = arith.constant -0.0160960332 : f32
    %38 = vector.broadcast %cst_19 : f32 to vector<512x128xf32>
    %39 = arith.addf %37, %38 : vector<512x128xf32>
    %cst_20 = arith.constant -1.45660715E-5 : f32
    %40 = vector.broadcast %cst_20 : f32 to vector<512x128xf32>
    %41 = arith.mulf %40, %20 : vector<512x128xf32>
    %cst_21 = arith.constant -2.13374049E-4 : f32
    %42 = vector.broadcast %cst_21 : f32 to vector<512x128xf32>
    %43 = arith.addf %41, %42 : vector<512x128xf32>
    %44 = arith.mulf %43, %20 : vector<512x128xf32>
    %cst_22 = arith.constant -0.00168282702 : f32
    %45 = vector.broadcast %cst_22 : f32 to vector<512x128xf32>
    %46 = arith.addf %44, %45 : vector<512x128xf32>
    %47 = arith.mulf %46, %20 : vector<512x128xf32>
    %cst_23 = arith.constant -0.00737332925 : f32
    %48 = vector.broadcast %cst_23 : f32 to vector<512x128xf32>
    %49 = arith.addf %47, %48 : vector<512x128xf32>
    %50 = arith.mulf %49, %20 : vector<512x128xf32>
    %cst_24 = arith.constant -0.0142647391 : f32
    %51 = vector.broadcast %cst_24 : f32 to vector<512x128xf32>
    %52 = arith.addf %50, %51 : vector<512x128xf32>
    %53 = arith.mulf %19, %39 : vector<512x128xf32>
    %54 = tpu.reciprocal %52 : vector<512x128xf32> -> vector<512x128xf32>
    %55 = arith.mulf %53, %54 : vector<512x128xf32>
    %cst_25 = arith.constant 1.000000e+00 : f32
    %56 = vector.broadcast %cst_25 : f32 to vector<512x128xf32>
    %57 = arith.addf %56, %55 : vector<512x128xf32>
    %58 = arith.mulf %13, %57 : vector<512x128xf32>
    %c0_26 = arith.constant 0 : index
    %c0_27 = arith.constant 0 : index
    %59 = vector.load %arg7[%c0_26, %c0_27] : memref<128x8xf32, #tpu.memory_space<vmem>>, vector<128x8xf32>
    %cst_28 = arith.constant dense<0.000000e+00> : vector<512x8xf32>
    %60 = tpu.matmul %58, %59, %cst_28 {dimension_numbers = #tpu.dot_dimension_numbers<[1], [0], [0], [1], [0, 0, 1, 1], [], []>} : vector<512x128xf32>, vector<128x8xf32>, vector<512x8xf32> -> vector<512x8xf32>
    %c0_29 = arith.constant 0 : index
    %c0_30 = arith.constant 0 : index
    %61 = vector.load %arg8[%c0_29, %c0_30] : memref<1x8xf32, #tpu.memory_space<vmem>>, vector<1x8xf32>
    %62 = vector.broadcast %61 : vector<1x8xf32> to vector<512x8xf32>
    %63 = arith.addf %60, %62 : vector<512x8xf32>
    %c0_31 = arith.constant 0 : index
    %c0_32 = arith.constant 0 : index
    %64 = vector.load %arg1[%c0_31, %c0_32] : memref<512x8xf32, #tpu.memory_space<vmem>>, vector<512x8xf32>
    %65 = arith.addf %63, %64 : vector<512x8xf32>
    %c0_33 = arith.constant 0 : index
    %c0_34 = arith.constant 0 : index
    %66 = vector.load %arg9[%c0_33, %c0_34] : memref<512x8xf32, #tpu.memory_space<vmem>>, vector<512x8xf32>
    tpu.vector_store %arg9[%c0_33, %c0_34], %65 {strides = array<i32>} : memref<512x8xf32, #tpu.memory_space<vmem>>, vector<512x8xf32>,
    return
  }
  func.func @transform_0(%arg0: i32) -> (i32, i32) {
    %c0_i32 = arith.constant 0 : i32
    %c0_i32_0 = arith.constant 0 : i32
    return %arg0, %c0_i32 : i32, i32
  }
  func.func @transform_1(%arg0: i32) -> (i32, i32) {
    %c0_i32 = arith.constant 0 : i32
    %c0_i32_0 = arith.constant 0 : i32
    return %arg0, %c0_i32 : i32, i32
  }
  func.func @transform_2(%arg0: i32) -> (i32, i32) {
    %c0_i32 = arith.constant 0 : i32
    %c0_i32_0 = arith.constant 0 : i32
    %c0_i32_1 = arith.constant 0 : i32
    return %c0_i32, %c0_i32_0 : i32, i32
  }
  func.func @transform_3(%arg0: i32) -> (i32, i32) {
    %c0_i32 = arith.constant 0 : i32
    %c0_i32_0 = arith.constant 0 : i32
    %c0_i32_1 = arith.constant 0 : i32
    return %c0_i32, %c0_i32_0 : i32, i32
  }
  func.func @transform_4(%arg0: i32) -> (i32, i32) {
    %c0_i32 = arith.constant 0 : i32
    %c0_i32_0 = arith.constant 0 : i32
    %c0_i32_1 = arith.constant 0 : i32
    return %c0_i32, %c0_i32_0 : i32, i32
  }
  func.func @transform_5(%arg0: i32) -> (i32, i32) {
    %c0_i32 = arith.constant 0 : i32
    %c0_i32_0 = arith.constant 0 : i32
    %c0_i32_1 = arith.constant 0 : i32
    return %c0_i32, %c0_i32_0 : i32, i32
  }
  func.func @transform_6(%arg0: i32) -> (i32, i32) {
    %c0_i32 = arith.constant 0 : i32
    %c0_i32_0 = arith.constant 0 : i32
    %c0_i32_1 = arith.constant 0 : i32
    return %c0_i32, %c0_i32_0 : i32, i32
  }
  func.func @transform_7(%arg0: i32) -> (i32, i32) {
    %c0_i32 = arith.constant 0 : i32
    %c0_i32_0 = arith.constant 0 : i32
    %c0_i32_1 = arith.constant 0 : i32
    return %c0_i32, %c0_i32_0 : i32, i32
  }
  func.func @transform_8(%arg0: i32) -> (i32, i32) {
    %c0_i32 = arith.constant 0 : i32
    %c0_i32_0 = arith.constant 0 : i32
    return %arg0, %c0_i32 : i32, i32
  }
}

</mosaic_0001>

<llo_original>
// kernel: conv_next_block.4
$region0: #{conv_next_block.4}
  #allocation0 [shape = 'u32[]', space=smem, size = 0x4, offset = 0x4, fixed_abs, tag = 'smem constant byte address 0x4 - core index']
  #allocation1 [shape = 'u32[144,128]{1,0:T(1,128)}', space=vmem, size = 0x12000, scoped, tag = 'internal scratch']
  %s0 = inlined_call_operand.vmem [shape: f32[1024,8], index: 0, kind: input, shape index: {}]
  %s1 = inlined_call_operand.vmem [shape: f32[2,8], index: 1, kind: output, shape index: {}]
  %s2 = sld [smem:[#allocation0]]
  $region41: #{conv_next_block.4} parent=0
    _
  %s4 = ssub.s32 1, %s2
  %s5 = scalar_select 0, %s4, %s2
  loop: start=0, step=1, limit=4
  $region2: #{conv_next_block.4} parent=0 // loop_pre_header
    _
  $region3: #{conv_next_block.4} parent=0 // loop_header
    %s7 = sphi 0, %s11
    %p8 = scmp.ge.s32.totalorder %s7, 4
    %s17 = sphi 0, %s19
    %s20 = sphi 0, %s17
    %s21 = sphi 0, %s20
    %s37 = sphi 0, %s21
    %s41 = sphi 0, %s41
    %s43 = sphi 0, %s41
    %s44 = sphi 0, %s43
    %s58 = sphi 0, %s44
  $region4: #{conv_next_block.4} parent=0 // loop_header_branch
    %10 = sbr.rel (%p8) target = $region8
  $region5: #{conv_next_block.4} parent=0 // loop_body
    %s12 = ssub.s32 %s7, 1
    %s13 = ssub.s32 %s7, 2
    %s14 = sadd.s32 %s7, 1
    %s15 = ssub.s32 %s7, %s14
    %p16 = scmp.eq.s32.totalorder %s15, 0
    %s18 = sadd.s32 %s17, 1
    %s19 = scalar_select %p16, %s17, %s18
    %p22 = pneg %p16
    %p23 = scmp.eq.s32.totalorder %s7, 1
    %p24 = por %p22, %p23
    %p25 = scmp.ne.s32.totalorder %s17, %s20
    %p26 = scmp.eq.s32.totalorder %s7, 0
    %p27 = por %p25, %p26
    %p28 = scmp.ne.s32.totalorder %s17, %s20
    %p29 = scmp.eq.s32.totalorder %s12, 1
    %p30 = por %p28, %p29
    %p31 = scmp.ne.s32.totalorder %s20, %s21
    %p32 = scmp.eq.s32.totalorder %s12, 0
    %p33 = por %p31, %p32
    %p34 = scmp.ne.s32.totalorder %s20, %s21
    %p35 = scmp.eq.s32.totalorder %s13, 1
    %p36 = por %p34, %p35
    %p38 = scmp.ne.s32.totalorder %s21, %s37
    %p39 = scmp.eq.s32.totalorder %s13, 0
    %p40 = por %p38, %p39
    %s42 = sadd.s32 %s41, 1
    %p45 = scmp.eq.s32.totalorder %s7, 1
    %p46 = scmp.ne.s32.totalorder %s41, %s43
    %p47 = scmp.eq.s32.totalorder %s7, 0
    %p48 = por %p46, %p47
    %p49 = scmp.ne.s32.totalorder %s41, %s43
    %p50 = scmp.eq.s32.totalorder %s12, 1
    %p51 = por %p49, %p50
    %p52 = scmp.ne.s32.totalorder %s43, %s44
    %p53 = scmp.eq.s32.totalorder %s12, 0
    %p54 = por %p52, %p53
    %p55 = scmp.ne.s32.totalorder %s43, %s44
    %p56 = scmp.eq.s32.totalorder %s13, 1
    %p57 = por %p55, %p56
    %p59 = scmp.ne.s32.totalorder %s44, %s58
    %p60 = scmp.eq.s32.totalorder %s13, 0
    %p61 = por %p59, %p60
    %p62 = scmp.le.s32.totalorder 1, %s7
    %p63 = scmp.lt.s32.totalorder %s7, 3
    %p64 = pnand %p62, %p63
    %p65 = pneg %p64
    // Predicated region
    $region9: #{conv_next_block.4} parent=5 // pred_check
      _
    $region10: #{conv_next_block.4} parent=5 // pred_check_branch
      %67 = sbr.rel (%p64) target = $region12
    $region11: #{conv_next_block.4} parent=5 // pred_region
      %s68 = ssub.s32 %s7, 1
    $region12: #{conv_next_block.4} parent=5 // pred_fallthru
      _
    %p69 = scmp.lt.s32.totalorder %s7, 2
    // Predicated region
    $region13: #{conv_next_block.4} parent=5 // pred_check
      %p70 = pneg %p69
    $region14: #{conv_next_block.4} parent=5 // pred_check_branch
      %72 = sbr.rel (%p70) target = $region16
    $region15: #{conv_next_block.4} parent=5 // pred_region
      // Predicated region
      $region17: #{conv_next_block.4} parent=15 // pred_check
        %p73 = pneg %p27
      $region18: #{conv_next_block.4} parent=15 // pred_check_branch
        %75 = sbr.rel (%p73) target = $region20
      $region19: #{conv_next_block.4} parent=15 // pred_region
        %s76 = smul.u32 64, %s7
        %p77 = scmp.lt.s32.totalorder %s76, 127
        %s78 = scalar_select %p77, %s76, 127
        %s79 = smul.addr %s78, 8
        %s80 = scalar_lea.vmem %s0, %s79
        %s81 = smul.u32 64, %s7
      $region20: #{conv_next_block.4} parent=15 // pred_fallthru
        _
    $region16: #{conv_next_block.4} parent=5 // pred_fallthru
      _
    %p82 = scmp.le.s32.totalorder 1, %s7
    %p83 = scmp.lt.s32.totalorder %s7, 3
    %p84 = pnand %p82, %p83
    %p85 = pneg %p84
    // Predicated region
    $region21: #{conv_next_block.4} parent=5 // pred_check
      _
    $region22: #{conv_next_block.4} parent=5 // pred_check_branch
      %87 = sbr.rel (%p84) target = $region24
    $region23: #{conv_next_block.4} parent=5 // pred_region
      %s88 = ssub.s32 %s7, 1
      %s89 = smul.u32 64, %s12
      %p90 = scmp.lt.s32.totalorder %s89, 127
      %s91 = scalar_select %p90, %s89, 127
      %s92 = smul.addr %s91, 8
      %s93 = scalar_lea.vmem %s0, %s92
      %p94 = pneg %p33
      %p95 = pneg %p30
      %p96 = pneg %p54
      %p97 = pneg %p51
      %s98 = smul.u32 64, %s12
      %p99 = scmp.lt.s32.totalorder %s98, 127
      %s100 = scalar_select %p99, %s98, 127
      %s101 = smul.addr %s100, 8
      %s102 = scalar_lea.vmem %s0, %s101
      %s103 = smul.u32 64, %s12
      %p104 = scmp.eq.s32.totalorder %s12, 0
      // Predicated region
      $region25: #{conv_next_block.4} parent=23 // pred_check
        %p105 = pneg %p104
      $region26: #{conv_next_block.4} parent=23 // pred_check_branch
        %107 = sbr.rel (%p105) target = $region28
      $region27: #{conv_next_block.4} parent=23 // pred_region
        %vm108 = vcmask 58368
        %109 = vst.msk [vmem:[%s1] sm:$0x3] %vm108, 0.0
      $region28: #{conv_next_block.4} parent=23 // pred_fallthru
        _
      %v110 = vld [vmem:[%s102] sm:$0xff]
      %v111 = vld [vmem:[%s102 + $0x8] sm:$0xff]
      %v112 = vld [vmem:[%s102 + $0x10] sm:$0xff]
      %v113 = vld [vmem:[%s102 + $0x18] sm:$0xff]
      %v114 = vld [vmem:[%s102 + $0x20] sm:$0xff]
      %v115 = vld [vmem:[%s102 + $0x28] sm:$0xff]
      %v116 = vld [vmem:[%s102 + $0x30] sm:$0xff]
      %v117 = vld [vmem:[%s102 + $0x38] sm:$0xff]
      %v118 = vld [vmem:[%s102 + $0x40] sm:$0xff]
      %v119 = vld [vmem:[%s102 + $0x48] sm:$0xff]
      %v120 = vld [vmem:[%s102 + $0x50] sm:$0xff]
      %v121 = vld [vmem:[%s102 + $0x58] sm:$0xff]
      %v122 = vld [vmem:[%s102 + $0x60] sm:$0xff]
      %v123 = vld [vmem:[%s102 + $0x68] sm:$0xff]
      %v124 = vld [vmem:[%s102 + $0x70] sm:$0xff]
      %v125 = vld [vmem:[%s102 + $0x78] sm:$0xff]
      %v126 = vld [vmem:[%s102 + $0x80] sm:$0xff]
      %v127 = vld [vmem:[%s102 + $0x88] sm:$0xff]
      %v128 = vld [vmem:[%s102 + $0x90] sm:$0xff]
      %v129 = vld [vmem:[%s102 + $0x98] sm:$0xff]
      %v130 = vld [vmem:[%s102 + $0xa0] sm:$0xff]
      %v131 = vld [vmem:[%s102 + $0xa8] sm:$0xff]
      %v132 = vld [vmem:[%s102 + $0xb0] sm:$0xff]
      %v133 = vld [vmem:[%s102 + $0xb8] sm:$0xff]
      %v134 = vld [vmem:[%s102 + $0xc0] sm:$0xff]
      %v135 = vld [vmem:[%s102 + $0xc8] sm:$0xff]
      %v136 = vld [vmem:[%s102 + $0xd0] sm:$0xff]
      %v137 = vld [vmem:[%s102 + $0xd8] sm:$0xff]
      %v138 = vld [vmem:[%s102 + $0xe0] sm:$0xff]
      %v139 = vld [vmem:[%s102 + $0xe8] sm:$0xff]
      %v140 = vld [vmem:[%s102 + $0xf0] sm:$0xff]
      %v141 = vld [vmem:[%s102 + $0xf8] sm:$0xff]
      %v142 = vld [vmem:[%s102 + $0x100] sm:$0xff]
      %v143 = vld [vmem:[%s102 + $0x108] sm:$0xff]
      %v144 = vld [vmem:[%s102 + $0x110] sm:$0xff]
      %v145 = vld [vmem:[%s102 + $0x118] sm:$0xff]
      %v146 = vld [vmem:[%s102 + $0x120] sm:$0xff]
      %v147 = vld [vmem:[%s102 + $0x128] sm:$0xff]
      %v148 = vld [vmem:[%s102 + $0x130] sm:$0xff]
      %v149 = vld [vmem:[%s102 + $0x138] sm:$0xff]
      %v150 = vld [vmem:[%s102 + $0x140] sm:$0xff]
      %v151 = vld [vmem:[%s102 + $0x148] sm:$0xff]
      %v152 = vld [vmem:[%s102 + $0x150] sm:$0xff]
      %v153 = vld [vmem:[%s102 + $0x158] sm:$0xff]
      %v154 = vld [vmem:[%s102 + $0x160] sm:$0xff]
      %v155 = vld [vmem:[%s102 + $0x168] sm:$0xff]
      %v156 = vld [vmem:[%s102 + $0x170] sm:$0xff]
      %v157 = vld [vmem:[%s102 + $0x178] sm:$0xff]
      %v158 = vld [vmem:[%s102 + $0x180] sm:$0xff]
      %v159 = vld [vmem:[%s102 + $0x188] sm:$0xff]
      %v160 = vld [vmem:[%s102 + $0x190] sm:$0xff]
      %v161 = vld [vmem:[%s102 + $0x198] sm:$0xff]
      %v162 = vld [vmem:[%s102 + $0x1a0] sm:$0xff]
      %v163 = vld [vmem:[%s102 + $0x1a8] sm:$0xff]
      %v164 = vld [vmem:[%s102 + $0x1b0] sm:$0xff]
      %v165 = vld [vmem:[%s102 + $0x1b8] sm:$0xff]
      %v166 = vld [vmem:[%s102 + $0x1c0] sm:$0xff]
      %v167 = vld [vmem:[%s102 + $0x1c8] sm:$0xff]
      %v168 = vld [vmem:[%s102 + $0x1d0] sm:$0xff]
      %v169 = vld [vmem:[%s102 + $0x1d8] sm:$0xff]
      %v170 = vld [vmem:[%s102 + $0x1e0] sm:$0xff]
      %v171 = vld [vmem:[%s102 + $0x1e8] sm:$0xff]
      %v172 = vld [vmem:[%s102 + $0x1f0] sm:$0xff]
      %v173 = vld [vmem:[%s102 + $0x1f8] sm:$0xff]
      %v174 = vld [vmem:[%s1] sm:$0x1]
      %vm175 = vcmask 64512
      %v176 = vsel %vm175, %v110, 0.0
      %v177 = vsel %vm175, %v111, 0.0
      %v178 = vadd.f32 %v176, %v177
      %v179 = vsel %vm175, %v112, 0.0
      %v180 = vadd.f32 %v178, %v179
      %v181 = vsel %vm175, %v113, 0.0
      %v182 = vadd.f32 %v180, %v181
      %v183 = vsel %vm175, %v114, 0.0
      %v184 = vadd.f32 %v182, %v183
      %v185 = vsel %vm175, %v115, 0.0
      %v186 = vadd.f32 %v184, %v185
      %v187 = vsel %vm175, %v116, 0.0
      %v188 = vadd.f32 %v186, %v187
      %v189 = vsel %vm175, %v117, 0.0
      %v190 = vadd.f32 %v188, %v189
      %v191 = vsel %vm175, %v118, 0.0
      %v192 = vadd.f32 %v190, %v191
      %v193 = vsel %vm175, %v119, 0.0
      %v194 = vadd.f32 %v192, %v193
      %v195 = vsel %vm175, %v120, 0.0
      %v196 = vadd.f32 %v194, %v195
      %v197 = vsel %vm175, %v121, 0.0
      %v198 = vadd.f32 %v196, %v197
      %v199 = vsel %vm175, %v122, 0.0
      %v200 = vadd.f32 %v198, %v199
      %v201 = vsel %vm175, %v123, 0.0
      %v202 = vadd.f32 %v200, %v201
      %v203 = vsel %vm175, %v124, 0.0
      %v204 = vadd.f32 %v202, %v203
      %v205 = vsel %vm175, %v125, 0.0
      %v206 = vadd.f32 %v204, %v205
      %v207 = vsel %vm175, %v126, 0.0
      %v208 = vadd.f32 %v206, %v207
      %v209 = vsel %vm175, %v127, 0.0
      %v210 = vadd.f32 %v208, %v209
      %v211 = vsel %vm175, %v128, 0.0
      %v212 = vadd.f32 %v210, %v211
      %v213 = vsel %vm175, %v129, 0.0
      %v214 = vadd.f32 %v212, %v213
      %v215 = vsel %vm175, %v130, 0.0
      %v216 = vadd.f32 %v214, %v215
      %v217 = vsel %vm175, %v131, 0.0
      %v218 = vadd.f32 %v216, %v217
      %v219 = vsel %vm175, %v132, 0.0
      %v220 = vadd.f32 %v218, %v219
      %v221 = vsel %vm175, %v133, 0.0
      %v222 = vadd.f32 %v220, %v221
      %v223 = vsel %vm175, %v134, 0.0
      %v224 = vadd.f32 %v222, %v223
      %v225 = vsel %vm175, %v135, 0.0
      %v226 = vadd.f32 %v224, %v225
      %v227 = vsel %vm175, %v136, 0.0
      %v228 = vadd.f32 %v226, %v227
      %v229 = vsel %vm175, %v137, 0.0
      %v230 = vadd.f32 %v228, %v229
      %v231 = vsel %vm175, %v138, 0.0
      %v232 = vadd.f32 %v230, %v231
      %v233 = vsel %vm175, %v139, 0.0
      %v234 = vadd.f32 %v232, %v233
      %v235 = vsel %vm175, %v140, 0.0
      %v236 = vadd.f32 %v234, %v235
      %v237 = vsel %vm175, %v141, 0.0
      %v238 = vadd.f32 %v236, %v237
      %v239 = vsel %vm175, %v142, 0.0
      %v240 = vadd.f32 %v238, %v239
      %v241 = vsel %vm175, %v143, 0.0
      %v242 = vadd.f32 %v240, %v241
      %v243 = vsel %vm175, %v144, 0.0
      %v244 = vadd.f32 %v242, %v243
      %v245 = vsel %vm175, %v145, 0.0
      %v246 = vadd.f32 %v244, %v245
      %v247 = vsel %vm175, %v146, 0.0
      %v248 = vadd.f32 %v246, %v247
      %v249 = vsel %vm175, %v147, 0.0
      %v250 = vadd.f32 %v248, %v249
      %v251 = vsel %vm175, %v148, 0.0
      %v252 = vadd.f32 %v250, %v251
      %v253 = vsel %vm175, %v149, 0.0
      %v254 = vadd.f32 %v252, %v253
      %v255 = vsel %vm175, %v150, 0.0
      %v256 = vadd.f32 %v254, %v255
      %v257 = vsel %vm175, %v151, 0.0
      %v258 = vadd.f32 %v256, %v257
      %v259 = vsel %vm175, %v152, 0.0
      %v260 = vadd.f32 %v258, %v259
      %v261 = vsel %vm175, %v153, 0.0
      %v262 = vadd.f32 %v260, %v261
      %v263 = vsel %vm175, %v154, 0.0
      %v264 = vadd.f32 %v262, %v263
      %v265 = vsel %vm175, %v155, 0.0
      %v266 = vadd.f32 %v264, %v265
      %v267 = vsel %vm175, %v156, 0.0
      %v268 = vadd.f32 %v266, %v267
      %v269 = vsel %vm175, %v157, 0.0
      %v270 = vadd.f32 %v268, %v269
      %v271 = vsel %vm175, %v158, 0.0
      %v272 = vadd.f32 %v270, %v271
      %v273 = vsel %vm175, %v159, 0.0
      %v274 = vadd.f32 %v272, %v273
      %v275 = vsel %vm175, %v160, 0.0
      %v276 = vadd.f32 %v274, %v275
      %v277 = vsel %vm175, %v161, 0.0
      %v278 = vadd.f32 %v276, %v277
      %v279 = vsel %vm175, %v162, 0.0
      %v280 = vadd.f32 %v278, %v279
      %v281 = vsel %vm175, %v163, 0.0
      %v282 = vadd.f32 %v280, %v281
      %v283 = vsel %vm175, %v164, 0.0
      %v284 = vadd.f32 %v282, %v283
      %v285 = vsel %vm175, %v165, 0.0
      %v286 = vadd.f32 %v284, %v285
      %v287 = vsel %vm175, %v166, 0.0
      %v288 = vadd.f32 %v286, %v287
      %v289 = vsel %vm175, %v167, 0.0
      %v290 = vadd.f32 %v288, %v289
      %v291 = vsel %vm175, %v168, 0.0
      %v292 = vadd.f32 %v290, %v291
      %v293 = vsel %vm175, %v169, 0.0
      %v294 = vadd.f32 %v292, %v293
      %v295 = vsel %vm175, %v170, 0.0
      %v296 = vadd.f32 %v294, %v295
      %v297 = vsel %vm175, %v171, 0.0
      %v298 = vadd.f32 %v296, %v297
      %v299 = vsel %vm175, %v172, 0.0
      %v300 = vadd.f32 %v298, %v299
      %v301 = vsel %vm175, %v173, 0.0
      %v302 = vadd.f32 %v300, %v301
      %v303 = vrot.slane %v302, 4
      %v304 = vadd.f32 %v302, %v303
      %v305 = vrot.slane %v304, 2
      %v306 = vadd.f32 %v304, %v305
      %v307 = vrot.slane %v306, 1
      %v308 = vadd.f32 %v306, %v307
      %v309 = vadd.f32 %v174, %v308
      %vm310 = vcmask 57344
      %311 = vst.msk [vmem:[%s1] sm:$0x1] %vm310, %v309
      %v312 = vld [vmem:[%s1 + $0x1] sm:$0x1]
      %v313 = vmul.f32 %v110, %v110
      %v314 = vmul.f32 %v111, %v111
      %v315 = vmul.f32 %v112, %v112
      %v316 = vmul.f32 %v113, %v113
      %v317 = vmul.f32 %v114, %v114
      %v318 = vmul.f32 %v115, %v115
      %v319 = vmul.f32 %v116, %v116
      %v320 = vmul.f32 %v117, %v117
      %v321 = vmul.f32 %v118, %v118
      %v322 = vmul.f32 %v119, %v119
      %v323 = vmul.f32 %v120, %v120
      %v324 = vmul.f32 %v121, %v121
      %v325 = vmul.f32 %v122, %v122
      %v326 = vmul.f32 %v123, %v123
      %v327 = vmul.f32 %v124, %v124
      %v328 = vmul.f32 %v125, %v125
      %v329 = vmul.f32 %v126, %v126
      %v330 = vmul.f32 %v127, %v127
      %v331 = vmul.f32 %v128, %v128
      %v332 = vmul.f32 %v129, %v129
      %v333 = vmul.f32 %v130, %v130
      %v334 = vmul.f32 %v131, %v131
      %v335 = vmul.f32 %v132, %v132
      %v336 = vmul.f32 %v133, %v133
      %v337 = vmul.f32 %v134, %v134
      %v338 = vmul.f32 %v135, %v135
      %v339 = vmul.f32 %v136, %v136
      %v340 = vmul.f32 %v137, %v137
      %v341 = vmul.f32 %v138, %v138
      %v342 = vmul.f32 %v139, %v139
      %v343 = vmul.f32 %v140, %v140
      %v344 = vmul.f32 %v141, %v141
      %v345 = vmul.f32 %v142, %v142
      %v346 = vmul.f32 %v143, %v143
      %v347 = vmul.f32 %v144, %v144
      %v348 = vmul.f32 %v145, %v145
      %v349 = vmul.f32 %v146, %v146
      %v350 = vmul.f32 %v147, %v147
      %v351 = vmul.f32 %v148, %v148
      %v352 = vmul.f32 %v149, %v149
      %v353 = vmul.f32 %v150, %v150
      %v354 = vmul.f32 %v151, %v151
      %v355 = vmul.f32 %v152, %v152
      %v356 = vmul.f32 %v153, %v153
      %v357 = vmul.f32 %v154, %v154
      %v358 = vmul.f32 %v155, %v155
      %v359 = vmul.f32 %v156, %v156
      %v360 = vmul.f32 %v157, %v157
      %v361 = vmul.f32 %v158, %v158
      %v362 = vmul.f32 %v159, %v159
      %v363 = vmul.f32 %v160, %v160
      %v364 = vmul.f32 %v161, %v161
      %v365 = vmul.f32 %v162, %v162
      %v366 = vmul.f32 %v163, %v163
      %v367 = vmul.f32 %v164, %v164
      %v368 = vmul.f32 %v165, %v165
      %v369 = vmul.f32 %v166, %v166
      %v370 = vmul.f32 %v167, %v167
      %v371 = vmul.f32 %v168, %v168
      %v372 = vmul.f32 %v169, %v169
      %v373 = vmul.f32 %v170, %v170
      %v374 = vmul.f32 %v171, %v171
      %v375 = vmul.f32 %v172, %v172
      %v376 = vmul.f32 %v173, %v173
      %v377 = vsel %vm175, %v313, 0.0
      %v378 = vsel %vm175, %v314, 0.0
      %v379 = vadd.f32 %v377, %v378
      %v380 = vsel %vm175, %v315, 0.0
      %v381 = vadd.f32 %v379, %v380
      %v382 = vsel %vm175, %v316, 0.0
      %v383 = vadd.f32 %v381, %v382
      %v384 = vsel %vm175, %v317, 0.0
      %v385 = vadd.f32 %v383, %v384
      %v386 = vsel %vm175, %v318, 0.0
      %v387 = vadd.f32 %v385, %v386
      %v388 = vsel %vm175, %v319, 0.0
      %v389 = vadd.f32 %v387, %v388
      %v390 = vsel %vm175, %v320, 0.0
      %v391 = vadd.f32 %v389, %v390
      %v392 = vsel %vm175, %v321, 0.0
      %v393 = vadd.f32 %v391, %v392
      %v394 = vsel %vm175, %v322, 0.0
      %v395 = vadd.f32 %v393, %v394
      %v396 = vsel %vm175, %v323, 0.0
      %v397 = vadd.f32 %v395, %v396
      %v398 = vsel %vm175, %v324, 0.0
      %v399 = vadd.f32 %v397, %v398
      %v400 = vsel %vm175, %v325, 0.0
      %v401 = vadd.f32 %v399, %v400
      %v402 = vsel %vm175, %v326, 0.0
      %v403 = vadd.f32 %v401, %v402
      %v404 = vsel %vm175, %v327, 0.0
      %v405 = vadd.f32 %v403, %v404
      %v406 = vsel %vm175, %v328, 0.0
      %v407 = vadd.f32 %v405, %v406
      %v408 = vsel %vm175, %v329, 0.0
      %v409 = vadd.f32 %v407, %v408
      %v410 = vsel %vm175, %v330, 0.0
      %v411 = vadd.f32 %v409, %v410
      %v412 = vsel %vm175, %v331, 0.0
      %v413 = vadd.f32 %v411, %v412
      %v414 = vsel %vm175, %v332, 0.0
      %v415 = vadd.f32 %v413, %v414
      %v416 = vsel %vm175, %v333, 0.0
      %v417 = vadd.f32 %v415, %v416
      %v418 = vsel %vm175, %v334, 0.0
      %v419 = vadd.f32 %v417, %v418
      %v420 = vsel %vm175, %v335, 0.0
      %v421 = vadd.f32 %v419, %v420
      %v422 = vsel %vm175, %v336, 0.0
      %v423 = vadd.f32 %v421, %v422
      %v424 = vsel %vm175, %v337, 0.0
      %v425 = vadd.f32 %v423, %v424
      %v426 = vsel %vm175, %v338, 0.0
      %v427 = vadd.f32 %v425, %v426
      %v428 = vsel %vm175, %v339, 0.0
      %v429 = vadd.f32 %v427, %v428
      %v430 = vsel %vm175, %v340, 0.0
      %v431 = vadd.f32 %v429, %v430
      %v432 = vsel %vm175, %v341, 0.0
      %v433 = vadd.f32 %v431, %v432
      %v434 = vsel %vm175, %v342, 0.0
      %v435 = vadd.f32 %v433, %v434
      %v436 = vsel %vm175, %v343, 0.0
      %v437 = vadd.f32 %v435, %v436
      %v438 = vsel %vm175, %v344, 0.0
      %v439 = vadd.f32 %v437, %v438
      %v440 = vsel %vm175, %v345, 0.0
      %v441 = vadd.f32 %v439, %v440
      %v442 = vsel %vm175, %v346, 0.0
      %v443 = vadd.f32 %v441, %v442
      %v444 = vsel %vm175, %v347, 0.0
      %v445 = vadd.f32 %v443, %v444
      %v446 = vsel %vm175, %v348, 0.0
      %v447 = vadd.f32 %v445, %v446
      %v448 = vsel %vm175, %v349, 0.0
      %v449 = vadd.f32 %v447, %v448
      %v450 = vsel %vm175, %v350, 0.0
      %v451 = vadd.f32 %v449, %v450
      %v452 = vsel %vm175, %v351, 0.0
      %v453 = vadd.f32 %v451, %v452
      %v454 = vsel %vm175, %v352, 0.0
      %v455 = vadd.f32 %v453, %v454
      %v456 = vsel %vm175, %v353, 0.0
      %v457 = vadd.f32 %v455, %v456
      %v458 = vsel %vm175, %v354, 0.0
      %v459 = vadd.f32 %v457, %v458
      %v460 = vsel %vm175, %v355, 0.0
      %v461 = vadd.f32 %v459, %v460
      %v462 = vsel %vm175, %v356, 0.0
      %v463 = vadd.f32 %v461, %v462
      %v464 = vsel %vm175, %v357, 0.0
      %v465 = vadd.f32 %v463, %v464
      %v466 = vsel %vm175, %v358, 0.0
      %v467 = vadd.f32 %v465, %v466
      %v468 = vsel %vm175, %v359, 0.0
      %v469 = vadd.f32 %v467, %v468
      %v470 = vsel %vm175, %v360, 0.0
      %v471 = vadd.f32 %v469, %v470
      %v472 = vsel %vm175, %v361, 0.0
      %v473 = vadd.f32 %v471, %v472
      %v474 = vsel %vm175, %v362, 0.0
      %v475 = vadd.f32 %v473, %v474
      %v476 = vsel %vm175, %v363, 0.0
      %v477 = vadd.f32 %v475, %v476
      %v478 = vsel %vm175, %v364, 0.0
      %v479 = vadd.f32 %v477, %v478
      %v480 = vsel %vm175, %v365, 0.0
      %v481 = vadd.f32 %v479, %v480
      %v482 = vsel %vm175, %v366, 0.0
      %v483 = vadd.f32 %v481, %v482
      %v484 = vsel %vm175, %v367, 0.0
      %v485 = vadd.f32 %v483, %v484
      %v486 = vsel %vm175, %v368, 0.0
      %v487 = vadd.f32 %v485, %v486
      %v488 = vsel %vm175, %v369, 0.0
      %v489 = vadd.f32 %v487, %v488
      %v490 = vsel %vm175, %v370, 0.0
      %v491 = vadd.f32 %v489, %v490
      %v492 = vsel %vm175, %v371, 0.0
      %v493 = vadd.f32 %v491, %v492
      %v494 = vsel %vm175, %v372, 0.0
      %v495 = vadd.f32 %v493, %v494
      %v496 = vsel %vm175, %v373, 0.0
      %v497 = vadd.f32 %v495, %v496
      %v498 = vsel %vm175, %v374, 0.0
      %v499 = vadd.f32 %v497, %v498
      %v500 = vsel %vm175, %v375, 0.0
      %v501 = vadd.f32 %v499, %v500
      %v502 = vsel %vm175, %v376, 0.0
      %v503 = vadd.f32 %v501, %v502
      %v504 = vrot.slane %v503, 4
      %v505 = vadd.f32 %v503, %v504
      %v506 = vrot.slane %v505, 2
      %v507 = vadd.f32 %v505, %v506
      %v508 = vrot.slane %v507, 1
      %v509 = vadd.f32 %v507, %v508
      %v510 = vadd.f32 %v312, %v509
      %511 = vst.msk [vmem:[%s1 + $0x1] sm:$0x1] %vm310, %v510
      // Predicated region
      $region29: #{conv_next_block.4} parent=23 // pred_check
        %p512 = pneg %p51
      $region30: #{conv_next_block.4} parent=23 // pred_check_branch
        %514 = sbr.rel (%p512) target = $region32
      $region31: #{conv_next_block.4} parent=23 // pred_region
        _
      $region32: #{conv_next_block.4} parent=23 // pred_fallthru
        _
      // Predicated region
      $region33: #{conv_next_block.4} parent=23 // pred_check
        %p515 = pneg %p51
      $region34: #{conv_next_block.4} parent=23 // pred_check_branch
        %517 = sbr.rel (%p515) target = $region36
      $region35: #{conv_next_block.4} parent=23 // pred_region
        _
      $region36: #{conv_next_block.4} parent=23 // pred_fallthru
        _
    $region24: #{conv_next_block.4} parent=5 // pred_fallthru
      _
    %p518 = scmp.le.s32.totalorder 2, %s7
    // Predicated region
    $region37: #{conv_next_block.4} parent=5 // pred_check
      %p519 = pneg %p518
    $region38: #{conv_next_block.4} parent=5 // pred_check_branch
      %521 = sbr.rel (%p519) target = $region40
    $region39: #{conv_next_block.4} parent=5 // pred_region
      %s522 = ssub.s32 %s7, 2
    $region40: #{conv_next_block.4} parent=5 // pred_fallthru
      _
  $region6: #{conv_next_block.4} parent=0 // loop_footer
    %s11 = sadd.s32 1, %s7
  $region7: #{conv_next_block.4} parent=0 // loop_footer_branch
    %6 = sbr.rel target = $region3
  $region8: #{conv_next_block.4} parent=0 // loop_exit
    _

// kernel: conv_next_block.3
$region0: #{conv_next_block.3}
  #allocation0 [shape = 'u32[]', space=smem, size = 0x4, offset = 0x4, fixed_abs, tag = 'smem constant byte address 0x4 - core index']
  #allocation1 [shape = 'u32[144,128]{1,0:T(1,128)}', space=vmem, size = 0x12000, scoped, tag = 'internal scratch']
  #allocation2 [shape = 'f32[3,10,10,8]{3,2,1,0:T(8,128)}', space=vmem, size = 0x3c000, scoped, tag = 'scratch operand']
  %s0 = inlined_call_operand.vmem [shape: f32[2,8,8,8,4], index: 0, kind: input, shape index: {}, may-alias: {0,1,2}]
  %s1 = inlined_call_operand.vmem [shape: f32[2,8,8,8,4], index: 1, kind: input, shape index: {}, may-alias: {0,1,2}]
  %s2 = inlined_call_operand.vmem [shape: f32[2,8,8,8,4], index: 2, kind: input, shape index: {}, may-alias: {0,1,2}]
  %s3 = inlined_call_operand.vmem [shape: f32[4,8], index: 3, kind: input, shape index: {}]
  %s4 = inlined_call_operand.vmem [shape: f32[1,8], index: 4, kind: input, shape index: {}]
  %s5 = inlined_call_operand.vmem [shape: f32[27,8], index: 5, kind: input, shape index: {}]
  %s6 = inlined_call_operand.vmem [shape: f32[1,8], index: 6, kind: input, shape index: {}]
  %s7 = inlined_call_operand.vmem [shape: f32[2,8,8,8,8], index: 7, kind: output, shape index: {0}]
  %s8 = inlined_call_operand.vmem [shape: f32[2,8,8,8,8], index: 8, kind: output, shape index: {1}]
  %9 = xla_tuple %s7, %s8
  %s10 = sld [smem:[#allocation0]]
  $region81: #{conv_next_block.3} parent=0
    _
  %s12 = ssub.s32 1, %s10
  %s13 = scalar_select 0, %s12, %s10
  loop: start=0, step=1, limit=18
  $region2: #{conv_next_block.3} parent=0 // loop_pre_header
    _
  $region3: #{conv_next_block.3} parent=0 // loop_header
    %s15 = sphi 0, %s19
    %p16 = scmp.ge.s32.totalorder %s15, 18
    %s22 = sphi 0, %s34
    %s23 = sphi 0, %s30
    %s24 = sphi 0, %s22
    %s25 = sphi 0, %s23
    %s26 = sphi 0, %s24
    %s27 = sphi 0, %s25
    %s49 = sphi 0, %s51
    %s52 = sphi 0, %s49
    %s53 = sphi 0, %s52
    %s69 = sphi 0, %s53
    %s85 = sphi 0, %s87
    %s88 = sphi 0, %s85
    %s89 = sphi 0, %s88
    %s105 = sphi 0, %s89
    %s123 = sphi 0, %s125
    %s126 = sphi 0, %s123
    %s127 = sphi 0, %s126
    %s143 = sphi 0, %s127
    %s147 = sphi 0, %s147
    %s149 = sphi 0, %s147
    %s150 = sphi 0, %s149
    %s164 = sphi 0, %s150
    %s168 = sphi 0, %s168
    %s170 = sphi 0, %s168
    %s171 = sphi 0, %s170
    %s185 = sphi 0, %s171
    %s189 = sphi 0, %s189
    %s191 = sphi 0, %s189
    %s192 = sphi 0, %s191
    %s206 = sphi 0, %s192
    %s210 = sphi 0, %s210
    %s212 = sphi 0, %s210
    %s213 = sphi 0, %s212
    %s227 = sphi 0, %s213
    %s235 = sphi 0, %s237
    %s238 = sphi 0, %s235
    %s239 = sphi 0, %s238
    %s255 = sphi 0, %s239
    %s263 = sphi 0, %s265
    %s266 = sphi 0, %s263
    %s267 = sphi 0, %s266
    %s283 = sphi 0, %s267
  $region4: #{conv_next_block.3} parent=0 // loop_header_branch
    %18 = sbr.rel (%p16) target = $region8
  $region5: #{conv_next_block.3} parent=0 // loop_body
    %s20 = ssub.s32 %s15, 1
    %s21 = ssub.s32 %s15, 2
    %s28 = sadd.s32 1, %s23
    %p29 = scmp.ge.s32.totalorder %s28, 8
    %s30 = scalar_select %p29, 0, %s28
    %s31 = sadd.s32 1, %s22
    %s32 = scalar_select %p29, %s31, %s22
    %p33 = scmp.ge.s32.totalorder %s32, 2
    %s34 = scalar_select %p33, 0, %s32
    %s35 = sadd.s32 %s23, 4294967295
    %p36 = scmp.gt.s32.totalorder %s35, 0
    %s37 = scalar_select %p36, %s35, 0
    %p38 = scmp.lt.s32.totalorder %s37, 7
    %s39 = scalar_select %p38, %s37, 7
    %s40 = sadd.s32 %s30, 4294967295
    %p41 = scmp.gt.s32.totalorder %s40, 0
    %s42 = scalar_select %p41, %s40, 0
    %p43 = scmp.lt.s32.totalorder %s42, 7
    %s44 = scalar_select %p43, %s42, 7
    %s45 = ssub.s32 %s22, %s34
    %s46 = ssub.s32 %s39, %s44
    %s47 = sor.u32 %s45, %s46
    %p48 = scmp.eq.s32.totalorder %s47, 0
    %s50 = sadd.s32 %s49, 1
    %s51 = scalar_select %p48, %s49, %s50
    %p54 = pneg %p48
    %p55 = scmp.eq.s32.totalorder %s15, 15
    %p56 = por %p54, %p55
    %p57 = scmp.ne.s32.totalorder %s49, %s52
    %p58 = scmp.eq.s32.totalorder %s15, 0
    %p59 = por %p57, %p58
    %p60 = scmp.ne.s32.totalorder %s49, %s52
    %p61 = scmp.eq.s32.totalorder %s20, 15
    %p62 = por %p60, %p61
    %p63 = scmp.ne.s32.totalorder %s52, %s53
    %p64 = scmp.eq.s32.totalorder %s20, 0
    %p65 = por %p63, %p64
    %p66 = scmp.ne.s32.totalorder %s52, %s53
    %p67 = scmp.eq.s32.totalorder %s21, 15
    %p68 = por %p66, %p67
    %p70 = scmp.ne.s32.totalorder %s53, %s69
    %p71 = scmp.eq.s32.totalorder %s21, 0
    %p72 = por %p70, %p71
    %p73 = scmp.gt.s32.totalorder %s23, 0
    %s74 = scalar_select %p73, %s23, 0
    %p75 = scmp.lt.s32.totalorder %s74, 7
    %s76 = scalar_select %p75, %s74, 7
    %p77 = scmp.gt.s32.totalorder %s30, 0
    %s78 = scalar_select %p77, %s30, 0
    %p79 = scmp.lt.s32.totalorder %s78, 7
    %s80 = scalar_select %p79, %s78, 7
    %s81 = ssub.s32 %s22, %s34
    %s82 = ssub.s32 %s76, %s80
    %s83 = sor.u32 %s81, %s82
    %p84 = scmp.eq.s32.totalorder %s83, 0
    %s86 = sadd.s32 %s85, 1
    %s87 = scalar_select %p84, %s85, %s86
    %p90 = pneg %p84
    %p91 = scmp.eq.s32.totalorder %s15, 15
    %p92 = por %p90, %p91
    %p93 = scmp.ne.s32.totalorder %s85, %s88
    %p94 = scmp.eq.s32.totalorder %s15, 0
    %p95 = por %p93, %p94
    %p96 = scmp.ne.s32.totalorder %s85, %s88
    %p97 = scmp.eq.s32.totalorder %s20, 15
    %p98 = por %p96, %p97
    %p99 = scmp.ne.s32.totalorder %s88, %s89
    %p100 = scmp.eq.s32.totalorder %s20, 0
    %p101 = por %p99, %p100
    %p102 = scmp.ne.s32.totalorder %s88, %s89
    %p103 = scmp.eq.s32.totalorder %s21, 15
    %p104 = por %p102, %p103
    %p106 = scmp.ne.s32.totalorder %s89, %s105
    %p107 = scmp.eq.s32.totalorder %s21, 0
    %p108 = por %p106, %p107
    %s109 = sadd.s32 %s23, 1
    %p110 = scmp.gt.s32.totalorder %s109, 0
    %s111 = scalar_select %p110, %s109, 0
    %p112 = scmp.lt.s32.totalorder %s111, 7
    %s113 = scalar_select %p112, %s111, 7
    %s114 = sadd.s32 %s30, 1
    %p115 = scmp.gt.s32.totalorder %s114, 0
    %s116 = scalar_select %p115, %s114, 0
    %p117 = scmp.lt.s32.totalorder %s116, 7
    %s118 = scalar_select %p117, %s116, 7
    %s119 = ssub.s32 %s22, %s34
    %s120 = ssub.s32 %s113, %s118
    %s121 = sor.u32 %s119, %s120
    %p122 = scmp.eq.s32.totalorder %s121, 0
    %s124 = sadd.s32 %s123, 1
    %s125 = scalar_select %p122, %s123, %s124
    %p128 = pneg %p122
    %p129 = scmp.eq.s32.totalorder %s15, 15
    %p130 = por %p128, %p129
    %p131 = scmp.ne.s32.totalorder %s123, %s126
    %p132 = scmp.eq.s32.totalorder %s15, 0
    %p133 = por %p131, %p132
    %p134 = scmp.ne.s32.totalorder %s123, %s126
    %p135 = scmp.eq.s32.totalorder %s20, 15
    %p136 = por %p134, %p135
    %p137 = scmp.ne.s32.totalorder %s126, %s127
    %p138 = scmp.eq.s32.totalorder %s20, 0
    %p139 = por %p137, %p138
    %p140 = scmp.ne.s32.totalorder %s126, %s127
    %p141 = scmp.eq.s32.totalorder %s21, 15
    %p142 = por %p140, %p141
    %p144 = scmp.ne.s32.totalorder %s127, %s143
    %p145 = scmp.eq.s32.totalorder %s21, 0
    %p146 = por %p144, %p145
    %s148 = sadd.s32 %s147, 1
    %p151 = scmp.eq.s32.totalorder %s15, 15
    %p152 = scmp.ne.s32.totalorder %s147, %s149
    %p153 = scmp.eq.s32.totalorder %s15, 0
    %p154 = por %p152, %p153
    %p155 = scmp.ne.s32.totalorder %s147, %s149
    %p156 = scmp.eq.s32.totalorder %s20, 15
    %p157 = por %p155, %p156
    %p158 = scmp.ne.s32.totalorder %s149, %s150
    %p159 = scmp.eq.s32.totalorder %s20, 0
    %p160 = por %p158, %p159
    %p161 = scmp.ne.s32.totalorder %s149, %s150
    %p162 = scmp.eq.s32.totalorder %s21, 15
    %p163 = por %p161, %p162
    %p165 = scmp.ne.s32.totalorder %s150, %s164
    %p166 = scmp.eq.s32.totalorder %s21, 0
    %p167 = por %p165, %p166
    %s169 = sadd.s32 %s168, 1
    %p172 = scmp.eq.s32.totalorder %s15, 15
    %p173 = scmp.ne.s32.totalorder %s168, %s170
    %p174 = scmp.eq.s32.totalorder %s15, 0
    %p175 = por %p173, %p174
    %p176 = scmp.ne.s32.totalorder %s168, %s170
    %p177 = scmp.eq.s32.totalorder %s20, 15
    %p178 = por %p176, %p177
    %p179 = scmp.ne.s32.totalorder %s170, %s171
    %p180 = scmp.eq.s32.totalorder %s20, 0
    %p181 = por %p179, %p180
    %p182 = scmp.ne.s32.totalorder %s170, %s171
    %p183 = scmp.eq.s32.totalorder %s21, 15
    %p184 = por %p182, %p183
    %p186 = scmp.ne.s32.totalorder %s171, %s185
    %p187 = scmp.eq.s32.totalorder %s21, 0
    %p188 = por %p186, %p187
    %s190 = sadd.s32 %s189, 1
    %p193 = scmp.eq.s32.totalorder %s15, 15
    %p194 = scmp.ne.s32.totalorder %s189, %s191
    %p195 = scmp.eq.s32.totalorder %s15, 0
    %p196 = por %p194, %p195
    %p197 = scmp.ne.s32.totalorder %s189, %s191
    %p198 = scmp.eq.s32.totalorder %s20, 15
    %p199 = por %p197, %p198
    %p200 = scmp.ne.s32.totalorder %s191, %s192
    %p201 = scmp.eq.s32.totalorder %s20, 0
    %p202 = por %p200, %p201
    %p203 = scmp.ne.s32.totalorder %s191, %s192
    %p204 = scmp.eq.s32.totalorder %s21, 15
    %p205 = por %p203, %p204
    %p207 = scmp.ne.s32.totalorder %s192, %s206
    %p208 = scmp.eq.s32.totalorder %s21, 0
    %p209 = por %p207, %p208
    %s211 = sadd.s32 %s210, 1
    %p214 = scmp.eq.s32.totalorder %s15, 15
    %p215 = scmp.ne.s32.totalorder %s210, %s212
    %p216 = scmp.eq.s32.totalorder %s15, 0
    %p217 = por %p215, %p216
    %p218 = scmp.ne.s32.totalorder %s210, %s212
    %p219 = scmp.eq.s32.totalorder %s20, 15
    %p220 = por %p218, %p219
    %p221 = scmp.ne.s32.totalorder %s212, %s213
    %p222 = scmp.eq.s32.totalorder %s20, 0
    %p223 = por %p221, %p222
    %p224 = scmp.ne.s32.totalorder %s212, %s213
    %p225 = scmp.eq.s32.totalorder %s21, 15
    %p226 = por %p224, %p225
    %p228 = scmp.ne.s32.totalorder %s213, %s227
    %p229 = scmp.eq.s32.totalorder %s21, 0
    %p230 = por %p228, %p229
    %s231 = ssub.s32 %s22, %s34
    %s232 = ssub.s32 %s23, %s30
    %s233 = sor.u32 %s231, %s232
    %p234 = scmp.eq.s32.totalorder %s233, 0
    %s236 = sadd.s32 %s235, 1
    %s237 = scalar_select %p234, %s235, %s236
    %p240 = pneg %p234
    %p241 = scmp.eq.s32.totalorder %s15, 15
    %p242 = por %p240, %p241
    %p243 = scmp.ne.s32.totalorder %s235, %s238
    %p244 = scmp.eq.s32.totalorder %s15, 0
    %p245 = por %p243, %p244
    %p246 = scmp.ne.s32.totalorder %s235, %s238
    %p247 = scmp.eq.s32.totalorder %s20, 15
    %p248 = por %p246, %p247
    %p249 = scmp.ne.s32.totalorder %s238, %s239
    %p250 = scmp.eq.s32.totalorder %s20, 0
    %p251 = por %p249, %p250
    %p252 = scmp.ne.s32.totalorder %s238, %s239
    %p253 = scmp.eq.s32.totalorder %s21, 15
    %p254 = por %p252, %p253
    %p256 = scmp.ne.s32.totalorder %s239, %s255
    %p257 = scmp.eq.s32.totalorder %s21, 0
    %p258 = por %p256, %p257
    %s259 = ssub.s32 %s22, %s34
    %s260 = ssub.s32 %s23, %s30
    %s261 = sor.u32 %s259, %s260
    %p262 = scmp.eq.s32.totalorder %s261, 0
    %s264 = sadd.s32 %s263, 1
    %s265 = scalar_select %p262, %s263, %s264
    %p268 = pneg %p262
    %p269 = scmp.eq.s32.totalorder %s15, 15
    %p270 = por %p268, %p269
    %p271 = scmp.ne.s32.totalorder %s263, %s266
    %p272 = scmp.eq.s32.totalorder %s15, 0
    %p273 = por %p271, %p272
    %p274 = scmp.ne.s32.totalorder %s263, %s266
    %p275 = scmp.eq.s32.totalorder %s20, 15
    %p276 = por %p274, %p275
    %p277 = scmp.ne.s32.totalorder %s266, %s267
    %p278 = scmp.eq.s32.totalorder %s20, 0
    %p279 = por %p277, %p278
    %p280 = scmp.ne.s32.totalorder %s266, %s267
    %p281 = scmp.eq.s32.totalorder %s21, 15
    %p282 = por %p280, %p281
    %p284 = scmp.ne.s32.totalorder %s267, %s283
    %p285 = scmp.eq.s32.totalorder %s21, 0
    %p286 = por %p284, %p285
    %p287 = scmp.le.s32.totalorder 1, %s15
    %p288 = scmp.lt.s32.totalorder %s15, 17
    %p289 = pnand %p287, %p288
    %p290 = pneg %p289
    // Predicated region
    $region9: #{conv_next_block.3} parent=5 // pred_check
      _
    $region10: #{conv_next_block.3} parent=5 // pred_check_branch
      %292 = sbr.rel (%p289) target = $region12
    $region11: #{conv_next_block.3} parent=5 // pred_region
      %s293 = ssub.s32 %s15, 1
      // Predicated region
      $region13: #{conv_next_block.3} parent=11 // pred_check
        %p294 = pneg %p160
      $region14: #{conv_next_block.3} parent=11 // pred_check_branch
        %296 = sbr.rel (%p294) target = $region16
      $region15: #{conv_next_block.3} parent=11 // pred_region
        _
      $region16: #{conv_next_block.3} parent=11 // pred_fallthru
        _
      // Predicated region
      $region17: #{conv_next_block.3} parent=11 // pred_check
        %p297 = pneg %p181
      $region18: #{conv_next_block.3} parent=11 // pred_check_branch
        %299 = sbr.rel (%p297) target = $region20
      $region19: #{conv_next_block.3} parent=11 // pred_region
        _
      $region20: #{conv_next_block.3} parent=11 // pred_fallthru
        _
      // Predicated region
      $region21: #{conv_next_block.3} parent=11 // pred_check
        %p300 = pneg %p202
      $region22: #{conv_next_block.3} parent=11 // pred_check_branch
        %302 = sbr.rel (%p300) target = $region24
      $region23: #{conv_next_block.3} parent=11 // pred_region
        _
      $region24: #{conv_next_block.3} parent=11 // pred_fallthru
        _
      // Predicated region
      $region25: #{conv_next_block.3} parent=11 // pred_check
        %p303 = pneg %p223
      $region26: #{conv_next_block.3} parent=11 // pred_check_branch
        %305 = sbr.rel (%p303) target = $region28
      $region27: #{conv_next_block.3} parent=11 // pred_region
        _
      $region28: #{conv_next_block.3} parent=11 // pred_fallthru
        _
    $region12: #{conv_next_block.3} parent=5 // pred_fallthru
      _
    %p306 = scmp.lt.s32.totalorder %s15, 16
    // Predicated region
    $region29: #{conv_next_block.3} parent=5 // pred_check
      %p307 = pneg %p306
    $region30: #{conv_next_block.3} parent=5 // pred_check_branch
      %309 = sbr.rel (%p307) target = $region32
    $region31: #{conv_next_block.3} parent=5 // pred_region
      // Predicated region
      $region33: #{conv_next_block.3} parent=31 // pred_check
        %p310 = pneg %p59
      $region34: #{conv_next_block.3} parent=31 // pred_check_branch
        %312 = sbr.rel (%p310) target = $region36
      $region35: #{conv_next_block.3} parent=31 // pred_region
        %s313 = sadd.s32 %s23, 4294967295
        %p314 = scmp.gt.s32.totalorder %s313, 0
        %s315 = scalar_select %p314, %s313, 0
        %p316 = scmp.lt.s32.totalorder %s315, 7
        %s317 = scalar_select %p316, %s315, 7
        %p318 = scmp.lt.s32.totalorder %s22, 1
        %s319 = scalar_select %p318, %s22, 1
        %p320 = scmp.lt.s32.totalorder %s317, 7
        %s321 = scalar_select %p320, %s317, 7
        %s322 = smul.addr %s321, 8
        %s323 = smul.addr %s319, 64
        %s324 = sadd.s32 %s322, %s323
        %s325 = smul.addr %s324, 8
        %s326 = scalar_lea.vmem %s0, %s325
        %s327 = sadd.s32 %s23, 4294967295
        %p328 = scmp.gt.s32.totalorder %s327, 0
        %s329 = scalar_select %p328, %s327, 0
        %p330 = scmp.lt.s32.totalorder %s329, 7
        %s331 = scalar_select %p330, %s329, 7
      $region36: #{conv_next_block.3} parent=31 // pred_fallthru
        _
      // Predicated region
      $region37: #{conv_next_block.3} parent=31 // pred_check
        %p332 = pneg %p95
      $region38: #{conv_next_block.3} parent=31 // pred_check_branch
        %334 = sbr.rel (%p332) target = $region40
      $region39: #{conv_next_block.3} parent=31 // pred_region
        %p335 = scmp.gt.s32.totalorder %s23, 0
        %s336 = scalar_select %p335, %s23, 0
        %p337 = scmp.lt.s32.totalorder %s336, 7
        %s338 = scalar_select %p337, %s336, 7
        %p339 = scmp.lt.s32.totalorder %s22, 1
        %s340 = scalar_select %p339, %s22, 1
        %p341 = scmp.lt.s32.totalorder %s338, 7
        %s342 = scalar_select %p341, %s338, 7
        %s343 = smul.addr %s342, 8
        %s344 = smul.addr %s340, 64
        %s345 = sadd.s32 %s343, %s344
        %s346 = smul.addr %s345, 8
        %s347 = scalar_lea.vmem %s1, %s346
        %p348 = scmp.gt.s32.totalorder %s23, 0
        %s349 = scalar_select %p348, %s23, 0
        %p350 = scmp.lt.s32.totalorder %s349, 7
        %s351 = scalar_select %p350, %s349, 7
      $region40: #{conv_next_block.3} parent=31 // pred_fallthru
        _
      // Predicated region
      $region41: #{conv_next_block.3} parent=31 // pred_check
        %p352 = pneg %p133
      $region42: #{conv_next_block.3} parent=31 // pred_check_branch
        %354 = sbr.rel (%p352) target = $region44
      $region43: #{conv_next_block.3} parent=31 // pred_region
        %s355 = sadd.s32 %s23, 1
        %p356 = scmp.gt.s32.totalorder %s355, 0
        %s357 = scalar_select %p356, %s355, 0
        %p358 = scmp.lt.s32.totalorder %s357, 7
        %s359 = scalar_select %p358, %s357, 7
        %p360 = scmp.lt.s32.totalorder %s22, 1
        %s361 = scalar_select %p360, %s22, 1
        %p362 = scmp.lt.s32.totalorder %s359, 7
        %s363 = scalar_select %p362, %s359, 7
        %s364 = smul.addr %s363, 8
        %s365 = smul.addr %s361, 64
        %s366 = sadd.s32 %s364, %s365
        %s367 = smul.addr %s366, 8
        %s368 = scalar_lea.vmem %s2, %s367
        %s369 = sadd.s32 %s23, 1
        %p370 = scmp.gt.s32.totalorder %s369, 0
        %s371 = scalar_select %p370, %s369, 0
        %p372 = scmp.lt.s32.totalorder %s371, 7
        %s373 = scalar_select %p372, %s371, 7
      $region44: #{conv_next_block.3} parent=31 // pred_fallthru
        _
    $region32: #{conv_next_block.3} parent=5 // pred_fallthru
      _
    %p374 = scmp.le.s32.totalorder 1, %s15
    %p375 = scmp.lt.s32.totalorder %s15, 17
    %p376 = pnand %p374, %p375
    %p377 = pneg %p376
    // Predicated region
    $region45: #{conv_next_block.3} parent=5 // pred_check
      _
    $region46: #{conv_next_block.3} parent=5 // pred_check_branch
      %379 = sbr.rel (%p376) target = $region48
    $region47: #{conv_next_block.3} parent=5 // pred_region
      %s380 = ssub.s32 %s15, 1
      %s381 = sadd.s32 %s25, 4294967295
      %p382 = scmp.gt.s32.totalorder %s381, 0
      %s383 = scalar_select %p382, %s381, 0
      %p384 = scmp.lt.s32.totalorder %s383, 7
      %s385 = scalar_select %p384, %s383, 7
      %p386 = scmp.lt.s32.totalorder %s24, 1
      %s387 = scalar_select %p386, %s24, 1
      %p388 = scmp.lt.s32.totalorder %s385, 7
      %s389 = scalar_select %p388, %s385, 7
      %s390 = smul.addr %s389, 8
      %s391 = smul.addr %s387, 64
      %s392 = sadd.s32 %s390, %s391
      %s393 = smul.addr %s392, 8
      %s394 = scalar_lea.vmem %s0, %s393
      %p395 = pneg %p65
      %p396 = pneg %p62
      %p397 = scmp.gt.s32.totalorder %s25, 0
      %s398 = scalar_select %p397, %s25, 0
      %p399 = scmp.lt.s32.totalorder %s398, 7
      %s400 = scalar_select %p399, %s398, 7
      %p401 = scmp.lt.s32.totalorder %s24, 1
      %s402 = scalar_select %p401, %s24, 1
      %p403 = scmp.lt.s32.totalorder %s400, 7
      %s404 = scalar_select %p403, %s400, 7
      %s405 = smul.addr %s404, 8
      %s406 = smul.addr %s402, 64
      %s407 = sadd.s32 %s405, %s406
      %s408 = smul.addr %s407, 8
      %s409 = scalar_lea.vmem %s1, %s408
      %p410 = pneg %p101
      %p411 = pneg %p98
      %s412 = sadd.s32 %s25, 1
      %p413 = scmp.gt.s32.totalorder %s412, 0
      %s414 = scalar_select %p413, %s412, 0
      %p415 = scmp.lt.s32.totalorder %s414, 7
      %s416 = scalar_select %p415, %s414, 7
      %p417 = scmp.lt.s32.totalorder %s24, 1
      %s418 = scalar_select %p417, %s24, 1
      %p419 = scmp.lt.s32.totalorder %s416, 7
      %s420 = scalar_select %p419, %s416, 7
      %s421 = smul.addr %s420, 8
      %s422 = smul.addr %s418, 64
      %s423 = sadd.s32 %s421, %s422
      %s424 = smul.addr %s423, 8
      %s425 = scalar_lea.vmem %s2, %s424
      %p426 = pneg %p139
      %p427 = pneg %p136
      %p428 = pneg %p160
      %p429 = pneg %p157
      %p430 = pneg %p181
      %p431 = pneg %p178
      %p432 = pneg %p202
      %p433 = pneg %p199
      %p434 = pneg %p223
      %p435 = pneg %p220
      %p436 = pneg %p251
      %p437 = pneg %p248
      %p438 = scmp.lt.s32.totalorder %s24, 1
      %s439 = scalar_select %p438, %s24, 1
      %p440 = scmp.lt.s32.totalorder %s25, 7
      %s441 = scalar_select %p440, %s25, 7
      %s442 = smul.addr %s441, 8
      %s443 = smul.addr %s439, 64
      %s444 = sadd.s32 %s442, %s443
      %s445 = smul.addr %s444, 8
      %s446 = scalar_lea.vmem %s7, %s445
      %p447 = pneg %p279
      %p448 = pneg %p276
      %p449 = scmp.lt.s32.totalorder %s24, 1
      %s450 = scalar_select %p449, %s24, 1
      %p451 = scmp.lt.s32.totalorder %s25, 7
      %s452 = scalar_select %p451, %s25, 7
      %s453 = smul.addr %s452, 8
      %s454 = smul.addr %s450, 64
      %s455 = sadd.s32 %s453, %s454
      %s456 = smul.addr %s455, 8
      %s457 = scalar_lea.vmem %s8, %s456
      %s458 = sadd.s32 %s25, 4294967295
      %p459 = scmp.gt.s32.totalorder %s458, 0
      %s460 = scalar_select %p459, %s458, 0
      %p461 = scmp.lt.s32.totalorder %s460, 7
      %s462 = scalar_select %p461, %s460, 7
      %p463 = scmp.lt.s32.totalorder %s24, 1
      %s464 = scalar_select %p463, %s24, 1
      %p465 = scmp.lt.s32.totalorder %s462, 7
      %s466 = scalar_select %p465, %s462, 7
      %s467 = smul.addr %s466, 8
      %s468 = smul.addr %s464, 64
      %s469 = sadd.s32 %s467, %s468
      %s470 = smul.addr %s469, 8
      %s471 = scalar_lea.vmem %s0, %s470
      %s472 = sadd.s32 %s25, 4294967295
      %p473 = scmp.gt.s32.totalorder %s472, 0
      %s474 = scalar_select %p473, %s472, 0
      %p475 = scmp.lt.s32.totalorder %s474, 7
      %s476 = scalar_select %p475, %s474, 7
      %p477 = scmp.gt.s32.totalorder %s25, 0
      %s478 = scalar_select %p477, %s25, 0
      %p479 = scmp.lt.s32.totalorder %s478, 7
      %s480 = scalar_select %p479, %s478, 7
      %p481 = scmp.lt.s32.totalorder %s24, 1
      %s482 = scalar_select %p481, %s24, 1
      %p483 = scmp.lt.s32.totalorder %s480, 7
      %s484 = scalar_select %p483, %s480, 7
      %s485 = smul.addr %s484, 8
      %s486 = smul.addr %s482, 64
      %s487 = sadd.s32 %s485, %s486
      %s488 = smul.addr %s487, 8
      %s489 = scalar_lea.vmem %s1, %s488
      %p490 = scmp.gt.s32.totalorder %s25, 0
      %s491 = scalar_select %p490, %s25, 0
      %p492 = scmp.lt.s32.totalorder %s491, 7
      %s493 = scalar_select %p492, %s491, 7
      %s494 = sadd.s32 %s25, 1
      %p495 = scmp.gt.s32.totalorder %s494, 0
      %s496 = scalar_select %p495, %s494, 0
      %p497 = scmp.lt.s32.totalorder %s496, 7
      %s498 = scalar_select %p497, %s496, 7
      %p499 = scmp.lt.s32.totalorder %s24, 1
      %s500 = scalar_select %p499, %s24, 1
      %p501 = scmp.lt.s32.totalorder %s498, 7
      %s502 = scalar_select %p501, %s498, 7
      %s503 = smul.addr %s502, 8
      %s504 = smul.addr %s500, 64
      %s505 = sadd.s32 %s503, %s504
      %s506 = smul.addr %s505, 8
      %s507 = scalar_lea.vmem %s2, %s506
      %s508 = sadd.s32 %s25, 1
      %p509 = scmp.gt.s32.totalorder %s508, 0
      %s510 = scalar_select %p509, %s508, 0
      %p511 = scmp.lt.s32.totalorder %s510, 7
      %s512 = scalar_select %p511, %s510, 7
      %p513 = scmp.lt.s32.totalorder %s24, 1
      %s514 = scalar_select %p513, %s24, 1
      %p515 = scmp.lt.s32.totalorder %s25, 7
      %s516 = scalar_select %p515, %s25, 7
      %s517 = smul.addr %s516, 8
      %s518 = smul.addr %s514, 64
      %s519 = sadd.s32 %s517, %s518
      %s520 = smul.addr %s519, 8
      %s521 = scalar_lea.vmem %s7, %s520
      %p522 = scmp.lt.s32.totalorder %s24, 1
      %s523 = scalar_select %p522, %s24, 1
      %p524 = scmp.lt.s32.totalorder %s25, 7
      %s525 = scalar_select %p524, %s25, 7
      %s526 = smul.addr %s525, 8
      %s527 = smul.addr %s523, 64
      %s528 = sadd.s32 %s526, %s527
      %s529 = smul.addr %s528, 8
      %s530 = scalar_lea.vmem %s8, %s529
      %vm531 = vcmask 64512
      %532 = vst.msk [vmem:[#allocation2] sm:$0xff] %vm531, 0.0
      %vm533 = vcmask 58368
      %534 = vst.msk [vmem:[#allocation2 + $0x8] sm:$0x3] %vm533, 0.0
      %535 = vst.msk [vmem:[#allocation2 + $0x10] sm:$0xff] %vm531, 0.0
      %536 = vst.msk [vmem:[#allocation2 + $0x18] sm:$0x3] %vm533, 0.0
      %537 = vst.msk [vmem:[#allocation2 + $0x20] sm:$0xff] %vm531, 0.0
      %538 = vst.msk [vmem:[#allocation2 + $0x28] sm:$0x3] %vm533, 0.0
      %539 = vst.msk [vmem:[#allocation2 + $0x30] sm:$0xff] %vm531, 0.0
      %540 = vst.msk [vmem:[#allocation2 + $0x38] sm:$0x3] %vm533, 0.0
      %541 = vst.msk [vmem:[#allocation2 + $0x40] sm:$0xff] %vm531, 0.0
      %542 = vst.msk [vmem:[#allocation2 + $0x48] sm:$0x3] %vm533, 0.0
      %543 = vst.msk [vmem:[#allocation2 + $0x50] sm:$0xff] %vm531, 0.0
      %544 = vst.msk [vmem:[#allocation2 + $0x58] sm:$0x3] %vm533, 0.0
      %545 = vst.msk [vmem:[#allocation2 + $0x60] sm:$0xff] %vm531, 0.0
      %546 = vst.msk [vmem:[#allocation2 + $0x68] sm:$0x3] %vm533, 0.0
      %547 = vst.msk [vmem:[#allocation2 + $0x70] sm:$0xff] %vm531, 0.0
      %548 = vst.msk [vmem:[#allocation2 + $0x78] sm:$0x3] %vm533, 0.0
      %549 = vst.msk [vmem:[#allocation2 + $0x80] sm:$0xff] %vm531, 0.0
      %550 = vst.msk [vmem:[#allocation2 + $0x88] sm:$0x3] %vm533, 0.0
      %551 = vst.msk [vmem:[#allocation2 + $0x90] sm:$0xff] %vm531, 0.0
      %552 = vst.msk [vmem:[#allocation2 + $0x98] sm:$0x3] %vm533, 0.0
      %553 = vst.msk [vmem:[#allocation2 + $0xa0] sm:$0xff] %vm531, 0.0
      %554 = vst.msk [vmem:[#allocation2 + $0xa8] sm:$0x3] %vm533, 0.0
      %555 = vst.msk [vmem:[#allocation2 + $0xb0] sm:$0xff] %vm531, 0.0
      %556 = vst.msk [vmem:[#allocation2 + $0xb8] sm:$0x3] %vm533, 0.0
      %557 = vst.msk [vmem:[#allocation2 + $0xc0] sm:$0xff] %vm531, 0.0
      %558 = vst.msk [vmem:[#allocation2 + $0xc8] sm:$0x3] %vm533, 0.0
      %559 = vst.msk [vmem:[#allocation2 + $0xd0] sm:$0xff] %vm531, 0.0
      %560 = vst.msk [vmem:[#allocation2 + $0xd8] sm:$0x3] %vm533, 0.0
      %561 = vst.msk [vmem:[#allocation2 + $0xe0] sm:$0xff] %vm531, 0.0
      %562 = vst.msk [vmem:[#allocation2 + $0xe8] sm:$0x3] %vm533, 0.0
      %563 = vst.msk [vmem:[#allocation2 + $0xf0] sm:$0xff] %vm531, 0.0
      %564 = vst.msk [vmem:[#allocation2 + $0xf8] sm:$0x3] %vm533, 0.0
      %565 = vst.msk [vmem:[#allocation2 + $0x100] sm:$0xff] %vm531, 0.0
      %566 = vst.msk [vmem:[#allocation2 + $0x108] sm:$0x3] %vm533, 0.0
      %567 = vst.msk [vmem:[#allocation2 + $0x110] sm:$0xff] %vm531, 0.0
      %568 = vst.msk [vmem:[#allocation2 + $0x118] sm:$0x3] %vm533, 0.0
      %569 = vst.msk [vmem:[#allocation2 + $0x120] sm:$0xff] %vm531, 0.0
      %570 = vst.msk [vmem:[#allocation2 + $0x128] sm:$0x3] %vm533, 0.0
      %571 = vst.msk [vmem:[#allocation2 + $0x130] sm:$0xff] %vm531, 0.0
      %572 = vst.msk [vmem:[#allocation2 + $0x138] sm:$0x3] %vm533, 0.0
      %573 = vst.msk [vmem:[#allocation2 + $0x140] sm:$0xff] %vm531, 0.0
      %574 = vst.msk [vmem:[#allocation2 + $0x148] sm:$0x3] %vm533, 0.0
      %575 = vst.msk [vmem:[#allocation2 + $0x150] sm:$0xff] %vm531, 0.0
      %576 = vst.msk [vmem:[#allocation2 + $0x158] sm:$0x3] %vm533, 0.0
      %577 = vst.msk [vmem:[#allocation2 + $0x160] sm:$0xff] %vm531, 0.0
      %578 = vst.msk [vmem:[#allocation2 + $0x168] sm:$0x3] %vm533, 0.0
      %579 = vst.msk [vmem:[#allocation2 + $0x170] sm:$0xff] %vm531, 0.0
      %580 = vst.msk [vmem:[#allocation2 + $0x178] sm:$0x3] %vm533, 0.0
      %581 = vst.msk [vmem:[#allocation2 + $0x180] sm:$0xff] %vm531, 0.0
      %582 = vst.msk [vmem:[#allocation2 + $0x188] sm:$0x3] %vm533, 0.0
      %583 = vst.msk [vmem:[#allocation2 + $0x190] sm:$0xff] %vm531, 0.0
      %584 = vst.msk [vmem:[#allocation2 + $0x198] sm:$0x3] %vm533, 0.0
      %585 = vst.msk [vmem:[#allocation2 + $0x1a0] sm:$0xff] %vm531, 0.0
      %586 = vst.msk [vmem:[#allocation2 + $0x1a8] sm:$0x3] %vm533, 0.0
      %587 = vst.msk [vmem:[#allocation2 + $0x1b0] sm:$0xff] %vm531, 0.0
      %588 = vst.msk [vmem:[#allocation2 + $0x1b8] sm:$0x3] %vm533, 0.0
      %589 = vst.msk [vmem:[#allocation2 + $0x1c0] sm:$0xff] %vm531, 0.0
      %590 = vst.msk [vmem:[#allocation2 + $0x1c8] sm:$0x3] %vm533, 0.0
      %591 = vst.msk [vmem:[#allocation2 + $0x1d0] sm:$0xff] %vm531, 0.0
      %592 = vst.msk [vmem:[#allocation2 + $0x1d8] sm:$0x3] %vm533, 0.0
      %v593 = vld [vmem:[%s3] sm:$0xf]
      %v594 = vld [vmem:[%s4] sm:$0x1]
      %v595 = vld [vmem:[%s471] sm:$0xff]
      %v596 = vld [vmem:[%s471 + $0x8] sm:$0xff]
      %v597 = vld [vmem:[%s471 + $0x10] sm:$0xff]
      %v598 = vld [vmem:[%s471 + $0x18] sm:$0xff]
      %v599 = vld [vmem:[%s471 + $0x20] sm:$0xff]
      %v600 = vld [vmem:[%s471 + $0x28] sm:$0xff]
      %v601 = vld [vmem:[%s471 + $0x30] sm:$0xff]
      %v602 = vld [vmem:[%s471 + $0x38] sm:$0xff]
      %v604 = vlaneseq
      %v605 = vshrl.u32 %v604, 7
      %v606 = vsub.s32 0, %v605
      %v607 = vrot.slane %v594, %v606
      %vm609 = vcmask 31744
      %v611 = vsel %vm609, %v595, 0
      %v614 = vsel %vm609, %v596, 0
      %v617 = vsel %vm609, %v597, 0
      %v620 = vsel %vm609, %v598, 0
      %v623 = vsel %vm609, %v599, 0
      %v626 = vsel %vm609, %v600, 0
      %v629 = vsel %vm609, %v601, 0
      %v632 = vsel %vm609, %v602, 0
      %vm634 = vcmask 1043456
      %v636 = vsel %vm634, %v593, 0
      %638 = vmatprep.subr.mxu0 0.0
      %639 = vmatpush1.msra.mxu0 %v636
      %640 = vmatprep.subr.mxu0 0.0
      %641 = vmatpush1.msra.mxu0 0.0
      %642 = vmatprep.subr.mxu0 0.0
      %643 = vmatpush1.msra.mxu0 0.0
      %644 = vmatprep.subr.mxu0 0.0
      %645 = vmatpush1.msra.mxu0 0.0
      %646 = vmatprep.subr.mxu0 0.0
      %647 = vmatpush1.msra.mxu0 0.0
      %648 = vmatprep.subr.mxu0 0.0
      %649 = vmatpush1.msra.mxu0 0.0
      %650 = vmatprep.subr.mxu0 0.0
      %651 = vmatpush1.msra.mxu0 0.0
      %652 = vmatprep.subr.mxu0 0.0
      %653 = vmatpush1.msra.mxu0 0.0
      %654 = vmatprep.subr.mxu0 0.0
      %655 = vmatpush1.msra.mxu0 0.0
      %656 = vmatprep.subr.mxu0 0.0
      %657 = vmatpush1.msra.mxu0 0.0
      %658 = vmatprep.subr.mxu0 0.0
      %659 = vmatpush1.msra.mxu0 0.0
      %660 = vmatprep.subr.mxu0 0.0
      %661 = vmatpush1.msra.mxu0 0.0
      %662 = vmatprep.subr.mxu0 0.0
      %663 = vmatpush1.msra.mxu0 0.0
      %664 = vmatprep.subr.mxu0 0.0
      %665 = vmatpush1.msra.mxu0 0.0
      %666 = vmatprep.subr.mxu0 0.0
      %667 = vmatpush1.msra.mxu0 0.0
      %668 = vmatprep.subr.mxu0 0.0
      %669 = vmatpush1.msra.mxu0 0.0
      %670 = vmatprep.subr.mxu0 0.0
      %671 = vmatpush1.msra.mxu0 0.0
      %672 = vmatprep.subr.mxu0 0.0
      %673 = vmatpush1.msra.mxu0 0.0
      %674 = vmatprep.subr.mxu0 0.0
      %675 = vmatpush1.msra.mxu0 0.0
      %676 = vmatprep.subr.mxu0 0.0
      %677 = vmatpush1.msra.mxu0 0.0
      %678 = vmatprep.subr.mxu0 0.0
      %679 = vmatpush1.msra.mxu0 0.0
      %680 = vmatprep.subr.mxu0 0.0
      %681 = vmatpush1.msra.mxu0 0.0
      %682 = vmatprep.subr.mxu0 0.0
      %683 = vmatpush1.msra.mxu0 0.0
      %684 = vmatprep.subr.mxu0 0.0
      %685 = vmatpush1.msra.mxu0 0.0
      %686 = vmatprep.subr.mxu0 0.0
      %687 = vmatpush1.msra.mxu0 0.0
      %688 = vmatprep.subr.mxu0 0.0
      %689 = vmatpush1.msra.mxu0 0.0
      %690 = vmatprep.subr.mxu0 0.0
      %691 = vmatpush1.msra.mxu0 0.0
      %692 = vmatprep.subr.mxu0 0.0
      %693 = vmatpush1.msra.mxu0 0.0
      %694 = vmatprep.subr.mxu0 0.0
      %695 = vmatpush1.msra.mxu0 0.0
      %696 = vmatprep.subr.mxu0 0.0
      %697 = vmatpush1.msra.mxu0 0.0
      %698 = vmatprep.subr.mxu0 0.0
      %699 = vmatpush1.msra.mxu0 0.0
      %700 = vmatprep.subr.mxu0 0.0
      %701 = vmatpush1.msra.mxu0 0.0
      %702 = vmatprep.mubr.f32.mxu0 0.0
      %703 = vmatmul.mubr.f32.gmra.mrb[0].mxu0 %v611
      %v704 = vpop.f32.mrb[0].mxu0
      %v705 = vadd.f32 %v607, %v704
      %v706 = vpop.f32.mrb[0].mxu0
      %707 = vmatprep.mubr.f32.mxu0 0.0
      %708 = vmatmul.mubr.f32.gmra.mrb[0].mxu0 %v614
      %v709 = vpop.f32.mrb[0].mxu0
      %v710 = vadd.f32 %v607, %v709
      %v711 = vpop.f32.mrb[0].mxu0
      %712 = vmatprep.mubr.f32.mxu0 0.0
      %713 = vmatmul.mubr.f32.gmra.mrb[0].mxu0 %v617
      %v714 = vpop.f32.mrb[0].mxu0
      %v715 = vadd.f32 %v607, %v714
      %v716 = vpop.f32.mrb[0].mxu0
      %717 = vmatprep.mubr.f32.mxu0 0.0
      %718 = vmatmul.mubr.f32.gmra.mrb[0].mxu0 %v620
      %v719 = vpop.f32.mrb[0].mxu0
      %v720 = vadd.f32 %v607, %v719
      %v721 = vpop.f32.mrb[0].mxu0
      %722 = vmatprep.mubr.f32.mxu0 0.0
      %723 = vmatmul.mubr.f32.gmra.mrb[0].mxu0 %v623
      %v724 = vpop.f32.mrb[0].mxu0
      %v725 = vadd.f32 %v607, %v724
      %v726 = vpop.f32.mrb[0].mxu0
      %727 = vmatprep.mubr.f32.mxu0 0.0
      %728 = vmatmul.mubr.f32.gmra.mrb[0].mxu0 %v626
      %v729 = vpop.f32.mrb[0].mxu0
      %v730 = vadd.f32 %v607, %v729
      %v731 = vpop.f32.mrb[0].mxu0
      %732 = vmatprep.mubr.f32.mxu0 0.0
      %733 = vmatmul.mubr.f32.gmra.mrb[0].mxu0 %v629
      %v734 = vpop.f32.mrb[0].mxu0
      %v735 = vadd.f32 %v607, %v734
      %v736 = vpop.f32.mrb[0].mxu0
      %737 = vmatprep.mubr.f32.mxu0 0.0
      %738 = vmatmul.mubr.f32.gmra.mrb[0].mxu0 %v632
      %v739 = vpop.f32.mrb[0].mxu0
      %v740 = vadd.f32 %v607, %v739
      %v741 = vpop.f32.mrb[0].mxu0
      %742 = vdwg.mxu0
      %s743 = sadd.s32 %s25, 4294967295
      %p744 = scmp.ge.s32.totalorder %s743, 0
      %p745 = scmp.le.s32.totalorder %s743, 7
      %p746 = pnand %p744, %p745
      %p747 = pneg %p746
      // Predicated region
      $region49: #{conv_next_block.3} parent=47 // pred_check
        _
      $region50: #{conv_next_block.3} parent=47 // pred_check_branch
        %749 = sbr.rel (%p746) target = $region52
      $region51: #{conv_next_block.3} parent=47 // pred_region
        %s750 = scalar_lea.vmem [#allocation2], 16
        %751 = vst.msk [vmem:[%s750 + $0x1] sm:$0xff] %vm531, %v705
        %752 = vst.msk [vmem:[%s750 + $0x11] sm:$0xff] %vm531, %v710
        %753 = vst.msk [vmem:[%s750 + $0x21] sm:$0xff] %vm531, %v715
        %754 = vst.msk [vmem:[%s750 + $0x31] sm:$0xff] %vm531, %v720
        %755 = vst.msk [vmem:[%s750 + $0x41] sm:$0xff] %vm531, %v725
        %756 = vst.msk [vmem:[%s750 + $0x51] sm:$0xff] %vm531, %v730
        %757 = vst.msk [vmem:[%s750 + $0x61] sm:$0xff] %vm531, %v735
        %758 = vst.msk [vmem:[%s750 + $0x71] sm:$0xff] %vm531, %v740
      $region52: #{conv_next_block.3} parent=47 // pred_fallthru
        _
      %v759 = vld [vmem:[%s489] sm:$0xff]
      %v760 = vld [vmem:[%s489 + $0x8] sm:$0xff]
      %v761 = vld [vmem:[%s489 + $0x10] sm:$0xff]
      %v762 = vld [vmem:[%s489 + $0x18] sm:$0xff]
      %v763 = vld [vmem:[%s489 + $0x20] sm:$0xff]
      %v764 = vld [vmem:[%s489 + $0x28] sm:$0xff]
      %v765 = vld [vmem:[%s489 + $0x30] sm:$0xff]
      %v766 = vld [vmem:[%s489 + $0x38] sm:$0xff]
      %v768 = vsel %vm609, %v759, 0
      %v771 = vsel %vm609, %v760, 0
      %v774 = vsel %vm609, %v761, 0
      %v777 = vsel %vm609, %v762, 0
      %v780 = vsel %vm609, %v763, 0
      %v783 = vsel %vm609, %v764, 0
      %v786 = vsel %vm609, %v765, 0
      %v789 = vsel %vm609, %v766, 0
      %791 = vmatprep.subr.mxu0 0.0
      %792 = vmatpush1.msra.mxu0 %v636
      %793 = vmatprep.subr.mxu0 0.0
      %794 = vmatpush1.msra.mxu0 0.0
      %795 = vmatprep.subr.mxu0 0.0
      %796 = vmatpush1.msra.mxu0 0.0
      %797 = vmatprep.subr.mxu0 0.0
      %798 = vmatpush1.msra.mxu0 0.0
      %799 = vmatprep.subr.mxu0 0.0
      %800 = vmatpush1.msra.mxu0 0.0
      %801 = vmatprep.subr.mxu0 0.0
      %802 = vmatpush1.msra.mxu0 0.0
      %803 = vmatprep.subr.mxu0 0.0
      %804 = vmatpush1.msra.mxu0 0.0
      %805 = vmatprep.subr.mxu0 0.0
      %806 = vmatpush1.msra.mxu0 0.0
      %807 = vmatprep.subr.mxu0 0.0
      %808 = vmatpush1.msra.mxu0 0.0
      %809 = vmatprep.subr.mxu0 0.0
      %810 = vmatpush1.msra.mxu0 0.0
      %811 = vmatprep.subr.mxu0 0.0
      %812 = vmatpush1.msra.mxu0 0.0
      %813 = vmatprep.subr.mxu0 0.0
      %814 = vmatpush1.msra.mxu0 0.0
      %815 = vmatprep.subr.mxu0 0.0
      %816 = vmatpush1.msra.mxu0 0.0
      %817 = vmatprep.subr.mxu0 0.0
      %818 = vmatpush1.msra.mxu0 0.0
      %819 = vmatprep.subr.mxu0 0.0
      %820 = vmatpush1.msra.mxu0 0.0
      %821 = vmatprep.subr.mxu0 0.0
      %822 = vmatpush1.msra.mxu0 0.0
      %823 = vmatprep.subr.mxu0 0.0
      %824 = vmatpush1.msra.mxu0 0.0
      %825 = vmatprep.subr.mxu0 0.0
      %826 = vmatpush1.msra.mxu0 0.0
      %827 = vmatprep.subr.mxu0 0.0
      %828 = vmatpush1.msra.mxu0 0.0
      %829 = vmatprep.subr.mxu0 0.0
      %830 = vmatpush1.msra.mxu0 0.0
      %831 = vmatprep.subr.mxu0 0.0
      %832 = vmatpush1.msra.mxu0 0.0
      %833 = vmatprep.subr.mxu0 0.0
      %834 = vmatpush1.msra.mxu0 0.0
      %835 = vmatprep.subr.mxu0 0.0
      %836 = vmatpush1.msra.mxu0 0.0
      %837 = vmatprep.subr.mxu0 0.0
      %838 = vmatpush1.msra.mxu0 0.0
      %839 = vmatprep.subr.mxu0 0.0
      %840 = vmatpush1.msra.mxu0 0.0
      %841 = vmatprep.subr.mxu0 0.0
      %842 = vmatpush1.msra.mxu0 0.0
      %843 = vmatprep.subr.mxu0 0.0
      %844 = vmatpush1.msra.mxu0 0.0
      %845 = vmatprep.subr.mxu0 0.0
      %846 = vmatpush1.msra.mxu0 0.0
      %847 = vmatprep.subr.mxu0 0.0
      %848 = vmatpush1.msra.mxu0 0.0
      %849 = vmatprep.subr.mxu0 0.0
      %850 = vmatpush1.msra.mxu0 0.0
      %851 = vmatprep.subr.mxu0 0.0
      %852 = vmatpush1.msra.mxu0 0.0
      %853 = vmatprep.subr.mxu0 0.0
      %854 = vmatpush1.msra.mxu0 0.0
      %855 = vmatprep.mubr.f32.mxu0 0.0
      %856 = vmatmul.mubr.f32.gmra.mrb[0].mxu0 %v768
      %v857 = vpop.f32.mrb[0].mxu0
      %v858 = vadd.f32 %v607, %v857
      %v859 = vpop.f32.mrb[0].mxu0
      %860 = vmatprep.mubr.f32.mxu0 0.0
      %861 = vmatmul.mubr.f32.gmra.mrb[0].mxu0 %v771
      %v862 = vpop.f32.mrb[0].mxu0
      %v863 = vadd.f32 %v607, %v862
      %v864 = vpop.f32.mrb[0].mxu0
      %865 = vmatprep.mubr.f32.mxu0 0.0
      %866 = vmatmul.mubr.f32.gmra.mrb[0].mxu0 %v774
      %v867 = vpop.f32.mrb[0].mxu0
      %v868 = vadd.f32 %v607, %v867
      %v869 = vpop.f32.mrb[0].mxu0
      %870 = vmatprep.mubr.f32.mxu0 0.0
      %871 = vmatmul.mubr.f32.gmra.mrb[0].mxu0 %v777
      %v872 = vpop.f32.mrb[0].mxu0
      %v873 = vadd.f32 %v607, %v872
      %v874 = vpop.f32.mrb[0].mxu0
      %875 = vmatprep.mubr.f32.mxu0 0.0
      %876 = vmatmul.mubr.f32.gmra.mrb[0].mxu0 %v780
      %v877 = vpop.f32.mrb[0].mxu0
      %v878 = vadd.f32 %v607, %v877
      %v879 = vpop.f32.mrb[0].mxu0
      %880 = vmatprep.mubr.f32.mxu0 0.0
      %881 = vmatmul.mubr.f32.gmra.mrb[0].mxu0 %v783
      %v882 = vpop.f32.mrb[0].mxu0
      %v883 = vadd.f32 %v607, %v882
      %v884 = vpop.f32.mrb[0].mxu0
      %885 = vmatprep.mubr.f32.mxu0 0.0
      %886 = vmatmul.mubr.f32.gmra.mrb[0].mxu0 %v786
      %v887 = vpop.f32.mrb[0].mxu0
      %v888 = vadd.f32 %v607, %v887
      %v889 = vpop.f32.mrb[0].mxu0
      %890 = vmatprep.mubr.f32.mxu0 0.0
      %891 = vmatmul.mubr.f32.gmra.mrb[0].mxu0 %v789
      %v892 = vpop.f32.mrb[0].mxu0
      %v893 = vadd.f32 %v607, %v892
      %v894 = vpop.f32.mrb[0].mxu0
      %895 = vdwg.mxu0
      %896 = vst.msk [vmem:[%s521] sm:$0xff] %vm531, %v858
      %897 = vst.msk [vmem:[%s521 + $0x8] sm:$0xff] %vm531, %v863
      %898 = vst.msk [vmem:[%s521 + $0x10] sm:$0xff] %vm531, %v868
      %899 = vst.msk [vmem:[%s521 + $0x18] sm:$0xff] %vm531, %v873
      %900 = vst.msk [vmem:[%s521 + $0x20] sm:$0xff] %vm531, %v878
      %901 = vst.msk [vmem:[%s521 + $0x28] sm:$0xff] %vm531, %v883
      %902 = vst.msk [vmem:[%s521 + $0x30] sm:$0xff] %vm531, %v888
      %903 = vst.msk [vmem:[%s521 + $0x38] sm:$0xff] %vm531, %v893
      %p904 = scmp.ge.s32.totalorder %s25, 0
      %p905 = scmp.le.s32.totalorder %s25, 7
      %p906 = pnand %p904, %p905
      %p907 = pneg %p906
      // Predicated region
      $region53: #{conv_next_block.3} parent=47 // pred_check
        _
      $region54: #{conv_next_block.3} parent=47 // pred_check_branch
        %909 = sbr.rel (%p906) target = $region56
      $region55: #{conv_next_block.3} parent=47 // pred_region
        %s910 = scalar_lea.vmem [#allocation2], 176
        %911 = vst.msk [vmem:[%s910 + $0x1] sm:$0xff] %vm531, %v858
        %912 = vst.msk [vmem:[%s910 + $0x11] sm:$0xff] %vm531, %v863
        %913 = vst.msk [vmem:[%s910 + $0x21] sm:$0xff] %vm531, %v868
        %914 = vst.msk [vmem:[%s910 + $0x31] sm:$0xff] %vm531, %v873
        %915 = vst.msk [vmem:[%s910 + $0x41] sm:$0xff] %vm531, %v878
        %916 = vst.msk [vmem:[%s910 + $0x51] sm:$0xff] %vm531, %v883
        %917 = vst.msk [vmem:[%s910 + $0x61] sm:$0xff] %vm531, %v888
        %918 = vst.msk [vmem:[%s910 + $0x71] sm:$0xff] %vm531, %v893
      $region56: #{conv_next_block.3} parent=47 // pred_fallthru
        _
      %v919 = vld [vmem:[%s507] sm:$0xff]
      %v920 = vld [vmem:[%s507 + $0x8] sm:$0xff]
      %v921 = vld [vmem:[%s507 + $0x10] sm:$0xff]
      %v922 = vld [vmem:[%s507 + $0x18] sm:$0xff]
      %v923 = vld [vmem:[%s507 + $0x20] sm:$0xff]
      %v924 = vld [vmem:[%s507 + $0x28] sm:$0xff]
      %v925 = vld [vmem:[%s507 + $0x30] sm:$0xff]
      %v926 = vld [vmem:[%s507 + $0x38] sm:$0xff]
      %v928 = vsel %vm609, %v919, 0
      %v931 = vsel %vm609, %v920, 0
      %v934 = vsel %vm609, %v921, 0
      %v937 = vsel %vm609, %v922, 0
      %v940 = vsel %vm609, %v923, 0
      %v943 = vsel %vm609, %v924, 0
      %v946 = vsel %vm609, %v925, 0
      %v949 = vsel %vm609, %v926, 0
      %951 = vmatprep.subr.mxu0 0.0
      %952 = vmatpush1.msra.mxu0 %v636
      %953 = vmatprep.subr.mxu0 0.0
      %954 = vmatpush1.msra.mxu0 0.0
      %955 = vmatprep.subr.mxu0 0.0
      %956 = vmatpush1.msra.mxu0 0.0
      %957 = vmatprep.subr.mxu0 0.0
      %958 = vmatpush1.msra.mxu0 0.0
      %959 = vmatprep.subr.mxu0 0.0
      %960 = vmatpush1.msra.mxu0 0.0
      %961 = vmatprep.subr.mxu0 0.0
      %962 = vmatpush1.msra.mxu0 0.0
      %963 = vmatprep.subr.mxu0 0.0
      %964 = vmatpush1.msra.mxu0 0.0
      %965 = vmatprep.subr.mxu0 0.0
      %966 = vmatpush1.msra.mxu0 0.0
      %967 = vmatprep.subr.mxu0 0.0
      %968 = vmatpush1.msra.mxu0 0.0
      %969 = vmatprep.subr.mxu0 0.0
      %970 = vmatpush1.msra.mxu0 0.0
      %971 = vmatprep.subr.mxu0 0.0
      %972 = vmatpush1.msra.mxu0 0.0
      %973 = vmatprep.subr.mxu0 0.0
      %974 = vmatpush1.msra.mxu0 0.0
      %975 = vmatprep.subr.mxu0 0.0
      %976 = vmatpush1.msra.mxu0 0.0
      %977 = vmatprep.subr.mxu0 0.0
      %978 = vmatpush1.msra.mxu0 0.0
      %979 = vmatprep.subr.mxu0 0.0
      %980 = vmatpush1.msra.mxu0 0.0
      %981 = vmatprep.subr.mxu0 0.0
      %982 = vmatpush1.msra.mxu0 0.0
      %983 = vmatprep.subr.mxu0 0.0
      %984 = vmatpush1.msra.mxu0 0.0
      %985 = vmatprep.subr.mxu0 0.0
      %986 = vmatpush1.msra.mxu0 0.0
      %987 = vmatprep.subr.mxu0 0.0
      %988 = vmatpush1.msra.mxu0 0.0
      %989 = vmatprep.subr.mxu0 0.0
      %990 = vmatpush1.msra.mxu0 0.0
      %991 = vmatprep.subr.mxu0 0.0
      %992 = vmatpush1.msra.mxu0 0.0
      %993 = vmatprep.subr.mxu0 0.0
      %994 = vmatpush1.msra.mxu0 0.0
      %995 = vmatprep.subr.mxu0 0.0
      %996 = vmatpush1.msra.mxu0 0.0
      %997 = vmatprep.subr.mxu0 0.0
      %998 = vmatpush1.msra.mxu0 0.0
      %999 = vmatprep.subr.mxu0 0.0
      %1000 = vmatpush1.msra.mxu0 0.0
      %1001 = vmatprep.subr.mxu0 0.0
      %1002 = vmatpush1.msra.mxu0 0.0
      %1003 = vmatprep.subr.mxu0 0.0
      %1004 = vmatpush1.msra.mxu0 0.0
      %1005 = vmatprep.subr.mxu0 0.0
      %1006 = vmatpush1.msra.mxu0 0.0
      %1007 = vmatprep.subr.mxu0 0.0
      %1008 = vmatpush1.msra.mxu0 0.0
      %1009 = vmatprep.subr.mxu0 0.0
      %1010 = vmatpush1.msra.mxu0 0.0
      %1011 = vmatprep.subr.mxu0 0.0
      %1012 = vmatpush1.msra.mxu0 0.0
      %1013 = vmatprep.subr.mxu0 0.0
      %1014 = vmatpush1.msra.mxu0 0.0
      %1015 = vmatprep.mubr.f32.mxu0 0.0
      %1016 = vmatmul.mubr.f32.gmra.mrb[0].mxu0 %v928
      %v1017 = vpop.f32.mrb[0].mxu0
      %v1018 = vadd.f32 %v607, %v1017
      %v1019 = vpop.f32.mrb[0].mxu0
      %1020 = vmatprep.mubr.f32.mxu0 0.0
      %1021 = vmatmul.mubr.f32.gmra.mrb[0].mxu0 %v931
      %v1022 = vpop.f32.mrb[0].mxu0
      %v1023 = vadd.f32 %v607, %v1022
      %v1024 = vpop.f32.mrb[0].mxu0
      %1025 = vmatprep.mubr.f32.mxu0 0.0
      %1026 = vmatmul.mubr.f32.gmra.mrb[0].mxu0 %v934
      %v1027 = vpop.f32.mrb[0].mxu0
      %v1028 = vadd.f32 %v607, %v1027
      %v1029 = vpop.f32.mrb[0].mxu0
      %1030 = vmatprep.mubr.f32.mxu0 0.0
      %1031 = vmatmul.mubr.f32.gmra.mrb[0].mxu0 %v937
      %v1032 = vpop.f32.mrb[0].mxu0
      %v1033 = vadd.f32 %v607, %v1032
      %v1034 = vpop.f32.mrb[0].mxu0
      %1035 = vmatprep.mubr.f32.mxu0 0.0
      %1036 = vmatmul.mubr.f32.gmra.mrb[0].mxu0 %v940
      %v1037 = vpop.f32.mrb[0].mxu0
      %v1038 = vadd.f32 %v607, %v1037
      %v1039 = vpop.f32.mrb[0].mxu0
      %1040 = vmatprep.mubr.f32.mxu0 0.0
      %1041 = vmatmul.mubr.f32.gmra.mrb[0].mxu0 %v943
      %v1042 = vpop.f32.mrb[0].mxu0
      %v1043 = vadd.f32 %v607, %v1042
      %v1044 = vpop.f32.mrb[0].mxu0
      %1045 = vmatprep.mubr.f32.mxu0 0.0
      %1046 = vmatmul.mubr.f32.gmra.mrb[0].mxu0 %v946
      %v1047 = vpop.f32.mrb[0].mxu0
      %v1048 = vadd.f32 %v607, %v1047
      %v1049 = vpop.f32.mrb[0].mxu0
      %1050 = vmatprep.mubr.f32.mxu0 0.0
      %1051 = vmatmul.mubr.f32.gmra.mrb[0].mxu0 %v949
      %v1052 = vpop.f32.mrb[0].mxu0
      %v1053 = vadd.f32 %v607, %v1052
      %v1054 = vpop.f32.mrb[0].mxu0
      %1055 = vdwg.mxu0
      %s1056 = sadd.s32 %s25, 1
      %p1057 = scmp.ge.s32.totalorder %s1056, 0
      %p1058 = scmp.le.s32.totalorder %s1056, 7
      %p1059 = pnand %p1057, %p1058
      %p1060 = pneg %p1059
      // Predicated region
      $region57: #{conv_next_block.3} parent=47 // pred_check
        _
      $region58: #{conv_next_block.3} parent=47 // pred_check_branch
        %1062 = sbr.rel (%p1059) target = $region60
      $region59: #{conv_next_block.3} parent=47 // pred_region
        %s1063 = scalar_lea.vmem [#allocation2], 336
        %1064 = vst.msk [vmem:[%s1063 + $0x1] sm:$0xff] %vm531, %v1018
        %1065 = vst.msk [vmem:[%s1063 + $0x11] sm:$0xff] %vm531, %v1023
        %1066 = vst.msk [vmem:[%s1063 + $0x21] sm:$0xff] %vm531, %v1028
        %1067 = vst.msk [vmem:[%s1063 + $0x31] sm:$0xff] %vm531, %v1033
        %1068 = vst.msk [vmem:[%s1063 + $0x41] sm:$0xff] %vm531, %v1038
        %1069 = vst.msk [vmem:[%s1063 + $0x51] sm:$0xff] %vm531, %v1043
        %1070 = vst.msk [vmem:[%s1063 + $0x61] sm:$0xff] %vm531, %v1048
        %1071 = vst.msk [vmem:[%s1063 + $0x71] sm:$0xff] %vm531, %v1053
      $region60: #{conv_next_block.3} parent=47 // pred_fallthru
        _
      %v1072 = vld [vmem:[%s5] sm:$0xff]
      %v1073 = vld [vmem:[%s5 + $0x8] sm:$0xff]
      %v1074 = vld [vmem:[%s5 + $0x10] sm:$0xff]
      %v1075 = vld [vmem:[%s5 + $0x18] sm:$0x7]
      %v1076 = vld [vmem:[#allocation2] sm:$0xff]
      %v1077 = vld [vmem:[#allocation2 + $0x10] sm:$0xff]
      %v1078 = vld [vmem:[#allocation2 + $0x20] sm:$0xff]
      %v1079 = vld [vmem:[#allocation2 + $0x30] sm:$0xff]
      %v1080 = vld [vmem:[#allocation2 + $0x40] sm:$0xff]
      %v1081 = vld [vmem:[#allocation2 + $0x50] sm:$0xff]
      %v1082 = vld [vmem:[#allocation2 + $0x60] sm:$0xff]
      %v1083 = vld [vmem:[#allocation2 + $0x70] sm:$0xff]
      %v1084 = vlaneseq
      %v1085 = vshrl.u32 %v1084, 7
      %v1086 = vsub.s32 0, %v1085
      %v1087 = vrot.slane %v1072, %v1086
      %v1088 = vmul.f32 %v1076, %v1087
      %v1089 = vmul.f32 %v1077, %v1087
      %v1090 = vmul.f32 %v1078, %v1087
      %v1091 = vmul.f32 %v1079, %v1087
      %v1092 = vmul.f32 %v1080, %v1087
      %v1093 = vmul.f32 %v1081, %v1087
      %v1094 = vmul.f32 %v1082, %v1087
      %v1095 = vmul.f32 %v1083, %v1087
      %v1096 = vadd.f32 %v1088, 0.0
      %v1097 = vadd.f32 %v1089, 0.0
      %v1098 = vadd.f32 %v1090, 0.0
      %v1099 = vadd.f32 %v1091, 0.0
      %v1100 = vadd.f32 %v1092, 0.0
      %v1101 = vadd.f32 %v1093, 0.0
      %v1102 = vadd.f32 %v1094, 0.0
      %v1103 = vadd.f32 %v1095, 0.0
      %v1104 = vld [vmem:[#allocation2 + $0x1] sm:$0xff]
      %v1105 = vld [vmem:[#allocation2 + $0x11] sm:$0xff]
      %v1106 = vld [vmem:[#allocation2 + $0x21] sm:$0xff]
      %v1107 = vld [vmem:[#allocation2 + $0x31] sm:$0xff]
      %v1108 = vld [vmem:[#allocation2 + $0x41] sm:$0xff]
      %v1109 = vld [vmem:[#allocation2 + $0x51] sm:$0xff]
      %v1110 = vld [vmem:[#allocation2 + $0x61] sm:$0xff]
      %v1111 = vld [vmem:[#allocation2 + $0x71] sm:$0xff]
      %v1112 = vlaneseq
      %v1113 = vshrl.u32 %v1112, 7
      %v1114 = vsub.s32 1, %v1113
      %v1115 = vrot.slane %v1072, %v1114
      %v1116 = vmul.f32 %v1104, %v1115
      %v1117 = vmul.f32 %v1105, %v1115
      %v1118 = vmul.f32 %v1106, %v1115
      %v1119 = vmul.f32 %v1107, %v1115
      %v1120 = vmul.f32 %v1108, %v1115
      %v1121 = vmul.f32 %v1109, %v1115
      %v1122 = vmul.f32 %v1110, %v1115
      %v1123 = vmul.f32 %v1111, %v1115
      %v1124 = vadd.f32 %v1096, %v1116
      %v1125 = vadd.f32 %v1097, %v1117
      %v1126 = vadd.f32 %v1098, %v1118
      %v1127 = vadd.f32 %v1099, %v1119
      %v1128 = vadd.f32 %v1100, %v1120
      %v1129 = vadd.f32 %v1101, %v1121
      %v1130 = vadd.f32 %v1102, %v1122
      %v1131 = vadd.f32 %v1103, %v1123
      %v1132 = vld [vmem:[#allocation2 + $0x2] sm:$0xff]
      %v1133 = vld [vmem:[#allocation2 + $0x12] sm:$0xff]
      %v1134 = vld [vmem:[#allocation2 + $0x22] sm:$0xff]
      %v1135 = vld [vmem:[#allocation2 + $0x32] sm:$0xff]
      %v1136 = vld [vmem:[#allocation2 + $0x42] sm:$0xff]
      %v1137 = vld [vmem:[#allocation2 + $0x52] sm:$0xff]
      %v1138 = vld [vmem:[#allocation2 + $0x62] sm:$0xff]
      %v1139 = vld [vmem:[#allocation2 + $0x72] sm:$0xff]
      %v1140 = vlaneseq
      %v1141 = vshrl.u32 %v1140, 7
      %v1142 = vsub.s32 2, %v1141
      %v1143 = vrot.slane %v1072, %v1142
      %v1144 = vmul.f32 %v1132, %v1143
      %v1145 = vmul.f32 %v1133, %v1143
      %v1146 = vmul.f32 %v1134, %v1143
      %v1147 = vmul.f32 %v1135, %v1143
      %v1148 = vmul.f32 %v1136, %v1143
      %v1149 = vmul.f32 %v1137, %v1143
      %v1150 = vmul.f32 %v1138, %v1143
      %v1151 = vmul.f32 %v1139, %v1143
      %v1152 = vadd.f32 %v1124, %v1144
      %v1153 = vadd.f32 %v1125, %v1145
      %v1154 = vadd.f32 %v1126, %v1146
      %v1155 = vadd.f32 %v1127, %v1147
      %v1156 = vadd.f32 %v1128, %v1148
      %v1157 = vadd.f32 %v1129, %v1149
      %v1158 = vadd.f32 %v1130, %v1150
      %v1159 = vadd.f32 %v1131, %v1151
      %s1160 = scalar_lea.vmem [#allocation2], 16
      %v1161 = vld [vmem:[%s1160] sm:$0xff]
      %v1162 = vld [vmem:[%s1160 + $0x10] sm:$0xff]
      %v1163 = vld [vmem:[%s1160 + $0x20] sm:$0xff]
      %v1164 = vld [vmem:[%s1160 + $0x30] sm:$0xff]
      %v1165 = vld [vmem:[%s1160 + $0x40] sm:$0xff]
      %v1166 = vld [vmem:[%s1160 + $0x50] sm:$0xff]
      %v1167 = vld [vmem:[%s1160 + $0x60] sm:$0xff]
      %v1168 = vld [vmem:[%s1160 + $0x70] sm:$0xff]
      %v1169 = vlaneseq
      %v1170 = vshrl.u32 %v1169, 7
      %v1171 = vsub.s32 3, %v1170
      %v1172 = vrot.slane %v1072, %v1171
      %v1173 = vmul.f32 %v1161, %v1172
      %v1174 = vmul.f32 %v1162, %v1172
      %v1175 = vmul.f32 %v1163, %v1172
      %v1176 = vmul.f32 %v1164, %v1172
      %v1177 = vmul.f32 %v1165, %v1172
      %v1178 = vmul.f32 %v1166, %v1172
      %v1179 = vmul.f32 %v1167, %v1172
      %v1180 = vmul.f32 %v1168, %v1172
      %v1181 = vadd.f32 %v1152, %v1173
      %v1182 = vadd.f32 %v1153, %v1174
      %v1183 = vadd.f32 %v1154, %v1175
      %v1184 = vadd.f32 %v1155, %v1176
      %v1185 = vadd.f32 %v1156, %v1177
      %v1186 = vadd.f32 %v1157, %v1178
      %v1187 = vadd.f32 %v1158, %v1179
      %v1188 = vadd.f32 %v1159, %v1180
      %v1189 = vld [vmem:[%s1160 + $0x1] sm:$0xff]
      %v1190 = vld [vmem:[%s1160 + $0x11] sm:$0xff]
      %v1191 = vld [vmem:[%s1160 + $0x21] sm:$0xff]
      %v1192 = vld [vmem:[%s1160 + $0x31] sm:$0xff]
      %v1193 = vld [vmem:[%s1160 + $0x41] sm:$0xff]
      %v1194 = vld [vmem:[%s1160 + $0x51] sm:$0xff]
      %v1195 = vld [vmem:[%s1160 + $0x61] sm:$0xff]
      %v1196 = vld [vmem:[%s1160 + $0x71] sm:$0xff]
      %v1197 = vlaneseq
      %v1198 = vshrl.u32 %v1197, 7
      %v1199 = vsub.s32 4, %v1198
      %v1200 = vrot.slane %v1072, %v1199
      %v1201 = vmul.f32 %v1189, %v1200
      %v1202 = vmul.f32 %v1190, %v1200
      %v1203 = vmul.f32 %v1191, %v1200
      %v1204 = vmul.f32 %v1192, %v1200
      %v1205 = vmul.f32 %v1193, %v1200
      %v1206 = vmul.f32 %v1194, %v1200
      %v1207 = vmul.f32 %v1195, %v1200
      %v1208 = vmul.f32 %v1196, %v1200
      %v1209 = vadd.f32 %v1181, %v1201
      %v1210 = vadd.f32 %v1182, %v1202
      %v1211 = vadd.f32 %v1183, %v1203
      %v1212 = vadd.f32 %v1184, %v1204
      %v1213 = vadd.f32 %v1185, %v1205
      %v1214 = vadd.f32 %v1186, %v1206
      %v1215 = vadd.f32 %v1187, %v1207
      %v1216 = vadd.f32 %v1188, %v1208
      %v1217 = vld [vmem:[%s1160 + $0x2] sm:$0xff]
      %v1218 = vld [vmem:[%s1160 + $0x12] sm:$0xff]
      %v1219 = vld [vmem:[%s1160 + $0x22] sm:$0xff]
      %v1220 = vld [vmem:[%s1160 + $0x32] sm:$0xff]
      %v1221 = vld [vmem:[%s1160 + $0x42] sm:$0xff]
      %v1222 = vld [vmem:[%s1160 + $0x52] sm:$0xff]
      %v1223 = vld [vmem:[%s1160 + $0x62] sm:$0xff]
      %v1224 = vld [vmem:[%s1160 + $0x72] sm:$0xff]
      %v1225 = vlaneseq
      %v1226 = vshrl.u32 %v1225, 7
      %v1227 = vsub.s32 5, %v1226
      %v1228 = vrot.slane %v1072, %v1227
      %v1229 = vmul.f32 %v1217, %v1228
      %v1230 = vmul.f32 %v1218, %v1228
      %v1231 = vmul.f32 %v1219, %v1228
      %v1232 = vmul.f32 %v1220, %v1228
      %v1233 = vmul.f32 %v1221, %v1228
      %v1234 = vmul.f32 %v1222, %v1228
      %v1235 = vmul.f32 %v1223, %v1228
      %v1236 = vmul.f32 %v1224, %v1228
      %v1237 = vadd.f32 %v1209, %v1229
      %v1238 = vadd.f32 %v1210, %v1230
      %v1239 = vadd.f32 %v1211, %v1231
      %v1240 = vadd.f32 %v1212, %v1232
      %v1241 = vadd.f32 %v1213, %v1233
      %v1242 = vadd.f32 %v1214, %v1234
      %v1243 = vadd.f32 %v1215, %v1235
      %v1244 = vadd.f32 %v1216, %v1236
      %s1245 = scalar_lea.vmem [#allocation2], 32
      %v1246 = vld [vmem:[%s1245] sm:$0xff]
      %v1247 = vld [vmem:[%s1245 + $0x10] sm:$0xff]
      %v1248 = vld [vmem:[%s1245 + $0x20] sm:$0xff]
      %v1249 = vld [vmem:[%s1245 + $0x30] sm:$0xff]
      %v1250 = vld [vmem:[%s1245 + $0x40] sm:$0xff]
      %v1251 = vld [vmem:[%s1245 + $0x50] sm:$0xff]
      %v1252 = vld [vmem:[%s1245 + $0x60] sm:$0xff]
      %v1253 = vld [vmem:[%s1245 + $0x70] sm:$0xff]
      %v1254 = vlaneseq
      %v1255 = vshrl.u32 %v1254, 7
      %v1256 = vsub.s32 6, %v1255
      %v1257 = vrot.slane %v1072, %v1256
      %v1258 = vmul.f32 %v1246, %v1257
      %v1259 = vmul.f32 %v1247, %v1257
      %v1260 = vmul.f32 %v1248, %v1257
      %v1261 = vmul.f32 %v1249, %v1257
      %v1262 = vmul.f32 %v1250, %v1257
      %v1263 = vmul.f32 %v1251, %v1257
      %v1264 = vmul.f32 %v1252, %v1257
      %v1265 = vmul.f32 %v1253, %v1257
      %v1266 = vadd.f32 %v1237, %v1258
      %v1267 = vadd.f32 %v1238, %v1259
      %v1268 = vadd.f32 %v1239, %v1260
      %v1269 = vadd.f32 %v1240, %v1261
      %v1270 = vadd.f32 %v1241, %v1262
      %v1271 = vadd.f32 %v1242, %v1263
      %v1272 = vadd.f32 %v1243, %v1264
      %v1273 = vadd.f32 %v1244, %v1265
      %v1274 = vld [vmem:[%s1245 + $0x1] sm:$0xff]
      %v1275 = vld [vmem:[%s1245 + $0x11] sm:$0xff]
      %v1276 = vld [vmem:[%s1245 + $0x21] sm:$0xff]
      %v1277 = vld [vmem:[%s1245 + $0x31] sm:$0xff]
      %v1278 = vld [vmem:[%s1245 + $0x41] sm:$0xff]
      %v1279 = vld [vmem:[%s1245 + $0x51] sm:$0xff]
      %v1280 = vld [vmem:[%s1245 + $0x61] sm:$0xff]
      %v1281 = vld [vmem:[%s1245 + $0x71] sm:$0xff]
      %v1282 = vlaneseq
      %v1283 = vshrl.u32 %v1282, 7
      %v1284 = vsub.s32 7, %v1283
      %v1285 = vrot.slane %v1072, %v1284
      %v1286 = vmul.f32 %v1274, %v1285
      %v1287 = vmul.f32 %v1275, %v1285
      %v1288 = vmul.f32 %v1276, %v1285
      %v1289 = vmul.f32 %v1277, %v1285
      %v1290 = vmul.f32 %v1278, %v1285
      %v1291 = vmul.f32 %v1279, %v1285
      %v1292 = vmul.f32 %v1280, %v1285
      %v1293 = vmul.f32 %v1281, %v1285
      %v1294 = vadd.f32 %v1266, %v1286
      %v1295 = vadd.f32 %v1267, %v1287
      %v1296 = vadd.f32 %v1268, %v1288
      %v1297 = vadd.f32 %v1269, %v1289
      %v1298 = vadd.f32 %v1270, %v1290
      %v1299 = vadd.f32 %v1271, %v1291
      %v1300 = vadd.f32 %v1272, %v1292
      %v1301 = vadd.f32 %v1273, %v1293
      %v1302 = vld [vmem:[%s1245 + $0x2] sm:$0xff]
      %v1303 = vld [vmem:[%s1245 + $0x12] sm:$0xff]
      %v1304 = vld [vmem:[%s1245 + $0x22] sm:$0xff]
      %v1305 = vld [vmem:[%s1245 + $0x32] sm:$0xff]
      %v1306 = vld [vmem:[%s1245 + $0x42] sm:$0xff]
      %v1307 = vld [vmem:[%s1245 + $0x52] sm:$0xff]
      %v1308 = vld [vmem:[%s1245 + $0x62] sm:$0xff]
      %v1309 = vld [vmem:[%s1245 + $0x72] sm:$0xff]
      %v1310 = vlaneseq
      %v1311 = vshrl.u32 %v1310, 7
      %v1312 = vsub.s32 0, %v1311
      %v1313 = vrot.slane %v1073, %v1312
      %v1314 = vmul.f32 %v1302, %v1313
      %v1315 = vmul.f32 %v1303, %v1313
      %v1316 = vmul.f32 %v1304, %v1313
      %v1317 = vmul.f32 %v1305, %v1313
      %v1318 = vmul.f32 %v1306, %v1313
      %v1319 = vmul.f32 %v1307, %v1313
      %v1320 = vmul.f32 %v1308, %v1313
      %v1321 = vmul.f32 %v1309, %v1313
      %v1322 = vadd.f32 %v1294, %v1314
      %v1323 = vadd.f32 %v1295, %v1315
      %v1324 = vadd.f32 %v1296, %v1316
      %v1325 = vadd.f32 %v1297, %v1317
      %v1326 = vadd.f32 %v1298, %v1318
      %v1327 = vadd.f32 %v1299, %v1319
      %v1328 = vadd.f32 %v1300, %v1320
      %v1329 = vadd.f32 %v1301, %v1321
      %s1330 = scalar_lea.vmem [#allocation2], 160
      %v1331 = vld [vmem:[%s1330] sm:$0xff]
      %v1332 = vld [vmem:[%s1330 + $0x10] sm:$0xff]
      %v1333 = vld [vmem:[%s1330 + $0x20] sm:$0xff]
      %v1334 = vld [vmem:[%s1330 + $0x30] sm:$0xff]
      %v1335 = vld [vmem:[%s1330 + $0x40] sm:$0xff]
      %v1336 = vld [vmem:[%s1330 + $0x50] sm:$0xff]
      %v1337 = vld [vmem:[%s1330 + $0x60] sm:$0xff]
      %v1338 = vld [vmem:[%s1330 + $0x70] sm:$0xff]
      %v1339 = vlaneseq
      %v1340 = vshrl.u32 %v1339, 7
      %v1341 = vsub.s32 1, %v1340
      %v1342 = vrot.slane %v1073, %v1341
      %v1343 = vmul.f32 %v1331, %v1342
      %v1344 = vmul.f32 %v1332, %v1342
      %v1345 = vmul.f32 %v1333, %v1342
      %v1346 = vmul.f32 %v1334, %v1342
      %v1347 = vmul.f32 %v1335, %v1342
      %v1348 = vmul.f32 %v1336, %v1342
      %v1349 = vmul.f32 %v1337, %v1342
      %v1350 = vmul.f32 %v1338, %v1342
      %v1351 = vadd.f32 %v1322, %v1343
      %v1352 = vadd.f32 %v1323, %v1344
      %v1353 = vadd.f32 %v1324, %v1345
      %v1354 = vadd.f32 %v1325, %v1346
      %v1355 = vadd.f32 %v1326, %v1347
      %v1356 = vadd.f32 %v1327, %v1348
      %v1357 = vadd.f32 %v1328, %v1349
      %v1358 = vadd.f32 %v1329, %v1350
      %v1359 = vld [vmem:[%s1330 + $0x1] sm:$0xff]
      %v1360 = vld [vmem:[%s1330 + $0x11] sm:$0xff]
      %v1361 = vld [vmem:[%s1330 + $0x21] sm:$0xff]
      %v1362 = vld [vmem:[%s1330 + $0x31] sm:$0xff]
      %v1363 = vld [vmem:[%s1330 + $0x41] sm:$0xff]
      %v1364 = vld [vmem:[%s1330 + $0x51] sm:$0xff]
      %v1365 = vld [vmem:[%s1330 + $0x61] sm:$0xff]
      %v1366 = vld [vmem:[%s1330 + $0x71] sm:$0xff]
      %v1367 = vlaneseq
      %v1368 = vshrl.u32 %v1367, 7
      %v1369 = vsub.s32 2, %v1368
      %v1370 = vrot.slane %v1073, %v1369
      %v1371 = vmul.f32 %v1359, %v1370
      %v1372 = vmul.f32 %v1360, %v1370
      %v1373 = vmul.f32 %v1361, %v1370
      %v1374 = vmul.f32 %v1362, %v1370
      %v1375 = vmul.f32 %v1363, %v1370
      %v1376 = vmul.f32 %v1364, %v1370
      %v1377 = vmul.f32 %v1365, %v1370
      %v1378 = vmul.f32 %v1366, %v1370
      %v1379 = vadd.f32 %v1351, %v1371
      %v1380 = vadd.f32 %v1352, %v1372
      %v1381 = vadd.f32 %v1353, %v1373
      %v1382 = vadd.f32 %v1354, %v1374
      %v1383 = vadd.f32 %v1355, %v1375
      %v1384 = vadd.f32 %v1356, %v1376
      %v1385 = vadd.f32 %v1357, %v1377
      %v1386 = vadd.f32 %v1358, %v1378
      %v1387 = vld [vmem:[%s1330 + $0x2] sm:$0xff]
      %v1388 = vld [vmem:[%s1330 + $0x12] sm:$0xff]
      %v1389 = vld [vmem:[%s1330 + $0x22] sm:$0xff]
      %v1390 = vld [vmem:[%s1330 + $0x32] sm:$0xff]
      %v1391 = vld [vmem:[%s1330 + $0x42] sm:$0xff]
      %v1392 = vld [vmem:[%s1330 + $0x52] sm:$0xff]
      %v1393 = vld [vmem:[%s1330 + $0x62] sm:$0xff]
      %v1394 = vld [vmem:[%s1330 + $0x72] sm:$0xff]
      %v1395 = vlaneseq
      %v1396 = vshrl.u32 %v1395, 7
      %v1397 = vsub.s32 3, %v1396
      %v1398 = vrot.slane %v1073, %v1397
      %v1399 = vmul.f32 %v1387, %v1398
      %v1400 = vmul.f32 %v1388, %v1398
      %v1401 = vmul.f32 %v1389, %v1398
      %v1402 = vmul.f32 %v1390, %v1398
      %v1403 = vmul.f32 %v1391, %v1398
      %v1404 = vmul.f32 %v1392, %v1398
      %v1405 = vmul.f32 %v1393, %v1398
      %v1406 = vmul.f32 %v1394, %v1398
      %v1407 = vadd.f32 %v1379, %v1399
      %v1408 = vadd.f32 %v1380, %v1400
      %v1409 = vadd.f32 %v1381, %v1401
      %v1410 = vadd.f32 %v1382, %v1402
      %v1411 = vadd.f32 %v1383, %v1403
      %v1412 = vadd.f32 %v1384, %v1404
      %v1413 = vadd.f32 %v1385, %v1405
      %v1414 = vadd.f32 %v1386, %v1406
      %s1415 = scalar_lea.vmem [#allocation2], 176
      %v1416 = vld [vmem:[%s1415] sm:$0xff]
      %v1417 = vld [vmem:[%s1415 + $0x10] sm:$0xff]
      %v1418 = vld [vmem:[%s1415 + $0x20] sm:$0xff]
      %v1419 = vld [vmem:[%s1415 + $0x30] sm:$0xff]
      %v1420 = vld [vmem:[%s1415 + $0x40] sm:$0xff]
      %v1421 = vld [vmem:[%s1415 + $0x50] sm:$0xff]
      %v1422 = vld [vmem:[%s1415 + $0x60] sm:$0xff]
      %v1423 = vld [vmem:[%s1415 + $0x70] sm:$0xff]
      %v1424 = vlaneseq
      %v1425 = vshrl.u32 %v1424, 7
      %v1426 = vsub.s32 4, %v1425
      %v1427 = vrot.slane %v1073, %v1426
      %v1428 = vmul.f32 %v1416, %v1427
      %v1429 = vmul.f32 %v1417, %v1427
      %v1430 = vmul.f32 %v1418, %v1427
      %v1431 = vmul.f32 %v1419, %v1427
      %v1432 = vmul.f32 %v1420, %v1427
      %v1433 = vmul.f32 %v1421, %v1427
      %v1434 = vmul.f32 %v1422, %v1427
      %v1435 = vmul.f32 %v1423, %v1427
      %v1436 = vadd.f32 %v1407, %v1428
      %v1437 = vadd.f32 %v1408, %v1429
      %v1438 = vadd.f32 %v1409, %v1430
      %v1439 = vadd.f32 %v1410, %v1431
      %v1440 = vadd.f32 %v1411, %v1432
      %v1441 = vadd.f32 %v1412, %v1433
      %v1442 = vadd.f32 %v1413, %v1434
      %v1443 = vadd.f32 %v1414, %v1435
      %v1444 = vld [vmem:[%s1415 + $0x1] sm:$0xff]
      %v1445 = vld [vmem:[%s1415 + $0x11] sm:$0xff]
      %v1446 = vld [vmem:[%s1415 + $0x21] sm:$0xff]
      %v1447 = vld [vmem:[%s1415 + $0x31] sm:$0xff]
      %v1448 = vld [vmem:[%s1415 + $0x41] sm:$0xff]
      %v1449 = vld [vmem:[%s1415 + $0x51] sm:$0xff]
      %v1450 = vld [vmem:[%s1415 + $0x61] sm:$0xff]
      %v1451 = vld [vmem:[%s1415 + $0x71] sm:$0xff]
      %v1452 = vlaneseq
      %v1453 = vshrl.u32 %v1452, 7
      %v1454 = vsub.s32 5, %v1453
      %v1455 = vrot.slane %v1073, %v1454
      %v1456 = vmul.f32 %v1444, %v1455
      %v1457 = vmul.f32 %v1445, %v1455
      %v1458 = vmul.f32 %v1446, %v1455
      %v1459 = vmul.f32 %v1447, %v1455
      %v1460 = vmul.f32 %v1448, %v1455
      %v1461 = vmul.f32 %v1449, %v1455
      %v1462 = vmul.f32 %v1450, %v1455
      %v1463 = vmul.f32 %v1451, %v1455
      %v1464 = vadd.f32 %v1436, %v1456
      %v1465 = vadd.f32 %v1437, %v1457
      %v1466 = vadd.f32 %v1438, %v1458
      %v1467 = vadd.f32 %v1439, %v1459
      %v1468 = vadd.f32 %v1440, %v1460
      %v1469 = vadd.f32 %v1441, %v1461
      %v1470 = vadd.f32 %v1442, %v1462
      %v1471 = vadd.f32 %v1443, %v1463
      %v1472 = vld [vmem:[%s1415 + $0x2] sm:$0xff]
      %v1473 = vld [vmem:[%s1415 + $0x12] sm:$0xff]
      %v1474 = vld [vmem:[%s1415 + $0x22] sm:$0xff]
      %v1475 = vld [vmem:[%s1415 + $0x32] sm:$0xff]
      %v1476 = vld [vmem:[%s1415 + $0x42] sm:$0xff]
      %v1477 = vld [vmem:[%s1415 + $0x52] sm:$0xff]
      %v1478 = vld [vmem:[%s1415 + $0x62] sm:$0xff]
      %v1479 = vld [vmem:[%s1415 + $0x72] sm:$0xff]
      %v1480 = vlaneseq
      %v1481 = vshrl.u32 %v1480, 7
      %v1482 = vsub.s32 6, %v1481
      %v1483 = vrot.slane %v1073, %v1482
      %v1484 = vmul.f32 %v1472, %v1483
      %v1485 = vmul.f32 %v1473, %v1483
      %v1486 = vmul.f32 %v1474, %v1483
      %v1487 = vmul.f32 %v1475, %v1483
      %v1488 = vmul.f32 %v1476, %v1483
      %v1489 = vmul.f32 %v1477, %v1483
      %v1490 = vmul.f32 %v1478, %v1483
      %v1491 = vmul.f32 %v1479, %v1483
      %v1492 = vadd.f32 %v1464, %v1484
      %v1493 = vadd.f32 %v1465, %v1485
      %v1494 = vadd.f32 %v1466, %v1486
      %v1495 = vadd.f32 %v1467, %v1487
      %v1496 = vadd.f32 %v1468, %v1488
      %v1497 = vadd.f32 %v1469, %v1489
      %v1498 = vadd.f32 %v1470, %v1490
      %v1499 = vadd.f32 %v1471, %v1491
      %s1500 = scalar_lea.vmem [#allocation2], 192
      %v1501 = vld [vmem:[%s1500] sm:$0xff]
      %v1502 = vld [vmem:[%s1500 + $0x10] sm:$0xff]
      %v1503 = vld [vmem:[%s1500 + $0x20] sm:$0xff]
      %v1504 = vld [vmem:[%s1500 + $0x30] sm:$0xff]
      %v1505 = vld [vmem:[%s1500 + $0x40] sm:$0xff]
      %v1506 = vld [vmem:[%s1500 + $0x50] sm:$0xff]
      %v1507 = vld [vmem:[%s1500 + $0x60] sm:$0xff]
      %v1508 = vld [vmem:[%s1500 + $0x70] sm:$0xff]
      %v1509 = vlaneseq
      %v1510 = vshrl.u32 %v1509, 7
      %v1511 = vsub.s32 7, %v1510
      %v1512 = vrot.slane %v1073, %v1511
      %v1513 = vmul.f32 %v1501, %v1512
      %v1514 = vmul.f32 %v1502, %v1512
      %v1515 = vmul.f32 %v1503, %v1512
      %v1516 = vmul.f32 %v1504, %v1512
      %v1517 = vmul.f32 %v1505, %v1512
      %v1518 = vmul.f32 %v1506, %v1512
      %v1519 = vmul.f32 %v1507, %v1512
      %v1520 = vmul.f32 %v1508, %v1512
      %v1521 = vadd.f32 %v1492, %v1513
      %v1522 = vadd.f32 %v1493, %v1514
      %v1523 = vadd.f32 %v1494, %v1515
      %v1524 = vadd.f32 %v1495, %v1516
      %v1525 = vadd.f32 %v1496, %v1517
      %v1526 = vadd.f32 %v1497, %v1518
      %v1527 = vadd.f32 %v1498, %v1519
      %v1528 = vadd.f32 %v1499, %v1520
      %v1529 = vld [vmem:[%s1500 + $0x1] sm:$0xff]
      %v1530 = vld [vmem:[%s1500 + $0x11] sm:$0xff]
      %v1531 = vld [vmem:[%s1500 + $0x21] sm:$0xff]
      %v1532 = vld [vmem:[%s1500 + $0x31] sm:$0xff]
      %v1533 = vld [vmem:[%s1500 + $0x41] sm:$0xff]
      %v1534 = vld [vmem:[%s1500 + $0x51] sm:$0xff]
      %v1535 = vld [vmem:[%s1500 + $0x61] sm:$0xff]
      %v1536 = vld [vmem:[%s1500 + $0x71] sm:$0xff]
      %v1537 = vlaneseq
      %v1538 = vshrl.u32 %v1537, 7
      %v1539 = vsub.s32 0, %v1538
      %v1540 = vrot.slane %v1074, %v1539
      %v1541 = vmul.f32 %v1529, %v1540
      %v1542 = vmul.f32 %v1530, %v1540
      %v1543 = vmul.f32 %v1531, %v1540
      %v1544 = vmul.f32 %v1532, %v1540
      %v1545 = vmul.f32 %v1533, %v1540
      %v1546 = vmul.f32 %v1534, %v1540
      %v1547 = vmul.f32 %v1535, %v1540
      %v1548 = vmul.f32 %v1536, %v1540
      %v1549 = vadd.f32 %v1521, %v1541
      %v1550 = vadd.f32 %v1522, %v1542
      %v1551 = vadd.f32 %v1523, %v1543
      %v1552 = vadd.f32 %v1524, %v1544
      %v1553 = vadd.f32 %v1525, %v1545
      %v1554 = vadd.f32 %v1526, %v1546
      %v1555 = vadd.f32 %v1527, %v1547
      %v1556 = vadd.f32 %v1528, %v1548
      %v1557 = vld [vmem:[%s1500 + $0x2] sm:$0xff]
      %v1558 = vld [vmem:[%s1500 + $0x12] sm:$0xff]
      %v1559 = vld [vmem:[%s1500 + $0x22] sm:$0xff]
      %v1560 = vld [vmem:[%s1500 + $0x32] sm:$0xff]
      %v1561 = vld [vmem:[%s1500 + $0x42] sm:$0xff]
      %v1562 = vld [vmem:[%s1500 + $0x52] sm:$0xff]
      %v1563 = vld [vmem:[%s1500 + $0x62] sm:$0xff]
      %v1564 = vld [vmem:[%s1500 + $0x72] sm:$0xff]
      %v1565 = vlaneseq
      %v1566 = vshrl.u32 %v1565, 7
      %v1567 = vsub.s32 1, %v1566
      %v1568 = vrot.slane %v1074, %v1567
      %v1569 = vmul.f32 %v1557, %v1568
      %v1570 = vmul.f32 %v1558, %v1568
      %v1571 = vmul.f32 %v1559, %v1568
      %v1572 = vmul.f32 %v1560, %v1568
      %v1573 = vmul.f32 %v1561, %v1568
      %v1574 = vmul.f32 %v1562, %v1568
      %v1575 = vmul.f32 %v1563, %v1568
      %v1576 = vmul.f32 %v1564, %v1568
      %v1577 = vadd.f32 %v1549, %v1569
      %v1578 = vadd.f32 %v1550, %v1570
      %v1579 = vadd.f32 %v1551, %v1571
      %v1580 = vadd.f32 %v1552, %v1572
      %v1581 = vadd.f32 %v1553, %v1573
      %v1582 = vadd.f32 %v1554, %v1574
      %v1583 = vadd.f32 %v1555, %v1575
      %v1584 = vadd.f32 %v1556, %v1576
      %s1585 = scalar_lea.vmem [#allocation2], 320
      %v1586 = vld [vmem:[%s1585] sm:$0xff]
      %v1587 = vld [vmem:[%s1585 + $0x10] sm:$0xff]
      %v1588 = vld [vmem:[%s1585 + $0x20] sm:$0xff]
      %v1589 = vld [vmem:[%s1585 + $0x30] sm:$0xff]
      %v1590 = vld [vmem:[%s1585 + $0x40] sm:$0xff]
      %v1591 = vld [vmem:[%s1585 + $0x50] sm:$0xff]
      %v1592 = vld [vmem:[%s1585 + $0x60] sm:$0xff]
      %v1593 = vld [vmem:[%s1585 + $0x70] sm:$0xff]
      %v1594 = vlaneseq
      %v1595 = vshrl.u32 %v1594, 7
      %v1596 = vsub.s32 2, %v1595
      %v1597 = vrot.slane %v1074, %v1596
      %v1598 = vmul.f32 %v1586, %v1597
      %v1599 = vmul.f32 %v1587, %v1597
      %v1600 = vmul.f32 %v1588, %v1597
      %v1601 = vmul.f32 %v1589, %v1597
      %v1602 = vmul.f32 %v1590, %v1597
      %v1603 = vmul.f32 %v1591, %v1597
      %v1604 = vmul.f32 %v1592, %v1597
      %v1605 = vmul.f32 %v1593, %v1597
      %v1606 = vadd.f32 %v1577, %v1598
      %v1607 = vadd.f32 %v1578, %v1599
      %v1608 = vadd.f32 %v1579, %v1600
      %v1609 = vadd.f32 %v1580, %v1601
      %v1610 = vadd.f32 %v1581, %v1602
      %v1611 = vadd.f32 %v1582, %v1603
      %v1612 = vadd.f32 %v1583, %v1604
      %v1613 = vadd.f32 %v1584, %v1605
      %v1614 = vld [vmem:[%s1585 + $0x1] sm:$0xff]
      %v1615 = vld [vmem:[%s1585 + $0x11] sm:$0xff]
      %v1616 = vld [vmem:[%s1585 + $0x21] sm:$0xff]
      %v1617 = vld [vmem:[%s1585 + $0x31] sm:$0xff]
      %v1618 = vld [vmem:[%s1585 + $0x41] sm:$0xff]
      %v1619 = vld [vmem:[%s1585 + $0x51] sm:$0xff]
      %v1620 = vld [vmem:[%s1585 + $0x61] sm:$0xff]
      %v1621 = vld [vmem:[%s1585 + $0x71] sm:$0xff]
      %v1622 = vlaneseq
      %v1623 = vshrl.u32 %v1622, 7
      %v1624 = vsub.s32 3, %v1623
      %v1625 = vrot.slane %v1074, %v1624
      %v1626 = vmul.f32 %v1614, %v1625
      %v1627 = vmul.f32 %v1615, %v1625
      %v1628 = vmul.f32 %v1616, %v1625
      %v1629 = vmul.f32 %v1617, %v1625
      %v1630 = vmul.f32 %v1618, %v1625
      %v1631 = vmul.f32 %v1619, %v1625
      %v1632 = vmul.f32 %v1620, %v1625
      %v1633 = vmul.f32 %v1621, %v1625
      %v1634 = vadd.f32 %v1606, %v1626
      %v1635 = vadd.f32 %v1607, %v1627
      %v1636 = vadd.f32 %v1608, %v1628
      %v1637 = vadd.f32 %v1609, %v1629
      %v1638 = vadd.f32 %v1610, %v1630
      %v1639 = vadd.f32 %v1611, %v1631
      %v1640 = vadd.f32 %v1612, %v1632
      %v1641 = vadd.f32 %v1613, %v1633
      %v1642 = vld [vmem:[%s1585 + $0x2] sm:$0xff]
      %v1643 = vld [vmem:[%s1585 + $0x12] sm:$0xff]
      %v1644 = vld [vmem:[%s1585 + $0x22] sm:$0xff]
      %v1645 = vld [vmem:[%s1585 + $0x32] sm:$0xff]
      %v1646 = vld [vmem:[%s1585 + $0x42] sm:$0xff]
      %v1647 = vld [vmem:[%s1585 + $0x52] sm:$0xff]
      %v1648 = vld [vmem:[%s1585 + $0x62] sm:$0xff]
      %v1649 = vld [vmem:[%s1585 + $0x72] sm:$0xff]
      %v1650 = vlaneseq
      %v1651 = vshrl.u32 %v1650, 7
      %v1652 = vsub.s32 4, %v1651
      %v1653 = vrot.slane %v1074, %v1652
      %v1654 = vmul.f32 %v1642, %v1653
      %v1655 = vmul.f32 %v1643, %v1653
      %v1656 = vmul.f32 %v1644, %v1653
      %v1657 = vmul.f32 %v1645, %v1653
      %v1658 = vmul.f32 %v1646, %v1653
      %v1659 = vmul.f32 %v1647, %v1653
      %v1660 = vmul.f32 %v1648, %v1653
      %v1661 = vmul.f32 %v1649, %v1653
      %v1662 = vadd.f32 %v1634, %v1654
      %v1663 = vadd.f32 %v1635, %v1655
      %v1664 = vadd.f32 %v1636, %v1656
      %v1665 = vadd.f32 %v1637, %v1657
      %v1666 = vadd.f32 %v1638, %v1658
      %v1667 = vadd.f32 %v1639, %v1659
      %v1668 = vadd.f32 %v1640, %v1660
      %v1669 = vadd.f32 %v1641, %v1661
      %s1670 = scalar_lea.vmem [#allocation2], 336
      %v1671 = vld [vmem:[%s1670] sm:$0xff]
      %v1672 = vld [vmem:[%s1670 + $0x10] sm:$0xff]
      %v1673 = vld [vmem:[%s1670 + $0x20] sm:$0xff]
      %v1674 = vld [vmem:[%s1670 + $0x30] sm:$0xff]
      %v1675 = vld [vmem:[%s1670 + $0x40] sm:$0xff]
      %v1676 = vld [vmem:[%s1670 + $0x50] sm:$0xff]
      %v1677 = vld [vmem:[%s1670 + $0x60] sm:$0xff]
      %v1678 = vld [vmem:[%s1670 + $0x70] sm:$0xff]
      %v1679 = vlaneseq
      %v1680 = vshrl.u32 %v1679, 7
      %v1681 = vsub.s32 5, %v1680
      %v1682 = vrot.slane %v1074, %v1681
      %v1683 = vmul.f32 %v1671, %v1682
      %v1684 = vmul.f32 %v1672, %v1682
      %v1685 = vmul.f32 %v1673, %v1682
      %v1686 = vmul.f32 %v1674, %v1682
      %v1687 = vmul.f32 %v1675, %v1682
      %v1688 = vmul.f32 %v1676, %v1682
      %v1689 = vmul.f32 %v1677, %v1682
      %v1690 = vmul.f32 %v1678, %v1682
      %v1691 = vadd.f32 %v1662, %v1683
      %v1692 = vadd.f32 %v1663, %v1684
      %v1693 = vadd.f32 %v1664, %v1685
      %v1694 = vadd.f32 %v1665, %v1686
      %v1695 = vadd.f32 %v1666, %v1687
      %v1696 = vadd.f32 %v1667, %v1688
      %v1697 = vadd.f32 %v1668, %v1689
      %v1698 = vadd.f32 %v1669, %v1690
      %v1699 = vld [vmem:[%s1670 + $0x1] sm:$0xff]
      %v1700 = vld [vmem:[%s1670 + $0x11] sm:$0xff]
      %v1701 = vld [vmem:[%s1670 + $0x21] sm:$0xff]
      %v1702 = vld [vmem:[%s1670 + $0x31] sm:$0xff]
      %v1703 = vld [vmem:[%s1670 + $0x41] sm:$0xff]
      %v1704 = vld [vmem:[%s1670 + $0x51] sm:$0xff]
      %v1705 = vld [vmem:[%s1670 + $0x61] sm:$0xff]
      %v1706 = vld [vmem:[%s1670 + $0x71] sm:$0xff]
      %v1707 = vlaneseq
      %v1708 = vshrl.u32 %v1707, 7
      %v1709 = vsub.s32 6, %v1708
      %v1710 = vrot.slane %v1074, %v1709
      %v1711 = vmul.f32 %v1699, %v1710
      %v1712 = vmul.f32 %v1700, %v1710
      %v1713 = vmul.f32 %v1701, %v1710
      %v1714 = vmul.f32 %v1702, %v1710
      %v1715 = vmul.f32 %v1703, %v1710
      %v1716 = vmul.f32 %v1704, %v1710
      %v1717 = vmul.f32 %v1705, %v1710
      %v1718 = vmul.f32 %v1706, %v1710
      %v1719 = vadd.f32 %v1691, %v1711
      %v1720 = vadd.f32 %v1692, %v1712
      %v1721 = vadd.f32 %v1693, %v1713
      %v1722 = vadd.f32 %v1694, %v1714
      %v1723 = vadd.f32 %v1695, %v1715
      %v1724 = vadd.f32 %v1696, %v1716
      %v1725 = vadd.f32 %v1697, %v1717
      %v1726 = vadd.f32 %v1698, %v1718
      %v1727 = vld [vmem:[%s1670 + $0x2] sm:$0xff]
      %v1728 = vld [vmem:[%s1670 + $0x12] sm:$0xff]
      %v1729 = vld [vmem:[%s1670 + $0x22] sm:$0xff]
      %v1730 = vld [vmem:[%s1670 + $0x32] sm:$0xff]
      %v1731 = vld [vmem:[%s1670 + $0x42] sm:$0xff]
      %v1732 = vld [vmem:[%s1670 + $0x52] sm:$0xff]
      %v1733 = vld [vmem:[%s1670 + $0x62] sm:$0xff]
      %v1734 = vld [vmem:[%s1670 + $0x72] sm:$0xff]
      %v1735 = vlaneseq
      %v1736 = vshrl.u32 %v1735, 7
      %v1737 = vsub.s32 7, %v1736
      %v1738 = vrot.slane %v1074, %v1737
      %v1739 = vmul.f32 %v1727, %v1738
      %v1740 = vmul.f32 %v1728, %v1738
      %v1741 = vmul.f32 %v1729, %v1738
      %v1742 = vmul.f32 %v1730, %v1738
      %v1743 = vmul.f32 %v1731, %v1738
      %v1744 = vmul.f32 %v1732, %v1738
      %v1745 = vmul.f32 %v1733, %v1738
      %v1746 = vmul.f32 %v1734, %v1738
      %v1747 = vadd.f32 %v1719, %v1739
      %v1748 = vadd.f32 %v1720, %v1740
      %v1749 = vadd.f32 %v1721, %v1741
      %v1750 = vadd.f32 %v1722, %v1742
      %v1751 = vadd.f32 %v1723, %v1743
      %v1752 = vadd.f32 %v1724, %v1744
      %v1753 = vadd.f32 %v1725, %v1745
      %v1754 = vadd.f32 %v1726, %v1746
      %s1755 = scalar_lea.vmem [#allocation2], 352
      %v1756 = vld [vmem:[%s1755] sm:$0xff]
      %v1757 = vld [vmem:[%s1755 + $0x10] sm:$0xff]
      %v1758 = vld [vmem:[%s1755 + $0x20] sm:$0xff]
      %v1759 = vld [vmem:[%s1755 + $0x30] sm:$0xff]
      %v1760 = vld [vmem:[%s1755 + $0x40] sm:$0xff]
      %v1761 = vld [vmem:[%s1755 + $0x50] sm:$0xff]
      %v1762 = vld [vmem:[%s1755 + $0x60] sm:$0xff]
      %v1763 = vld [vmem:[%s1755 + $0x70] sm:$0xff]
      %v1764 = vlaneseq
      %v1765 = vshrl.u32 %v1764, 7
      %v1766 = vsub.s32 0, %v1765
      %v1767 = vrot.slane %v1075, %v1766
      %v1768 = vmul.f32 %v1756, %v1767
      %v1769 = vmul.f32 %v1757, %v1767
      %v1770 = vmul.f32 %v1758, %v1767
      %v1771 = vmul.f32 %v1759, %v1767
      %v1772 = vmul.f32 %v1760, %v1767
      %v1773 = vmul.f32 %v1761, %v1767
      %v1774 = vmul.f32 %v1762, %v1767
      %v1775 = vmul.f32 %v1763, %v1767
      %v1776 = vadd.f32 %v1747, %v1768
      %v1777 = vadd.f32 %v1748, %v1769
      %v1778 = vadd.f32 %v1749, %v1770
      %v1779 = vadd.f32 %v1750, %v1771
      %v1780 = vadd.f32 %v1751, %v1772
      %v1781 = vadd.f32 %v1752, %v1773
      %v1782 = vadd.f32 %v1753, %v1774
      %v1783 = vadd.f32 %v1754, %v1775
      %v1784 = vld [vmem:[%s1755 + $0x1] sm:$0xff]
      %v1785 = vld [vmem:[%s1755 + $0x11] sm:$0xff]
      %v1786 = vld [vmem:[%s1755 + $0x21] sm:$0xff]
      %v1787 = vld [vmem:[%s1755 + $0x31] sm:$0xff]
      %v1788 = vld [vmem:[%s1755 + $0x41] sm:$0xff]
      %v1789 = vld [vmem:[%s1755 + $0x51] sm:$0xff]
      %v1790 = vld [vmem:[%s1755 + $0x61] sm:$0xff]
      %v1791 = vld [vmem:[%s1755 + $0x71] sm:$0xff]
      %v1792 = vlaneseq
      %v1793 = vshrl.u32 %v1792, 7
      %v1794 = vsub.s32 1, %v1793
      %v1795 = vrot.slane %v1075, %v1794
      %v1796 = vmul.f32 %v1784, %v1795
      %v1797 = vmul.f32 %v1785, %v1795
      %v1798 = vmul.f32 %v1786, %v1795
      %v1799 = vmul.f32 %v1787, %v1795
      %v1800 = vmul.f32 %v1788, %v1795
      %v1801 = vmul.f32 %v1789, %v1795
      %v1802 = vmul.f32 %v1790, %v1795
      %v1803 = vmul.f32 %v1791, %v1795
      %v1804 = vadd.f32 %v1776, %v1796
      %v1805 = vadd.f32 %v1777, %v1797
      %v1806 = vadd.f32 %v1778, %v1798
      %v1807 = vadd.f32 %v1779, %v1799
      %v1808 = vadd.f32 %v1780, %v1800
      %v1809 = vadd.f32 %v1781, %v1801
      %v1810 = vadd.f32 %v1782, %v1802
      %v1811 = vadd.f32 %v1783, %v1803
      %v1812 = vld [vmem:[%s1755 + $0x2] sm:$0xff]
      %v1813 = vld [vmem:[%s1755 + $0x12] sm:$0xff]
      %v1814 = vld [vmem:[%s1755 + $0x22] sm:$0xff]
      %v1815 = vld [vmem:[%s1755 + $0x32] sm:$0xff]
      %v1816 = vld [vmem:[%s1755 + $0x42] sm:$0xff]
      %v1817 = vld [vmem:[%s1755 + $0x52] sm:$0xff]
      %v1818 = vld [vmem:[%s1755 + $0x62] sm:$0xff]
      %v1819 = vld [vmem:[%s1755 + $0x72] sm:$0xff]
      %v1820 = vlaneseq
      %v1821 = vshrl.u32 %v1820, 7
      %v1822 = vsub.s32 2, %v1821
      %v1823 = vrot.slane %v1075, %v1822
      %v1824 = vmul.f32 %v1812, %v1823
      %v1825 = vmul.f32 %v1813, %v1823
      %v1826 = vmul.f32 %v1814, %v1823
      %v1827 = vmul.f32 %v1815, %v1823
      %v1828 = vmul.f32 %v1816, %v1823
      %v1829 = vmul.f32 %v1817, %v1823
      %v1830 = vmul.f32 %v1818, %v1823
      %v1831 = vmul.f32 %v1819, %v1823
      %v1832 = vadd.f32 %v1804, %v1824
      %v1833 = vadd.f32 %v1805, %v1825
      %v1834 = vadd.f32 %v1806, %v1826
      %v1835 = vadd.f32 %v1807, %v1827
      %v1836 = vadd.f32 %v1808, %v1828
      %v1837 = vadd.f32 %v1809, %v1829
      %v1838 = vadd.f32 %v1810, %v1830
      %v1839 = vadd.f32 %v1811, %v1831
      %v1840 = vld [vmem:[%s6] sm:$0x1]
      %v1842 = vlaneseq
      %v1843 = vshrl.u32 %v1842, 7
      %v1844 = vsub.s32 0, %v1843
      %v1845 = vrot.slane %v1840, %v1844
      %v1847 = vadd.f32 %v1832, %v1845
      %v1848 = vadd.f32 %v1833, %v1845
      %v1849 = vadd.f32 %v1834, %v1845
      %v1850 = vadd.f32 %v1835, %v1845
      %v1851 = vadd.f32 %v1836, %v1845
      %v1852 = vadd.f32 %v1837, %v1845
      %v1853 = vadd.f32 %v1838, %v1845
      %v1854 = vadd.f32 %v1839, %v1845
      %1855 = vst.msk [vmem:[%s530] sm:$0xff] %vm531, %v1847
      %1856 = vst.msk [vmem:[%s530 + $0x8] sm:$0xff] %vm531, %v1848
      %1857 = vst.msk [vmem:[%s530 + $0x10] sm:$0xff] %vm531, %v1849
      %1858 = vst.msk [vmem:[%s530 + $0x18] sm:$0xff] %vm531, %v1850
      %1859 = vst.msk [vmem:[%s530 + $0x20] sm:$0xff] %vm531, %v1851
      %1860 = vst.msk [vmem:[%s530 + $0x28] sm:$0xff] %vm531, %v1852
      %1861 = vst.msk [vmem:[%s530 + $0x30] sm:$0xff] %vm531, %v1853
      %1862 = vst.msk [vmem:[%s530 + $0x38] sm:$0xff] %vm531, %v1854
      %p1863 = scmp.lt.s32.totalorder %s24, 1
      %s1864 = scalar_select %p1863, %s24, 1
      %p1865 = scmp.lt.s32.totalorder %s25, 7
      %s1866 = scalar_select %p1865, %s25, 7
      %s1867 = smul.addr %s1866, 8
      %s1868 = smul.addr %s1864, 64
      %s1869 = sadd.s32 %s1867, %s1868
      %s1870 = smul.addr %s1869, 8
      %s1871 = scalar_lea.vmem %s7, %s1870
      %p1872 = scmp.lt.s32.totalorder %s24, 1
      %s1873 = scalar_select %p1872, %s24, 1
      %p1874 = scmp.lt.s32.totalorder %s25, 7
      %s1875 = scalar_select %p1874, %s25, 7
      %s1876 = smul.addr %s1875, 8
      %s1877 = smul.addr %s1873, 64
      %s1878 = sadd.s32 %s1876, %s1877
      %s1879 = smul.addr %s1878, 8
      %s1880 = scalar_lea.vmem %s8, %s1879
      // Predicated region
      $region61: #{conv_next_block.3} parent=47 // pred_check
        %p1881 = pneg %p248
      $region62: #{conv_next_block.3} parent=47 // pred_check_branch
        %1883 = sbr.rel (%p1881) target = $region64
      $region63: #{conv_next_block.3} parent=47 // pred_region
        _
      $region64: #{conv_next_block.3} parent=47 // pred_fallthru
        _
      // Predicated region
      $region65: #{conv_next_block.3} parent=47 // pred_check
        %p1884 = pneg %p276
      $region66: #{conv_next_block.3} parent=47 // pred_check_branch
        %1886 = sbr.rel (%p1884) target = $region68
      $region67: #{conv_next_block.3} parent=47 // pred_region
        _
      $region68: #{conv_next_block.3} parent=47 // pred_fallthru
        _
    $region48: #{conv_next_block.3} parent=5 // pred_fallthru
      _
    %p1887 = scmp.le.s32.totalorder 2, %s15
    // Predicated region
    $region69: #{conv_next_block.3} parent=5 // pred_check
      %p1888 = pneg %p1887
    $region70: #{conv_next_block.3} parent=5 // pred_check_branch
      %1890 = sbr.rel (%p1888) target = $region72
    $region71: #{conv_next_block.3} parent=5 // pred_region
      %s1891 = ssub.s32 %s15, 2
      // Predicated region
      $region73: #{conv_next_block.3} parent=71 // pred_check
        %p1892 = pneg %p254
      $region74: #{conv_next_block.3} parent=71 // pred_check_branch
        %1894 = sbr.rel (%p1892) target = $region76
      $region75: #{conv_next_block.3} parent=71 // pred_region
        %p1895 = scmp.lt.s32.totalorder %s26, 1
        %s1896 = scalar_select %p1895, %s26, 1
        %p1897 = scmp.lt.s32.totalorder %s27, 7
        %s1898 = scalar_select %p1897, %s27, 7
        %s1899 = smul.addr %s1898, 8
        %s1900 = smul.addr %s1896, 64
        %s1901 = sadd.s32 %s1899, %s1900
        %s1902 = smul.addr %s1901, 8
        %s1903 = scalar_lea.vmem %s7, %s1902
      $region76: #{conv_next_block.3} parent=71 // pred_fallthru
        _
      // Predicated region
      $region77: #{conv_next_block.3} parent=71 // pred_check
        %p1904 = pneg %p282
      $region78: #{conv_next_block.3} parent=71 // pred_check_branch
        %1906 = sbr.rel (%p1904) target = $region80
      $region79: #{conv_next_block.3} parent=71 // pred_region
        %p1907 = scmp.lt.s32.totalorder %s26, 1
        %s1908 = scalar_select %p1907, %s26, 1
        %p1909 = scmp.lt.s32.totalorder %s27, 7
        %s1910 = scalar_select %p1909, %s27, 7
        %s1911 = smul.addr %s1910, 8
        %s1912 = smul.addr %s1908, 64
        %s1913 = sadd.s32 %s1911, %s1912
        %s1914 = smul.addr %s1913, 8
        %s1915 = scalar_lea.vmem %s8, %s1914
      $region80: #{conv_next_block.3} parent=71 // pred_fallthru
        _
    $region72: #{conv_next_block.3} parent=5 // pred_fallthru
      _
  $region6: #{conv_next_block.3} parent=0 // loop_footer
    %s19 = sadd.s32 1, %s15
  $region7: #{conv_next_block.3} parent=0 // loop_footer_branch
    %14 = sbr.rel target = $region3
  $region8: #{conv_next_block.3} parent=0 // loop_exit
    _

// kernel: conv_next_block.5
$region0: #{conv_next_block.5}
  #allocation0 [shape = 'u32[]', space=smem, size = 0x4, offset = 0x4, fixed_abs, tag = 'smem constant byte address 0x4 - core index']
  #allocation1 [shape = 'u32[144,128]{1,0:T(1,128)}', space=vmem, size = 0x12000, scoped, tag = 'internal scratch']
  %s0 = inlined_call_operand.vmem [shape: f32[1024,8], index: 0, kind: input, shape index: {}]
  %s1 = inlined_call_operand.vmem [shape: f32[1024,8], index: 1, kind: input, shape index: {}]
  %s2 = inlined_call_operand.vmem [shape: f32[1,8], index: 2, kind: input, shape index: {}]
  %s3 = inlined_call_operand.vmem [shape: f32[1,8], index: 3, kind: input, shape index: {}]
  %s4 = inlined_call_operand.vmem [shape: f32[8,128], index: 4, kind: input, shape index: {}]
  %s5 = inlined_call_operand.vmem [shape: f32[1,128], index: 5, kind: input, shape index: {}]
  %s6 = inlined_call_operand.vmem [shape: f32[128,8], index: 6, kind: input, shape index: {}]
  %s7 = inlined_call_operand.vmem [shape: f32[1,8], index: 7, kind: input, shape index: {}]
  %s8 = inlined_call_operand.vmem [shape: f32[1024,8], index: 8, kind: output, shape index: {}]
  %s9 = sld [smem:[#allocation0]]
  $region65: #{conv_next_block.5} parent=0
    _
  %s11 = ssub.s32 1, %s9
  %s12 = scalar_select 0, %s11, %s9
  loop: start=0, step=1, limit=4
  $region2: #{conv_next_block.5} parent=0 // loop_pre_header
    _
  $region3: #{conv_next_block.5} parent=0 // loop_header
    %s14 = sphi 0, %s18
    %p15 = scmp.ge.s32.totalorder %s14, 4
    %s24 = sphi 0, %s26
    %s27 = sphi 0, %s24
    %s28 = sphi 0, %s27
    %s44 = sphi 0, %s28
    %s50 = sphi 0, %s52
    %s53 = sphi 0, %s50
    %s54 = sphi 0, %s53
    %s70 = sphi 0, %s54
    %s74 = sphi 0, %s74
    %s76 = sphi 0, %s74
    %s77 = sphi 0, %s76
    %s91 = sphi 0, %s77
    %s95 = sphi 0, %s95
    %s97 = sphi 0, %s95
    %s98 = sphi 0, %s97
    %s112 = sphi 0, %s98
    %s116 = sphi 0, %s116
    %s118 = sphi 0, %s116
    %s119 = sphi 0, %s118
    %s133 = sphi 0, %s119
    %s137 = sphi 0, %s137
    %s139 = sphi 0, %s137
    %s140 = sphi 0, %s139
    %s154 = sphi 0, %s140
    %s158 = sphi 0, %s158
    %s160 = sphi 0, %s158
    %s161 = sphi 0, %s160
    %s175 = sphi 0, %s161
    %s179 = sphi 0, %s179
    %s181 = sphi 0, %s179
    %s182 = sphi 0, %s181
    %s196 = sphi 0, %s182
    %s202 = sphi 0, %s204
    %s205 = sphi 0, %s202
    %s206 = sphi 0, %s205
    %s222 = sphi 0, %s206
  $region4: #{conv_next_block.5} parent=0 // loop_header_branch
    %17 = sbr.rel (%p15) target = $region8
  $region5: #{conv_next_block.5} parent=0 // loop_body
    %s19 = ssub.s32 %s14, 1
    %s20 = ssub.s32 %s14, 2
    %s21 = sadd.s32 %s14, 1
    %s22 = ssub.s32 %s14, %s21
    %p23 = scmp.eq.s32.totalorder %s22, 0
    %s25 = sadd.s32 %s24, 1
    %s26 = scalar_select %p23, %s24, %s25
    %p29 = pneg %p23
    %p30 = scmp.eq.s32.totalorder %s14, 1
    %p31 = por %p29, %p30
    %p32 = scmp.ne.s32.totalorder %s24, %s27
    %p33 = scmp.eq.s32.totalorder %s14, 0
    %p34 = por %p32, %p33
    %p35 = scmp.ne.s32.totalorder %s24, %s27
    %p36 = scmp.eq.s32.totalorder %s19, 1
    %p37 = por %p35, %p36
    %p38 = scmp.ne.s32.totalorder %s27, %s28
    %p39 = scmp.eq.s32.totalorder %s19, 0
    %p40 = por %p38, %p39
    %p41 = scmp.ne.s32.totalorder %s27, %s28
    %p42 = scmp.eq.s32.totalorder %s20, 1
    %p43 = por %p41, %p42
    %p45 = scmp.ne.s32.totalorder %s28, %s44
    %p46 = scmp.eq.s32.totalorder %s20, 0
    %p47 = por %p45, %p46
    %s48 = ssub.s32 %s14, %s21
    %p49 = scmp.eq.s32.totalorder %s48, 0
    %s51 = sadd.s32 %s50, 1
    %s52 = scalar_select %p49, %s50, %s51
    %p55 = pneg %p49
    %p56 = scmp.eq.s32.totalorder %s14, 1
    %p57 = por %p55, %p56
    %p58 = scmp.ne.s32.totalorder %s50, %s53
    %p59 = scmp.eq.s32.totalorder %s14, 0
    %p60 = por %p58, %p59
    %p61 = scmp.ne.s32.totalorder %s50, %s53
    %p62 = scmp.eq.s32.totalorder %s19, 1
    %p63 = por %p61, %p62
    %p64 = scmp.ne.s32.totalorder %s53, %s54
    %p65 = scmp.eq.s32.totalorder %s19, 0
    %p66 = por %p64, %p65
    %p67 = scmp.ne.s32.totalorder %s53, %s54
    %p68 = scmp.eq.s32.totalorder %s20, 1
    %p69 = por %p67, %p68
    %p71 = scmp.ne.s32.totalorder %s54, %s70
    %p72 = scmp.eq.s32.totalorder %s20, 0
    %p73 = por %p71, %p72
    %s75 = sadd.s32 %s74, 1
    %p78 = scmp.eq.s32.totalorder %s14, 1
    %p79 = scmp.ne.s32.totalorder %s74, %s76
    %p80 = scmp.eq.s32.totalorder %s14, 0
    %p81 = por %p79, %p80
    %p82 = scmp.ne.s32.totalorder %s74, %s76
    %p83 = scmp.eq.s32.totalorder %s19, 1
    %p84 = por %p82, %p83
    %p85 = scmp.ne.s32.totalorder %s76, %s77
    %p86 = scmp.eq.s32.totalorder %s19, 0
    %p87 = por %p85, %p86
    %p88 = scmp.ne.s32.totalorder %s76, %s77
    %p89 = scmp.eq.s32.totalorder %s20, 1
    %p90 = por %p88, %p89
    %p92 = scmp.ne.s32.totalorder %s77, %s91
    %p93 = scmp.eq.s32.totalorder %s20, 0
    %p94 = por %p92, %p93
    %s96 = sadd.s32 %s95, 1
    %p99 = scmp.eq.s32.totalorder %s14, 1
    %p100 = scmp.ne.s32.totalorder %s95, %s97
    %p101 = scmp.eq.s32.totalorder %s14, 0
    %p102 = por %p100, %p101
    %p103 = scmp.ne.s32.totalorder %s95, %s97
    %p104 = scmp.eq.s32.totalorder %s19, 1
    %p105 = por %p103, %p104
    %p106 = scmp.ne.s32.totalorder %s97, %s98
    %p107 = scmp.eq.s32.totalorder %s19, 0
    %p108 = por %p106, %p107
    %p109 = scmp.ne.s32.totalorder %s97, %s98
    %p110 = scmp.eq.s32.totalorder %s20, 1
    %p111 = por %p109, %p110
    %p113 = scmp.ne.s32.totalorder %s98, %s112
    %p114 = scmp.eq.s32.totalorder %s20, 0
    %p115 = por %p113, %p114
    %s117 = sadd.s32 %s116, 1
    %p120 = scmp.eq.s32.totalorder %s14, 1
    %p121 = scmp.ne.s32.totalorder %s116, %s118
    %p122 = scmp.eq.s32.totalorder %s14, 0
    %p123 = por %p121, %p122
    %p124 = scmp.ne.s32.totalorder %s116, %s118
    %p125 = scmp.eq.s32.totalorder %s19, 1
    %p126 = por %p124, %p125
    %p127 = scmp.ne.s32.totalorder %s118, %s119
    %p128 = scmp.eq.s32.totalorder %s19, 0
    %p129 = por %p127, %p128
    %p130 = scmp.ne.s32.totalorder %s118, %s119
    %p131 = scmp.eq.s32.totalorder %s20, 1
    %p132 = por %p130, %p131
    %p134 = scmp.ne.s32.totalorder %s119, %s133
    %p135 = scmp.eq.s32.totalorder %s20, 0
    %p136 = por %p134, %p135
    %s138 = sadd.s32 %s137, 1
    %p141 = scmp.eq.s32.totalorder %s14, 1
    %p142 = scmp.ne.s32.totalorder %s137, %s139
    %p143 = scmp.eq.s32.totalorder %s14, 0
    %p144 = por %p142, %p143
    %p145 = scmp.ne.s32.totalorder %s137, %s139
    %p146 = scmp.eq.s32.totalorder %s19, 1
    %p147 = por %p145, %p146
    %p148 = scmp.ne.s32.totalorder %s139, %s140
    %p149 = scmp.eq.s32.totalorder %s19, 0
    %p150 = por %p148, %p149
    %p151 = scmp.ne.s32.totalorder %s139, %s140
    %p152 = scmp.eq.s32.totalorder %s20, 1
    %p153 = por %p151, %p152
    %p155 = scmp.ne.s32.totalorder %s140, %s154
    %p156 = scmp.eq.s32.totalorder %s20, 0
    %p157 = por %p155, %p156
    %s159 = sadd.s32 %s158, 1
    %p162 = scmp.eq.s32.totalorder %s14, 1
    %p163 = scmp.ne.s32.totalorder %s158, %s160
    %p164 = scmp.eq.s32.totalorder %s14, 0
    %p165 = por %p163, %p164
    %p166 = scmp.ne.s32.totalorder %s158, %s160
    %p167 = scmp.eq.s32.totalorder %s19, 1
    %p168 = por %p166, %p167
    %p169 = scmp.ne.s32.totalorder %s160, %s161
    %p170 = scmp.eq.s32.totalorder %s19, 0
    %p171 = por %p169, %p170
    %p172 = scmp.ne.s32.totalorder %s160, %s161
    %p173 = scmp.eq.s32.totalorder %s20, 1
    %p174 = por %p172, %p173
    %p176 = scmp.ne.s32.totalorder %s161, %s175
    %p177 = scmp.eq.s32.totalorder %s20, 0
    %p178 = por %p176, %p177
    %s180 = sadd.s32 %s179, 1
    %p183 = scmp.eq.s32.totalorder %s14, 1
    %p184 = scmp.ne.s32.totalorder %s179, %s181
    %p185 = scmp.eq.s32.totalorder %s14, 0
    %p186 = por %p184, %p185
    %p187 = scmp.ne.s32.totalorder %s179, %s181
    %p188 = scmp.eq.s32.totalorder %s19, 1
    %p189 = por %p187, %p188
    %p190 = scmp.ne.s32.totalorder %s181, %s182
    %p191 = scmp.eq.s32.totalorder %s19, 0
    %p192 = por %p190, %p191
    %p193 = scmp.ne.s32.totalorder %s181, %s182
    %p194 = scmp.eq.s32.totalorder %s20, 1
    %p195 = por %p193, %p194
    %p197 = scmp.ne.s32.totalorder %s182, %s196
    %p198 = scmp.eq.s32.totalorder %s20, 0
    %p199 = por %p197, %p198
    %s200 = ssub.s32 %s14, %s21
    %p201 = scmp.eq.s32.totalorder %s200, 0
    %s203 = sadd.s32 %s202, 1
    %s204 = scalar_select %p201, %s202, %s203
    %p207 = pneg %p201
    %p208 = scmp.eq.s32.totalorder %s14, 1
    %p209 = por %p207, %p208
    %p210 = scmp.ne.s32.totalorder %s202, %s205
    %p211 = scmp.eq.s32.totalorder %s14, 0
    %p212 = por %p210, %p211
    %p213 = scmp.ne.s32.totalorder %s202, %s205
    %p214 = scmp.eq.s32.totalorder %s19, 1
    %p215 = por %p213, %p214
    %p216 = scmp.ne.s32.totalorder %s205, %s206
    %p217 = scmp.eq.s32.totalorder %s19, 0
    %p218 = por %p216, %p217
    %p219 = scmp.ne.s32.totalorder %s205, %s206
    %p220 = scmp.eq.s32.totalorder %s20, 1
    %p221 = por %p219, %p220
    %p223 = scmp.ne.s32.totalorder %s206, %s222
    %p224 = scmp.eq.s32.totalorder %s20, 0
    %p225 = por %p223, %p224
    %p226 = scmp.le.s32.totalorder 1, %s14
    %p227 = scmp.lt.s32.totalorder %s14, 3
    %p228 = pnand %p226, %p227
    %p229 = pneg %p228
    // Predicated region
    $region9: #{conv_next_block.5} parent=5 // pred_check
      _
    $region10: #{conv_next_block.5} parent=5 // pred_check_branch
      %231 = sbr.rel (%p228) target = $region12
    $region11: #{conv_next_block.5} parent=5 // pred_region
      %s232 = ssub.s32 %s14, 1
      // Predicated region
      $region13: #{conv_next_block.5} parent=11 // pred_check
        %p233 = pneg %p87
      $region14: #{conv_next_block.5} parent=11 // pred_check_branch
        %235 = sbr.rel (%p233) target = $region16
      $region15: #{conv_next_block.5} parent=11 // pred_region
        _
      $region16: #{conv_next_block.5} parent=11 // pred_fallthru
        _
      // Predicated region
      $region17: #{conv_next_block.5} parent=11 // pred_check
        %p236 = pneg %p108
      $region18: #{conv_next_block.5} parent=11 // pred_check_branch
        %238 = sbr.rel (%p236) target = $region20
      $region19: #{conv_next_block.5} parent=11 // pred_region
        _
      $region20: #{conv_next_block.5} parent=11 // pred_fallthru
        _
      // Predicated region
      $region21: #{conv_next_block.5} parent=11 // pred_check
        %p239 = pneg %p129
      $region22: #{conv_next_block.5} parent=11 // pred_check_branch
        %241 = sbr.rel (%p239) target = $region24
      $region23: #{conv_next_block.5} parent=11 // pred_region
        _
      $region24: #{conv_next_block.5} parent=11 // pred_fallthru
        _
      // Predicated region
      $region25: #{conv_next_block.5} parent=11 // pred_check
        %p242 = pneg %p150
      $region26: #{conv_next_block.5} parent=11 // pred_check_branch
        %244 = sbr.rel (%p242) target = $region28
      $region27: #{conv_next_block.5} parent=11 // pred_region
        _
      $region28: #{conv_next_block.5} parent=11 // pred_fallthru
        _
      // Predicated region
      $region29: #{conv_next_block.5} parent=11 // pred_check
        %p245 = pneg %p171
      $region30: #{conv_next_block.5} parent=11 // pred_check_branch
        %247 = sbr.rel (%p245) target = $region32
      $region31: #{conv_next_block.5} parent=11 // pred_region
        _
      $region32: #{conv_next_block.5} parent=11 // pred_fallthru
        _
      // Predicated region
      $region33: #{conv_next_block.5} parent=11 // pred_check
        %p248 = pneg %p192
      $region34: #{conv_next_block.5} parent=11 // pred_check_branch
        %250 = sbr.rel (%p248) target = $region36
      $region35: #{conv_next_block.5} parent=11 // pred_region
        _
      $region36: #{conv_next_block.5} parent=11 // pred_fallthru
        _
    $region12: #{conv_next_block.5} parent=5 // pred_fallthru
      _
    %p251 = scmp.lt.s32.totalorder %s14, 2
    // Predicated region
    $region37: #{conv_next_block.5} parent=5 // pred_check
      %p252 = pneg %p251
    $region38: #{conv_next_block.5} parent=5 // pred_check_branch
      %254 = sbr.rel (%p252) target = $region40
    $region39: #{conv_next_block.5} parent=5 // pred_region
      // Predicated region
      $region41: #{conv_next_block.5} parent=39 // pred_check
        %p255 = pneg %p34
      $region42: #{conv_next_block.5} parent=39 // pred_check_branch
        %257 = sbr.rel (%p255) target = $region44
      $region43: #{conv_next_block.5} parent=39 // pred_region
        %s258 = smul.u32 64, %s14
        %p259 = scmp.lt.s32.totalorder %s258, 127
        %s260 = scalar_select %p259, %s258, 127
        %s261 = smul.addr %s260, 8
        %s262 = scalar_lea.vmem %s0, %s261
        %s263 = smul.u32 64, %s14
      $region44: #{conv_next_block.5} parent=39 // pred_fallthru
        _
      // Predicated region
      $region45: #{conv_next_block.5} parent=39 // pred_check
        %p264 = pneg %p60
      $region46: #{conv_next_block.5} parent=39 // pred_check_branch
        %266 = sbr.rel (%p264) target = $region48
      $region47: #{conv_next_block.5} parent=39 // pred_region
        %s267 = smul.u32 64, %s14
        %p268 = scmp.lt.s32.totalorder %s267, 127
        %s269 = scalar_select %p268, %s267, 127
        %s270 = smul.addr %s269, 8
        %s271 = scalar_lea.vmem %s1, %s270
        %s272 = smul.u32 64, %s14
      $region48: #{conv_next_block.5} parent=39 // pred_fallthru
        _
    $region40: #{conv_next_block.5} parent=5 // pred_fallthru
      _
    %p273 = scmp.le.s32.totalorder 1, %s14
    %p274 = scmp.lt.s32.totalorder %s14, 3
    %p275 = pnand %p273, %p274
    %p276 = pneg %p275
    // Predicated region
    $region49: #{conv_next_block.5} parent=5 // pred_check
      _
    $region50: #{conv_next_block.5} parent=5 // pred_check_branch
      %278 = sbr.rel (%p275) target = $region52
    $region51: #{conv_next_block.5} parent=5 // pred_region
      %s279 = ssub.s32 %s14, 1
      %s280 = smul.u32 64, %s19
      %p281 = scmp.lt.s32.totalorder %s280, 127
      %s282 = scalar_select %p281, %s280, 127
      %s283 = smul.addr %s282, 8
      %s284 = scalar_lea.vmem %s0, %s283
      %p285 = pneg %p40
      %p286 = pneg %p37
      %s287 = smul.u32 64, %s19
      %p288 = scmp.lt.s32.totalorder %s287, 127
      %s289 = scalar_select %p288, %s287, 127
      %s290 = smul.addr %s289, 8
      %s291 = scalar_lea.vmem %s1, %s290
      %p292 = pneg %p66
      %p293 = pneg %p63
      %p294 = pneg %p87
      %p295 = pneg %p84
      %p296 = pneg %p108
      %p297 = pneg %p105
      %p298 = pneg %p129
      %p299 = pneg %p126
      %p300 = pneg %p150
      %p301 = pneg %p147
      %p302 = pneg %p171
      %p303 = pneg %p168
      %p304 = pneg %p192
      %p305 = pneg %p189
      %p306 = pneg %p218
      %p307 = pneg %p215
      %s308 = smul.u32 64, %s19
      %p309 = scmp.lt.s32.totalorder %s308, 127
      %s310 = scalar_select %p309, %s308, 127
      %s311 = smul.addr %s310, 8
      %s312 = scalar_lea.vmem %s8, %s311
      %s313 = smul.u32 64, %s19
      %p314 = scmp.lt.s32.totalorder %s313, 127
      %s315 = scalar_select %p314, %s313, 127
      %s316 = smul.addr %s315, 8
      %s317 = scalar_lea.vmem %s0, %s316
      %s318 = smul.u32 64, %s19
      %s319 = smul.u32 64, %s19
      %p320 = scmp.lt.s32.totalorder %s319, 127
      %s321 = scalar_select %p320, %s319, 127
      %s322 = smul.addr %s321, 8
      %s323 = scalar_lea.vmem %s1, %s322
      %s324 = smul.u32 64, %s19
      %s325 = smul.u32 64, %s19
      %p326 = scmp.lt.s32.totalorder %s325, 127
      %s327 = scalar_select %p326, %s325, 127
      %s328 = smul.addr %s327, 8
      %s329 = scalar_lea.vmem %s8, %s328
      %s330 = smul.u32 64, %s19
      %v331 = vld [vmem:[%s323] sm:$0xff]
      %v332 = vld [vmem:[%s323 + $0x8] sm:$0xff]
      %v333 = vld [vmem:[%s323 + $0x10] sm:$0xff]
      %v334 = vld [vmem:[%s323 + $0x18] sm:$0xff]
      %v335 = vld [vmem:[%s323 + $0x20] sm:$0xff]
      %v336 = vld [vmem:[%s323 + $0x28] sm:$0xff]
      %v337 = vld [vmem:[%s323 + $0x30] sm:$0xff]
      %v338 = vld [vmem:[%s323 + $0x38] sm:$0xff]
      %v339 = vld [vmem:[%s323 + $0x40] sm:$0xff]
      %v340 = vld [vmem:[%s323 + $0x48] sm:$0xff]
      %v341 = vld [vmem:[%s323 + $0x50] sm:$0xff]
      %v342 = vld [vmem:[%s323 + $0x58] sm:$0xff]
      %v343 = vld [vmem:[%s323 + $0x60] sm:$0xff]
      %v344 = vld [vmem:[%s323 + $0x68] sm:$0xff]
      %v345 = vld [vmem:[%s323 + $0x70] sm:$0xff]
      %v346 = vld [vmem:[%s323 + $0x78] sm:$0xff]
      %v347 = vld [vmem:[%s323 + $0x80] sm:$0xff]
      %v348 = vld [vmem:[%s323 + $0x88] sm:$0xff]
      %v349 = vld [vmem:[%s323 + $0x90] sm:$0xff]
      %v350 = vld [vmem:[%s323 + $0x98] sm:$0xff]
      %v351 = vld [vmem:[%s323 + $0xa0] sm:$0xff]
      %v352 = vld [vmem:[%s323 + $0xa8] sm:$0xff]
      %v353 = vld [vmem:[%s323 + $0xb0] sm:$0xff]
      %v354 = vld [vmem:[%s323 + $0xb8] sm:$0xff]
      %v355 = vld [vmem:[%s323 + $0xc0] sm:$0xff]
      %v356 = vld [vmem:[%s323 + $0xc8] sm:$0xff]
      %v357 = vld [vmem:[%s323 + $0xd0] sm:$0xff]
      %v358 = vld [vmem:[%s323 + $0xd8] sm:$0xff]
      %v359 = vld [vmem:[%s323 + $0xe0] sm:$0xff]
      %v360 = vld [vmem:[%s323 + $0xe8] sm:$0xff]
      %v361 = vld [vmem:[%s323 + $0xf0] sm:$0xff]
      %v362 = vld [vmem:[%s323 + $0xf8] sm:$0xff]
      %v363 = vld [vmem:[%s323 + $0x100] sm:$0xff]
      %v364 = vld [vmem:[%s323 + $0x108] sm:$0xff]
      %v365 = vld [vmem:[%s323 + $0x110] sm:$0xff]
      %v366 = vld [vmem:[%s323 + $0x118] sm:$0xff]
      %v367 = vld [vmem:[%s323 + $0x120] sm:$0xff]
      %v368 = vld [vmem:[%s323 + $0x128] sm:$0xff]
      %v369 = vld [vmem:[%s323 + $0x130] sm:$0xff]
      %v370 = vld [vmem:[%s323 + $0x138] sm:$0xff]
      %v371 = vld [vmem:[%s323 + $0x140] sm:$0xff]
      %v372 = vld [vmem:[%s323 + $0x148] sm:$0xff]
      %v373 = vld [vmem:[%s323 + $0x150] sm:$0xff]
      %v374 = vld [vmem:[%s323 + $0x158] sm:$0xff]
      %v375 = vld [vmem:[%s323 + $0x160] sm:$0xff]
      %v376 = vld [vmem:[%s323 + $0x168] sm:$0xff]
      %v377 = vld [vmem:[%s323 + $0x170] sm:$0xff]
      %v378 = vld [vmem:[%s323 + $0x178] sm:$0xff]
      %v379 = vld [vmem:[%s323 + $0x180] sm:$0xff]
      %v380 = vld [vmem:[%s323 + $0x188] sm:$0xff]
      %v381 = vld [vmem:[%s323 + $0x190] sm:$0xff]
      %v382 = vld [vmem:[%s323 + $0x198] sm:$0xff]
      %v383 = vld [vmem:[%s323 + $0x1a0] sm:$0xff]
      %v384 = vld [vmem:[%s323 + $0x1a8] sm:$0xff]
      %v385 = vld [vmem:[%s323 + $0x1b0] sm:$0xff]
      %v386 = vld [vmem:[%s323 + $0x1b8] sm:$0xff]
      %v387 = vld [vmem:[%s323 + $0x1c0] sm:$0xff]
      %v388 = vld [vmem:[%s323 + $0x1c8] sm:$0xff]
      %v389 = vld [vmem:[%s323 + $0x1d0] sm:$0xff]
      %v390 = vld [vmem:[%s323 + $0x1d8] sm:$0xff]
      %v391 = vld [vmem:[%s323 + $0x1e0] sm:$0xff]
      %v392 = vld [vmem:[%s323 + $0x1e8] sm:$0xff]
      %v393 = vld [vmem:[%s323 + $0x1f0] sm:$0xff]
      %v394 = vld [vmem:[%s323 + $0x1f8] sm:$0xff]
      %v395 = vld [vmem:[%s2] sm:$0x1]
      %v397 = vlaneseq
      %v398 = vshrl.u32 %v397, 7
      %v399 = vsub.s32 0, %v398
      %v400 = vrot.slane %v395, %v399
      %v402 = vmul.f32 %v331, %v400
      %v403 = vmul.f32 %v332, %v400
      %v404 = vmul.f32 %v333, %v400
      %v405 = vmul.f32 %v334, %v400
      %v406 = vmul.f32 %v335, %v400
      %v407 = vmul.f32 %v336, %v400
      %v408 = vmul.f32 %v337, %v400
      %v409 = vmul.f32 %v338, %v400
      %v410 = vmul.f32 %v339, %v400
      %v411 = vmul.f32 %v340, %v400
      %v412 = vmul.f32 %v341, %v400
      %v413 = vmul.f32 %v342, %v400
      %v414 = vmul.f32 %v343, %v400
      %v415 = vmul.f32 %v344, %v400
      %v416 = vmul.f32 %v345, %v400
      %v417 = vmul.f32 %v346, %v400
      %v418 = vmul.f32 %v347, %v400
      %v419 = vmul.f32 %v348, %v400
      %v420 = vmul.f32 %v349, %v400
      %v421 = vmul.f32 %v350, %v400
      %v422 = vmul.f32 %v351, %v400
      %v423 = vmul.f32 %v352, %v400
      %v424 = vmul.f32 %v353, %v400
      %v425 = vmul.f32 %v354, %v400
      %v426 = vmul.f32 %v355, %v400
      %v427 = vmul.f32 %v356, %v400
      %v428 = vmul.f32 %v357, %v400
      %v429 = vmul.f32 %v358, %v400
      %v430 = vmul.f32 %v359, %v400
      %v431 = vmul.f32 %v360, %v400
      %v432 = vmul.f32 %v361, %v400
      %v433 = vmul.f32 %v362, %v400
      %v434 = vmul.f32 %v363, %v400
      %v435 = vmul.f32 %v364, %v400
      %v436 = vmul.f32 %v365, %v400
      %v437 = vmul.f32 %v366, %v400
      %v438 = vmul.f32 %v367, %v400
      %v439 = vmul.f32 %v368, %v400
      %v440 = vmul.f32 %v369, %v400
      %v441 = vmul.f32 %v370, %v400
      %v442 = vmul.f32 %v371, %v400
      %v443 = vmul.f32 %v372, %v400
      %v444 = vmul.f32 %v373, %v400
      %v445 = vmul.f32 %v374, %v400
      %v446 = vmul.f32 %v375, %v400
      %v447 = vmul.f32 %v376, %v400
      %v448 = vmul.f32 %v377, %v400
      %v449 = vmul.f32 %v378, %v400
      %v450 = vmul.f32 %v379, %v400
      %v451 = vmul.f32 %v380, %v400
      %v452 = vmul.f32 %v381, %v400
      %v453 = vmul.f32 %v382, %v400
      %v454 = vmul.f32 %v383, %v400
      %v455 = vmul.f32 %v384, %v400
      %v456 = vmul.f32 %v385, %v400
      %v457 = vmul.f32 %v386, %v400
      %v458 = vmul.f32 %v387, %v400
      %v459 = vmul.f32 %v388, %v400
      %v460 = vmul.f32 %v389, %v400
      %v461 = vmul.f32 %v390, %v400
      %v462 = vmul.f32 %v391, %v400
      %v463 = vmul.f32 %v392, %v400
      %v464 = vmul.f32 %v393, %v400
      %v465 = vmul.f32 %v394, %v400
      %v466 = vld [vmem:[%s3] sm:$0x1]
      %v468 = vlaneseq
      %v469 = vshrl.u32 %v468, 7
      %v470 = vsub.s32 0, %v469
      %v471 = vrot.slane %v466, %v470
      %v473 = vadd.f32 %v402, %v471
      %v474 = vadd.f32 %v403, %v471
      %v475 = vadd.f32 %v404, %v471
      %v476 = vadd.f32 %v405, %v471
      %v477 = vadd.f32 %v406, %v471
      %v478 = vadd.f32 %v407, %v471
      %v479 = vadd.f32 %v408, %v471
      %v480 = vadd.f32 %v409, %v471
      %v481 = vadd.f32 %v410, %v471
      %v482 = vadd.f32 %v411, %v471
      %v483 = vadd.f32 %v412, %v471
      %v484 = vadd.f32 %v413, %v471
      %v485 = vadd.f32 %v414, %v471
      %v486 = vadd.f32 %v415, %v471
      %v487 = vadd.f32 %v416, %v471
      %v488 = vadd.f32 %v417, %v471
      %v489 = vadd.f32 %v418, %v471
      %v490 = vadd.f32 %v419, %v471
      %v491 = vadd.f32 %v420, %v471
      %v492 = vadd.f32 %v421, %v471
      %v493 = vadd.f32 %v422, %v471
      %v494 = vadd.f32 %v423, %v471
      %v495 = vadd.f32 %v424, %v471
      %v496 = vadd.f32 %v425, %v471
      %v497 = vadd.f32 %v426, %v471
      %v498 = vadd.f32 %v427, %v471
      %v499 = vadd.f32 %v428, %v471
      %v500 = vadd.f32 %v429, %v471
      %v501 = vadd.f32 %v430, %v471
      %v502 = vadd.f32 %v431, %v471
      %v503 = vadd.f32 %v432, %v471
      %v504 = vadd.f32 %v433, %v471
      %v505 = vadd.f32 %v434, %v471
      %v506 = vadd.f32 %v435, %v471
      %v507 = vadd.f32 %v436, %v471
      %v508 = vadd.f32 %v437, %v471
      %v509 = vadd.f32 %v438, %v471
      %v510 = vadd.f32 %v439, %v471
      %v511 = vadd.f32 %v440, %v471
      %v512 = vadd.f32 %v441, %v471
      %v513 = vadd.f32 %v442, %v471
      %v514 = vadd.f32 %v443, %v471
      %v515 = vadd.f32 %v444, %v471
      %v516 = vadd.f32 %v445, %v471
      %v517 = vadd.f32 %v446, %v471
      %v518 = vadd.f32 %v447, %v471
      %v519 = vadd.f32 %v448, %v471
      %v520 = vadd.f32 %v449, %v471
      %v521 = vadd.f32 %v450, %v471
      %v522 = vadd.f32 %v451, %v471
      %v523 = vadd.f32 %v452, %v471
      %v524 = vadd.f32 %v453, %v471
      %v525 = vadd.f32 %v454, %v471
      %v526 = vadd.f32 %v455, %v471
      %v527 = vadd.f32 %v456, %v471
      %v528 = vadd.f32 %v457, %v471
      %v529 = vadd.f32 %v458, %v471
      %v530 = vadd.f32 %v459, %v471
      %v531 = vadd.f32 %v460, %v471
      %v532 = vadd.f32 %v461, %v471
      %v533 = vadd.f32 %v462, %v471
      %v534 = vadd.f32 %v463, %v471
      %v535 = vadd.f32 %v464, %v471
      %v536 = vadd.f32 %v465, %v471
      %v537 = vld [vmem:[%s4] sm:$0xff]
      %v538 = vld [vmem:[%s5] sm:$0x1]
      %v540 = vlaneseq
      %v541 = vshrl.u32 %v540, 7
      %v542 = vsub.s32 0, %v541
      %v543 = vrot.slane %v538, %v542
      %vm545 = vcmask 64512
      %v547 = vsel %vm545, %v473, 0
      %v550 = vsel %vm545, %v474, 0
      %v553 = vsel %vm545, %v475, 0
      %v556 = vsel %vm545, %v476, 0
      %v559 = vsel %vm545, %v477, 0
      %v562 = vsel %vm545, %v478, 0
      %v565 = vsel %vm545, %v479, 0
      %v568 = vsel %vm545, %v480, 0
      %v571 = vsel %vm545, %v481, 0
      %v574 = vsel %vm545, %v482, 0
      %v577 = vsel %vm545, %v483, 0
      %v580 = vsel %vm545, %v484, 0
      %v583 = vsel %vm545, %v485, 0
      %v586 = vsel %vm545, %v486, 0
      %v589 = vsel %vm545, %v487, 0
      %v592 = vsel %vm545, %v488, 0
      %v595 = vsel %vm545, %v489, 0
      %v598 = vsel %vm545, %v490, 0
      %v601 = vsel %vm545, %v491, 0
      %v604 = vsel %vm545, %v492, 0
      %v607 = vsel %vm545, %v493, 0
      %v610 = vsel %vm545, %v494, 0
      %v613 = vsel %vm545, %v495, 0
      %v616 = vsel %vm545, %v496, 0
      %v619 = vsel %vm545, %v497, 0
      %v622 = vsel %vm545, %v498, 0
      %v625 = vsel %vm545, %v499, 0
      %v628 = vsel %vm545, %v500, 0
      %v631 = vsel %vm545, %v501, 0
      %v634 = vsel %vm545, %v502, 0
      %v637 = vsel %vm545, %v503, 0
      %v640 = vsel %vm545, %v504, 0
      %v643 = vsel %vm545, %v505, 0
      %v646 = vsel %vm545, %v506, 0
      %v649 = vsel %vm545, %v507, 0
      %v652 = vsel %vm545, %v508, 0
      %v655 = vsel %vm545, %v509, 0
      %v658 = vsel %vm545, %v510, 0
      %v661 = vsel %vm545, %v511, 0
      %v664 = vsel %vm545, %v512, 0
      %v667 = vsel %vm545, %v513, 0
      %v670 = vsel %vm545, %v514, 0
      %v673 = vsel %vm545, %v515, 0
      %v676 = vsel %vm545, %v516, 0
      %v679 = vsel %vm545, %v517, 0
      %v682 = vsel %vm545, %v518, 0
      %v685 = vsel %vm545, %v519, 0
      %v688 = vsel %vm545, %v520, 0
      %v691 = vsel %vm545, %v521, 0
      %v694 = vsel %vm545, %v522, 0
      %v697 = vsel %vm545, %v523, 0
      %v700 = vsel %vm545, %v524, 0
      %v703 = vsel %vm545, %v525, 0
      %v706 = vsel %vm545, %v526, 0
      %v709 = vsel %vm545, %v527, 0
      %v712 = vsel %vm545, %v528, 0
      %v715 = vsel %vm545, %v529, 0
      %v718 = vsel %vm545, %v530, 0
      %v721 = vsel %vm545, %v531, 0
      %v724 = vsel %vm545, %v532, 0
      %v727 = vsel %vm545, %v533, 0
      %v730 = vsel %vm545, %v534, 0
      %v733 = vsel %vm545, %v535, 0
      %v736 = vsel %vm545, %v536, 0
      %738 = vmatprep.subr.mxu0 0.0
      %739 = vmatpush1.msra.mxu0 %v537
      %740 = vmatprep.subr.mxu0 0.0
      %741 = vmatpush1.msra.mxu0 0.0
      %742 = vmatprep.subr.mxu0 0.0
      %743 = vmatpush1.msra.mxu0 0.0
      %744 = vmatprep.subr.mxu0 0.0
      %745 = vmatpush1.msra.mxu0 0.0
      %746 = vmatprep.subr.mxu0 0.0
      %747 = vmatpush1.msra.mxu0 0.0
      %748 = vmatprep.subr.mxu0 0.0
      %749 = vmatpush1.msra.mxu0 0.0
      %750 = vmatprep.subr.mxu0 0.0
      %751 = vmatpush1.msra.mxu0 0.0
      %752 = vmatprep.subr.mxu0 0.0
      %753 = vmatpush1.msra.mxu0 0.0
      %754 = vmatprep.subr.mxu0 0.0
      %755 = vmatpush1.msra.mxu0 0.0
      %756 = vmatprep.subr.mxu0 0.0
      %757 = vmatpush1.msra.mxu0 0.0
      %758 = vmatprep.subr.mxu0 0.0
      %759 = vmatpush1.msra.mxu0 0.0
      %760 = vmatprep.subr.mxu0 0.0
      %761 = vmatpush1.msra.mxu0 0.0
      %762 = vmatprep.subr.mxu0 0.0
      %763 = vmatpush1.msra.mxu0 0.0
      %764 = vmatprep.subr.mxu0 0.0
      %765 = vmatpush1.msra.mxu0 0.0
      %766 = vmatprep.subr.mxu0 0.0
      %767 = vmatpush1.msra.mxu0 0.0
      %768 = vmatprep.subr.mxu0 0.0
      %769 = vmatpush1.msra.mxu0 0.0
      %770 = vmatprep.subr.mxu0 0.0
      %771 = vmatpush1.msra.mxu0 0.0
      %772 = vmatprep.subr.mxu0 0.0
      %773 = vmatpush1.msra.mxu0 0.0
      %774 = vmatprep.subr.mxu0 0.0
      %775 = vmatpush1.msra.mxu0 0.0
      %776 = vmatprep.subr.mxu0 0.0
      %777 = vmatpush1.msra.mxu0 0.0
      %778 = vmatprep.subr.mxu0 0.0
      %779 = vmatpush1.msra.mxu0 0.0
      %780 = vmatprep.subr.mxu0 0.0
      %781 = vmatpush1.msra.mxu0 0.0
      %782 = vmatprep.subr.mxu0 0.0
      %783 = vmatpush1.msra.mxu0 0.0
      %784 = vmatprep.subr.mxu0 0.0
      %785 = vmatpush1.msra.mxu0 0.0
      %786 = vmatprep.subr.mxu0 0.0
      %787 = vmatpush1.msra.mxu0 0.0
      %788 = vmatprep.subr.mxu0 0.0
      %789 = vmatpush1.msra.mxu0 0.0
      %790 = vmatprep.subr.mxu0 0.0
      %791 = vmatpush1.msra.mxu0 0.0
      %792 = vmatprep.subr.mxu0 0.0
      %793 = vmatpush1.msra.mxu0 0.0
      %794 = vmatprep.subr.mxu0 0.0
      %795 = vmatpush1.msra.mxu0 0.0
      %796 = vmatprep.subr.mxu0 0.0
      %797 = vmatpush1.msra.mxu0 0.0
      %798 = vmatprep.subr.mxu0 0.0
      %799 = vmatpush1.msra.mxu0 0.0
      %800 = vmatprep.subr.mxu0 0.0
      %801 = vmatpush1.msra.mxu0 0.0
      %802 = vmatprep.mubr.f32.mxu0 0.0
      %803 = vmatmul.mubr.f32.gmra.mrb[0].mxu0 %v547
      %v804 = vpop.f32.mrb[0].mxu0
      %v805 = vadd.f32 %v543, %v804
      %v806 = vpop.f32.mrb[0].mxu0
      %807 = vmatprep.mubr.f32.mxu0 0.0
      %808 = vmatmul.mubr.f32.gmra.mrb[0].mxu0 %v550
      %v809 = vpop.f32.mrb[0].mxu0
      %v810 = vadd.f32 %v543, %v809
      %v811 = vpop.f32.mrb[0].mxu0
      %812 = vmatprep.mubr.f32.mxu0 0.0
      %813 = vmatmul.mubr.f32.gmra.mrb[0].mxu0 %v553
      %v814 = vpop.f32.mrb[0].mxu0
      %v815 = vadd.f32 %v543, %v814
      %v816 = vpop.f32.mrb[0].mxu0
      %817 = vmatprep.mubr.f32.mxu0 0.0
      %818 = vmatmul.mubr.f32.gmra.mrb[0].mxu0 %v556
      %v819 = vpop.f32.mrb[0].mxu0
      %v820 = vadd.f32 %v543, %v819
      %v821 = vpop.f32.mrb[0].mxu0
      %822 = vmatprep.mubr.f32.mxu0 0.0
      %823 = vmatmul.mubr.f32.gmra.mrb[0].mxu0 %v559
      %v824 = vpop.f32.mrb[0].mxu0
      %v825 = vadd.f32 %v543, %v824
      %v826 = vpop.f32.mrb[0].mxu0
      %827 = vmatprep.mubr.f32.mxu0 0.0
      %828 = vmatmul.mubr.f32.gmra.mrb[0].mxu0 %v562
      %v829 = vpop.f32.mrb[0].mxu0
      %v830 = vadd.f32 %v543, %v829
      %v831 = vpop.f32.mrb[0].mxu0
      %832 = vmatprep.mubr.f32.mxu0 0.0
      %833 = vmatmul.mubr.f32.gmra.mrb[0].mxu0 %v565
      %v834 = vpop.f32.mrb[0].mxu0
      %v835 = vadd.f32 %v543, %v834
      %v836 = vpop.f32.mrb[0].mxu0
      %837 = vmatprep.mubr.f32.mxu0 0.0
      %838 = vmatmul.mubr.f32.gmra.mrb[0].mxu0 %v568
      %v839 = vpop.f32.mrb[0].mxu0
      %v840 = vadd.f32 %v543, %v839
      %v841 = vpop.f32.mrb[0].mxu0
      %842 = vmatprep.mubr.f32.mxu0 0.0
      %843 = vmatmul.mubr.f32.gmra.mrb[0].mxu0 %v571
      %v844 = vpop.f32.mrb[0].mxu0
      %v845 = vadd.f32 %v543, %v844
      %v846 = vpop.f32.mrb[0].mxu0
      %847 = vmatprep.mubr.f32.mxu0 0.0
      %848 = vmatmul.mubr.f32.gmra.mrb[0].mxu0 %v574
      %v849 = vpop.f32.mrb[0].mxu0
      %v850 = vadd.f32 %v543, %v849
      %v851 = vpop.f32.mrb[0].mxu0
      %852 = vmatprep.mubr.f32.mxu0 0.0
      %853 = vmatmul.mubr.f32.gmra.mrb[0].mxu0 %v577
      %v854 = vpop.f32.mrb[0].mxu0
      %v855 = vadd.f32 %v543, %v854
      %v856 = vpop.f32.mrb[0].mxu0
      %857 = vmatprep.mubr.f32.mxu0 0.0
      %858 = vmatmul.mubr.f32.gmra.mrb[0].mxu0 %v580
      %v859 = vpop.f32.mrb[0].mxu0
      %v860 = vadd.f32 %v543, %v859
      %v861 = vpop.f32.mrb[0].mxu0
      %862 = vmatprep.mubr.f32.mxu0 0.0
      %863 = vmatmul.mubr.f32.gmra.mrb[0].mxu0 %v583
      %v864 = vpop.f32.mrb[0].mxu0
      %v865 = vadd.f32 %v543, %v864
      %v866 = vpop.f32.mrb[0].mxu0
      %867 = vmatprep.mubr.f32.mxu0 0.0
      %868 = vmatmul.mubr.f32.gmra.mrb[0].mxu0 %v586
      %v869 = vpop.f32.mrb[0].mxu0
      %v870 = vadd.f32 %v543, %v869
      %v871 = vpop.f32.mrb[0].mxu0
      %872 = vmatprep.mubr.f32.mxu0 0.0
      %873 = vmatmul.mubr.f32.gmra.mrb[0].mxu0 %v589
      %v874 = vpop.f32.mrb[0].mxu0
      %v875 = vadd.f32 %v543, %v874
      %v876 = vpop.f32.mrb[0].mxu0
      %877 = vmatprep.mubr.f32.mxu0 0.0
      %878 = vmatmul.mubr.f32.gmra.mrb[0].mxu0 %v592
      %v879 = vpop.f32.mrb[0].mxu0
      %v880 = vadd.f32 %v543, %v879
      %v881 = vpop.f32.mrb[0].mxu0
      %882 = vmatprep.mubr.f32.mxu0 0.0
      %883 = vmatmul.mubr.f32.gmra.mrb[0].mxu0 %v595
      %v884 = vpop.f32.mrb[0].mxu0
      %v885 = vadd.f32 %v543, %v884
      %v886 = vpop.f32.mrb[0].mxu0
      %887 = vmatprep.mubr.f32.mxu0 0.0
      %888 = vmatmul.mubr.f32.gmra.mrb[0].mxu0 %v598
      %v889 = vpop.f32.mrb[0].mxu0
      %v890 = vadd.f32 %v543, %v889
      %v891 = vpop.f32.mrb[0].mxu0
      %892 = vmatprep.mubr.f32.mxu0 0.0
      %893 = vmatmul.mubr.f32.gmra.mrb[0].mxu0 %v601
      %v894 = vpop.f32.mrb[0].mxu0
      %v895 = vadd.f32 %v543, %v894
      %v896 = vpop.f32.mrb[0].mxu0
      %897 = vmatprep.mubr.f32.mxu0 0.0
      %898 = vmatmul.mubr.f32.gmra.mrb[0].mxu0 %v604
      %v899 = vpop.f32.mrb[0].mxu0
      %v900 = vadd.f32 %v543, %v899
      %v901 = vpop.f32.mrb[0].mxu0
      %902 = vmatprep.mubr.f32.mxu0 0.0
      %903 = vmatmul.mubr.f32.gmra.mrb[0].mxu0 %v607
      %v904 = vpop.f32.mrb[0].mxu0
      %v905 = vadd.f32 %v543, %v904
      %v906 = vpop.f32.mrb[0].mxu0
      %907 = vmatprep.mubr.f32.mxu0 0.0
      %908 = vmatmul.mubr.f32.gmra.mrb[0].mxu0 %v610
      %v909 = vpop.f32.mrb[0].mxu0
      %v910 = vadd.f32 %v543, %v909
      %v911 = vpop.f32.mrb[0].mxu0
      %912 = vmatprep.mubr.f32.mxu0 0.0
      %913 = vmatmul.mubr.f32.gmra.mrb[0].mxu0 %v613
      %v914 = vpop.f32.mrb[0].mxu0
      %v915 = vadd.f32 %v543, %v914
      %v916 = vpop.f32.mrb[0].mxu0
      %917 = vmatprep.mubr.f32.mxu0 0.0
      %918 = vmatmul.mubr.f32.gmra.mrb[0].mxu0 %v616
      %v919 = vpop.f32.mrb[0].mxu0
      %v920 = vadd.f32 %v543, %v919
      %v921 = vpop.f32.mrb[0].mxu0
      %922 = vmatprep.mubr.f32.mxu0 0.0
      %923 = vmatmul.mubr.f32.gmra.mrb[0].mxu0 %v619
      %v924 = vpop.f32.mrb[0].mxu0
      %v925 = vadd.f32 %v543, %v924
      %v926 = vpop.f32.mrb[0].mxu0
      %927 = vmatprep.mubr.f32.mxu0 0.0
      %928 = vmatmul.mubr.f32.gmra.mrb[0].mxu0 %v622
      %v929 = vpop.f32.mrb[0].mxu0
      %v930 = vadd.f32 %v543, %v929
      %v931 = vpop.f32.mrb[0].mxu0
      %932 = vmatprep.mubr.f32.mxu0 0.0
      %933 = vmatmul.mubr.f32.gmra.mrb[0].mxu0 %v625
      %v934 = vpop.f32.mrb[0].mxu0
      %v935 = vadd.f32 %v543, %v934
      %v936 = vpop.f32.mrb[0].mxu0
      %937 = vmatprep.mubr.f32.mxu0 0.0
      %938 = vmatmul.mubr.f32.gmra.mrb[0].mxu0 %v628
      %v939 = vpop.f32.mrb[0].mxu0
      %v940 = vadd.f32 %v543, %v939
      %v941 = vpop.f32.mrb[0].mxu0
      %942 = vmatprep.mubr.f32.mxu0 0.0
      %943 = vmatmul.mubr.f32.gmra.mrb[0].mxu0 %v631
      %v944 = vpop.f32.mrb[0].mxu0
      %v945 = vadd.f32 %v543, %v944
      %v946 = vpop.f32.mrb[0].mxu0
      %947 = vmatprep.mubr.f32.mxu0 0.0
      %948 = vmatmul.mubr.f32.gmra.mrb[0].mxu0 %v634
      %v949 = vpop.f32.mrb[0].mxu0
      %v950 = vadd.f32 %v543, %v949
      %v951 = vpop.f32.mrb[0].mxu0
      %952 = vmatprep.mubr.f32.mxu0 0.0
      %953 = vmatmul.mubr.f32.gmra.mrb[0].mxu0 %v637
      %v954 = vpop.f32.mrb[0].mxu0
      %v955 = vadd.f32 %v543, %v954
      %v956 = vpop.f32.mrb[0].mxu0
      %957 = vmatprep.mubr.f32.mxu0 0.0
      %958 = vmatmul.mubr.f32.gmra.mrb[0].mxu0 %v640
      %v959 = vpop.f32.mrb[0].mxu0
      %v960 = vadd.f32 %v543, %v959
      %v961 = vpop.f32.mrb[0].mxu0
      %962 = vmatprep.mubr.f32.mxu0 0.0
      %963 = vmatmul.mubr.f32.gmra.mrb[0].mxu0 %v643
      %v964 = vpop.f32.mrb[0].mxu0
      %v965 = vadd.f32 %v543, %v964
      %v966 = vpop.f32.mrb[0].mxu0
      %967 = vmatprep.mubr.f32.mxu0 0.0
      %968 = vmatmul.mubr.f32.gmra.mrb[0].mxu0 %v646
      %v969 = vpop.f32.mrb[0].mxu0
      %v970 = vadd.f32 %v543, %v969
      %v971 = vpop.f32.mrb[0].mxu0
      %972 = vmatprep.mubr.f32.mxu0 0.0
      %973 = vmatmul.mubr.f32.gmra.mrb[0].mxu0 %v649
      %v974 = vpop.f32.mrb[0].mxu0
      %v975 = vadd.f32 %v543, %v974
      %v976 = vpop.f32.mrb[0].mxu0
      %977 = vmatprep.mubr.f32.mxu0 0.0
      %978 = vmatmul.mubr.f32.gmra.mrb[0].mxu0 %v652
      %v979 = vpop.f32.mrb[0].mxu0
      %v980 = vadd.f32 %v543, %v979
      %v981 = vpop.f32.mrb[0].mxu0
      %982 = vmatprep.mubr.f32.mxu0 0.0
      %983 = vmatmul.mubr.f32.gmra.mrb[0].mxu0 %v655
      %v984 = vpop.f32.mrb[0].mxu0
      %v985 = vadd.f32 %v543, %v984
      %v986 = vpop.f32.mrb[0].mxu0
      %987 = vmatprep.mubr.f32.mxu0 0.0
      %988 = vmatmul.mubr.f32.gmra.mrb[0].mxu0 %v658
      %v989 = vpop.f32.mrb[0].mxu0
      %v990 = vadd.f32 %v543, %v989
      %v991 = vpop.f32.mrb[0].mxu0
      %992 = vmatprep.mubr.f32.mxu0 0.0
      %993 = vmatmul.mubr.f32.gmra.mrb[0].mxu0 %v661
      %v994 = vpop.f32.mrb[0].mxu0
      %v995 = vadd.f32 %v543, %v994
      %v996 = vpop.f32.mrb[0].mxu0
      %997 = vmatprep.mubr.f32.mxu0 0.0
      %998 = vmatmul.mubr.f32.gmra.mrb[0].mxu0 %v664
      %v999 = vpop.f32.mrb[0].mxu0
      %v1000 = vadd.f32 %v543, %v999
      %v1001 = vpop.f32.mrb[0].mxu0
      %1002 = vmatprep.mubr.f32.mxu0 0.0
      %1003 = vmatmul.mubr.f32.gmra.mrb[0].mxu0 %v667
      %v1004 = vpop.f32.mrb[0].mxu0
      %v1005 = vadd.f32 %v543, %v1004
      %v1006 = vpop.f32.mrb[0].mxu0
      %1007 = vmatprep.mubr.f32.mxu0 0.0
      %1008 = vmatmul.mubr.f32.gmra.mrb[0].mxu0 %v670
      %v1009 = vpop.f32.mrb[0].mxu0
      %v1010 = vadd.f32 %v543, %v1009
      %v1011 = vpop.f32.mrb[0].mxu0
      %1012 = vmatprep.mubr.f32.mxu0 0.0
      %1013 = vmatmul.mubr.f32.gmra.mrb[0].mxu0 %v673
      %v1014 = vpop.f32.mrb[0].mxu0
      %v1015 = vadd.f32 %v543, %v1014
      %v1016 = vpop.f32.mrb[0].mxu0
      %1017 = vmatprep.mubr.f32.mxu0 0.0
      %1018 = vmatmul.mubr.f32.gmra.mrb[0].mxu0 %v676
      %v1019 = vpop.f32.mrb[0].mxu0
      %v1020 = vadd.f32 %v543, %v1019
      %v1021 = vpop.f32.mrb[0].mxu0
      %1022 = vmatprep.mubr.f32.mxu0 0.0
      %1023 = vmatmul.mubr.f32.gmra.mrb[0].mxu0 %v679
      %v1024 = vpop.f32.mrb[0].mxu0
      %v1025 = vadd.f32 %v543, %v1024
      %v1026 = vpop.f32.mrb[0].mxu0
      %1027 = vmatprep.mubr.f32.mxu0 0.0
      %1028 = vmatmul.mubr.f32.gmra.mrb[0].mxu0 %v682
      %v1029 = vpop.f32.mrb[0].mxu0
      %v1030 = vadd.f32 %v543, %v1029
      %v1031 = vpop.f32.mrb[0].mxu0
      %1032 = vmatprep.mubr.f32.mxu0 0.0
      %1033 = vmatmul.mubr.f32.gmra.mrb[0].mxu0 %v685
      %v1034 = vpop.f32.mrb[0].mxu0
      %v1035 = vadd.f32 %v543, %v1034
      %v1036 = vpop.f32.mrb[0].mxu0
      %1037 = vmatprep.mubr.f32.mxu0 0.0
      %1038 = vmatmul.mubr.f32.gmra.mrb[0].mxu0 %v688
      %v1039 = vpop.f32.mrb[0].mxu0
      %v1040 = vadd.f32 %v543, %v1039
      %v1041 = vpop.f32.mrb[0].mxu0
      %1042 = vmatprep.mubr.f32.mxu0 0.0
      %1043 = vmatmul.mubr.f32.gmra.mrb[0].mxu0 %v691
      %v1044 = vpop.f32.mrb[0].mxu0
      %v1045 = vadd.f32 %v543, %v1044
      %v1046 = vpop.f32.mrb[0].mxu0
      %1047 = vmatprep.mubr.f32.mxu0 0.0
      %1048 = vmatmul.mubr.f32.gmra.mrb[0].mxu0 %v694
      %v1049 = vpop.f32.mrb[0].mxu0
      %v1050 = vadd.f32 %v543, %v1049
      %v1051 = vpop.f32.mrb[0].mxu0
      %1052 = vmatprep.mubr.f32.mxu0 0.0
      %1053 = vmatmul.mubr.f32.gmra.mrb[0].mxu0 %v697
      %v1054 = vpop.f32.mrb[0].mxu0
      %v1055 = vadd.f32 %v543, %v1054
      %v1056 = vpop.f32.mrb[0].mxu0
      %1057 = vmatprep.mubr.f32.mxu0 0.0
      %1058 = vmatmul.mubr.f32.gmra.mrb[0].mxu0 %v700
      %v1059 = vpop.f32.mrb[0].mxu0
      %v1060 = vadd.f32 %v543, %v1059
      %v1061 = vpop.f32.mrb[0].mxu0
      %1062 = vmatprep.mubr.f32.mxu0 0.0
      %1063 = vmatmul.mubr.f32.gmra.mrb[0].mxu0 %v703
      %v1064 = vpop.f32.mrb[0].mxu0
      %v1065 = vadd.f32 %v543, %v1064
      %v1066 = vpop.f32.mrb[0].mxu0
      %1067 = vmatprep.mubr.f32.mxu0 0.0
      %1068 = vmatmul.mubr.f32.gmra.mrb[0].mxu0 %v706
      %v1069 = vpop.f32.mrb[0].mxu0
      %v1070 = vadd.f32 %v543, %v1069
      %v1071 = vpop.f32.mrb[0].mxu0
      %1072 = vmatprep.mubr.f32.mxu0 0.0
      %1073 = vmatmul.mubr.f32.gmra.mrb[0].mxu0 %v709
      %v1074 = vpop.f32.mrb[0].mxu0
      %v1075 = vadd.f32 %v543, %v1074
      %v1076 = vpop.f32.mrb[0].mxu0
      %1077 = vmatprep.mubr.f32.mxu0 0.0
      %1078 = vmatmul.mubr.f32.gmra.mrb[0].mxu0 %v712
      %v1079 = vpop.f32.mrb[0].mxu0
      %v1080 = vadd.f32 %v543, %v1079
      %v1081 = vpop.f32.mrb[0].mxu0
      %1082 = vmatprep.mubr.f32.mxu0 0.0
      %1083 = vmatmul.mubr.f32.gmra.mrb[0].mxu0 %v715
      %v1084 = vpop.f32.mrb[0].mxu0
      %v1085 = vadd.f32 %v543, %v1084
      %v1086 = vpop.f32.mrb[0].mxu0
      %1087 = vmatprep.mubr.f32.mxu0 0.0
      %1088 = vmatmul.mubr.f32.gmra.mrb[0].mxu0 %v718
      %v1089 = vpop.f32.mrb[0].mxu0
      %v1090 = vadd.f32 %v543, %v1089
      %v1091 = vpop.f32.mrb[0].mxu0
      %1092 = vmatprep.mubr.f32.mxu0 0.0
      %1093 = vmatmul.mubr.f32.gmra.mrb[0].mxu0 %v721
      %v1094 = vpop.f32.mrb[0].mxu0
      %v1095 = vadd.f32 %v543, %v1094
      %v1096 = vpop.f32.mrb[0].mxu0
      %1097 = vmatprep.mubr.f32.mxu0 0.0
      %1098 = vmatmul.mubr.f32.gmra.mrb[0].mxu0 %v724
      %v1099 = vpop.f32.mrb[0].mxu0
      %v1100 = vadd.f32 %v543, %v1099
      %v1101 = vpop.f32.mrb[0].mxu0
      %1102 = vmatprep.mubr.f32.mxu0 0.0
      %1103 = vmatmul.mubr.f32.gmra.mrb[0].mxu0 %v727
      %v1104 = vpop.f32.mrb[0].mxu0
      %v1105 = vadd.f32 %v543, %v1104
      %v1106 = vpop.f32.mrb[0].mxu0
      %1107 = vmatprep.mubr.f32.mxu0 0.0
      %1108 = vmatmul.mubr.f32.gmra.mrb[0].mxu0 %v730
      %v1109 = vpop.f32.mrb[0].mxu0
      %v1110 = vadd.f32 %v543, %v1109
      %v1111 = vpop.f32.mrb[0].mxu0
      %1112 = vmatprep.mubr.f32.mxu0 0.0
      %1113 = vmatmul.mubr.f32.gmra.mrb[0].mxu0 %v733
      %v1114 = vpop.f32.mrb[0].mxu0
      %v1115 = vadd.f32 %v543, %v1114
      %v1116 = vpop.f32.mrb[0].mxu0
      %1117 = vmatprep.mubr.f32.mxu0 0.0
      %1118 = vmatmul.mubr.f32.gmra.mrb[0].mxu0 %v736
      %v1119 = vpop.f32.mrb[0].mxu0
      %v1120 = vadd.f32 %v543, %v1119
      %v1121 = vpop.f32.mrb[0].mxu0
      %1122 = vdwg.mxu0
      %v1123 = vmul.f32 %v805, 0.5
      %v1124 = vmul.f32 %v810, 0.5
      %v1125 = vmul.f32 %v815, 0.5
      %v1126 = vmul.f32 %v820, 0.5
      %v1127 = vmul.f32 %v825, 0.5
      %v1128 = vmul.f32 %v830, 0.5
      %v1129 = vmul.f32 %v835, 0.5
      %v1130 = vmul.f32 %v840, 0.5
      %v1131 = vmul.f32 %v845, 0.5
      %v1132 = vmul.f32 %v850, 0.5
      %v1133 = vmul.f32 %v855, 0.5
      %v1134 = vmul.f32 %v860, 0.5
      %v1135 = vmul.f32 %v865, 0.5
      %v1136 = vmul.f32 %v870, 0.5
      %v1137 = vmul.f32 %v875, 0.5
      %v1138 = vmul.f32 %v880, 0.5
      %v1139 = vmul.f32 %v885, 0.5
      %v1140 = vmul.f32 %v890, 0.5
      %v1141 = vmul.f32 %v895, 0.5
      %v1142 = vmul.f32 %v900, 0.5
      %v1143 = vmul.f32 %v905, 0.5
      %v1144 = vmul.f32 %v910, 0.5
      %v1145 = vmul.f32 %v915, 0.5
      %v1146 = vmul.f32 %v920, 0.5
      %v1147 = vmul.f32 %v925, 0.5
      %v1148 = vmul.f32 %v930, 0.5
      %v1149 = vmul.f32 %v935, 0.5
      %v1150 = vmul.f32 %v940, 0.5
      %v1151 = vmul.f32 %v945, 0.5
      %v1152 = vmul.f32 %v950, 0.5
      %v1153 = vmul.f32 %v955, 0.5
      %v1154 = vmul.f32 %v960, 0.5
      %v1155 = vmul.f32 %v965, 0.5
      %v1156 = vmul.f32 %v970, 0.5
      %v1157 = vmul.f32 %v975, 0.5
      %v1158 = vmul.f32 %v980, 0.5
      %v1159 = vmul.f32 %v985, 0.5
      %v1160 = vmul.f32 %v990, 0.5
      %v1161 = vmul.f32 %v995, 0.5
      %v1162 = vmul.f32 %v1000, 0.5
      %v1163 = vmul.f32 %v1005, 0.5
      %v1164 = vmul.f32 %v1010, 0.5
      %v1165 = vmul.f32 %v1015, 0.5
      %v1166 = vmul.f32 %v1020, 0.5
      %v1167 = vmul.f32 %v1025, 0.5
      %v1168 = vmul.f32 %v1030, 0.5
      %v1169 = vmul.f32 %v1035, 0.5
      %v1170 = vmul.f32 %v1040, 0.5
      %v1171 = vmul.f32 %v1045, 0.5
      %v1172 = vmul.f32 %v1050, 0.5
      %v1173 = vmul.f32 %v1055, 0.5
      %v1174 = vmul.f32 %v1060, 0.5
      %v1175 = vmul.f32 %v1065, 0.5
      %v1176 = vmul.f32 %v1070, 0.5
      %v1177 = vmul.f32 %v1075, 0.5
      %v1178 = vmul.f32 %v1080, 0.5
      %v1179 = vmul.f32 %v1085, 0.5
      %v1180 = vmul.f32 %v1090, 0.5
      %v1181 = vmul.f32 %v1095, 0.5
      %v1182 = vmul.f32 %v1100, 0.5
      %v1183 = vmul.f32 %v1105, 0.5
      %v1184 = vmul.f32 %v1110, 0.5
      %v1185 = vmul.f32 %v1115, 0.5
      %v1186 = vmul.f32 %v1120, 0.5
      %v1187 = vmul.f32 %v805, 0.70710677
      %v1188 = vmul.f32 %v810, 0.70710677
      %v1189 = vmul.f32 %v815, 0.70710677
      %v1190 = vmul.f32 %v820, 0.70710677
      %v1191 = vmul.f32 %v825, 0.70710677
      %v1192 = vmul.f32 %v830, 0.70710677
      %v1193 = vmul.f32 %v835, 0.70710677
      %v1194 = vmul.f32 %v840, 0.70710677
      %v1195 = vmul.f32 %v845, 0.70710677
      %v1196 = vmul.f32 %v850, 0.70710677
      %v1197 = vmul.f32 %v855, 0.70710677
      %v1198 = vmul.f32 %v860, 0.70710677
      %v1199 = vmul.f32 %v865, 0.70710677
      %v1200 = vmul.f32 %v870, 0.70710677
      %v1201 = vmul.f32 %v875, 0.70710677
      %v1202 = vmul.f32 %v880, 0.70710677
      %v1203 = vmul.f32 %v885, 0.70710677
      %v1204 = vmul.f32 %v890, 0.70710677
      %v1205 = vmul.f32 %v895, 0.70710677
      %v1206 = vmul.f32 %v900, 0.70710677
      %v1207 = vmul.f32 %v905, 0.70710677
      %v1208 = vmul.f32 %v910, 0.70710677
      %v1209 = vmul.f32 %v915, 0.70710677
      %v1210 = vmul.f32 %v920, 0.70710677
      %v1211 = vmul.f32 %v925, 0.70710677
      %v1212 = vmul.f32 %v930, 0.70710677
      %v1213 = vmul.f32 %v935, 0.70710677
      %v1214 = vmul.f32 %v940, 0.70710677
      %v1215 = vmul.f32 %v945, 0.70710677
      %v1216 = vmul.f32 %v950, 0.70710677
      %v1217 = vmul.f32 %v955, 0.70710677
      %v1218 = vmul.f32 %v960, 0.70710677
      %v1219 = vmul.f32 %v965, 0.70710677
      %v1220 = vmul.f32 %v970, 0.70710677
      %v1221 = vmul.f32 %v975, 0.70710677
      %v1222 = vmul.f32 %v980, 0.70710677
      %v1223 = vmul.f32 %v985, 0.70710677
      %v1224 = vmul.f32 %v990, 0.70710677
      %v1225 = vmul.f32 %v995, 0.70710677
      %v1226 = vmul.f32 %v1000, 0.70710677
      %v1227 = vmul.f32 %v1005, 0.70710677
      %v1228 = vmul.f32 %v1010, 0.70710677
      %v1229 = vmul.f32 %v1015, 0.70710677
      %v1230 = vmul.f32 %v1020, 0.70710677
      %v1231 = vmul.f32 %v1025, 0.70710677
      %v1232 = vmul.f32 %v1030, 0.70710677
      %v1233 = vmul.f32 %v1035, 0.70710677
      %v1234 = vmul.f32 %v1040, 0.70710677
      %v1235 = vmul.f32 %v1045, 0.70710677
      %v1236 = vmul.f32 %v1050, 0.70710677
      %v1237 = vmul.f32 %v1055, 0.70710677
      %v1238 = vmul.f32 %v1060, 0.70710677
      %v1239 = vmul.f32 %v1065, 0.70710677
      %v1240 = vmul.f32 %v1070, 0.70710677
      %v1241 = vmul.f32 %v1075, 0.70710677
      %v1242 = vmul.f32 %v1080, 0.70710677
      %v1243 = vmul.f32 %v1085, 0.70710677
      %v1244 = vmul.f32 %v1090, 0.70710677
      %v1245 = vmul.f32 %v1095, 0.70710677
      %v1246 = vmul.f32 %v1100, 0.70710677
      %v1247 = vmul.f32 %v1105, 0.70710677
      %v1248 = vmul.f32 %v1110, 0.70710677
      %v1249 = vmul.f32 %v1115, 0.70710677
      %v1250 = vmul.f32 %v1120, 0.70710677
      %v1251 = vmax.f32 %v1187, -4.0
      %v1252 = vmax.f32 %v1188, -4.0
      %v1253 = vmax.f32 %v1189, -4.0
      %v1254 = vmax.f32 %v1190, -4.0
      %v1255 = vmax.f32 %v1191, -4.0
      %v1256 = vmax.f32 %v1192, -4.0
      %v1257 = vmax.f32 %v1193, -4.0
      %v1258 = vmax.f32 %v1194, -4.0
      %v1259 = vmax.f32 %v1195, -4.0
      %v1260 = vmax.f32 %v1196, -4.0
      %v1261 = vmax.f32 %v1197, -4.0
      %v1262 = vmax.f32 %v1198, -4.0
      %v1263 = vmax.f32 %v1199, -4.0
      %v1264 = vmax.f32 %v1200, -4.0
      %v1265 = vmax.f32 %v1201, -4.0
      %v1266 = vmax.f32 %v1202, -4.0
      %v1267 = vmax.f32 %v1203, -4.0
      %v1268 = vmax.f32 %v1204, -4.0
      %v1269 = vmax.f32 %v1205, -4.0
      %v1270 = vmax.f32 %v1206, -4.0
      %v1271 = vmax.f32 %v1207, -4.0
      %v1272 = vmax.f32 %v1208, -4.0
      %v1273 = vmax.f32 %v1209, -4.0
      %v1274 = vmax.f32 %v1210, -4.0
      %v1275 = vmax.f32 %v1211, -4.0
      %v1276 = vmax.f32 %v1212, -4.0
      %v1277 = vmax.f32 %v1213, -4.0
      %v1278 = vmax.f32 %v1214, -4.0
      %v1279 = vmax.f32 %v1215, -4.0
      %v1280 = vmax.f32 %v1216, -4.0
      %v1281 = vmax.f32 %v1217, -4.0
      %v1282 = vmax.f32 %v1218, -4.0
      %v1283 = vmax.f32 %v1219, -4.0
      %v1284 = vmax.f32 %v1220, -4.0
      %v1285 = vmax.f32 %v1221, -4.0
      %v1286 = vmax.f32 %v1222, -4.0
      %v1287 = vmax.f32 %v1223, -4.0
      %v1288 = vmax.f32 %v1224, -4.0
      %v1289 = vmax.f32 %v1225, -4.0
      %v1290 = vmax.f32 %v1226, -4.0
      %v1291 = vmax.f32 %v1227, -4.0
      %v1292 = vmax.f32 %v1228, -4.0
      %v1293 = vmax.f32 %v1229, -4.0
      %v1294 = vmax.f32 %v1230, -4.0
      %v1295 = vmax.f32 %v1231, -4.0
      %v1296 = vmax.f32 %v1232, -4.0
      %v1297 = vmax.f32 %v1233, -4.0
      %v1298 = vmax.f32 %v1234, -4.0
      %v1299 = vmax.f32 %v1235, -4.0
      %v1300 = vmax.f32 %v1236, -4.0
      %v1301 = vmax.f32 %v1237, -4.0
      %v1302 = vmax.f32 %v1238, -4.0
      %v1303 = vmax.f32 %v1239, -4.0
      %v1304 = vmax.f32 %v1240, -4.0
      %v1305 = vmax.f32 %v1241, -4.0
      %v1306 = vmax.f32 %v1242, -4.0
      %v1307 = vmax.f32 %v1243, -4.0
      %v1308 = vmax.f32 %v1244, -4.0
      %v1309 = vmax.f32 %v1245, -4.0
      %v1310 = vmax.f32 %v1246, -4.0
      %v1311 = vmax.f32 %v1247, -4.0
      %v1312 = vmax.f32 %v1248, -4.0
      %v1313 = vmax.f32 %v1249, -4.0
      %v1314 = vmax.f32 %v1250, -4.0
      %v1315 = vmin.f32 %v1251, 4.0
      %v1316 = vmin.f32 %v1252, 4.0
      %v1317 = vmin.f32 %v1253, 4.0
      %v1318 = vmin.f32 %v1254, 4.0
      %v1319 = vmin.f32 %v1255, 4.0
      %v1320 = vmin.f32 %v1256, 4.0
      %v1321 = vmin.f32 %v1257, 4.0
      %v1322 = vmin.f32 %v1258, 4.0
      %v1323 = vmin.f32 %v1259, 4.0
      %v1324 = vmin.f32 %v1260, 4.0
      %v1325 = vmin.f32 %v1261, 4.0
      %v1326 = vmin.f32 %v1262, 4.0
      %v1327 = vmin.f32 %v1263, 4.0
      %v1328 = vmin.f32 %v1264, 4.0
      %v1329 = vmin.f32 %v1265, 4.0
      %v1330 = vmin.f32 %v1266, 4.0
      %v1331 = vmin.f32 %v1267, 4.0
      %v1332 = vmin.f32 %v1268, 4.0
      %v1333 = vmin.f32 %v1269, 4.0
      %v1334 = vmin.f32 %v1270, 4.0
      %v1335 = vmin.f32 %v1271, 4.0
      %v1336 = vmin.f32 %v1272, 4.0
      %v1337 = vmin.f32 %v1273, 4.0
      %v1338 = vmin.f32 %v1274, 4.0
      %v1339 = vmin.f32 %v1275, 4.0
      %v1340 = vmin.f32 %v1276, 4.0
      %v1341 = vmin.f32 %v1277, 4.0
      %v1342 = vmin.f32 %v1278, 4.0
      %v1343 = vmin.f32 %v1279, 4.0
      %v1344 = vmin.f32 %v1280, 4.0
      %v1345 = vmin.f32 %v1281, 4.0
      %v1346 = vmin.f32 %v1282, 4.0
      %v1347 = vmin.f32 %v1283, 4.0
      %v1348 = vmin.f32 %v1284, 4.0
      %v1349 = vmin.f32 %v1285, 4.0
      %v1350 = vmin.f32 %v1286, 4.0
      %v1351 = vmin.f32 %v1287, 4.0
      %v1352 = vmin.f32 %v1288, 4.0
      %v1353 = vmin.f32 %v1289, 4.0
      %v1354 = vmin.f32 %v1290, 4.0
      %v1355 = vmin.f32 %v1291, 4.0
      %v1356 = vmin.f32 %v1292, 4.0
      %v1357 = vmin.f32 %v1293, 4.0
      %v1358 = vmin.f32 %v1294, 4.0
      %v1359 = vmin.f32 %v1295, 4.0
      %v1360 = vmin.f32 %v1296, 4.0
      %v1361 = vmin.f32 %v1297, 4.0
      %v1362 = vmin.f32 %v1298, 4.0
      %v1363 = vmin.f32 %v1299, 4.0
      %v1364 = vmin.f32 %v1300, 4.0
      %v1365 = vmin.f32 %v1301, 4.0
      %v1366 = vmin.f32 %v1302, 4.0
      %v1367 = vmin.f32 %v1303, 4.0
      %v1368 = vmin.f32 %v1304, 4.0
      %v1369 = vmin.f32 %v1305, 4.0
      %v1370 = vmin.f32 %v1306, 4.0
      %v1371 = vmin.f32 %v1307, 4.0
      %v1372 = vmin.f32 %v1308, 4.0
      %v1373 = vmin.f32 %v1309, 4.0
      %v1374 = vmin.f32 %v1310, 4.0
      %v1375 = vmin.f32 %v1311, 4.0
      %v1376 = vmin.f32 %v1312, 4.0
      %v1377 = vmin.f32 %v1313, 4.0
      %v1378 = vmin.f32 %v1314, 4.0
      %v1379 = vmul.f32 %v1315, %v1315
      %v1380 = vmul.f32 %v1316, %v1316
      %v1381 = vmul.f32 %v1317, %v1317
      %v1382 = vmul.f32 %v1318, %v1318
      %v1383 = vmul.f32 %v1319, %v1319
      %v1384 = vmul.f32 %v1320, %v1320
      %v1385 = vmul.f32 %v1321, %v1321
      %v1386 = vmul.f32 %v1322, %v1322
      %v1387 = vmul.f32 %v1323, %v1323
      %v1388 = vmul.f32 %v1324, %v1324
      %v1389 = vmul.f32 %v1325, %v1325
      %v1390 = vmul.f32 %v1326, %v1326
      %v1391 = vmul.f32 %v1327, %v1327
      %v1392 = vmul.f32 %v1328, %v1328
      %v1393 = vmul.f32 %v1329, %v1329
      %v1394 = vmul.f32 %v1330, %v1330
      %v1395 = vmul.f32 %v1331, %v1331
      %v1396 = vmul.f32 %v1332, %v1332
      %v1397 = vmul.f32 %v1333, %v1333
      %v1398 = vmul.f32 %v1334, %v1334
      %v1399 = vmul.f32 %v1335, %v1335
      %v1400 = vmul.f32 %v1336, %v1336
      %v1401 = vmul.f32 %v1337, %v1337
      %v1402 = vmul.f32 %v1338, %v1338
      %v1403 = vmul.f32 %v1339, %v1339
      %v1404 = vmul.f32 %v1340, %v1340
      %v1405 = vmul.f32 %v1341, %v1341
      %v1406 = vmul.f32 %v1342, %v1342
      %v1407 = vmul.f32 %v1343, %v1343
      %v1408 = vmul.f32 %v1344, %v1344
      %v1409 = vmul.f32 %v1345, %v1345
      %v1410 = vmul.f32 %v1346, %v1346
      %v1411 = vmul.f32 %v1347, %v1347
      %v1412 = vmul.f32 %v1348, %v1348
      %v1413 = vmul.f32 %v1349, %v1349
      %v1414 = vmul.f32 %v1350, %v1350
      %v1415 = vmul.f32 %v1351, %v1351
      %v1416 = vmul.f32 %v1352, %v1352
      %v1417 = vmul.f32 %v1353, %v1353
      %v1418 = vmul.f32 %v1354, %v1354
      %v1419 = vmul.f32 %v1355, %v1355
      %v1420 = vmul.f32 %v1356, %v1356
      %v1421 = vmul.f32 %v1357, %v1357
      %v1422 = vmul.f32 %v1358, %v1358
      %v1423 = vmul.f32 %v1359, %v1359
      %v1424 = vmul.f32 %v1360, %v1360
      %v1425 = vmul.f32 %v1361, %v1361
      %v1426 = vmul.f32 %v1362, %v1362
      %v1427 = vmul.f32 %v1363, %v1363
      %v1428 = vmul.f32 %v1364, %v1364
      %v1429 = vmul.f32 %v1365, %v1365
      %v1430 = vmul.f32 %v1366, %v1366
      %v1431 = vmul.f32 %v1367, %v1367
      %v1432 = vmul.f32 %v1368, %v1368
      %v1433 = vmul.f32 %v1369, %v1369
      %v1434 = vmul.f32 %v1370, %v1370
      %v1435 = vmul.f32 %v1371, %v1371
      %v1436 = vmul.f32 %v1372, %v1372
      %v1437 = vmul.f32 %v1373, %v1373
      %v1438 = vmul.f32 %v1374, %v1374
      %v1439 = vmul.f32 %v1375, %v1375
      %v1440 = vmul.f32 %v1376, %v1376
      %v1441 = vmul.f32 %v1377, %v1377
      %v1442 = vmul.f32 %v1378, %v1378
      %v1443 = vmul.f32 %v1379, -2.7261424e-10
      %v1444 = vmul.f32 %v1380, -2.7261424e-10
      %v1445 = vmul.f32 %v1381, -2.7261424e-10
      %v1446 = vmul.f32 %v1382, -2.7261424e-10
      %v1447 = vmul.f32 %v1383, -2.7261424e-10
      %v1448 = vmul.f32 %v1384, -2.7261424e-10
      %v1449 = vmul.f32 %v1385, -2.7261424e-10
      %v1450 = vmul.f32 %v1386, -2.7261424e-10
      %v1451 = vmul.f32 %v1387, -2.7261424e-10
      %v1452 = vmul.f32 %v1388, -2.7261424e-10
      %v1453 = vmul.f32 %v1389, -2.7261424e-10
      %v1454 = vmul.f32 %v1390, -2.7261424e-10
      %v1455 = vmul.f32 %v1391, -2.7261424e-10
      %v1456 = vmul.f32 %v1392, -2.7261424e-10
      %v1457 = vmul.f32 %v1393, -2.7261424e-10
      %v1458 = vmul.f32 %v1394, -2.7261424e-10
      %v1459 = vmul.f32 %v1395, -2.7261424e-10
      %v1460 = vmul.f32 %v1396, -2.7261424e-10
      %v1461 = vmul.f32 %v1397, -2.7261424e-10
      %v1462 = vmul.f32 %v1398, -2.7261424e-10
      %v1463 = vmul.f32 %v1399, -2.7261424e-10
      %v1464 = vmul.f32 %v1400, -2.7261424e-10
      %v1465 = vmul.f32 %v1401, -2.7261424e-10
      %v1466 = vmul.f32 %v1402, -2.7261424e-10
      %v1467 = vmul.f32 %v1403, -2.7261424e-10
      %v1468 = vmul.f32 %v1404, -2.7261424e-10
      %v1469 = vmul.f32 %v1405, -2.7261424e-10
      %v1470 = vmul.f32 %v1406, -2.7261424e-10
      %v1471 = vmul.f32 %v1407, -2.7261424e-10
      %v1472 = vmul.f32 %v1408, -2.7261424e-10
      %v1473 = vmul.f32 %v1409, -2.7261424e-10
      %v1474 = vmul.f32 %v1410, -2.7261424e-10
      %v1475 = vmul.f32 %v1411, -2.7261424e-10
      %v1476 = vmul.f32 %v1412, -2.7261424e-10
      %v1477 = vmul.f32 %v1413, -2.7261424e-10
      %v1478 = vmul.f32 %v1414, -2.7261424e-10
      %v1479 = vmul.f32 %v1415, -2.7261424e-10
      %v1480 = vmul.f32 %v1416, -2.7261424e-10
      %v1481 = vmul.f32 %v1417, -2.7261424e-10
      %v1482 = vmul.f32 %v1418, -2.7261424e-10
      %v1483 = vmul.f32 %v1419, -2.7261424e-10
      %v1484 = vmul.f32 %v1420, -2.7261424e-10
      %v1485 = vmul.f32 %v1421, -2.7261424e-10
      %v1486 = vmul.f32 %v1422, -2.7261424e-10
      %v1487 = vmul.f32 %v1423, -2.7261424e-10
      %v1488 = vmul.f32 %v1424, -2.7261424e-10
      %v1489 = vmul.f32 %v1425, -2.7261424e-10
      %v1490 = vmul.f32 %v1426, -2.7261424e-10
      %v1491 = vmul.f32 %v1427, -2.7261424e-10
      %v1492 = vmul.f32 %v1428, -2.7261424e-10
      %v1493 = vmul.f32 %v1429, -2.7261424e-10
      %v1494 = vmul.f32 %v1430, -2.7261424e-10
      %v1495 = vmul.f32 %v1431, -2.7261424e-10
      %v1496 = vmul.f32 %v1432, -2.7261424e-10
      %v1497 = vmul.f32 %v1433, -2.7261424e-10
      %v1498 = vmul.f32 %v1434, -2.7261424e-10
      %v1499 = vmul.f32 %v1435, -2.7261424e-10
      %v1500 = vmul.f32 %v1436, -2.7261424e-10
      %v1501 = vmul.f32 %v1437, -2.7261424e-10
      %v1502 = vmul.f32 %v1438, -2.7261424e-10
      %v1503 = vmul.f32 %v1439, -2.7261424e-10
      %v1504 = vmul.f32 %v1440, -2.7261424e-10
      %v1505 = vmul.f32 %v1441, -2.7261424e-10
      %v1506 = vmul.f32 %v1442, -2.7261424e-10
      %v1507 = vadd.f32 %v1443, 2.7706815e-08
      %v1508 = vadd.f32 %v1444, 2.7706815e-08
      %v1509 = vadd.f32 %v1445, 2.7706815e-08
      %v1510 = vadd.f32 %v1446, 2.7706815e-08
      %v1511 = vadd.f32 %v1447, 2.7706815e-08
      %v1512 = vadd.f32 %v1448, 2.7706815e-08
      %v1513 = vadd.f32 %v1449, 2.7706815e-08
      %v1514 = vadd.f32 %v1450, 2.7706815e-08
      %v1515 = vadd.f32 %v1451, 2.7706815e-08
      %v1516 = vadd.f32 %v1452, 2.7706815e-08
      %v1517 = vadd.f32 %v1453, 2.7706815e-08
      %v1518 = vadd.f32 %v1454, 2.7706815e-08
      %v1519 = vadd.f32 %v1455, 2.7706815e-08
      %v1520 = vadd.f32 %v1456, 2.7706815e-08
      %v1521 = vadd.f32 %v1457, 2.7706815e-08
      %v1522 = vadd.f32 %v1458, 2.7706815e-08
      %v1523 = vadd.f32 %v1459, 2.7706815e-08
      %v1524 = vadd.f32 %v1460, 2.7706815e-08
      %v1525 = vadd.f32 %v1461, 2.7706815e-08
      %v1526 = vadd.f32 %v1462, 2.7706815e-08
      %v1527 = vadd.f32 %v1463, 2.7706815e-08
      %v1528 = vadd.f32 %v1464, 2.7706815e-08
      %v1529 = vadd.f32 %v1465, 2.7706815e-08
      %v1530 = vadd.f32 %v1466, 2.7706815e-08
      %v1531 = vadd.f32 %v1467, 2.7706815e-08
      %v1532 = vadd.f32 %v1468, 2.7706815e-08
      %v1533 = vadd.f32 %v1469, 2.7706815e-08
      %v1534 = vadd.f32 %v1470, 2.7706815e-08
      %v1535 = vadd.f32 %v1471, 2.7706815e-08
      %v1536 = vadd.f32 %v1472, 2.7706815e-08
      %v1537 = vadd.f32 %v1473, 2.7706815e-08
      %v1538 = vadd.f32 %v1474, 2.7706815e-08
      %v1539 = vadd.f32 %v1475, 2.7706815e-08
      %v1540 = vadd.f32 %v1476, 2.7706815e-08
      %v1541 = vadd.f32 %v1477, 2.7706815e-08
      %v1542 = vadd.f32 %v1478, 2.7706815e-08
      %v1543 = vadd.f32 %v1479, 2.7706815e-08
      %v1544 = vadd.f32 %v1480, 2.7706815e-08
      %v1545 = vadd.f32 %v1481, 2.7706815e-08
      %v1546 = vadd.f32 %v1482, 2.7706815e-08
      %v1547 = vadd.f32 %v1483, 2.7706815e-08
      %v1548 = vadd.f32 %v1484, 2.7706815e-08
      %v1549 = vadd.f32 %v1485, 2.7706815e-08
      %v1550 = vadd.f32 %v1486, 2.7706815e-08
      %v1551 = vadd.f32 %v1487, 2.7706815e-08
      %v1552 = vadd.f32 %v1488, 2.7706815e-08
      %v1553 = vadd.f32 %v1489, 2.7706815e-08
      %v1554 = vadd.f32 %v1490, 2.7706815e-08
      %v1555 = vadd.f32 %v1491, 2.7706815e-08
      %v1556 = vadd.f32 %v1492, 2.7706815e-08
      %v1557 = vadd.f32 %v1493, 2.7706815e-08
      %v1558 = vadd.f32 %v1494, 2.7706815e-08
      %v1559 = vadd.f32 %v1495, 2.7706815e-08
      %v1560 = vadd.f32 %v1496, 2.7706815e-08
      %v1561 = vadd.f32 %v1497, 2.7706815e-08
      %v1562 = vadd.f32 %v1498, 2.7706815e-08
      %v1563 = vadd.f32 %v1499, 2.7706815e-08
      %v1564 = vadd.f32 %v1500, 2.7706815e-08
      %v1565 = vadd.f32 %v1501, 2.7706815e-08
      %v1566 = vadd.f32 %v1502, 2.7706815e-08
      %v1567 = vadd.f32 %v1503, 2.7706815e-08
      %v1568 = vadd.f32 %v1504, 2.7706815e-08
      %v1569 = vadd.f32 %v1505, 2.7706815e-08
      %v1570 = vadd.f32 %v1506, 2.7706815e-08
      %v1571 = vmul.f32 %v1507, %v1379
      %v1572 = vmul.f32 %v1508, %v1380
      %v1573 = vmul.f32 %v1509, %v1381
      %v1574 = vmul.f32 %v1510, %v1382
      %v1575 = vmul.f32 %v1511, %v1383
      %v1576 = vmul.f32 %v1512, %v1384
      %v1577 = vmul.f32 %v1513, %v1385
      %v1578 = vmul.f32 %v1514, %v1386
      %v1579 = vmul.f32 %v1515, %v1387
      %v1580 = vmul.f32 %v1516, %v1388
      %v1581 = vmul.f32 %v1517, %v1389
      %v1582 = vmul.f32 %v1518, %v1390
      %v1583 = vmul.f32 %v1519, %v1391
      %v1584 = vmul.f32 %v1520, %v1392
      %v1585 = vmul.f32 %v1521, %v1393
      %v1586 = vmul.f32 %v1522, %v1394
      %v1587 = vmul.f32 %v1523, %v1395
      %v1588 = vmul.f32 %v1524, %v1396
      %v1589 = vmul.f32 %v1525, %v1397
      %v1590 = vmul.f32 %v1526, %v1398
      %v1591 = vmul.f32 %v1527, %v1399
      %v1592 = vmul.f32 %v1528, %v1400
      %v1593 = vmul.f32 %v1529, %v1401
      %v1594 = vmul.f32 %v1530, %v1402
      %v1595 = vmul.f32 %v1531, %v1403
      %v1596 = vmul.f32 %v1532, %v1404
      %v1597 = vmul.f32 %v1533, %v1405
      %v1598 = vmul.f32 %v1534, %v1406
      %v1599 = vmul.f32 %v1535, %v1407
      %v1600 = vmul.f32 %v1536, %v1408
      %v1601 = vmul.f32 %v1537, %v1409
      %v1602 = vmul.f32 %v1538, %v1410
      %v1603 = vmul.f32 %v1539, %v1411
      %v1604 = vmul.f32 %v1540, %v1412
      %v1605 = vmul.f32 %v1541, %v1413
      %v1606 = vmul.f32 %v1542, %v1414
      %v1607 = vmul.f32 %v1543, %v1415
      %v1608 = vmul.f32 %v1544, %v1416
      %v1609 = vmul.f32 %v1545, %v1417
      %v1610 = vmul.f32 %v1546, %v1418
      %v1611 = vmul.f32 %v1547, %v1419
      %v1612 = vmul.f32 %v1548, %v1420
      %v1613 = vmul.f32 %v1549, %v1421
      %v1614 = vmul.f32 %v1550, %v1422
      %v1615 = vmul.f32 %v1551, %v1423
      %v1616 = vmul.f32 %v1552, %v1424
      %v1617 = vmul.f32 %v1553, %v1425
      %v1618 = vmul.f32 %v1554, %v1426
      %v1619 = vmul.f32 %v1555, %v1427
      %v1620 = vmul.f32 %v1556, %v1428
      %v1621 = vmul.f32 %v1557, %v1429
      %v1622 = vmul.f32 %v1558, %v1430
      %v1623 = vmul.f32 %v1559, %v1431
      %v1624 = vmul.f32 %v1560, %v1432
      %v1625 = vmul.f32 %v1561, %v1433
      %v1626 = vmul.f32 %v1562, %v1434
      %v1627 = vmul.f32 %v1563, %v1435
      %v1628 = vmul.f32 %v1564, %v1436
      %v1629 = vmul.f32 %v1565, %v1437
      %v1630 = vmul.f32 %v1566, %v1438
      %v1631 = vmul.f32 %v1567, %v1439
      %v1632 = vmul.f32 %v1568, %v1440
      %v1633 = vmul.f32 %v1569, %v1441
      %v1634 = vmul.f32 %v1570, %v1442
      %v1635 = vadd.f32 %v1571, -2.101024e-06
      %v1636 = vadd.f32 %v1572, -2.101024e-06
      %v1637 = vadd.f32 %v1573, -2.101024e-06
      %v1638 = vadd.f32 %v1574, -2.101024e-06
      %v1639 = vadd.f32 %v1575, -2.101024e-06
      %v1640 = vadd.f32 %v1576, -2.101024e-06
      %v1641 = vadd.f32 %v1577, -2.101024e-06
      %v1642 = vadd.f32 %v1578, -2.101024e-06
      %v1643 = vadd.f32 %v1579, -2.101024e-06
      %v1644 = vadd.f32 %v1580, -2.101024e-06
      %v1645 = vadd.f32 %v1581, -2.101024e-06
      %v1646 = vadd.f32 %v1582, -2.101024e-06
      %v1647 = vadd.f32 %v1583, -2.101024e-06
      %v1648 = vadd.f32 %v1584, -2.101024e-06
      %v1649 = vadd.f32 %v1585, -2.101024e-06
      %v1650 = vadd.f32 %v1586, -2.101024e-06
      %v1651 = vadd.f32 %v1587, -2.101024e-06
      %v1652 = vadd.f32 %v1588, -2.101024e-06
      %v1653 = vadd.f32 %v1589, -2.101024e-06
      %v1654 = vadd.f32 %v1590, -2.101024e-06
      %v1655 = vadd.f32 %v1591, -2.101024e-06
      %v1656 = vadd.f32 %v1592, -2.101024e-06
      %v1657 = vadd.f32 %v1593, -2.101024e-06
      %v1658 = vadd.f32 %v1594, -2.101024e-06
      %v1659 = vadd.f32 %v1595, -2.101024e-06
      %v1660 = vadd.f32 %v1596, -2.101024e-06
      %v1661 = vadd.f32 %v1597, -2.101024e-06
      %v1662 = vadd.f32 %v1598, -2.101024e-06
      %v1663 = vadd.f32 %v1599, -2.101024e-06
      %v1664 = vadd.f32 %v1600, -2.101024e-06
      %v1665 = vadd.f32 %v1601, -2.101024e-06
      %v1666 = vadd.f32 %v1602, -2.101024e-06
      %v1667 = vadd.f32 %v1603, -2.101024e-06
      %v1668 = vadd.f32 %v1604, -2.101024e-06
      %v1669 = vadd.f32 %v1605, -2.101024e-06
      %v1670 = vadd.f32 %v1606, -2.101024e-06
      %v1671 = vadd.f32 %v1607, -2.101024e-06
      %v1672 = vadd.f32 %v1608, -2.101024e-06
      %v1673 = vadd.f32 %v1609, -2.101024e-06
      %v1674 = vadd.f32 %v1610, -2.101024e-06
      %v1675 = vadd.f32 %v1611, -2.101024e-06
      %v1676 = vadd.f32 %v1612, -2.101024e-06
      %v1677 = vadd.f32 %v1613, -2.101024e-06
      %v1678 = vadd.f32 %v1614, -2.101024e-06
      %v1679 = vadd.f32 %v1615, -2.101024e-06
      %v1680 = vadd.f32 %v1616, -2.101024e-06
      %v1681 = vadd.f32 %v1617, -2.101024e-06
      %v1682 = vadd.f32 %v1618, -2.101024e-06
      %v1683 = vadd.f32 %v1619, -2.101024e-06
      %v1684 = vadd.f32 %v1620, -2.101024e-06
      %v1685 = vadd.f32 %v1621, -2.101024e-06
      %v1686 = vadd.f32 %v1622, -2.101024e-06
      %v1687 = vadd.f32 %v1623, -2.101024e-06
      %v1688 = vadd.f32 %v1624, -2.101024e-06
      %v1689 = vadd.f32 %v1625, -2.101024e-06
      %v1690 = vadd.f32 %v1626, -2.101024e-06
      %v1691 = vadd.f32 %v1627, -2.101024e-06
      %v1692 = vadd.f32 %v1628, -2.101024e-06
      %v1693 = vadd.f32 %v1629, -2.101024e-06
      %v1694 = vadd.f32 %v1630, -2.101024e-06
      %v1695 = vadd.f32 %v1631, -2.101024e-06
      %v1696 = vadd.f32 %v1632, -2.101024e-06
      %v1697 = vadd.f32 %v1633, -2.101024e-06
      %v1698 = vadd.f32 %v1634, -2.101024e-06
      %v1699 = vmul.f32 %v1635, %v1379
      %v1700 = vmul.f32 %v1636, %v1380
      %v1701 = vmul.f32 %v1637, %v1381
      %v1702 = vmul.f32 %v1638, %v1382
      %v1703 = vmul.f32 %v1639, %v1383
      %v1704 = vmul.f32 %v1640, %v1384
      %v1705 = vmul.f32 %v1641, %v1385
      %v1706 = vmul.f32 %v1642, %v1386
      %v1707 = vmul.f32 %v1643, %v1387
      %v1708 = vmul.f32 %v1644, %v1388
      %v1709 = vmul.f32 %v1645, %v1389
      %v1710 = vmul.f32 %v1646, %v1390
      %v1711 = vmul.f32 %v1647, %v1391
      %v1712 = vmul.f32 %v1648, %v1392
      %v1713 = vmul.f32 %v1649, %v1393
      %v1714 = vmul.f32 %v1650, %v1394
      %v1715 = vmul.f32 %v1651, %v1395
      %v1716 = vmul.f32 %v1652, %v1396
      %v1717 = vmul.f32 %v1653, %v1397
      %v1718 = vmul.f32 %v1654, %v1398
      %v1719 = vmul.f32 %v1655, %v1399
      %v1720 = vmul.f32 %v1656, %v1400
      %v1721 = vmul.f32 %v1657, %v1401
      %v1722 = vmul.f32 %v1658, %v1402
      %v1723 = vmul.f32 %v1659, %v1403
      %v1724 = vmul.f32 %v1660, %v1404
      %v1725 = vmul.f32 %v1661, %v1405
      %v1726 = vmul.f32 %v1662, %v1406
      %v1727 = vmul.f32 %v1663, %v1407
      %v1728 = vmul.f32 %v1664, %v1408
      %v1729 = vmul.f32 %v1665, %v1409
      %v1730 = vmul.f32 %v1666, %v1410
      %v1731 = vmul.f32 %v1667, %v1411
      %v1732 = vmul.f32 %v1668, %v1412
      %v1733 = vmul.f32 %v1669, %v1413
      %v1734 = vmul.f32 %v1670, %v1414
      %v1735 = vmul.f32 %v1671, %v1415
      %v1736 = vmul.f32 %v1672, %v1416
      %v1737 = vmul.f32 %v1673, %v1417
      %v1738 = vmul.f32 %v1674, %v1418
      %v1739 = vmul.f32 %v1675, %v1419
      %v1740 = vmul.f32 %v1676, %v1420
      %v1741 = vmul.f32 %v1677, %v1421
      %v1742 = vmul.f32 %v1678, %v1422
      %v1743 = vmul.f32 %v1679, %v1423
      %v1744 = vmul.f32 %v1680, %v1424
      %v1745 = vmul.f32 %v1681, %v1425
      %v1746 = vmul.f32 %v1682, %v1426
      %v1747 = vmul.f32 %v1683, %v1427
      %v1748 = vmul.f32 %v1684, %v1428
      %v1749 = vmul.f32 %v1685, %v1429
      %v1750 = vmul.f32 %v1686, %v1430
      %v1751 = vmul.f32 %v1687, %v1431
      %v1752 = vmul.f32 %v1688, %v1432
      %v1753 = vmul.f32 %v1689, %v1433
      %v1754 = vmul.f32 %v1690, %v1434
      %v1755 = vmul.f32 %v1691, %v1435
      %v1756 = vmul.f32 %v1692, %v1436
      %v1757 = vmul.f32 %v1693, %v1437
      %v1758 = vmul.f32 %v1694, %v1438
      %v1759 = vmul.f32 %v1695, %v1439
      %v1760 = vmul.f32 %v1696, %v1440
      %v1761 = vmul.f32 %v1697, %v1441
      %v1762 = vmul.f32 %v1698, %v1442
      %v1763 = vadd.f32 %v1699, -5.6925062e-05
      %v1764 = vadd.f32 %v1700, -5.6925062e-05
      %v1765 = vadd.f32 %v1701, -5.6925062e-05
      %v1766 = vadd.f32 %v1702, -5.6925062e-05
      %v1767 = vadd.f32 %v1703, -5.6925062e-05
      %v1768 = vadd.f32 %v1704, -5.6925062e-05
      %v1769 = vadd.f32 %v1705, -5.6925062e-05
      %v1770 = vadd.f32 %v1706, -5.6925062e-05
      %v1771 = vadd.f32 %v1707, -5.6925062e-05
      %v1772 = vadd.f32 %v1708, -5.6925062e-05
      %v1773 = vadd.f32 %v1709, -5.6925062e-05
      %v1774 = vadd.f32 %v1710, -5.6925062e-05
      %v1775 = vadd.f32 %v1711, -5.6925062e-05
      %v1776 = vadd.f32 %v1712, -5.6925062e-05
      %v1777 = vadd.f32 %v1713, -5.6925062e-05
      %v1778 = vadd.f32 %v1714, -5.6925062e-05
      %v1779 = vadd.f32 %v1715, -5.6925062e-05
      %v1780 = vadd.f32 %v1716, -5.6925062e-05
      %v1781 = vadd.f32 %v1717, -5.6925062e-05
      %v1782 = vadd.f32 %v1718, -5.6925062e-05
      %v1783 = vadd.f32 %v1719, -5.6925062e-05
      %v1784 = vadd.f32 %v1720, -5.6925062e-05
      %v1785 = vadd.f32 %v1721, -5.6925062e-05
      %v1786 = vadd.f32 %v1722, -5.6925062e-05
      %v1787 = vadd.f32 %v1723, -5.6925062e-05
      %v1788 = vadd.f32 %v1724, -5.6925062e-05
      %v1789 = vadd.f32 %v1725, -5.6925062e-05
      %v1790 = vadd.f32 %v1726, -5.6925062e-05
      %v1791 = vadd.f32 %v1727, -5.6925062e-05
      %v1792 = vadd.f32 %v1728, -5.6925062e-05
      %v1793 = vadd.f32 %v1729, -5.6925062e-05
      %v1794 = vadd.f32 %v1730, -5.6925062e-05
      %v1795 = vadd.f32 %v1731, -5.6925062e-05
      %v1796 = vadd.f32 %v1732, -5.6925062e-05
      %v1797 = vadd.f32 %v1733, -5.6925062e-05
      %v1798 = vadd.f32 %v1734, -5.6925062e-05
      %v1799 = vadd.f32 %v1735, -5.6925062e-05
      %v1800 = vadd.f32 %v1736, -5.6925062e-05
      %v1801 = vadd.f32 %v1737, -5.6925062e-05
      %v1802 = vadd.f32 %v1738, -5.6925062e-05
      %v1803 = vadd.f32 %v1739, -5.6925062e-05
      %v1804 = vadd.f32 %v1740, -5.6925062e-05
      %v1805 = vadd.f32 %v1741, -5.6925062e-05
      %v1806 = vadd.f32 %v1742, -5.6925062e-05
      %v1807 = vadd.f32 %v1743, -5.6925062e-05
      %v1808 = vadd.f32 %v1744, -5.6925062e-05
      %v1809 = vadd.f32 %v1745, -5.6925062e-05
      %v1810 = vadd.f32 %v1746, -5.6925062e-05
      %v1811 = vadd.f32 %v1747, -5.6925062e-05
      %v1812 = vadd.f32 %v1748, -5.6925062e-05
      %v1813 = vadd.f32 %v1749, -5.6925062e-05
      %v1814 = vadd.f32 %v1750, -5.6925062e-05
      %v1815 = vadd.f32 %v1751, -5.6925062e-05
      %v1816 = vadd.f32 %v1752, -5.6925062e-05
      %v1817 = vadd.f32 %v1753, -5.6925062e-05
      %v1818 = vadd.f32 %v1754, -5.6925062e-05
      %v1819 = vadd.f32 %v1755, -5.6925062e-05
      %v1820 = vadd.f32 %v1756, -5.6925062e-05
      %v1821 = vadd.f32 %v1757, -5.6925062e-05
      %v1822 = vadd.f32 %v1758, -5.6925062e-05
      %v1823 = vadd.f32 %v1759, -5.6925062e-05
      %v1824 = vadd.f32 %v1760, -5.6925062e-05
      %v1825 = vadd.f32 %v1761, -5.6925062e-05
      %v1826 = vadd.f32 %v1762, -5.6925062e-05
      %v1827 = vmul.f32 %v1763, %v1379
      %v1828 = vmul.f32 %v1764, %v1380
      %v1829 = vmul.f32 %v1765, %v1381
      %v1830 = vmul.f32 %v1766, %v1382
      %v1831 = vmul.f32 %v1767, %v1383
      %v1832 = vmul.f32 %v1768, %v1384
      %v1833 = vmul.f32 %v1769, %v1385
      %v1834 = vmul.f32 %v1770, %v1386
      %v1835 = vmul.f32 %v1771, %v1387
      %v1836 = vmul.f32 %v1772, %v1388
      %v1837 = vmul.f32 %v1773, %v1389
      %v1838 = vmul.f32 %v1774, %v1390
      %v1839 = vmul.f32 %v1775, %v1391
      %v1840 = vmul.f32 %v1776, %v1392
      %v1841 = vmul.f32 %v1777, %v1393
      %v1842 = vmul.f32 %v1778, %v1394
      %v1843 = vmul.f32 %v1779, %v1395
      %v1844 = vmul.f32 %v1780, %v1396
      %v1845 = vmul.f32 %v1781, %v1397
      %v1846 = vmul.f32 %v1782, %v1398
      %v1847 = vmul.f32 %v1783, %v1399
      %v1848 = vmul.f32 %v1784, %v1400
      %v1849 = vmul.f32 %v1785, %v1401
      %v1850 = vmul.f32 %v1786, %v1402
      %v1851 = vmul.f32 %v1787, %v1403
      %v1852 = vmul.f32 %v1788, %v1404
      %v1853 = vmul.f32 %v1789, %v1405
      %v1854 = vmul.f32 %v1790, %v1406
      %v1855 = vmul.f32 %v1791, %v1407
      %v1856 = vmul.f32 %v1792, %v1408
      %v1857 = vmul.f32 %v1793, %v1409
      %v1858 = vmul.f32 %v1794, %v1410
      %v1859 = vmul.f32 %v1795, %v1411
      %v1860 = vmul.f32 %v1796, %v1412
      %v1861 = vmul.f32 %v1797, %v1413
      %v1862 = vmul.f32 %v1798, %v1414
      %v1863 = vmul.f32 %v1799, %v1415
      %v1864 = vmul.f32 %v1800, %v1416
      %v1865 = vmul.f32 %v1801, %v1417
      %v1866 = vmul.f32 %v1802, %v1418
      %v1867 = vmul.f32 %v1803, %v1419
      %v1868 = vmul.f32 %v1804, %v1420
      %v1869 = vmul.f32 %v1805, %v1421
      %v1870 = vmul.f32 %v1806, %v1422
      %v1871 = vmul.f32 %v1807, %v1423
      %v1872 = vmul.f32 %v1808, %v1424
      %v1873 = vmul.f32 %v1809, %v1425
      %v1874 = vmul.f32 %v1810, %v1426
      %v1875 = vmul.f32 %v1811, %v1427
      %v1876 = vmul.f32 %v1812, %v1428
      %v1877 = vmul.f32 %v1813, %v1429
      %v1878 = vmul.f32 %v1814, %v1430
      %v1879 = vmul.f32 %v1815, %v1431
      %v1880 = vmul.f32 %v1816, %v1432
      %v1881 = vmul.f32 %v1817, %v1433
      %v1882 = vmul.f32 %v1818, %v1434
      %v1883 = vmul.f32 %v1819, %v1435
      %v1884 = vmul.f32 %v1820, %v1436
      %v1885 = vmul.f32 %v1821, %v1437
      %v1886 = vmul.f32 %v1822, %v1438
      %v1887 = vmul.f32 %v1823, %v1439
      %v1888 = vmul.f32 %v1824, %v1440
      %v1889 = vmul.f32 %v1825, %v1441
      %v1890 = vmul.f32 %v1826, %v1442
      %v1891 = vadd.f32 %v1827, -0.00073499064
      %v1892 = vadd.f32 %v1828, -0.00073499064
      %v1893 = vadd.f32 %v1829, -0.00073499064
      %v1894 = vadd.f32 %v1830, -0.00073499064
      %v1895 = vadd.f32 %v1831, -0.00073499064
      %v1896 = vadd.f32 %v1832, -0.00073499064
      %v1897 = vadd.f32 %v1833, -0.00073499064
      %v1898 = vadd.f32 %v1834, -0.00073499064
      %v1899 = vadd.f32 %v1835, -0.00073499064
      %v1900 = vadd.f32 %v1836, -0.00073499064
      %v1901 = vadd.f32 %v1837, -0.00073499064
      %v1902 = vadd.f32 %v1838, -0.00073499064
      %v1903 = vadd.f32 %v1839, -0.00073499064
      %v1904 = vadd.f32 %v1840, -0.00073499064
      %v1905 = vadd.f32 %v1841, -0.00073499064
      %v1906 = vadd.f32 %v1842, -0.00073499064
      %v1907 = vadd.f32 %v1843, -0.00073499064
      %v1908 = vadd.f32 %v1844, -0.00073499064
      %v1909 = vadd.f32 %v1845, -0.00073499064
      %v1910 = vadd.f32 %v1846, -0.00073499064
      %v1911 = vadd.f32 %v1847, -0.00073499064
      %v1912 = vadd.f32 %v1848, -0.00073499064
      %v1913 = vadd.f32 %v1849, -0.00073499064
      %v1914 = vadd.f32 %v1850, -0.00073499064
      %v1915 = vadd.f32 %v1851, -0.00073499064
      %v1916 = vadd.f32 %v1852, -0.00073499064
      %v1917 = vadd.f32 %v1853, -0.00073499064
      %v1918 = vadd.f32 %v1854, -0.00073499064
      %v1919 = vadd.f32 %v1855, -0.00073499064
      %v1920 = vadd.f32 %v1856, -0.00073499064
      %v1921 = vadd.f32 %v1857, -0.00073499064
      %v1922 = vadd.f32 %v1858, -0.00073499064
      %v1923 = vadd.f32 %v1859, -0.00073499064
      %v1924 = vadd.f32 %v1860, -0.00073499064
      %v1925 = vadd.f32 %v1861, -0.00073499064
      %v1926 = vadd.f32 %v1862, -0.00073499064
      %v1927 = vadd.f32 %v1863, -0.00073499064
      %v1928 = vadd.f32 %v1864, -0.00073499064
      %v1929 = vadd.f32 %v1865, -0.00073499064
      %v1930 = vadd.f32 %v1866, -0.00073499064
      %v1931 = vadd.f32 %v1867, -0.00073499064
      %v1932 = vadd.f32 %v1868, -0.00073499064
      %v1933 = vadd.f32 %v1869, -0.00073499064
      %v1934 = vadd.f32 %v1870, -0.00073499064
      %v1935 = vadd.f32 %v1871, -0.00073499064
      %v1936 = vadd.f32 %v1872, -0.00073499064
      %v1937 = vadd.f32 %v1873, -0.00073499064
      %v1938 = vadd.f32 %v1874, -0.00073499064
      %v1939 = vadd.f32 %v1875, -0.00073499064
      %v1940 = vadd.f32 %v1876, -0.00073499064
      %v1941 = vadd.f32 %v1877, -0.00073499064
      %v1942 = vadd.f32 %v1878, -0.00073499064
      %v1943 = vadd.f32 %v1879, -0.00073499064
      %v1944 = vadd.f32 %v1880, -0.00073499064
      %v1945 = vadd.f32 %v1881, -0.00073499064
      %v1946 = vadd.f32 %v1882, -0.00073499064
      %v1947 = vadd.f32 %v1883, -0.00073499064
      %v1948 = vadd.f32 %v1884, -0.00073499064
      %v1949 = vadd.f32 %v1885, -0.00073499064
      %v1950 = vadd.f32 %v1886, -0.00073499064
      %v1951 = vadd.f32 %v1887, -0.00073499064
      %v1952 = vadd.f32 %v1888, -0.00073499064
      %v1953 = vadd.f32 %v1889, -0.00073499064
      %v1954 = vadd.f32 %v1890, -0.00073499064
      %v1955 = vmul.f32 %v1891, %v1379
      %v1956 = vmul.f32 %v1892, %v1380
      %v1957 = vmul.f32 %v1893, %v1381
      %v1958 = vmul.f32 %v1894, %v1382
      %v1959 = vmul.f32 %v1895, %v1383
      %v1960 = vmul.f32 %v1896, %v1384
      %v1961 = vmul.f32 %v1897, %v1385
      %v1962 = vmul.f32 %v1898, %v1386
      %v1963 = vmul.f32 %v1899, %v1387
      %v1964 = vmul.f32 %v1900, %v1388
      %v1965 = vmul.f32 %v1901, %v1389
      %v1966 = vmul.f32 %v1902, %v1390
      %v1967 = vmul.f32 %v1903, %v1391
      %v1968 = vmul.f32 %v1904, %v1392
      %v1969 = vmul.f32 %v1905, %v1393
      %v1970 = vmul.f32 %v1906, %v1394
      %v1971 = vmul.f32 %v1907, %v1395
      %v1972 = vmul.f32 %v1908, %v1396
      %v1973 = vmul.f32 %v1909, %v1397
      %v1974 = vmul.f32 %v1910, %v1398
      %v1975 = vmul.f32 %v1911, %v1399
      %v1976 = vmul.f32 %v1912, %v1400
      %v1977 = vmul.f32 %v1913, %v1401
      %v1978 = vmul.f32 %v1914, %v1402
      %v1979 = vmul.f32 %v1915, %v1403
      %v1980 = vmul.f32 %v1916, %v1404
      %v1981 = vmul.f32 %v1917, %v1405
      %v1982 = vmul.f32 %v1918, %v1406
      %v1983 = vmul.f32 %v1919, %v1407
      %v1984 = vmul.f32 %v1920, %v1408
      %v1985 = vmul.f32 %v1921, %v1409
      %v1986 = vmul.f32 %v1922, %v1410
      %v1987 = vmul.f32 %v1923, %v1411
      %v1988 = vmul.f32 %v1924, %v1412
      %v1989 = vmul.f32 %v1925, %v1413
      %v1990 = vmul.f32 %v1926, %v1414
      %v1991 = vmul.f32 %v1927, %v1415
      %v1992 = vmul.f32 %v1928, %v1416
      %v1993 = vmul.f32 %v1929, %v1417
      %v1994 = vmul.f32 %v1930, %v1418
      %v1995 = vmul.f32 %v1931, %v1419
      %v1996 = vmul.f32 %v1932, %v1420
      %v1997 = vmul.f32 %v1933, %v1421
      %v1998 = vmul.f32 %v1934, %v1422
      %v1999 = vmul.f32 %v1935, %v1423
      %v2000 = vmul.f32 %v1936, %v1424
      %v2001 = vmul.f32 %v1937, %v1425
      %v2002 = vmul.f32 %v1938, %v1426
      %v2003 = vmul.f32 %v1939, %v1427
      %v2004 = vmul.f32 %v1940, %v1428
      %v2005 = vmul.f32 %v1941, %v1429
      %v2006 = vmul.f32 %v1942, %v1430
      %v2007 = vmul.f32 %v1943, %v1431
      %v2008 = vmul.f32 %v1944, %v1432
      %v2009 = vmul.f32 %v1945, %v1433
      %v2010 = vmul.f32 %v1946, %v1434
      %v2011 = vmul.f32 %v1947, %v1435
      %v2012 = vmul.f32 %v1948, %v1436
      %v2013 = vmul.f32 %v1949, %v1437
      %v2014 = vmul.f32 %v1950, %v1438
      %v2015 = vmul.f32 %v1951, %v1439
      %v2016 = vmul.f32 %v1952, %v1440
      %v2017 = vmul.f32 %v1953, %v1441
      %v2018 = vmul.f32 %v1954, %v1442
      %v2019 = vadd.f32 %v1955, -0.0029546
      %v2020 = vadd.f32 %v1956, -0.0029546
      %v2021 = vadd.f32 %v1957, -0.0029546
      %v2022 = vadd.f32 %v1958, -0.0029546
      %v2023 = vadd.f32 %v1959, -0.0029546
      %v2024 = vadd.f32 %v1960, -0.0029546
      %v2025 = vadd.f32 %v1961, -0.0029546
      %v2026 = vadd.f32 %v1962, -0.0029546
      %v2027 = vadd.f32 %v1963, -0.0029546
      %v2028 = vadd.f32 %v1964, -0.0029546
      %v2029 = vadd.f32 %v1965, -0.0029546
      %v2030 = vadd.f32 %v1966, -0.0029546
      %v2031 = vadd.f32 %v1967, -0.0029546
      %v2032 = vadd.f32 %v1968, -0.0029546
      %v2033 = vadd.f32 %v1969, -0.0029546
      %v2034 = vadd.f32 %v1970, -0.0029546
      %v2035 = vadd.f32 %v1971, -0.0029546
      %v2036 = vadd.f32 %v1972, -0.0029546
      %v2037 = vadd.f32 %v1973, -0.0029546
      %v2038 = vadd.f32 %v1974, -0.0029546
      %v2039 = vadd.f32 %v1975, -0.0029546
      %v2040 = vadd.f32 %v1976, -0.0029546
      %v2041 = vadd.f32 %v1977, -0.0029546
      %v2042 = vadd.f32 %v1978, -0.0029546
      %v2043 = vadd.f32 %v1979, -0.0029546
      %v2044 = vadd.f32 %v1980, -0.0029546
      %v2045 = vadd.f32 %v1981, -0.0029546
      %v2046 = vadd.f32 %v1982, -0.0029546
      %v2047 = vadd.f32 %v1983, -0.0029546
      %v2048 = vadd.f32 %v1984, -0.0029546
      %v2049 = vadd.f32 %v1985, -0.0029546
      %v2050 = vadd.f32 %v1986, -0.0029546
      %v2051 = vadd.f32 %v1987, -0.0029546
      %v2052 = vadd.f32 %v1988, -0.0029546
      %v2053 = vadd.f32 %v1989, -0.0029546
      %v2054 = vadd.f32 %v1990, -0.0029546
      %v2055 = vadd.f32 %v1991, -0.0029546
      %v2056 = vadd.f32 %v1992, -0.0029546
      %v2057 = vadd.f32 %v1993, -0.0029546
      %v2058 = vadd.f32 %v1994, -0.0029546
      %v2059 = vadd.f32 %v1995, -0.0029546
      %v2060 = vadd.f32 %v1996, -0.0029546
      %v2061 = vadd.f32 %v1997, -0.0029546
      %v2062 = vadd.f32 %v1998, -0.0029546
      %v2063 = vadd.f32 %v1999, -0.0029546
      %v2064 = vadd.f32 %v2000, -0.0029546
      %v2065 = vadd.f32 %v2001, -0.0029546
      %v2066 = vadd.f32 %v2002, -0.0029546
      %v2067 = vadd.f32 %v2003, -0.0029546
      %v2068 = vadd.f32 %v2004, -0.0029546
      %v2069 = vadd.f32 %v2005, -0.0029546
      %v2070 = vadd.f32 %v2006, -0.0029546
      %v2071 = vadd.f32 %v2007, -0.0029546
      %v2072 = vadd.f32 %v2008, -0.0029546
      %v2073 = vadd.f32 %v2009, -0.0029546
      %v2074 = vadd.f32 %v2010, -0.0029546
      %v2075 = vadd.f32 %v2011, -0.0029546
      %v2076 = vadd.f32 %v2012, -0.0029546
      %v2077 = vadd.f32 %v2013, -0.0029546
      %v2078 = vadd.f32 %v2014, -0.0029546
      %v2079 = vadd.f32 %v2015, -0.0029546
      %v2080 = vadd.f32 %v2016, -0.0029546
      %v2081 = vadd.f32 %v2017, -0.0029546
      %v2082 = vadd.f32 %v2018, -0.0029546
      %v2083 = vmul.f32 %v2019, %v1379
      %v2084 = vmul.f32 %v2020, %v1380
      %v2085 = vmul.f32 %v2021, %v1381
      %v2086 = vmul.f32 %v2022, %v1382
      %v2087 = vmul.f32 %v2023, %v1383
      %v2088 = vmul.f32 %v2024, %v1384
      %v2089 = vmul.f32 %v2025, %v1385
      %v2090 = vmul.f32 %v2026, %v1386
      %v2091 = vmul.f32 %v2027, %v1387
      %v2092 = vmul.f32 %v2028, %v1388
      %v2093 = vmul.f32 %v2029, %v1389
      %v2094 = vmul.f32 %v2030, %v1390
      %v2095 = vmul.f32 %v2031, %v1391
      %v2096 = vmul.f32 %v2032, %v1392
      %v2097 = vmul.f32 %v2033, %v1393
      %v2098 = vmul.f32 %v2034, %v1394
      %v2099 = vmul.f32 %v2035, %v1395
      %v2100 = vmul.f32 %v2036, %v1396
      %v2101 = vmul.f32 %v2037, %v1397
      %v2102 = vmul.f32 %v2038, %v1398
      %v2103 = vmul.f32 %v2039, %v1399
      %v2104 = vmul.f32 %v2040, %v1400
      %v2105 = vmul.f32 %v2041, %v1401
      %v2106 = vmul.f32 %v2042, %v1402
      %v2107 = vmul.f32 %v2043, %v1403
      %v2108 = vmul.f32 %v2044, %v1404
      %v2109 = vmul.f32 %v2045, %v1405
      %v2110 = vmul.f32 %v2046, %v1406
      %v2111 = vmul.f32 %v2047, %v1407
      %v2112 = vmul.f32 %v2048, %v1408
      %v2113 = vmul.f32 %v2049, %v1409
      %v2114 = vmul.f32 %v2050, %v1410
      %v2115 = vmul.f32 %v2051, %v1411
      %v2116 = vmul.f32 %v2052, %v1412
      %v2117 = vmul.f32 %v2053, %v1413
      %v2118 = vmul.f32 %v2054, %v1414
      %v2119 = vmul.f32 %v2055, %v1415
      %v2120 = vmul.f32 %v2056, %v1416
      %v2121 = vmul.f32 %v2057, %v1417
      %v2122 = vmul.f32 %v2058, %v1418
      %v2123 = vmul.f32 %v2059, %v1419
      %v2124 = vmul.f32 %v2060, %v1420
      %v2125 = vmul.f32 %v2061, %v1421
      %v2126 = vmul.f32 %v2062, %v1422
      %v2127 = vmul.f32 %v2063, %v1423
      %v2128 = vmul.f32 %v2064, %v1424
      %v2129 = vmul.f32 %v2065, %v1425
      %v2130 = vmul.f32 %v2066, %v1426
      %v2131 = vmul.f32 %v2067, %v1427
      %v2132 = vmul.f32 %v2068, %v1428
      %v2133 = vmul.f32 %v2069, %v1429
      %v2134 = vmul.f32 %v2070, %v1430
      %v2135 = vmul.f32 %v2071, %v1431
      %v2136 = vmul.f32 %v2072, %v1432
      %v2137 = vmul.f32 %v2073, %v1433
      %v2138 = vmul.f32 %v2074, %v1434
      %v2139 = vmul.f32 %v2075, %v1435
      %v2140 = vmul.f32 %v2076, %v1436
      %v2141 = vmul.f32 %v2077, %v1437
      %v2142 = vmul.f32 %v2078, %v1438
      %v2143 = vmul.f32 %v2079, %v1439
      %v2144 = vmul.f32 %v2080, %v1440
      %v2145 = vmul.f32 %v2081, %v1441
      %v2146 = vmul.f32 %v2082, %v1442
      %v2147 = vadd.f32 %v2083, -0.016096033
      %v2148 = vadd.f32 %v2084, -0.016096033
      %v2149 = vadd.f32 %v2085, -0.016096033
      %v2150 = vadd.f32 %v2086, -0.016096033
      %v2151 = vadd.f32 %v2087, -0.016096033
      %v2152 = vadd.f32 %v2088, -0.016096033
      %v2153 = vadd.f32 %v2089, -0.016096033
      %v2154 = vadd.f32 %v2090, -0.016096033
      %v2155 = vadd.f32 %v2091, -0.016096033
      %v2156 = vadd.f32 %v2092, -0.016096033
      %v2157 = vadd.f32 %v2093, -0.016096033
      %v2158 = vadd.f32 %v2094, -0.016096033
      %v2159 = vadd.f32 %v2095, -0.016096033
      %v2160 = vadd.f32 %v2096, -0.016096033
      %v2161 = vadd.f32 %v2097, -0.016096033
      %v2162 = vadd.f32 %v2098, -0.016096033
      %v2163 = vadd.f32 %v2099, -0.016096033
      %v2164 = vadd.f32 %v2100, -0.016096033
      %v2165 = vadd.f32 %v2101, -0.016096033
      %v2166 = vadd.f32 %v2102, -0.016096033
      %v2167 = vadd.f32 %v2103, -0.016096033
      %v2168 = vadd.f32 %v2104, -0.016096033
      %v2169 = vadd.f32 %v2105, -0.016096033
      %v2170 = vadd.f32 %v2106, -0.016096033
      %v2171 = vadd.f32 %v2107, -0.016096033
      %v2172 = vadd.f32 %v2108, -0.016096033
      %v2173 = vadd.f32 %v2109, -0.016096033
      %v2174 = vadd.f32 %v2110, -0.016096033
      %v2175 = vadd.f32 %v2111, -0.016096033
      %v2176 = vadd.f32 %v2112, -0.016096033
      %v2177 = vadd.f32 %v2113, -0.016096033
      %v2178 = vadd.f32 %v2114, -0.016096033
      %v2179 = vadd.f32 %v2115, -0.016096033
      %v2180 = vadd.f32 %v2116, -0.016096033
      %v2181 = vadd.f32 %v2117, -0.016096033
      %v2182 = vadd.f32 %v2118, -0.016096033
      %v2183 = vadd.f32 %v2119, -0.016096033
      %v2184 = vadd.f32 %v2120, -0.016096033
      %v2185 = vadd.f32 %v2121, -0.016096033
      %v2186 = vadd.f32 %v2122, -0.016096033
      %v2187 = vadd.f32 %v2123, -0.016096033
      %v2188 = vadd.f32 %v2124, -0.016096033
      %v2189 = vadd.f32 %v2125, -0.016096033
      %v2190 = vadd.f32 %v2126, -0.016096033
      %v2191 = vadd.f32 %v2127, -0.016096033
      %v2192 = vadd.f32 %v2128, -0.016096033
      %v2193 = vadd.f32 %v2129, -0.016096033
      %v2194 = vadd.f32 %v2130, -0.016096033
      %v2195 = vadd.f32 %v2131, -0.016096033
      %v2196 = vadd.f32 %v2132, -0.016096033
      %v2197 = vadd.f32 %v2133, -0.016096033
      %v2198 = vadd.f32 %v2134, -0.016096033
      %v2199 = vadd.f32 %v2135, -0.016096033
      %v2200 = vadd.f32 %v2136, -0.016096033
      %v2201 = vadd.f32 %v2137, -0.016096033
      %v2202 = vadd.f32 %v2138, -0.016096033
      %v2203 = vadd.f32 %v2139, -0.016096033
      %v2204 = vadd.f32 %v2140, -0.016096033
      %v2205 = vadd.f32 %v2141, -0.016096033
      %v2206 = vadd.f32 %v2142, -0.016096033
      %v2207 = vadd.f32 %v2143, -0.016096033
      %v2208 = vadd.f32 %v2144, -0.016096033
      %v2209 = vadd.f32 %v2145, -0.016096033
      %v2210 = vadd.f32 %v2146, -0.016096033
      %v2211 = vmul.f32 %v1379, -1.45660715e-05
      %v2212 = vmul.f32 %v1380, -1.45660715e-05
      %v2213 = vmul.f32 %v1381, -1.45660715e-05
      %v2214 = vmul.f32 %v1382, -1.45660715e-05
      %v2215 = vmul.f32 %v1383, -1.45660715e-05
      %v2216 = vmul.f32 %v1384, -1.45660715e-05
      %v2217 = vmul.f32 %v1385, -1.45660715e-05
      %v2218 = vmul.f32 %v1386, -1.45660715e-05
      %v2219 = vmul.f32 %v1387, -1.45660715e-05
      %v2220 = vmul.f32 %v1388, -1.45660715e-05
      %v2221 = vmul.f32 %v1389, -1.45660715e-05
      %v2222 = vmul.f32 %v1390, -1.45660715e-05
      %v2223 = vmul.f32 %v1391, -1.45660715e-05
      %v2224 = vmul.f32 %v1392, -1.45660715e-05
      %v2225 = vmul.f32 %v1393, -1.45660715e-05
      %v2226 = vmul.f32 %v1394, -1.45660715e-05
      %v2227 = vmul.f32 %v1395, -1.45660715e-05
      %v2228 = vmul.f32 %v1396, -1.45660715e-05
      %v2229 = vmul.f32 %v1397, -1.45660715e-05
      %v2230 = vmul.f32 %v1398, -1.45660715e-05
      %v2231 = vmul.f32 %v1399, -1.45660715e-05
      %v2232 = vmul.f32 %v1400, -1.45660715e-05
      %v2233 = vmul.f32 %v1401, -1.45660715e-05
      %v2234 = vmul.f32 %v1402, -1.45660715e-05
      %v2235 = vmul.f32 %v1403, -1.45660715e-05
      %v2236 = vmul.f32 %v1404, -1.45660715e-05
      %v2237 = vmul.f32 %v1405, -1.45660715e-05
      %v2238 = vmul.f32 %v1406, -1.45660715e-05
      %v2239 = vmul.f32 %v1407, -1.45660715e-05
      %v2240 = vmul.f32 %v1408, -1.45660715e-05
      %v2241 = vmul.f32 %v1409, -1.45660715e-05
      %v2242 = vmul.f32 %v1410, -1.45660715e-05
      %v2243 = vmul.f32 %v1411, -1.45660715e-05
      %v2244 = vmul.f32 %v1412, -1.45660715e-05
      %v2245 = vmul.f32 %v1413, -1.45660715e-05
      %v2246 = vmul.f32 %v1414, -1.45660715e-05
      %v2247 = vmul.f32 %v1415, -1.45660715e-05
      %v2248 = vmul.f32 %v1416, -1.45660715e-05
      %v2249 = vmul.f32 %v1417, -1.45660715e-05
      %v2250 = vmul.f32 %v1418, -1.45660715e-05
      %v2251 = vmul.f32 %v1419, -1.45660715e-05
      %v2252 = vmul.f32 %v1420, -1.45660715e-05
      %v2253 = vmul.f32 %v1421, -1.45660715e-05
      %v2254 = vmul.f32 %v1422, -1.45660715e-05
      %v2255 = vmul.f32 %v1423, -1.45660715e-05
      %v2256 = vmul.f32 %v1424, -1.45660715e-05
      %v2257 = vmul.f32 %v1425, -1.45660715e-05
      %v2258 = vmul.f32 %v1426, -1.45660715e-05
      %v2259 = vmul.f32 %v1427, -1.45660715e-05
      %v2260 = vmul.f32 %v1428, -1.45660715e-05
      %v2261 = vmul.f32 %v1429, -1.45660715e-05
      %v2262 = vmul.f32 %v1430, -1.45660715e-05
      %v2263 = vmul.f32 %v1431, -1.45660715e-05
      %v2264 = vmul.f32 %v1432, -1.45660715e-05
      %v2265 = vmul.f32 %v1433, -1.45660715e-05
      %v2266 = vmul.f32 %v1434, -1.45660715e-05
      %v2267 = vmul.f32 %v1435, -1.45660715e-05
      %v2268 = vmul.f32 %v1436, -1.45660715e-05
      %v2269 = vmul.f32 %v1437, -1.45660715e-05
      %v2270 = vmul.f32 %v1438, -1.45660715e-05
      %v2271 = vmul.f32 %v1439, -1.45660715e-05
      %v2272 = vmul.f32 %v1440, -1.45660715e-05
      %v2273 = vmul.f32 %v1441, -1.45660715e-05
      %v2274 = vmul.f32 %v1442, -1.45660715e-05
      %v2275 = vadd.f32 %v2211, -0.00021337405
      %v2276 = vadd.f32 %v2212, -0.00021337405
      %v2277 = vadd.f32 %v2213, -0.00021337405
      %v2278 = vadd.f32 %v2214, -0.00021337405
      %v2279 = vadd.f32 %v2215, -0.00021337405
      %v2280 = vadd.f32 %v2216, -0.00021337405
      %v2281 = vadd.f32 %v2217, -0.00021337405
      %v2282 = vadd.f32 %v2218, -0.00021337405
      %v2283 = vadd.f32 %v2219, -0.00021337405
      %v2284 = vadd.f32 %v2220, -0.00021337405
      %v2285 = vadd.f32 %v2221, -0.00021337405
      %v2286 = vadd.f32 %v2222, -0.00021337405
      %v2287 = vadd.f32 %v2223, -0.00021337405
      %v2288 = vadd.f32 %v2224, -0.00021337405
      %v2289 = vadd.f32 %v2225, -0.00021337405
      %v2290 = vadd.f32 %v2226, -0.00021337405
      %v2291 = vadd.f32 %v2227, -0.00021337405
      %v2292 = vadd.f32 %v2228, -0.00021337405
      %v2293 = vadd.f32 %v2229, -0.00021337405
      %v2294 = vadd.f32 %v2230, -0.00021337405
      %v2295 = vadd.f32 %v2231, -0.00021337405
      %v2296 = vadd.f32 %v2232, -0.00021337405
      %v2297 = vadd.f32 %v2233, -0.00021337405
      %v2298 = vadd.f32 %v2234, -0.00021337405
      %v2299 = vadd.f32 %v2235, -0.00021337405
      %v2300 = vadd.f32 %v2236, -0.00021337405
      %v2301 = vadd.f32 %v2237, -0.00021337405
      %v2302 = vadd.f32 %v2238, -0.00021337405
      %v2303 = vadd.f32 %v2239, -0.00021337405
      %v2304 = vadd.f32 %v2240, -0.00021337405
      %v2305 = vadd.f32 %v2241, -0.00021337405
      %v2306 = vadd.f32 %v2242, -0.00021337405
      %v2307 = vadd.f32 %v2243, -0.00021337405
      %v2308 = vadd.f32 %v2244, -0.00021337405
      %v2309 = vadd.f32 %v2245, -0.00021337405
      %v2310 = vadd.f32 %v2246, -0.00021337405
      %v2311 = vadd.f32 %v2247, -0.00021337405
      %v2312 = vadd.f32 %v2248, -0.00021337405
      %v2313 = vadd.f32 %v2249, -0.00021337405
      %v2314 = vadd.f32 %v2250, -0.00021337405
      %v2315 = vadd.f32 %v2251, -0.00021337405
      %v2316 = vadd.f32 %v2252, -0.00021337405
      %v2317 = vadd.f32 %v2253, -0.00021337405
      %v2318 = vadd.f32 %v2254, -0.00021337405
      %v2319 = vadd.f32 %v2255, -0.00021337405
      %v2320 = vadd.f32 %v2256, -0.00021337405
      %v2321 = vadd.f32 %v2257, -0.00021337405
      %v2322 = vadd.f32 %v2258, -0.00021337405
      %v2323 = vadd.f32 %v2259, -0.00021337405
      %v2324 = vadd.f32 %v2260, -0.00021337405
      %v2325 = vadd.f32 %v2261, -0.00021337405
      %v2326 = vadd.f32 %v2262, -0.00021337405
      %v2327 = vadd.f32 %v2263, -0.00021337405
      %v2328 = vadd.f32 %v2264, -0.00021337405
      %v2329 = vadd.f32 %v2265, -0.00021337405
      %v2330 = vadd.f32 %v2266, -0.00021337405
      %v2331 = vadd.f32 %v2267, -0.00021337405
      %v2332 = vadd.f32 %v2268, -0.00021337405
      %v2333 = vadd.f32 %v2269, -0.00021337405
      %v2334 = vadd.f32 %v2270, -0.00021337405
      %v2335 = vadd.f32 %v2271, -0.00021337405
      %v2336 = vadd.f32 %v2272, -0.00021337405
      %v2337 = vadd.f32 %v2273, -0.00021337405
      %v2338 = vadd.f32 %v2274, -0.00021337405
      %v2339 = vmul.f32 %v2275, %v1379
      %v2340 = vmul.f32 %v2276, %v1380
      %v2341 = vmul.f32 %v2277, %v1381
      %v2342 = vmul.f32 %v2278, %v1382
      %v2343 = vmul.f32 %v2279, %v1383
      %v2344 = vmul.f32 %v2280, %v1384
      %v2345 = vmul.f32 %v2281, %v1385
      %v2346 = vmul.f32 %v2282, %v1386
      %v2347 = vmul.f32 %v2283, %v1387
      %v2348 = vmul.f32 %v2284, %v1388
      %v2349 = vmul.f32 %v2285, %v1389
      %v2350 = vmul.f32 %v2286, %v1390
      %v2351 = vmul.f32 %v2287, %v1391
      %v2352 = vmul.f32 %v2288, %v1392
      %v2353 = vmul.f32 %v2289, %v1393
      %v2354 = vmul.f32 %v2290, %v1394
      %v2355 = vmul.f32 %v2291, %v1395
      %v2356 = vmul.f32 %v2292, %v1396
      %v2357 = vmul.f32 %v2293, %v1397
      %v2358 = vmul.f32 %v2294, %v1398
      %v2359 = vmul.f32 %v2295, %v1399
      %v2360 = vmul.f32 %v2296, %v1400
      %v2361 = vmul.f32 %v2297, %v1401
      %v2362 = vmul.f32 %v2298, %v1402
      %v2363 = vmul.f32 %v2299, %v1403
      %v2364 = vmul.f32 %v2300, %v1404
      %v2365 = vmul.f32 %v2301, %v1405
      %v2366 = vmul.f32 %v2302, %v1406
      %v2367 = vmul.f32 %v2303, %v1407
      %v2368 = vmul.f32 %v2304, %v1408
      %v2369 = vmul.f32 %v2305, %v1409
      %v2370 = vmul.f32 %v2306, %v1410
      %v2371 = vmul.f32 %v2307, %v1411
      %v2372 = vmul.f32 %v2308, %v1412
      %v2373 = vmul.f32 %v2309, %v1413
      %v2374 = vmul.f32 %v2310, %v1414
      %v2375 = vmul.f32 %v2311, %v1415
      %v2376 = vmul.f32 %v2312, %v1416
      %v2377 = vmul.f32 %v2313, %v1417
      %v2378 = vmul.f32 %v2314, %v1418
      %v2379 = vmul.f32 %v2315, %v1419
      %v2380 = vmul.f32 %v2316, %v1420
      %v2381 = vmul.f32 %v2317, %v1421
      %v2382 = vmul.f32 %v2318, %v1422
      %v2383 = vmul.f32 %v2319, %v1423
      %v2384 = vmul.f32 %v2320, %v1424
      %v2385 = vmul.f32 %v2321, %v1425
      %v2386 = vmul.f32 %v2322, %v1426
      %v2387 = vmul.f32 %v2323, %v1427
      %v2388 = vmul.f32 %v2324, %v1428
      %v2389 = vmul.f32 %v2325, %v1429
      %v2390 = vmul.f32 %v2326, %v1430
      %v2391 = vmul.f32 %v2327, %v1431
      %v2392 = vmul.f32 %v2328, %v1432
      %v2393 = vmul.f32 %v2329, %v1433
      %v2394 = vmul.f32 %v2330, %v1434
      %v2395 = vmul.f32 %v2331, %v1435
      %v2396 = vmul.f32 %v2332, %v1436
      %v2397 = vmul.f32 %v2333, %v1437
      %v2398 = vmul.f32 %v2334, %v1438
      %v2399 = vmul.f32 %v2335, %v1439
      %v2400 = vmul.f32 %v2336, %v1440
      %v2401 = vmul.f32 %v2337, %v1441
      %v2402 = vmul.f32 %v2338, %v1442
      %v2403 = vadd.f32 %v2339, -0.001682827
      %v2404 = vadd.f32 %v2340, -0.001682827
      %v2405 = vadd.f32 %v2341, -0.001682827
      %v2406 = vadd.f32 %v2342, -0.001682827
      %v2407 = vadd.f32 %v2343, -0.001682827
      %v2408 = vadd.f32 %v2344, -0.001682827
      %v2409 = vadd.f32 %v2345, -0.001682827
      %v2410 = vadd.f32 %v2346, -0.001682827
      %v2411 = vadd.f32 %v2347, -0.001682827
      %v2412 = vadd.f32 %v2348, -0.001682827
      %v2413 = vadd.f32 %v2349, -0.001682827
      %v2414 = vadd.f32 %v2350, -0.001682827
      %v2415 = vadd.f32 %v2351, -0.001682827
      %v2416 = vadd.f32 %v2352, -0.001682827
      %v2417 = vadd.f32 %v2353, -0.001682827
      %v2418 = vadd.f32 %v2354, -0.001682827
      %v2419 = vadd.f32 %v2355, -0.001682827
      %v2420 = vadd.f32 %v2356, -0.001682827
      %v2421 = vadd.f32 %v2357, -0.001682827
      %v2422 = vadd.f32 %v2358, -0.001682827
      %v2423 = vadd.f32 %v2359, -0.001682827
      %v2424 = vadd.f32 %v2360, -0.001682827
      %v2425 = vadd.f32 %v2361, -0.001682827
      %v2426 = vadd.f32 %v2362, -0.001682827
      %v2427 = vadd.f32 %v2363, -0.001682827
      %v2428 = vadd.f32 %v2364, -0.001682827
      %v2429 = vadd.f32 %v2365, -0.001682827
      %v2430 = vadd.f32 %v2366, -0.001682827
      %v2431 = vadd.f32 %v2367, -0.001682827
      %v2432 = vadd.f32 %v2368, -0.001682827
      %v2433 = vadd.f32 %v2369, -0.001682827
      %v2434 = vadd.f32 %v2370, -0.001682827
      %v2435 = vadd.f32 %v2371, -0.001682827
      %v2436 = vadd.f32 %v2372, -0.001682827
      %v2437 = vadd.f32 %v2373, -0.001682827
      %v2438 = vadd.f32 %v2374, -0.001682827
      %v2439 = vadd.f32 %v2375, -0.001682827
      %v2440 = vadd.f32 %v2376, -0.001682827
      %v2441 = vadd.f32 %v2377, -0.001682827
      %v2442 = vadd.f32 %v2378, -0.001682827
      %v2443 = vadd.f32 %v2379, -0.001682827
      %v2444 = vadd.f32 %v2380, -0.001682827
      %v2445 = vadd.f32 %v2381, -0.001682827
      %v2446 = vadd.f32 %v2382, -0.001682827
      %v2447 = vadd.f32 %v2383, -0.001682827
      %v2448 = vadd.f32 %v2384, -0.001682827
      %v2449 = vadd.f32 %v2385, -0.001682827
      %v2450 = vadd.f32 %v2386, -0.001682827
      %v2451 = vadd.f32 %v2387, -0.001682827
      %v2452 = vadd.f32 %v2388, -0.001682827
      %v2453 = vadd.f32 %v2389, -0.001682827
      %v2454 = vadd.f32 %v2390, -0.001682827
      %v2455 = vadd.f32 %v2391, -0.001682827
      %v2456 = vadd.f32 %v2392, -0.001682827
      %v2457 = vadd.f32 %v2393, -0.001682827
      %v2458 = vadd.f32 %v2394, -0.001682827
      %v2459 = vadd.f32 %v2395, -0.001682827
      %v2460 = vadd.f32 %v2396, -0.001682827
      %v2461 = vadd.f32 %v2397, -0.001682827
      %v2462 = vadd.f32 %v2398, -0.001682827
      %v2463 = vadd.f32 %v2399, -0.001682827
      %v2464 = vadd.f32 %v2400, -0.001682827
      %v2465 = vadd.f32 %v2401, -0.001682827
      %v2466 = vadd.f32 %v2402, -0.001682827
      %v2467 = vmul.f32 %v2403, %v1379
      %v2468 = vmul.f32 %v2404, %v1380
      %v2469 = vmul.f32 %v2405, %v1381
      %v2470 = vmul.f32 %v2406, %v1382
      %v2471 = vmul.f32 %v2407, %v1383
      %v2472 = vmul.f32 %v2408, %v1384
      %v2473 = vmul.f32 %v2409, %v1385
      %v2474 = vmul.f32 %v2410, %v1386
      %v2475 = vmul.f32 %v2411, %v1387
      %v2476 = vmul.f32 %v2412, %v1388
      %v2477 = vmul.f32 %v2413, %v1389
      %v2478 = vmul.f32 %v2414, %v1390
      %v2479 = vmul.f32 %v2415, %v1391
      %v2480 = vmul.f32 %v2416, %v1392
      %v2481 = vmul.f32 %v2417, %v1393
      %v2482 = vmul.f32 %v2418, %v1394
      %v2483 = vmul.f32 %v2419, %v1395
      %v2484 = vmul.f32 %v2420, %v1396
      %v2485 = vmul.f32 %v2421, %v1397
      %v2486 = vmul.f32 %v2422, %v1398
      %v2487 = vmul.f32 %v2423, %v1399
      %v2488 = vmul.f32 %v2424, %v1400
      %v2489 = vmul.f32 %v2425, %v1401
      %v2490 = vmul.f32 %v2426, %v1402
      %v2491 = vmul.f32 %v2427, %v1403
      %v2492 = vmul.f32 %v2428, %v1404
      %v2493 = vmul.f32 %v2429, %v1405
      %v2494 = vmul.f32 %v2430, %v1406
      %v2495 = vmul.f32 %v2431, %v1407
      %v2496 = vmul.f32 %v2432, %v1408
      %v2497 = vmul.f32 %v2433, %v1409
      %v2498 = vmul.f32 %v2434, %v1410
      %v2499 = vmul.f32 %v2435, %v1411
      %v2500 = vmul.f32 %v2436, %v1412
      %v2501 = vmul.f32 %v2437, %v1413
      %v2502 = vmul.f32 %v2438, %v1414
      %v2503 = vmul.f32 %v2439, %v1415
      %v2504 = vmul.f32 %v2440, %v1416
      %v2505 = vmul.f32 %v2441, %v1417
      %v2506 = vmul.f32 %v2442, %v1418
      %v2507 = vmul.f32 %v2443, %v1419
      %v2508 = vmul.f32 %v2444, %v1420
      %v2509 = vmul.f32 %v2445, %v1421
      %v2510 = vmul.f32 %v2446, %v1422
      %v2511 = vmul.f32 %v2447, %v1423
      %v2512 = vmul.f32 %v2448, %v1424
      %v2513 = vmul.f32 %v2449, %v1425
      %v2514 = vmul.f32 %v2450, %v1426
      %v2515 = vmul.f32 %v2451, %v1427
      %v2516 = vmul.f32 %v2452, %v1428
      %v2517 = vmul.f32 %v2453, %v1429
      %v2518 = vmul.f32 %v2454, %v1430
      %v2519 = vmul.f32 %v2455, %v1431
      %v2520 = vmul.f32 %v2456, %v1432
      %v2521 = vmul.f32 %v2457, %v1433
      %v2522 = vmul.f32 %v2458, %v1434
      %v2523 = vmul.f32 %v2459, %v1435
      %v2524 = vmul.f32 %v2460, %v1436
      %v2525 = vmul.f32 %v2461, %v1437
      %v2526 = vmul.f32 %v2462, %v1438
      %v2527 = vmul.f32 %v2463, %v1439
      %v2528 = vmul.f32 %v2464, %v1440
      %v2529 = vmul.f32 %v2465, %v1441
      %v2530 = vmul.f32 %v2466, %v1442
      %v2531 = vadd.f32 %v2467, -0.0073733293
      %v2532 = vadd.f32 %v2468, -0.0073733293
      %v2533 = vadd.f32 %v2469, -0.0073733293
      %v2534 = vadd.f32 %v2470, -0.0073733293
      %v2535 = vadd.f32 %v2471, -0.0073733293
      %v2536 = vadd.f32 %v2472, -0.0073733293
      %v2537 = vadd.f32 %v2473, -0.0073733293
      %v2538 = vadd.f32 %v2474, -0.0073733293
      %v2539 = vadd.f32 %v2475, -0.0073733293
      %v2540 = vadd.f32 %v2476, -0.0073733293
      %v2541 = vadd.f32 %v2477, -0.0073733293
      %v2542 = vadd.f32 %v2478, -0.0073733293
      %v2543 = vadd.f32 %v2479, -0.0073733293
      %v2544 = vadd.f32 %v2480, -0.0073733293
      %v2545 = vadd.f32 %v2481, -0.0073733293
      %v2546 = vadd.f32 %v2482, -0.0073733293
      %v2547 = vadd.f32 %v2483, -0.0073733293
      %v2548 = vadd.f32 %v2484, -0.0073733293
      %v2549 = vadd.f32 %v2485, -0.0073733293
      %v2550 = vadd.f32 %v2486, -0.0073733293
      %v2551 = vadd.f32 %v2487, -0.0073733293
      %v2552 = vadd.f32 %v2488, -0.0073733293
      %v2553 = vadd.f32 %v2489, -0.0073733293
      %v2554 = vadd.f32 %v2490, -0.0073733293
      %v2555 = vadd.f32 %v2491, -0.0073733293
      %v2556 = vadd.f32 %v2492, -0.0073733293
      %v2557 = vadd.f32 %v2493, -0.0073733293
      %v2558 = vadd.f32 %v2494, -0.0073733293
      %v2559 = vadd.f32 %v2495, -0.0073733293
      %v2560 = vadd.f32 %v2496, -0.0073733293
      %v2561 = vadd.f32 %v2497, -0.0073733293
      %v2562 = vadd.f32 %v2498, -0.0073733293
      %v2563 = vadd.f32 %v2499, -0.0073733293
      %v2564 = vadd.f32 %v2500, -0.0073733293
      %v2565 = vadd.f32 %v2501, -0.0073733293
      %v2566 = vadd.f32 %v2502, -0.0073733293
      %v2567 = vadd.f32 %v2503, -0.0073733293
      %v2568 = vadd.f32 %v2504, -0.0073733293
      %v2569 = vadd.f32 %v2505, -0.0073733293
      %v2570 = vadd.f32 %v2506, -0.0073733293
      %v2571 = vadd.f32 %v2507, -0.0073733293
      %v2572 = vadd.f32 %v2508, -0.0073733293
      %v2573 = vadd.f32 %v2509, -0.0073733293
      %v2574 = vadd.f32 %v2510, -0.0073733293
      %v2575 = vadd.f32 %v2511, -0.0073733293
      %v2576 = vadd.f32 %v2512, -0.0073733293
      %v2577 = vadd.f32 %v2513, -0.0073733293
      %v2578 = vadd.f32 %v2514, -0.0073733293
      %v2579 = vadd.f32 %v2515, -0.0073733293
      %v2580 = vadd.f32 %v2516, -0.0073733293
      %v2581 = vadd.f32 %v2517, -0.0073733293
      %v2582 = vadd.f32 %v2518, -0.0073733293
      %v2583 = vadd.f32 %v2519, -0.0073733293
      %v2584 = vadd.f32 %v2520, -0.0073733293
      %v2585 = vadd.f32 %v2521, -0.0073733293
      %v2586 = vadd.f32 %v2522, -0.0073733293
      %v2587 = vadd.f32 %v2523, -0.0073733293
      %v2588 = vadd.f32 %v2524, -0.0073733293
      %v2589 = vadd.f32 %v2525, -0.0073733293
      %v2590 = vadd.f32 %v2526, -0.0073733293
      %v2591 = vadd.f32 %v2527, -0.0073733293
      %v2592 = vadd.f32 %v2528, -0.0073733293
      %v2593 = vadd.f32 %v2529, -0.0073733293
      %v2594 = vadd.f32 %v2530, -0.0073733293
      %v2595 = vmul.f32 %v2531, %v1379
      %v2596 = vmul.f32 %v2532, %v1380
      %v2597 = vmul.f32 %v2533, %v1381
      %v2598 = vmul.f32 %v2534, %v1382
      %v2599 = vmul.f32 %v2535, %v1383
      %v2600 = vmul.f32 %v2536, %v1384
      %v2601 = vmul.f32 %v2537, %v1385
      %v2602 = vmul.f32 %v2538, %v1386
      %v2603 = vmul.f32 %v2539, %v1387
      %v2604 = vmul.f32 %v2540, %v1388
      %v2605 = vmul.f32 %v2541, %v1389
      %v2606 = vmul.f32 %v2542, %v1390
      %v2607 = vmul.f32 %v2543, %v1391
      %v2608 = vmul.f32 %v2544, %v1392
      %v2609 = vmul.f32 %v2545, %v1393
      %v2610 = vmul.f32 %v2546, %v1394
      %v2611 = vmul.f32 %v2547, %v1395
      %v2612 = vmul.f32 %v2548, %v1396
      %v2613 = vmul.f32 %v2549, %v1397
      %v2614 = vmul.f32 %v2550, %v1398
      %v2615 = vmul.f32 %v2551, %v1399
      %v2616 = vmul.f32 %v2552, %v1400
      %v2617 = vmul.f32 %v2553, %v1401
      %v2618 = vmul.f32 %v2554, %v1402
      %v2619 = vmul.f32 %v2555, %v1403
      %v2620 = vmul.f32 %v2556, %v1404
      %v2621 = vmul.f32 %v2557, %v1405
      %v2622 = vmul.f32 %v2558, %v1406
      %v2623 = vmul.f32 %v2559, %v1407
      %v2624 = vmul.f32 %v2560, %v1408
      %v2625 = vmul.f32 %v2561, %v1409
      %v2626 = vmul.f32 %v2562, %v1410
      %v2627 = vmul.f32 %v2563, %v1411
      %v2628 = vmul.f32 %v2564, %v1412
      %v2629 = vmul.f32 %v2565, %v1413
      %v2630 = vmul.f32 %v2566, %v1414
      %v2631 = vmul.f32 %v2567, %v1415
      %v2632 = vmul.f32 %v2568, %v1416
      %v2633 = vmul.f32 %v2569, %v1417
      %v2634 = vmul.f32 %v2570, %v1418
      %v2635 = vmul.f32 %v2571, %v1419
      %v2636 = vmul.f32 %v2572, %v1420
      %v2637 = vmul.f32 %v2573, %v1421
      %v2638 = vmul.f32 %v2574, %v1422
      %v2639 = vmul.f32 %v2575, %v1423
      %v2640 = vmul.f32 %v2576, %v1424
      %v2641 = vmul.f32 %v2577, %v1425
      %v2642 = vmul.f32 %v2578, %v1426
      %v2643 = vmul.f32 %v2579, %v1427
      %v2644 = vmul.f32 %v2580, %v1428
      %v2645 = vmul.f32 %v2581, %v1429
      %v2646 = vmul.f32 %v2582, %v1430
      %v2647 = vmul.f32 %v2583, %v1431
      %v2648 = vmul.f32 %v2584, %v1432
      %v2649 = vmul.f32 %v2585, %v1433
      %v2650 = vmul.f32 %v2586, %v1434
      %v2651 = vmul.f32 %v2587, %v1435
      %v2652 = vmul.f32 %v2588, %v1436
      %v2653 = vmul.f32 %v2589, %v1437
      %v2654 = vmul.f32 %v2590, %v1438
      %v2655 = vmul.f32 %v2591, %v1439
      %v2656 = vmul.f32 %v2592, %v1440
      %v2657 = vmul.f32 %v2593, %v1441
      %v2658 = vmul.f32 %v2594, %v1442
      %v2659 = vadd.f32 %v2595, -0.014264739
      %v2660 = vadd.f32 %v2596, -0.014264739
      %v2661 = vadd.f32 %v2597, -0.014264739
      %v2662 = vadd.f32 %v2598, -0.014264739
      %v2663 = vadd.f32 %v2599, -0.014264739
      %v2664 = vadd.f32 %v2600, -0.014264739
      %v2665 = vadd.f32 %v2601, -0.014264739
      %v2666 = vadd.f32 %v2602, -0.014264739
      %v2667 = vadd.f32 %v2603, -0.014264739
      %v2668 = vadd.f32 %v2604, -0.014264739
      %v2669 = vadd.f32 %v2605, -0.014264739
      %v2670 = vadd.f32 %v2606, -0.014264739
      %v2671 = vadd.f32 %v2607, -0.014264739
      %v2672 = vadd.f32 %v2608, -0.014264739
      %v2673 = vadd.f32 %v2609, -0.014264739
      %v2674 = vadd.f32 %v2610, -0.014264739
      %v2675 = vadd.f32 %v2611, -0.014264739
      %v2676 = vadd.f32 %v2612, -0.014264739
      %v2677 = vadd.f32 %v2613, -0.014264739
      %v2678 = vadd.f32 %v2614, -0.014264739
      %v2679 = vadd.f32 %v2615, -0.014264739
      %v2680 = vadd.f32 %v2616, -0.014264739
      %v2681 = vadd.f32 %v2617, -0.014264739
      %v2682 = vadd.f32 %v2618, -0.014264739
      %v2683 = vadd.f32 %v2619, -0.014264739
      %v2684 = vadd.f32 %v2620, -0.014264739
      %v2685 = vadd.f32 %v2621, -0.014264739
      %v2686 = vadd.f32 %v2622, -0.014264739
      %v2687 = vadd.f32 %v2623, -0.014264739
      %v2688 = vadd.f32 %v2624, -0.014264739
      %v2689 = vadd.f32 %v2625, -0.014264739
      %v2690 = vadd.f32 %v2626, -0.014264739
      %v2691 = vadd.f32 %v2627, -0.014264739
      %v2692 = vadd.f32 %v2628, -0.014264739
      %v2693 = vadd.f32 %v2629, -0.014264739
      %v2694 = vadd.f32 %v2630, -0.014264739
      %v2695 = vadd.f32 %v2631, -0.014264739
      %v2696 = vadd.f32 %v2632, -0.014264739
      %v2697 = vadd.f32 %v2633, -0.014264739
      %v2698 = vadd.f32 %v2634, -0.014264739
      %v2699 = vadd.f32 %v2635, -0.014264739
      %v2700 = vadd.f32 %v2636, -0.014264739
      %v2701 = vadd.f32 %v2637, -0.014264739
      %v2702 = vadd.f32 %v2638, -0.014264739
      %v2703 = vadd.f32 %v2639, -0.014264739
      %v2704 = vadd.f32 %v2640, -0.014264739
      %v2705 = vadd.f32 %v2641, -0.014264739
      %v2706 = vadd.f32 %v2642, -0.014264739
      %v2707 = vadd.f32 %v2643, -0.014264739
      %v2708 = vadd.f32 %v2644, -0.014264739
      %v2709 = vadd.f32 %v2645, -0.014264739
      %v2710 = vadd.f32 %v2646, -0.014264739
      %v2711 = vadd.f32 %v2647, -0.014264739
      %v2712 = vadd.f32 %v2648, -0.014264739
      %v2713 = vadd.f32 %v2649, -0.014264739
      %v2714 = vadd.f32 %v2650, -0.014264739
      %v2715 = vadd.f32 %v2651, -0.014264739
      %v2716 = vadd.f32 %v2652, -0.014264739
      %v2717 = vadd.f32 %v2653, -0.014264739
      %v2718 = vadd.f32 %v2654, -0.014264739
      %v2719 = vadd.f32 %v2655, -0.014264739
      %v2720 = vadd.f32 %v2656, -0.014264739
      %v2721 = vadd.f32 %v2657, -0.014264739
      %v2722 = vadd.f32 %v2658, -0.014264739
      %v2723 = vmul.f32 %v1315, %v2147
      %v2724 = vmul.f32 %v1316, %v2148
      %v2725 = vmul.f32 %v1317, %v2149
      %v2726 = vmul.f32 %v1318, %v2150
      %v2727 = vmul.f32 %v1319, %v2151
      %v2728 = vmul.f32 %v1320, %v2152
      %v2729 = vmul.f32 %v1321, %v2153
      %v2730 = vmul.f32 %v1322, %v2154
      %v2731 = vmul.f32 %v1323, %v2155
      %v2732 = vmul.f32 %v1324, %v2156
      %v2733 = vmul.f32 %v1325, %v2157
      %v2734 = vmul.f32 %v1326, %v2158
      %v2735 = vmul.f32 %v1327, %v2159
      %v2736 = vmul.f32 %v1328, %v2160
      %v2737 = vmul.f32 %v1329, %v2161
      %v2738 = vmul.f32 %v1330, %v2162
      %v2739 = vmul.f32 %v1331, %v2163
      %v2740 = vmul.f32 %v1332, %v2164
      %v2741 = vmul.f32 %v1333, %v2165
      %v2742 = vmul.f32 %v1334, %v2166
      %v2743 = vmul.f32 %v1335, %v2167
      %v2744 = vmul.f32 %v1336, %v2168
      %v2745 = vmul.f32 %v1337, %v2169
      %v2746 = vmul.f32 %v1338, %v2170
      %v2747 = vmul.f32 %v1339, %v2171
      %v2748 = vmul.f32 %v1340, %v2172
      %v2749 = vmul.f32 %v1341, %v2173
      %v2750 = vmul.f32 %v1342, %v2174
      %v2751 = vmul.f32 %v1343, %v2175
      %v2752 = vmul.f32 %v1344, %v2176
      %v2753 = vmul.f32 %v1345, %v2177
      %v2754 = vmul.f32 %v1346, %v2178
      %v2755 = vmul.f32 %v1347, %v2179
      %v2756 = vmul.f32 %v1348, %v2180
      %v2757 = vmul.f32 %v1349, %v2181
      %v2758 = vmul.f32 %v1350, %v2182
      %v2759 = vmul.f32 %v1351, %v2183
      %v2760 = vmul.f32 %v1352, %v2184
      %v2761 = vmul.f32 %v1353, %v2185
      %v2762 = vmul.f32 %v1354, %v2186
      %v2763 = vmul.f32 %v1355, %v2187
      %v2764 = vmul.f32 %v1356, %v2188
      %v2765 = vmul.f32 %v1357, %v2189
      %v2766 = vmul.f32 %v1358, %v2190
      %v2767 = vmul.f32 %v1359, %v2191
      %v2768 = vmul.f32 %v1360, %v2192
      %v2769 = vmul.f32 %v1361, %v2193
      %v2770 = vmul.f32 %v1362, %v2194
      %v2771 = vmul.f32 %v1363, %v2195
      %v2772 = vmul.f32 %v1364, %v2196
      %v2773 = vmul.f32 %v1365, %v2197
      %v2774 = vmul.f32 %v1366, %v2198
      %v2775 = vmul.f32 %v1367, %v2199
      %v2776 = vmul.f32 %v1368, %v2200
      %v2777 = vmul.f32 %v1369, %v2201
      %v2778 = vmul.f32 %v1370, %v2202
      %v2779 = vmul.f32 %v1371, %v2203
      %v2780 = vmul.f32 %v1372, %v2204
      %v2781 = vmul.f32 %v1373, %v2205
      %v2782 = vmul.f32 %v1374, %v2206
      %v2783 = vmul.f32 %v1375, %v2207
      %v2784 = vmul.f32 %v1376, %v2208
      %v2785 = vmul.f32 %v1377, %v2209
      %v2786 = vmul.f32 %v1378, %v2210
      %v2787 = vrcp.pop %v2659
      %v2788 = vrcp.pop %v2660
      %v2789 = vrcp.pop %v2661
      %v2790 = vrcp.pop %v2662
      %v2791 = vrcp.pop %v2663
      %v2792 = vrcp.pop %v2664
      %v2793 = vrcp.pop %v2665
      %v2794 = vrcp.pop %v2666
      %v2795 = vrcp.pop %v2667
      %v2796 = vrcp.pop %v2668
      %v2797 = vrcp.pop %v2669
      %v2798 = vrcp.pop %v2670
      %v2799 = vrcp.pop %v2671
      %v2800 = vrcp.pop %v2672
      %v2801 = vrcp.pop %v2673
      %v2802 = vrcp.pop %v2674
      %v2803 = vrcp.pop %v2675
      %v2804 = vrcp.pop %v2676
      %v2805 = vrcp.pop %v2677
      %v2806 = vrcp.pop %v2678
      %v2807 = vrcp.pop %v2679
      %v2808 = vrcp.pop %v2680
      %v2809 = vrcp.pop %v2681
      %v2810 = vrcp.pop %v2682
      %v2811 = vrcp.pop %v2683
      %v2812 = vrcp.pop %v2684
      %v2813 = vrcp.pop %v2685
      %v2814 = vrcp.pop %v2686
      %v2815 = vrcp.pop %v2687
      %v2816 = vrcp.pop %v2688
      %v2817 = vrcp.pop %v2689
      %v2818 = vrcp.pop %v2690
      %v2819 = vrcp.pop %v2691
      %v2820 = vrcp.pop %v2692
      %v2821 = vrcp.pop %v2693
      %v2822 = vrcp.pop %v2694
      %v2823 = vrcp.pop %v2695
      %v2824 = vrcp.pop %v2696
      %v2825 = vrcp.pop %v2697
      %v2826 = vrcp.pop %v2698
      %v2827 = vrcp.pop %v2699
      %v2828 = vrcp.pop %v2700
      %v2829 = vrcp.pop %v2701
      %v2830 = vrcp.pop %v2702
      %v2831 = vrcp.pop %v2703
      %v2832 = vrcp.pop %v2704
      %v2833 = vrcp.pop %v2705
      %v2834 = vrcp.pop %v2706
      %v2835 = vrcp.pop %v2707
      %v2836 = vrcp.pop %v2708
      %v2837 = vrcp.pop %v2709
      %v2838 = vrcp.pop %v2710
      %v2839 = vrcp.pop %v2711
      %v2840 = vrcp.pop %v2712
      %v2841 = vrcp.pop %v2713
      %v2842 = vrcp.pop %v2714
      %v2843 = vrcp.pop %v2715
      %v2844 = vrcp.pop %v2716
      %v2845 = vrcp.pop %v2717
      %v2846 = vrcp.pop %v2718
      %v2847 = vrcp.pop %v2719
      %v2848 = vrcp.pop %v2720
      %v2849 = vrcp.pop %v2721
      %v2850 = vrcp.pop %v2722
      %v2851 = vmul.f32 %v2723, %v2787
      %v2852 = vmul.f32 %v2724, %v2788
      %v2853 = vmul.f32 %v2725, %v2789
      %v2854 = vmul.f32 %v2726, %v2790
      %v2855 = vmul.f32 %v2727, %v2791
      %v2856 = vmul.f32 %v2728, %v2792
      %v2857 = vmul.f32 %v2729, %v2793
      %v2858 = vmul.f32 %v2730, %v2794
      %v2859 = vmul.f32 %v2731, %v2795
      %v2860 = vmul.f32 %v2732, %v2796
      %v2861 = vmul.f32 %v2733, %v2797
      %v2862 = vmul.f32 %v2734, %v2798
      %v2863 = vmul.f32 %v2735, %v2799
      %v2864 = vmul.f32 %v2736, %v2800
      %v2865 = vmul.f32 %v2737, %v2801
      %v2866 = vmul.f32 %v2738, %v2802
      %v2867 = vmul.f32 %v2739, %v2803
      %v2868 = vmul.f32 %v2740, %v2804
      %v2869 = vmul.f32 %v2741, %v2805
      %v2870 = vmul.f32 %v2742, %v2806
      %v2871 = vmul.f32 %v2743, %v2807
      %v2872 = vmul.f32 %v2744, %v2808
      %v2873 = vmul.f32 %v2745, %v2809
      %v2874 = vmul.f32 %v2746, %v2810
      %v2875 = vmul.f32 %v2747, %v2811
      %v2876 = vmul.f32 %v2748, %v2812
      %v2877 = vmul.f32 %v2749, %v2813
      %v2878 = vmul.f32 %v2750, %v2814
      %v2879 = vmul.f32 %v2751, %v2815
      %v2880 = vmul.f32 %v2752, %v2816
      %v2881 = vmul.f32 %v2753, %v2817
      %v2882 = vmul.f32 %v2754, %v2818
      %v2883 = vmul.f32 %v2755, %v2819
      %v2884 = vmul.f32 %v2756, %v2820
      %v2885 = vmul.f32 %v2757, %v2821
      %v2886 = vmul.f32 %v2758, %v2822
      %v2887 = vmul.f32 %v2759, %v2823
      %v2888 = vmul.f32 %v2760, %v2824
      %v2889 = vmul.f32 %v2761, %v2825
      %v2890 = vmul.f32 %v2762, %v2826
      %v2891 = vmul.f32 %v2763, %v2827
      %v2892 = vmul.f32 %v2764, %v2828
      %v2893 = vmul.f32 %v2765, %v2829
      %v2894 = vmul.f32 %v2766, %v2830
      %v2895 = vmul.f32 %v2767, %v2831
      %v2896 = vmul.f32 %v2768, %v2832
      %v2897 = vmul.f32 %v2769, %v2833
      %v2898 = vmul.f32 %v2770, %v2834
      %v2899 = vmul.f32 %v2771, %v2835
      %v2900 = vmul.f32 %v2772, %v2836
      %v2901 = vmul.f32 %v2773, %v2837
      %v2902 = vmul.f32 %v2774, %v2838
      %v2903 = vmul.f32 %v2775, %v2839
      %v2904 = vmul.f32 %v2776, %v2840
      %v2905 = vmul.f32 %v2777, %v2841
      %v2906 = vmul.f32 %v2778, %v2842
      %v2907 = vmul.f32 %v2779, %v2843
      %v2908 = vmul.f32 %v2780, %v2844
      %v2909 = vmul.f32 %v2781, %v2845
      %v2910 = vmul.f32 %v2782, %v2846
      %v2911 = vmul.f32 %v2783, %v2847
      %v2912 = vmul.f32 %v2784, %v2848
      %v2913 = vmul.f32 %v2785, %v2849
      %v2914 = vmul.f32 %v2786, %v2850
      %v2915 = vadd.f32 %v2851, 1.0
      %v2916 = vadd.f32 %v2852, 1.0
      %v2917 = vadd.f32 %v2853, 1.0
      %v2918 = vadd.f32 %v2854, 1.0
      %v2919 = vadd.f32 %v2855, 1.0
      %v2920 = vadd.f32 %v2856, 1.0
      %v2921 = vadd.f32 %v2857, 1.0
      %v2922 = vadd.f32 %v2858, 1.0
      %v2923 = vadd.f32 %v2859, 1.0
      %v2924 = vadd.f32 %v2860, 1.0
      %v2925 = vadd.f32 %v2861, 1.0
      %v2926 = vadd.f32 %v2862, 1.0
      %v2927 = vadd.f32 %v2863, 1.0
      %v2928 = vadd.f32 %v2864, 1.0
      %v2929 = vadd.f32 %v2865, 1.0
      %v2930 = vadd.f32 %v2866, 1.0
      %v2931 = vadd.f32 %v2867, 1.0
      %v2932 = vadd.f32 %v2868, 1.0
      %v2933 = vadd.f32 %v2869, 1.0
      %v2934 = vadd.f32 %v2870, 1.0
      %v2935 = vadd.f32 %v2871, 1.0
      %v2936 = vadd.f32 %v2872, 1.0
      %v2937 = vadd.f32 %v2873, 1.0
      %v2938 = vadd.f32 %v2874, 1.0
      %v2939 = vadd.f32 %v2875, 1.0
      %v2940 = vadd.f32 %v2876, 1.0
      %v2941 = vadd.f32 %v2877, 1.0
      %v2942 = vadd.f32 %v2878, 1.0
      %v2943 = vadd.f32 %v2879, 1.0
      %v2944 = vadd.f32 %v2880, 1.0
      %v2945 = vadd.f32 %v2881, 1.0
      %v2946 = vadd.f32 %v2882, 1.0
      %v2947 = vadd.f32 %v2883, 1.0
      %v2948 = vadd.f32 %v2884, 1.0
      %v2949 = vadd.f32 %v2885, 1.0
      %v2950 = vadd.f32 %v2886, 1.0
      %v2951 = vadd.f32 %v2887, 1.0
      %v2952 = vadd.f32 %v2888, 1.0
      %v2953 = vadd.f32 %v2889, 1.0
      %v2954 = vadd.f32 %v2890, 1.0
      %v2955 = vadd.f32 %v2891, 1.0
      %v2956 = vadd.f32 %v2892, 1.0
      %v2957 = vadd.f32 %v2893, 1.0
      %v2958 = vadd.f32 %v2894, 1.0
      %v2959 = vadd.f32 %v2895, 1.0
      %v2960 = vadd.f32 %v2896, 1.0
      %v2961 = vadd.f32 %v2897, 1.0
      %v2962 = vadd.f32 %v2898, 1.0
      %v2963 = vadd.f32 %v2899, 1.0
      %v2964 = vadd.f32 %v2900, 1.0
      %v2965 = vadd.f32 %v2901, 1.0
      %v2966 = vadd.f32 %v2902, 1.0
      %v2967 = vadd.f32 %v2903, 1.0
      %v2968 = vadd.f32 %v2904, 1.0
      %v2969 = vadd.f32 %v2905, 1.0
      %v2970 = vadd.f32 %v2906, 1.0
      %v2971 = vadd.f32 %v2907, 1.0
      %v2972 = vadd.f32 %v2908, 1.0
      %v2973 = vadd.f32 %v2909, 1.0
      %v2974 = vadd.f32 %v2910, 1.0
      %v2975 = vadd.f32 %v2911, 1.0
      %v2976 = vadd.f32 %v2912, 1.0
      %v2977 = vadd.f32 %v2913, 1.0
      %v2978 = vadd.f32 %v2914, 1.0
      %v2979 = vmul.f32 %v1123, %v2915
      %v2980 = vmul.f32 %v1124, %v2916
      %v2981 = vmul.f32 %v1125, %v2917
      %v2982 = vmul.f32 %v1126, %v2918
      %v2983 = vmul.f32 %v1127, %v2919
      %v2984 = vmul.f32 %v1128, %v2920
      %v2985 = vmul.f32 %v1129, %v2921
      %v2986 = vmul.f32 %v1130, %v2922
      %v2987 = vmul.f32 %v1131, %v2923
      %v2988 = vmul.f32 %v1132, %v2924
      %v2989 = vmul.f32 %v1133, %v2925
      %v2990 = vmul.f32 %v1134, %v2926
      %v2991 = vmul.f32 %v1135, %v2927
      %v2992 = vmul.f32 %v1136, %v2928
      %v2993 = vmul.f32 %v1137, %v2929
      %v2994 = vmul.f32 %v1138, %v2930
      %v2995 = vmul.f32 %v1139, %v2931
      %v2996 = vmul.f32 %v1140, %v2932
      %v2997 = vmul.f32 %v1141, %v2933
      %v2998 = vmul.f32 %v1142, %v2934
      %v2999 = vmul.f32 %v1143, %v2935
      %v3000 = vmul.f32 %v1144, %v2936
      %v3001 = vmul.f32 %v1145, %v2937
      %v3002 = vmul.f32 %v1146, %v2938
      %v3003 = vmul.f32 %v1147, %v2939
      %v3004 = vmul.f32 %v1148, %v2940
      %v3005 = vmul.f32 %v1149, %v2941
      %v3006 = vmul.f32 %v1150, %v2942
      %v3007 = vmul.f32 %v1151, %v2943
      %v3008 = vmul.f32 %v1152, %v2944
      %v3009 = vmul.f32 %v1153, %v2945
      %v3010 = vmul.f32 %v1154, %v2946
      %v3011 = vmul.f32 %v1155, %v2947
      %v3012 = vmul.f32 %v1156, %v2948
      %v3013 = vmul.f32 %v1157, %v2949
      %v3014 = vmul.f32 %v1158, %v2950
      %v3015 = vmul.f32 %v1159, %v2951
      %v3016 = vmul.f32 %v1160, %v2952
      %v3017 = vmul.f32 %v1161, %v2953
      %v3018 = vmul.f32 %v1162, %v2954
      %v3019 = vmul.f32 %v1163, %v2955
      %v3020 = vmul.f32 %v1164, %v2956
      %v3021 = vmul.f32 %v1165, %v2957
      %v3022 = vmul.f32 %v1166, %v2958
      %v3023 = vmul.f32 %v1167, %v2959
      %v3024 = vmul.f32 %v1168, %v2960
      %v3025 = vmul.f32 %v1169, %v2961
      %v3026 = vmul.f32 %v1170, %v2962
      %v3027 = vmul.f32 %v1171, %v2963
      %v3028 = vmul.f32 %v1172, %v2964
      %v3029 = vmul.f32 %v1173, %v2965
      %v3030 = vmul.f32 %v1174, %v2966
      %v3031 = vmul.f32 %v1175, %v2967
      %v3032 = vmul.f32 %v1176, %v2968
      %v3033 = vmul.f32 %v1177, %v2969
      %v3034 = vmul.f32 %v1178, %v2970
      %v3035 = vmul.f32 %v1179, %v2971
      %v3036 = vmul.f32 %v1180, %v2972
      %v3037 = vmul.f32 %v1181, %v2973
      %v3038 = vmul.f32 %v1182, %v2974
      %v3039 = vmul.f32 %v1183, %v2975
      %v3040 = vmul.f32 %v1184, %v2976
      %v3041 = vmul.f32 %v1185, %v2977
      %v3042 = vmul.f32 %v1186, %v2978
      %v3043 = vld [vmem:[%s6] sm:$0xff]
      %v3044 = vld [vmem:[%s6 + $0x8] sm:$0xff]
      %v3045 = vld [vmem:[%s6 + $0x10] sm:$0xff]
      %v3046 = vld [vmem:[%s6 + $0x18] sm:$0xff]
      %v3047 = vld [vmem:[%s6 + $0x20] sm:$0xff]
      %v3048 = vld [vmem:[%s6 + $0x28] sm:$0xff]
      %v3049 = vld [vmem:[%s6 + $0x30] sm:$0xff]
      %v3050 = vld [vmem:[%s6 + $0x38] sm:$0xff]
      %v3051 = vld [vmem:[%s6 + $0x40] sm:$0xff]
      %v3052 = vld [vmem:[%s6 + $0x48] sm:$0xff]
      %v3053 = vld [vmem:[%s6 + $0x50] sm:$0xff]
      %v3054 = vld [vmem:[%s6 + $0x58] sm:$0xff]
      %v3055 = vld [vmem:[%s6 + $0x60] sm:$0xff]
      %v3056 = vld [vmem:[%s6 + $0x68] sm:$0xff]
      %v3057 = vld [vmem:[%s6 + $0x70] sm:$0xff]
      %v3058 = vld [vmem:[%s6 + $0x78] sm:$0xff]
      %v3059 = vld [vmem:[%s7] sm:$0x1]
      %v3061 = vlaneseq
      %v3062 = vshrl.u32 %v3061, 7
      %v3063 = vsub.s32 0, %v3062
      %v3064 = vrot.slane %v3059, %v3063
      %3066 = vmatprep.subr.mxu0 0.0
      %3067 = vmatpush1.msra.mxu0 %v3043
      %3068 = vmatprep.subr.mxu0 0.0
      %3069 = vmatpush1.msra.mxu0 %v3044
      %3070 = vmatprep.subr.mxu0 0.0
      %3071 = vmatpush1.msra.mxu0 %v3045
      %3072 = vmatprep.subr.mxu0 0.0
      %3073 = vmatpush1.msra.mxu0 %v3046
      %3074 = vmatprep.subr.mxu0 0.0
      %3075 = vmatpush1.msra.mxu0 %v3047
      %3076 = vmatprep.subr.mxu0 0.0
      %3077 = vmatpush1.msra.mxu0 %v3048
      %3078 = vmatprep.subr.mxu0 0.0
      %3079 = vmatpush1.msra.mxu0 %v3049
      %3080 = vmatprep.subr.mxu0 0.0
      %3081 = vmatpush1.msra.mxu0 %v3050
      %3082 = vmatprep.subr.mxu0 0.0
      %3083 = vmatpush1.msra.mxu0 %v3051
      %3084 = vmatprep.subr.mxu0 0.0
      %3085 = vmatpush1.msra.mxu0 %v3052
      %3086 = vmatprep.subr.mxu0 0.0
      %3087 = vmatpush1.msra.mxu0 %v3053
      %3088 = vmatprep.subr.mxu0 0.0
      %3089 = vmatpush1.msra.mxu0 %v3054
      %3090 = vmatprep.subr.mxu0 0.0
      %3091 = vmatpush1.msra.mxu0 %v3055
      %3092 = vmatprep.subr.mxu0 0.0
      %3093 = vmatpush1.msra.mxu0 %v3056
      %3094 = vmatprep.subr.mxu0 0.0
      %3095 = vmatpush1.msra.mxu0 %v3057
      %3096 = vmatprep.subr.mxu0 0.0
      %3097 = vmatpush1.msra.mxu0 %v3058
      %3098 = vmatprep.subr.mxu0 0.0
      %3099 = vmatpush1.msra.mxu0 0.0
      %3100 = vmatprep.subr.mxu0 0.0
      %3101 = vmatpush1.msra.mxu0 0.0
      %3102 = vmatprep.subr.mxu0 0.0
      %3103 = vmatpush1.msra.mxu0 0.0
      %3104 = vmatprep.subr.mxu0 0.0
      %3105 = vmatpush1.msra.mxu0 0.0
      %3106 = vmatprep.subr.mxu0 0.0
      %3107 = vmatpush1.msra.mxu0 0.0
      %3108 = vmatprep.subr.mxu0 0.0
      %3109 = vmatpush1.msra.mxu0 0.0
      %3110 = vmatprep.subr.mxu0 0.0
      %3111 = vmatpush1.msra.mxu0 0.0
      %3112 = vmatprep.subr.mxu0 0.0
      %3113 = vmatpush1.msra.mxu0 0.0
      %3114 = vmatprep.subr.mxu0 0.0
      %3115 = vmatpush1.msra.mxu0 0.0
      %3116 = vmatprep.subr.mxu0 0.0
      %3117 = vmatpush1.msra.mxu0 0.0
      %3118 = vmatprep.subr.mxu0 0.0
      %3119 = vmatpush1.msra.mxu0 0.0
      %3120 = vmatprep.subr.mxu0 0.0
      %3121 = vmatpush1.msra.mxu0 0.0
      %3122 = vmatprep.subr.mxu0 0.0
      %3123 = vmatpush1.msra.mxu0 0.0
      %3124 = vmatprep.subr.mxu0 0.0
      %3125 = vmatpush1.msra.mxu0 0.0
      %3126 = vmatprep.subr.mxu0 0.0
      %3127 = vmatpush1.msra.mxu0 0.0
      %3128 = vmatprep.subr.mxu0 0.0
      %3129 = vmatpush1.msra.mxu0 0.0
      %3130 = vmatprep.mubr.f32.mxu0 0.0
      %3131 = vmatmul.mubr.f32.gmra.mrb[0].mxu0 %v2979
      %v3132 = vpop.f32.mrb[0].mxu0
      %v3133 = vadd.f32 %v3064, %v3132
      %v3134 = vpop.f32.mrb[0].mxu0
      %3135 = vmatprep.mubr.f32.mxu0 0.0
      %3136 = vmatmul.mubr.f32.gmra.mrb[0].mxu0 %v2980
      %v3137 = vpop.f32.mrb[0].mxu0
      %v3138 = vadd.f32 %v3064, %v3137
      %v3139 = vpop.f32.mrb[0].mxu0
      %3140 = vmatprep.mubr.f32.mxu0 0.0
      %3141 = vmatmul.mubr.f32.gmra.mrb[0].mxu0 %v2981
      %v3142 = vpop.f32.mrb[0].mxu0
      %v3143 = vadd.f32 %v3064, %v3142
      %v3144 = vpop.f32.mrb[0].mxu0
      %3145 = vmatprep.mubr.f32.mxu0 0.0
      %3146 = vmatmul.mubr.f32.gmra.mrb[0].mxu0 %v2982
      %v3147 = vpop.f32.mrb[0].mxu0
      %v3148 = vadd.f32 %v3064, %v3147
      %v3149 = vpop.f32.mrb[0].mxu0
      %3150 = vmatprep.mubr.f32.mxu0 0.0
      %3151 = vmatmul.mubr.f32.gmra.mrb[0].mxu0 %v2983
      %v3152 = vpop.f32.mrb[0].mxu0
      %v3153 = vadd.f32 %v3064, %v3152
      %v3154 = vpop.f32.mrb[0].mxu0
      %3155 = vmatprep.mubr.f32.mxu0 0.0
      %3156 = vmatmul.mubr.f32.gmra.mrb[0].mxu0 %v2984
      %v3157 = vpop.f32.mrb[0].mxu0
      %v3158 = vadd.f32 %v3064, %v3157
      %v3159 = vpop.f32.mrb[0].mxu0
      %3160 = vmatprep.mubr.f32.mxu0 0.0
      %3161 = vmatmul.mubr.f32.gmra.mrb[0].mxu0 %v2985
      %v3162 = vpop.f32.mrb[0].mxu0
      %v3163 = vadd.f32 %v3064, %v3162
      %v3164 = vpop.f32.mrb[0].mxu0
      %3165 = vmatprep.mubr.f32.mxu0 0.0
      %3166 = vmatmul.mubr.f32.gmra.mrb[0].mxu0 %v2986
      %v3167 = vpop.f32.mrb[0].mxu0
      %v3168 = vadd.f32 %v3064, %v3167
      %v3169 = vpop.f32.mrb[0].mxu0
      %3170 = vmatprep.mubr.f32.mxu0 0.0
      %3171 = vmatmul.mubr.f32.gmra.mrb[0].mxu0 %v2987
      %v3172 = vpop.f32.mrb[0].mxu0
      %v3173 = vadd.f32 %v3064, %v3172
      %v3174 = vpop.f32.mrb[0].mxu0
      %3175 = vmatprep.mubr.f32.mxu0 0.0
      %3176 = vmatmul.mubr.f32.gmra.mrb[0].mxu0 %v2988
      %v3177 = vpop.f32.mrb[0].mxu0
      %v3178 = vadd.f32 %v3064, %v3177
      %v3179 = vpop.f32.mrb[0].mxu0
      %3180 = vmatprep.mubr.f32.mxu0 0.0
      %3181 = vmatmul.mubr.f32.gmra.mrb[0].mxu0 %v2989
      %v3182 = vpop.f32.mrb[0].mxu0
      %v3183 = vadd.f32 %v3064, %v3182
      %v3184 = vpop.f32.mrb[0].mxu0
      %3185 = vmatprep.mubr.f32.mxu0 0.0
      %3186 = vmatmul.mubr.f32.gmra.mrb[0].mxu0 %v2990
      %v3187 = vpop.f32.mrb[0].mxu0
      %v3188 = vadd.f32 %v3064, %v3187
      %v3189 = vpop.f32.mrb[0].mxu0
      %3190 = vmatprep.mubr.f32.mxu0 0.0
      %3191 = vmatmul.mubr.f32.gmra.mrb[0].mxu0 %v2991
      %v3192 = vpop.f32.mrb[0].mxu0
      %v3193 = vadd.f32 %v3064, %v3192
      %v3194 = vpop.f32.mrb[0].mxu0
      %3195 = vmatprep.mubr.f32.mxu0 0.0
      %3196 = vmatmul.mubr.f32.gmra.mrb[0].mxu0 %v2992
      %v3197 = vpop.f32.mrb[0].mxu0
      %v3198 = vadd.f32 %v3064, %v3197
      %v3199 = vpop.f32.mrb[0].mxu0
      %3200 = vmatprep.mubr.f32.mxu0 0.0
      %3201 = vmatmul.mubr.f32.gmra.mrb[0].mxu0 %v2993
      %v3202 = vpop.f32.mrb[0].mxu0
      %v3203 = vadd.f32 %v3064, %v3202
      %v3204 = vpop.f32.mrb[0].mxu0
      %3205 = vmatprep.mubr.f32.mxu0 0.0
      %3206 = vmatmul.mubr.f32.gmra.mrb[0].mxu0 %v2994
      %v3207 = vpop.f32.mrb[0].mxu0
      %v3208 = vadd.f32 %v3064, %v3207
      %v3209 = vpop.f32.mrb[0].mxu0
      %3210 = vmatprep.mubr.f32.mxu0 0.0
      %3211 = vmatmul.mubr.f32.gmra.mrb[0].mxu0 %v2995
      %v3212 = vpop.f32.mrb[0].mxu0
      %v3213 = vadd.f32 %v3064, %v3212
      %v3214 = vpop.f32.mrb[0].mxu0
      %3215 = vmatprep.mubr.f32.mxu0 0.0
      %3216 = vmatmul.mubr.f32.gmra.mrb[0].mxu0 %v2996
      %v3217 = vpop.f32.mrb[0].mxu0
      %v3218 = vadd.f32 %v3064, %v3217
      %v3219 = vpop.f32.mrb[0].mxu0
      %3220 = vmatprep.mubr.f32.mxu0 0.0
      %3221 = vmatmul.mubr.f32.gmra.mrb[0].mxu0 %v2997
      %v3222 = vpop.f32.mrb[0].mxu0
      %v3223 = vadd.f32 %v3064, %v3222
      %v3224 = vpop.f32.mrb[0].mxu0
      %3225 = vmatprep.mubr.f32.mxu0 0.0
      %3226 = vmatmul.mubr.f32.gmra.mrb[0].mxu0 %v2998
      %v3227 = vpop.f32.mrb[0].mxu0
      %v3228 = vadd.f32 %v3064, %v3227
      %v3229 = vpop.f32.mrb[0].mxu0
      %3230 = vmatprep.mubr.f32.mxu0 0.0
      %3231 = vmatmul.mubr.f32.gmra.mrb[0].mxu0 %v2999
      %v3232 = vpop.f32.mrb[0].mxu0
      %v3233 = vadd.f32 %v3064, %v3232
      %v3234 = vpop.f32.mrb[0].mxu0
      %3235 = vmatprep.mubr.f32.mxu0 0.0
      %3236 = vmatmul.mubr.f32.gmra.mrb[0].mxu0 %v3000
      %v3237 = vpop.f32.mrb[0].mxu0
      %v3238 = vadd.f32 %v3064, %v3237
      %v3239 = vpop.f32.mrb[0].mxu0
      %3240 = vmatprep.mubr.f32.mxu0 0.0
      %3241 = vmatmul.mubr.f32.gmra.mrb[0].mxu0 %v3001
      %v3242 = vpop.f32.mrb[0].mxu0
      %v3243 = vadd.f32 %v3064, %v3242
      %v3244 = vpop.f32.mrb[0].mxu0
      %3245 = vmatprep.mubr.f32.mxu0 0.0
      %3246 = vmatmul.mubr.f32.gmra.mrb[0].mxu0 %v3002
      %v3247 = vpop.f32.mrb[0].mxu0
      %v3248 = vadd.f32 %v3064, %v3247
      %v3249 = vpop.f32.mrb[0].mxu0
      %3250 = vmatprep.mubr.f32.mxu0 0.0
      %3251 = vmatmul.mubr.f32.gmra.mrb[0].mxu0 %v3003
      %v3252 = vpop.f32.mrb[0].mxu0
      %v3253 = vadd.f32 %v3064, %v3252
      %v3254 = vpop.f32.mrb[0].mxu0
      %3255 = vmatprep.mubr.f32.mxu0 0.0
      %3256 = vmatmul.mubr.f32.gmra.mrb[0].mxu0 %v3004
      %v3257 = vpop.f32.mrb[0].mxu0
      %v3258 = vadd.f32 %v3064, %v3257
      %v3259 = vpop.f32.mrb[0].mxu0
      %3260 = vmatprep.mubr.f32.mxu0 0.0
      %3261 = vmatmul.mubr.f32.gmra.mrb[0].mxu0 %v3005
      %v3262 = vpop.f32.mrb[0].mxu0
      %v3263 = vadd.f32 %v3064, %v3262
      %v3264 = vpop.f32.mrb[0].mxu0
      %3265 = vmatprep.mubr.f32.mxu0 0.0
      %3266 = vmatmul.mubr.f32.gmra.mrb[0].mxu0 %v3006
      %v3267 = vpop.f32.mrb[0].mxu0
      %v3268 = vadd.f32 %v3064, %v3267
      %v3269 = vpop.f32.mrb[0].mxu0
      %3270 = vmatprep.mubr.f32.mxu0 0.0
      %3271 = vmatmul.mubr.f32.gmra.mrb[0].mxu0 %v3007
      %v3272 = vpop.f32.mrb[0].mxu0
      %v3273 = vadd.f32 %v3064, %v3272
      %v3274 = vpop.f32.mrb[0].mxu0
      %3275 = vmatprep.mubr.f32.mxu0 0.0
      %3276 = vmatmul.mubr.f32.gmra.mrb[0].mxu0 %v3008
      %v3277 = vpop.f32.mrb[0].mxu0
      %v3278 = vadd.f32 %v3064, %v3277
      %v3279 = vpop.f32.mrb[0].mxu0
      %3280 = vmatprep.mubr.f32.mxu0 0.0
      %3281 = vmatmul.mubr.f32.gmra.mrb[0].mxu0 %v3009
      %v3282 = vpop.f32.mrb[0].mxu0
      %v3283 = vadd.f32 %v3064, %v3282
      %v3284 = vpop.f32.mrb[0].mxu0
      %3285 = vmatprep.mubr.f32.mxu0 0.0
      %3286 = vmatmul.mubr.f32.gmra.mrb[0].mxu0 %v3010
      %v3287 = vpop.f32.mrb[0].mxu0
      %v3288 = vadd.f32 %v3064, %v3287
      %v3289 = vpop.f32.mrb[0].mxu0
      %3290 = vmatprep.mubr.f32.mxu0 0.0
      %3291 = vmatmul.mubr.f32.gmra.mrb[0].mxu0 %v3011
      %v3292 = vpop.f32.mrb[0].mxu0
      %v3293 = vadd.f32 %v3064, %v3292
      %v3294 = vpop.f32.mrb[0].mxu0
      %3295 = vmatprep.mubr.f32.mxu0 0.0
      %3296 = vmatmul.mubr.f32.gmra.mrb[0].mxu0 %v3012
      %v3297 = vpop.f32.mrb[0].mxu0
      %v3298 = vadd.f32 %v3064, %v3297
      %v3299 = vpop.f32.mrb[0].mxu0
      %3300 = vmatprep.mubr.f32.mxu0 0.0
      %3301 = vmatmul.mubr.f32.gmra.mrb[0].mxu0 %v3013
      %v3302 = vpop.f32.mrb[0].mxu0
      %v3303 = vadd.f32 %v3064, %v3302
      %v3304 = vpop.f32.mrb[0].mxu0
      %3305 = vmatprep.mubr.f32.mxu0 0.0
      %3306 = vmatmul.mubr.f32.gmra.mrb[0].mxu0 %v3014
      %v3307 = vpop.f32.mrb[0].mxu0
      %v3308 = vadd.f32 %v3064, %v3307
      %v3309 = vpop.f32.mrb[0].mxu0
      %3310 = vmatprep.mubr.f32.mxu0 0.0
      %3311 = vmatmul.mubr.f32.gmra.mrb[0].mxu0 %v3015
      %v3312 = vpop.f32.mrb[0].mxu0
      %v3313 = vadd.f32 %v3064, %v3312
      %v3314 = vpop.f32.mrb[0].mxu0
      %3315 = vmatprep.mubr.f32.mxu0 0.0
      %3316 = vmatmul.mubr.f32.gmra.mrb[0].mxu0 %v3016
      %v3317 = vpop.f32.mrb[0].mxu0
      %v3318 = vadd.f32 %v3064, %v3317
      %v3319 = vpop.f32.mrb[0].mxu0
      %3320 = vmatprep.mubr.f32.mxu0 0.0
      %3321 = vmatmul.mubr.f32.gmra.mrb[0].mxu0 %v3017
      %v3322 = vpop.f32.mrb[0].mxu0
      %v3323 = vadd.f32 %v3064, %v3322
      %v3324 = vpop.f32.mrb[0].mxu0
      %3325 = vmatprep.mubr.f32.mxu0 0.0
      %3326 = vmatmul.mubr.f32.gmra.mrb[0].mxu0 %v3018
      %v3327 = vpop.f32.mrb[0].mxu0
      %v3328 = vadd.f32 %v3064, %v3327
      %v3329 = vpop.f32.mrb[0].mxu0
      %3330 = vmatprep.mubr.f32.mxu0 0.0
      %3331 = vmatmul.mubr.f32.gmra.mrb[0].mxu0 %v3019
      %v3332 = vpop.f32.mrb[0].mxu0
      %v3333 = vadd.f32 %v3064, %v3332
      %v3334 = vpop.f32.mrb[0].mxu0
      %3335 = vmatprep.mubr.f32.mxu0 0.0
      %3336 = vmatmul.mubr.f32.gmra.mrb[0].mxu0 %v3020
      %v3337 = vpop.f32.mrb[0].mxu0
      %v3338 = vadd.f32 %v3064, %v3337
      %v3339 = vpop.f32.mrb[0].mxu0
      %3340 = vmatprep.mubr.f32.mxu0 0.0
      %3341 = vmatmul.mubr.f32.gmra.mrb[0].mxu0 %v3021
      %v3342 = vpop.f32.mrb[0].mxu0
      %v3343 = vadd.f32 %v3064, %v3342
      %v3344 = vpop.f32.mrb[0].mxu0
      %3345 = vmatprep.mubr.f32.mxu0 0.0
      %3346 = vmatmul.mubr.f32.gmra.mrb[0].mxu0 %v3022
      %v3347 = vpop.f32.mrb[0].mxu0
      %v3348 = vadd.f32 %v3064, %v3347
      %v3349 = vpop.f32.mrb[0].mxu0
      %3350 = vmatprep.mubr.f32.mxu0 0.0
      %3351 = vmatmul.mubr.f32.gmra.mrb[0].mxu0 %v3023
      %v3352 = vpop.f32.mrb[0].mxu0
      %v3353 = vadd.f32 %v3064, %v3352
      %v3354 = vpop.f32.mrb[0].mxu0
      %3355 = vmatprep.mubr.f32.mxu0 0.0
      %3356 = vmatmul.mubr.f32.gmra.mrb[0].mxu0 %v3024
      %v3357 = vpop.f32.mrb[0].mxu0
      %v3358 = vadd.f32 %v3064, %v3357
      %v3359 = vpop.f32.mrb[0].mxu0
      %3360 = vmatprep.mubr.f32.mxu0 0.0
      %3361 = vmatmul.mubr.f32.gmra.mrb[0].mxu0 %v3025
      %v3362 = vpop.f32.mrb[0].mxu0
      %v3363 = vadd.f32 %v3064, %v3362
      %v3364 = vpop.f32.mrb[0].mxu0
      %3365 = vmatprep.mubr.f32.mxu0 0.0
      %3366 = vmatmul.mubr.f32.gmra.mrb[0].mxu0 %v3026
      %v3367 = vpop.f32.mrb[0].mxu0
      %v3368 = vadd.f32 %v3064, %v3367
      %v3369 = vpop.f32.mrb[0].mxu0
      %3370 = vmatprep.mubr.f32.mxu0 0.0
      %3371 = vmatmul.mubr.f32.gmra.mrb[0].mxu0 %v3027
      %v3372 = vpop.f32.mrb[0].mxu0
      %v3373 = vadd.f32 %v3064, %v3372
      %v3374 = vpop.f32.mrb[0].mxu0
      %3375 = vmatprep.mubr.f32.mxu0 0.0
      %3376 = vmatmul.mubr.f32.gmra.mrb[0].mxu0 %v3028
      %v3377 = vpop.f32.mrb[0].mxu0
      %v3378 = vadd.f32 %v3064, %v3377
      %v3379 = vpop.f32.mrb[0].mxu0
      %3380 = vmatprep.mubr.f32.mxu0 0.0
      %3381 = vmatmul.mubr.f32.gmra.mrb[0].mxu0 %v3029
      %v3382 = vpop.f32.mrb[0].mxu0
      %v3383 = vadd.f32 %v3064, %v3382
      %v3384 = vpop.f32.mrb[0].mxu0
      %3385 = vmatprep.mubr.f32.mxu0 0.0
      %3386 = vmatmul.mubr.f32.gmra.mrb[0].mxu0 %v3030
      %v3387 = vpop.f32.mrb[0].mxu0
      %v3388 = vadd.f32 %v3064, %v3387
      %v3389 = vpop.f32.mrb[0].mxu0
      %3390 = vmatprep.mubr.f32.mxu0 0.0
      %3391 = vmatmul.mubr.f32.gmra.mrb[0].mxu0 %v3031
      %v3392 = vpop.f32.mrb[0].mxu0
      %v3393 = vadd.f32 %v3064, %v3392
      %v3394 = vpop.f32.mrb[0].mxu0
      %3395 = vmatprep.mubr.f32.mxu0 0.0
      %3396 = vmatmul.mubr.f32.gmra.mrb[0].mxu0 %v3032
      %v3397 = vpop.f32.mrb[0].mxu0
      %v3398 = vadd.f32 %v3064, %v3397
      %v3399 = vpop.f32.mrb[0].mxu0
      %3400 = vmatprep.mubr.f32.mxu0 0.0
      %3401 = vmatmul.mubr.f32.gmra.mrb[0].mxu0 %v3033
      %v3402 = vpop.f32.mrb[0].mxu0
      %v3403 = vadd.f32 %v3064, %v3402
      %v3404 = vpop.f32.mrb[0].mxu0
      %3405 = vmatprep.mubr.f32.mxu0 0.0
      %3406 = vmatmul.mubr.f32.gmra.mrb[0].mxu0 %v3034
      %v3407 = vpop.f32.mrb[0].mxu0
      %v3408 = vadd.f32 %v3064, %v3407
      %v3409 = vpop.f32.mrb[0].mxu0
      %3410 = vmatprep.mubr.f32.mxu0 0.0
      %3411 = vmatmul.mubr.f32.gmra.mrb[0].mxu0 %v3035
      %v3412 = vpop.f32.mrb[0].mxu0
      %v3413 = vadd.f32 %v3064, %v3412
      %v3414 = vpop.f32.mrb[0].mxu0
      %3415 = vmatprep.mubr.f32.mxu0 0.0
      %3416 = vmatmul.mubr.f32.gmra.mrb[0].mxu0 %v3036
      %v3417 = vpop.f32.mrb[0].mxu0
      %v3418 = vadd.f32 %v3064, %v3417
      %v3419 = vpop.f32.mrb[0].mxu0
      %3420 = vmatprep.mubr.f32.mxu0 0.0
      %3421 = vmatmul.mubr.f32.gmra.mrb[0].mxu0 %v3037
      %v3422 = vpop.f32.mrb[0].mxu0
      %v3423 = vadd.f32 %v3064, %v3422
      %v3424 = vpop.f32.mrb[0].mxu0
      %3425 = vmatprep.mubr.f32.mxu0 0.0
      %3426 = vmatmul.mubr.f32.gmra.mrb[0].mxu0 %v3038
      %v3427 = vpop.f32.mrb[0].mxu0
      %v3428 = vadd.f32 %v3064, %v3427
      %v3429 = vpop.f32.mrb[0].mxu0
      %3430 = vmatprep.mubr.f32.mxu0 0.0
      %3431 = vmatmul.mubr.f32.gmra.mrb[0].mxu0 %v3039
      %v3432 = vpop.f32.mrb[0].mxu0
      %v3433 = vadd.f32 %v3064, %v3432
      %v3434 = vpop.f32.mrb[0].mxu0
      %3435 = vmatprep.mubr.f32.mxu0 0.0
      %3436 = vmatmul.mubr.f32.gmra.mrb[0].mxu0 %v3040
      %v3437 = vpop.f32.mrb[0].mxu0
      %v3438 = vadd.f32 %v3064, %v3437
      %v3439 = vpop.f32.mrb[0].mxu0
      %3440 = vmatprep.mubr.f32.mxu0 0.0
      %3441 = vmatmul.mubr.f32.gmra.mrb[0].mxu0 %v3041
      %v3442 = vpop.f32.mrb[0].mxu0
      %v3443 = vadd.f32 %v3064, %v3442
      %v3444 = vpop.f32.mrb[0].mxu0
      %3445 = vmatprep.mubr.f32.mxu0 0.0
      %3446 = vmatmul.mubr.f32.gmra.mrb[0].mxu0 %v3042
      %v3447 = vpop.f32.mrb[0].mxu0
      %v3448 = vadd.f32 %v3064, %v3447
      %v3449 = vpop.f32.mrb[0].mxu0
      %3450 = vdwg.mxu0
      %v3451 = vld [vmem:[%s317] sm:$0xff]
      %v3452 = vld [vmem:[%s317 + $0x8] sm:$0xff]
      %v3453 = vld [vmem:[%s317 + $0x10] sm:$0xff]
      %v3454 = vld [vmem:[%s317 + $0x18] sm:$0xff]
      %v3455 = vld [vmem:[%s317 + $0x20] sm:$0xff]
      %v3456 = vld [vmem:[%s317 + $0x28] sm:$0xff]
      %v3457 = vld [vmem:[%s317 + $0x30] sm:$0xff]
      %v3458 = vld [vmem:[%s317 + $0x38] sm:$0xff]
      %v3459 = vld [vmem:[%s317 + $0x40] sm:$0xff]
      %v3460 = vld [vmem:[%s317 + $0x48] sm:$0xff]
      %v3461 = vld [vmem:[%s317 + $0x50] sm:$0xff]
      %v3462 = vld [vmem:[%s317 + $0x58] sm:$0xff]
      %v3463 = vld [vmem:[%s317 + $0x60] sm:$0xff]
      %v3464 = vld [vmem:[%s317 + $0x68] sm:$0xff]
      %v3465 = vld [vmem:[%s317 + $0x70] sm:$0xff]
      %v3466 = vld [vmem:[%s317 + $0x78] sm:$0xff]
      %v3467 = vld [vmem:[%s317 + $0x80] sm:$0xff]
      %v3468 = vld [vmem:[%s317 + $0x88] sm:$0xff]
      %v3469 = vld [vmem:[%s317 + $0x90] sm:$0xff]
      %v3470 = vld [vmem:[%s317 + $0x98] sm:$0xff]
      %v3471 = vld [vmem:[%s317 + $0xa0] sm:$0xff]
      %v3472 = vld [vmem:[%s317 + $0xa8] sm:$0xff]
      %v3473 = vld [vmem:[%s317 + $0xb0] sm:$0xff]
      %v3474 = vld [vmem:[%s317 + $0xb8] sm:$0xff]
      %v3475 = vld [vmem:[%s317 + $0xc0] sm:$0xff]
      %v3476 = vld [vmem:[%s317 + $0xc8] sm:$0xff]
      %v3477 = vld [vmem:[%s317 + $0xd0] sm:$0xff]
      %v3478 = vld [vmem:[%s317 + $0xd8] sm:$0xff]
      %v3479 = vld [vmem:[%s317 + $0xe0] sm:$0xff]
      %v3480 = vld [vmem:[%s317 + $0xe8] sm:$0xff]
      %v3481 = vld [vmem:[%s317 + $0xf0] sm:$0xff]
      %v3482 = vld [vmem:[%s317 + $0xf8] sm:$0xff]
      %v3483 = vld [vmem:[%s317 + $0x100] sm:$0xff]
      %v3484 = vld [vmem:[%s317 + $0x108] sm:$0xff]
      %v3485 = vld [vmem:[%s317 + $0x110] sm:$0xff]
      %v3486 = vld [vmem:[%s317 + $0x118] sm:$0xff]
      %v3487 = vld [vmem:[%s317 + $0x120] sm:$0xff]
      %v3488 = vld [vmem:[%s317 + $0x128] sm:$0xff]
      %v3489 = vld [vmem:[%s317 + $0x130] sm:$0xff]
      %v3490 = vld [vmem:[%s317 + $0x138] sm:$0xff]
      %v3491 = vld [vmem:[%s317 + $0x140] sm:$0xff]
      %v3492 = vld [vmem:[%s317 + $0x148] sm:$0xff]
      %v3493 = vld [vmem:[%s317 + $0x150] sm:$0xff]
      %v3494 = vld [vmem:[%s317 + $0x158] sm:$0xff]
      %v3495 = vld [vmem:[%s317 + $0x160] sm:$0xff]
      %v3496 = vld [vmem:[%s317 + $0x168] sm:$0xff]
      %v3497 = vld [vmem:[%s317 + $0x170] sm:$0xff]
      %v3498 = vld [vmem:[%s317 + $0x178] sm:$0xff]
      %v3499 = vld [vmem:[%s317 + $0x180] sm:$0xff]
      %v3500 = vld [vmem:[%s317 + $0x188] sm:$0xff]
      %v3501 = vld [vmem:[%s317 + $0x190] sm:$0xff]
      %v3502 = vld [vmem:[%s317 + $0x198] sm:$0xff]
      %v3503 = vld [vmem:[%s317 + $0x1a0] sm:$0xff]
      %v3504 = vld [vmem:[%s317 + $0x1a8] sm:$0xff]
      %v3505 = vld [vmem:[%s317 + $0x1b0] sm:$0xff]
      %v3506 = vld [vmem:[%s317 + $0x1b8] sm:$0xff]
      %v3507 = vld [vmem:[%s317 + $0x1c0] sm:$0xff]
      %v3508 = vld [vmem:[%s317 + $0x1c8] sm:$0xff]
      %v3509 = vld [vmem:[%s317 + $0x1d0] sm:$0xff]
      %v3510 = vld [vmem:[%s317 + $0x1d8] sm:$0xff]
      %v3511 = vld [vmem:[%s317 + $0x1e0] sm:$0xff]
      %v3512 = vld [vmem:[%s317 + $0x1e8] sm:$0xff]
      %v3513 = vld [vmem:[%s317 + $0x1f0] sm:$0xff]
      %v3514 = vld [vmem:[%s317 + $0x1f8] sm:$0xff]
      %v3515 = vadd.f32 %v3133, %v3451
      %v3516 = vadd.f32 %v3138, %v3452
      %v3517 = vadd.f32 %v3143, %v3453
      %v3518 = vadd.f32 %v3148, %v3454
      %v3519 = vadd.f32 %v3153, %v3455
      %v3520 = vadd.f32 %v3158, %v3456
      %v3521 = vadd.f32 %v3163, %v3457
      %v3522 = vadd.f32 %v3168, %v3458
      %v3523 = vadd.f32 %v3173, %v3459
      %v3524 = vadd.f32 %v3178, %v3460
      %v3525 = vadd.f32 %v3183, %v3461
      %v3526 = vadd.f32 %v3188, %v3462
      %v3527 = vadd.f32 %v3193, %v3463
      %v3528 = vadd.f32 %v3198, %v3464
      %v3529 = vadd.f32 %v3203, %v3465
      %v3530 = vadd.f32 %v3208, %v3466
      %v3531 = vadd.f32 %v3213, %v3467
      %v3532 = vadd.f32 %v3218, %v3468
      %v3533 = vadd.f32 %v3223, %v3469
      %v3534 = vadd.f32 %v3228, %v3470
      %v3535 = vadd.f32 %v3233, %v3471
      %v3536 = vadd.f32 %v3238, %v3472
      %v3537 = vadd.f32 %v3243, %v3473
      %v3538 = vadd.f32 %v3248, %v3474
      %v3539 = vadd.f32 %v3253, %v3475
      %v3540 = vadd.f32 %v3258, %v3476
      %v3541 = vadd.f32 %v3263, %v3477
      %v3542 = vadd.f32 %v3268, %v3478
      %v3543 = vadd.f32 %v3273, %v3479
      %v3544 = vadd.f32 %v3278, %v3480
      %v3545 = vadd.f32 %v3283, %v3481
      %v3546 = vadd.f32 %v3288, %v3482
      %v3547 = vadd.f32 %v3293, %v3483
      %v3548 = vadd.f32 %v3298, %v3484
      %v3549 = vadd.f32 %v3303, %v3485
      %v3550 = vadd.f32 %v3308, %v3486
      %v3551 = vadd.f32 %v3313, %v3487
      %v3552 = vadd.f32 %v3318, %v3488
      %v3553 = vadd.f32 %v3323, %v3489
      %v3554 = vadd.f32 %v3328, %v3490
      %v3555 = vadd.f32 %v3333, %v3491
      %v3556 = vadd.f32 %v3338, %v3492
      %v3557 = vadd.f32 %v3343, %v3493
      %v3558 = vadd.f32 %v3348, %v3494
      %v3559 = vadd.f32 %v3353, %v3495
      %v3560 = vadd.f32 %v3358, %v3496
      %v3561 = vadd.f32 %v3363, %v3497
      %v3562 = vadd.f32 %v3368, %v3498
      %v3563 = vadd.f32 %v3373, %v3499
      %v3564 = vadd.f32 %v3378, %v3500
      %v3565 = vadd.f32 %v3383, %v3501
      %v3566 = vadd.f32 %v3388, %v3502
      %v3567 = vadd.f32 %v3393, %v3503
      %v3568 = vadd.f32 %v3398, %v3504
      %v3569 = vadd.f32 %v3403, %v3505
      %v3570 = vadd.f32 %v3408, %v3506
      %v3571 = vadd.f32 %v3413, %v3507
      %v3572 = vadd.f32 %v3418, %v3508
      %v3573 = vadd.f32 %v3423, %v3509
      %v3574 = vadd.f32 %v3428, %v3510
      %v3575 = vadd.f32 %v3433, %v3511
      %v3576 = vadd.f32 %v3438, %v3512
      %v3577 = vadd.f32 %v3443, %v3513
      %v3578 = vadd.f32 %v3448, %v3514
      %3579 = vst.msk [vmem:[%s329] sm:$0xff] %vm545, %v3515
      %3580 = vst.msk [vmem:[%s329 + $0x8] sm:$0xff] %vm545, %v3516
      %3581 = vst.msk [vmem:[%s329 + $0x10] sm:$0xff] %vm545, %v3517
      %3582 = vst.msk [vmem:[%s329 + $0x18] sm:$0xff] %vm545, %v3518
      %3583 = vst.msk [vmem:[%s329 + $0x20] sm:$0xff] %vm545, %v3519
      %3584 = vst.msk [vmem:[%s329 + $0x28] sm:$0xff] %vm545, %v3520
      %3585 = vst.msk [vmem:[%s329 + $0x30] sm:$0xff] %vm545, %v3521
      %3586 = vst.msk [vmem:[%s329 + $0x38] sm:$0xff] %vm545, %v3522
      %3587 = vst.msk [vmem:[%s329 + $0x40] sm:$0xff] %vm545, %v3523
      %3588 = vst.msk [vmem:[%s329 + $0x48] sm:$0xff] %vm545, %v3524
      %3589 = vst.msk [vmem:[%s329 + $0x50] sm:$0xff] %vm545, %v3525
      %3590 = vst.msk [vmem:[%s329 + $0x58] sm:$0xff] %vm545, %v3526
      %3591 = vst.msk [vmem:[%s329 + $0x60] sm:$0xff] %vm545, %v3527
      %3592 = vst.msk [vmem:[%s329 + $0x68] sm:$0xff] %vm545, %v3528
      %3593 = vst.msk [vmem:[%s329 + $0x70] sm:$0xff] %vm545, %v3529
      %3594 = vst.msk [vmem:[%s329 + $0x78] sm:$0xff] %vm545, %v3530
      %3595 = vst.msk [vmem:[%s329 + $0x80] sm:$0xff] %vm545, %v3531
      %3596 = vst.msk [vmem:[%s329 + $0x88] sm:$0xff] %vm545, %v3532
      %3597 = vst.msk [vmem:[%s329 + $0x90] sm:$0xff] %vm545, %v3533
      %3598 = vst.msk [vmem:[%s329 + $0x98] sm:$0xff] %vm545, %v3534
      %3599 = vst.msk [vmem:[%s329 + $0xa0] sm:$0xff] %vm545, %v3535
      %3600 = vst.msk [vmem:[%s329 + $0xa8] sm:$0xff] %vm545, %v3536
      %3601 = vst.msk [vmem:[%s329 + $0xb0] sm:$0xff] %vm545, %v3537
      %3602 = vst.msk [vmem:[%s329 + $0xb8] sm:$0xff] %vm545, %v3538
      %3603 = vst.msk [vmem:[%s329 + $0xc0] sm:$0xff] %vm545, %v3539
      %3604 = vst.msk [vmem:[%s329 + $0xc8] sm:$0xff] %vm545, %v3540
      %3605 = vst.msk [vmem:[%s329 + $0xd0] sm:$0xff] %vm545, %v3541
      %3606 = vst.msk [vmem:[%s329 + $0xd8] sm:$0xff] %vm545, %v3542
      %3607 = vst.msk [vmem:[%s329 + $0xe0] sm:$0xff] %vm545, %v3543
      %3608 = vst.msk [vmem:[%s329 + $0xe8] sm:$0xff] %vm545, %v3544
      %3609 = vst.msk [vmem:[%s329 + $0xf0] sm:$0xff] %vm545, %v3545
      %3610 = vst.msk [vmem:[%s329 + $0xf8] sm:$0xff] %vm545, %v3546
      %3611 = vst.msk [vmem:[%s329 + $0x100] sm:$0xff] %vm545, %v3547
      %3612 = vst.msk [vmem:[%s329 + $0x108] sm:$0xff] %vm545, %v3548
      %3613 = vst.msk [vmem:[%s329 + $0x110] sm:$0xff] %vm545, %v3549
      %3614 = vst.msk [vmem:[%s329 + $0x118] sm:$0xff] %vm545, %v3550
      %3615 = vst.msk [vmem:[%s329 + $0x120] sm:$0xff] %vm545, %v3551
      %3616 = vst.msk [vmem:[%s329 + $0x128] sm:$0xff] %vm545, %v3552
      %3617 = vst.msk [vmem:[%s329 + $0x130] sm:$0xff] %vm545, %v3553
      %3618 = vst.msk [vmem:[%s329 + $0x138] sm:$0xff] %vm545, %v3554
      %3619 = vst.msk [vmem:[%s329 + $0x140] sm:$0xff] %vm545, %v3555
      %3620 = vst.msk [vmem:[%s329 + $0x148] sm:$0xff] %vm545, %v3556
      %3621 = vst.msk [vmem:[%s329 + $0x150] sm:$0xff] %vm545, %v3557
      %3622 = vst.msk [vmem:[%s329 + $0x158] sm:$0xff] %vm545, %v3558
      %3623 = vst.msk [vmem:[%s329 + $0x160] sm:$0xff] %vm545, %v3559
      %3624 = vst.msk [vmem:[%s329 + $0x168] sm:$0xff] %vm545, %v3560
      %3625 = vst.msk [vmem:[%s329 + $0x170] sm:$0xff] %vm545, %v3561
      %3626 = vst.msk [vmem:[%s329 + $0x178] sm:$0xff] %vm545, %v3562
      %3627 = vst.msk [vmem:[%s329 + $0x180] sm:$0xff] %vm545, %v3563
      %3628 = vst.msk [vmem:[%s329 + $0x188] sm:$0xff] %vm545, %v3564
      %3629 = vst.msk [vmem:[%s329 + $0x190] sm:$0xff] %vm545, %v3565
      %3630 = vst.msk [vmem:[%s329 + $0x198] sm:$0xff] %vm545, %v3566
      %3631 = vst.msk [vmem:[%s329 + $0x1a0] sm:$0xff] %vm545, %v3567
      %3632 = vst.msk [vmem:[%s329 + $0x1a8] sm:$0xff] %vm545, %v3568
      %3633 = vst.msk [vmem:[%s329 + $0x1b0] sm:$0xff] %vm545, %v3569
      %3634 = vst.msk [vmem:[%s329 + $0x1b8] sm:$0xff] %vm545, %v3570
      %3635 = vst.msk [vmem:[%s329 + $0x1c0] sm:$0xff] %vm545, %v3571
      %3636 = vst.msk [vmem:[%s329 + $0x1c8] sm:$0xff] %vm545, %v3572
      %3637 = vst.msk [vmem:[%s329 + $0x1d0] sm:$0xff] %vm545, %v3573
      %3638 = vst.msk [vmem:[%s329 + $0x1d8] sm:$0xff] %vm545, %v3574
      %3639 = vst.msk [vmem:[%s329 + $0x1e0] sm:$0xff] %vm545, %v3575
      %3640 = vst.msk [vmem:[%s329 + $0x1e8] sm:$0xff] %vm545, %v3576
      %3641 = vst.msk [vmem:[%s329 + $0x1f0] sm:$0xff] %vm545, %v3577
      %3642 = vst.msk [vmem:[%s329 + $0x1f8] sm:$0xff] %vm545, %v3578
      %s3643 = smul.u32 64, %s19
      %p3644 = scmp.lt.s32.totalorder %s3643, 127
      %s3645 = scalar_select %p3644, %s3643, 127
      %s3646 = smul.addr %s3645, 8
      %s3647 = scalar_lea.vmem %s8, %s3646
      // Predicated region
      $region53: #{conv_next_block.5} parent=51 // pred_check
        %p3648 = pneg %p215
      $region54: #{conv_next_block.5} parent=51 // pred_check_branch
        %3650 = sbr.rel (%p3648) target = $region56
      $region55: #{conv_next_block.5} parent=51 // pred_region
        %s3651 = smul.u32 64, %s19
      $region56: #{conv_next_block.5} parent=51 // pred_fallthru
        _
    $region52: #{conv_next_block.5} parent=5 // pred_fallthru
      _
    %p3652 = scmp.le.s32.totalorder 2, %s14
    // Predicated region
    $region57: #{conv_next_block.5} parent=5 // pred_check
      %p3653 = pneg %p3652
    $region58: #{conv_next_block.5} parent=5 // pred_check_branch
      %3655 = sbr.rel (%p3653) target = $region60
    $region59: #{conv_next_block.5} parent=5 // pred_region
      %s3656 = ssub.s32 %s14, 2
      // Predicated region
      $region61: #{conv_next_block.5} parent=59 // pred_check
        %p3657 = pneg %p221
      $region62: #{conv_next_block.5} parent=59 // pred_check_branch
        %3659 = sbr.rel (%p3657) target = $region64
      $region63: #{conv_next_block.5} parent=59 // pred_region
        %s3660 = smul.u32 64, %s20
        %p3661 = scmp.lt.s32.totalorder %s3660, 127
        %s3662 = scalar_select %p3661, %s3660, 127
        %s3663 = smul.addr %s3662, 8
        %s3664 = scalar_lea.vmem %s8, %s3663
      $region64: #{conv_next_block.5} parent=59 // pred_fallthru
        _
    $region60: #{conv_next_block.5} parent=5 // pred_fallthru
      _
  $region6: #{conv_next_block.5} parent=0 // loop_footer
    %s18 = sadd.s32 1, %s14
  $region7: #{conv_next_block.5} parent=0 // loop_footer_branch
    %13 = sbr.rel target = $region3
  $region8: #{conv_next_block.5} parent=0 // loop_exit
    _

</llo_original>
